<compile_context>
chip_gen: v6e
topology: v6e:2x2x1
jax: 0.10.0
libtpu: 0.0.40
codegen_flags: <defaults>
</compile_context>

<pallas_src>
import jax
import jax.numpy as jnp
from jax.experimental import pallas as pl
from jax.experimental.pallas import tpu as pltpu

INPUT_SIZE = 28 * 28   # 784
HIDDEN_DIM = 400
LATENT_SIZE = 15


def _round_up(x, m):
    return (x + m - 1) // m * m


IN_P = _round_up(INPUT_SIZE, 128)    # 896
HID_P = _round_up(HIDDEN_DIM, 128)   # 512
LAT_P = _round_up(LATENT_SIZE, 128)  # 128

# Padded MACs per batch row (for the cost estimate).
_MACS_PER_ROW = (IN_P * HID_P + 2 * HID_P * HID_P + HID_P * 2 * LAT_P
                 + LAT_P * HID_P + 2 * HID_P * HID_P + HID_P * IN_P)


def _vae_kernel(x_ref, eps_ref,
                w1, b1, w2, b2, w3, b3, wml, bml,
                d1, db1, d2, db2, d3, db3, d4, db4,
                xhat_ref, mu_ref, logvar_ref):
    """Fused encoder + reparametrize + decoder for one batch tile.

    Weights are bf16 (VMEM-resident via constant index_map); accumulation and all
    VPU/EUP math (bias, ReLU, exp, sigmoid) are f32.
    """
    f32 = jnp.float32
    bf16 = jnp.bfloat16

    def lin(h, w, b):
        return jnp.dot(h.astype(bf16), w[...], preferred_element_type=f32) + b[...]

    x = x_ref[...]

    # ---- Encoder MLP: Linear+ReLU x3 ----
    h = jnp.maximum(lin(x, w1, b1), 0.0)
    h = jnp.maximum(lin(h, w2, b2), 0.0)
    h = jnp.maximum(lin(h, w3, b3), 0.0)

    # ---- fused mu | logvar head: one (HID_P, 2*LAT_P) matmul ----
    ml = lin(h, wml, bml)
    mu = ml[:, :LAT_P]
    logvar = ml[:, LAT_P:]

    # ---- reparametrize: z = exp(0.5 * logvar) * eps + mu ----
    z = jnp.exp(0.5 * logvar) * eps_ref[...] + mu

    # ---- Decoder MLP: Linear+ReLU x3, Linear+Sigmoid ----
    g = jnp.maximum(lin(z, d1, db1), 0.0)
    g = jnp.maximum(lin(g, d2, db2), 0.0)
    g = jnp.maximum(lin(g, d3, db3), 0.0)
    xhat_ref[...] = jax.nn.sigmoid(lin(g, d4, db4))

    mu_ref[...] = mu
    logvar_ref[...] = logvar


def make_params(key):
    """Deterministic PyTorch-style nn.Linear init: U(-1/sqrt(fan_in), 1/sqrt(fan_in)).
    Weights are stored as (fan_in, fan_out) so the kernel computes x @ W + b."""
    dims = [
        (INPUT_SIZE, HIDDEN_DIM),   # enc fc1
        (HIDDEN_DIM, HIDDEN_DIM),   # enc fc2
        (HIDDEN_DIM, HIDDEN_DIM),   # enc fc3
        (HIDDEN_DIM, LATENT_SIZE),  # mu layer
        (HIDDEN_DIM, LATENT_SIZE),  # logvar layer
        (LATENT_SIZE, HIDDEN_DIM),  # dec fc1
        (HIDDEN_DIM, HIDDEN_DIM),   # dec fc2
        (HIDDEN_DIM, HIDDEN_DIM),   # dec fc3
        (HIDDEN_DIM, INPUT_SIZE),   # dec fc4
    ]
    params = []
    for fin, fout in dims:
        kw, kb, key = jax.random.split(key, 3)
        bound = 1.0 / (fin ** 0.5)
        w = jax.random.uniform(kw, (fin, fout), jnp.float32, -bound, bound)
        b = jax.random.uniform(kb, (fout,), jnp.float32, -bound, bound)
        params.append((w, b))
    return params


def _pad_w(w, rp, cp):
    """Zero-pad weight to (rp, cp) and cast to bf16 (MXU operand dtype)."""
    out = jnp.zeros((rp, cp), jnp.bfloat16)
    return out.at[: w.shape[0], : w.shape[1]].set(w.astype(jnp.bfloat16))


def _pad_b(b, cp):
    """Zero-pad bias to (1, cp); biases stay f32 (VPU add in f32)."""
    return jnp.zeros((1, cp), jnp.float32).at[0, : b.shape[0]].set(b)


def prepare_params(params):
    """One-time padding / bf16 cast / mu+logvar fusion.  Call OUTSIDE the hot path."""
    ((w1, b1), (w2, b2), (w3, b3), (wmu, bmu), (wlv, blv),
     (d1, db1), (d2, db2), (d3, db3), (d4, db4)) = params

    wml = jnp.concatenate([_pad_w(wmu, HID_P, LAT_P), _pad_w(wlv, HID_P, LAT_P)], axis=1)
    bml = jnp.concatenate([_pad_b(bmu, LAT_P), _pad_b(blv, LAT_P)], axis=1)

    return [
        _pad_w(w1, IN_P, HID_P), _pad_b(b1, HID_P),
        _pad_w(w2, HID_P, HID_P), _pad_b(b2, HID_P),
        _pad_w(w3, HID_P, HID_P), _pad_b(b3, HID_P),
        wml, bml,
        _pad_w(d1, LAT_P, HID_P), _pad_b(db1, HID_P),
        _pad_w(d2, HID_P, HID_P), _pad_b(db2, HID_P),
        _pad_w(d3, HID_P, HID_P), _pad_b(db3, HID_P),
        _pad_w(d4, HID_P, IN_P), _pad_b(db4, IN_P),
    ]


@jax.jit
def vae_forward(x, eps, padded_params):
    N = x.shape[0]

    # Batch tiling: TM <= 256 rows per tile, Np padded to a multiple of TM.
    Np = _round_up(max(N, 8), 8)
    tm = min(256, Np)
    Np = _round_up(Np, tm)
    grid = (Np // tm,)

    xf = x.reshape(N, -1).astype(jnp.float32)
    xp = jnp.zeros((Np, IN_P), jnp.float32).at[:N, :INPUT_SIZE].set(xf)
    epsp = jnp.zeros((Np, LAT_P), jnp.float32).at[:N, :LATENT_SIZE].set(eps)

    # Activation tiles stream over the batch grid; weights/biases get a constant
    # index_map so they are loaded once and stay resident in VMEM.
    act_in_specs = [
        pl.BlockSpec((tm, IN_P), lambda i: (i, 0)),
        pl.BlockSpec((tm, LAT_P), lambda i: (i, 0)),
    ]
    weight_specs = [pl.BlockSpec(p.shape, lambda i: (0, 0)) for p in padded_params]
    out_specs = (
        pl.BlockSpec((tm, IN_P), lambda i: (i, 0)),
        pl.BlockSpec((tm, LAT_P), lambda i: (i, 0)),
        pl.BlockSpec((tm, LAT_P), lambda i: (i, 0)),
    )
    out_shapes = (
        jax.ShapeDtypeStruct((Np, IN_P), jnp.float32),    # x_hat (padded)
        jax.ShapeDtypeStruct((Np, LAT_P), jnp.float32),   # mu    (padded)
        jax.ShapeDtypeStruct((Np, LAT_P), jnp.float32),   # logvar(padded)
    )

    weight_bytes = sum(int(p.size) * p.dtype.itemsize for p in padded_params)
    io_bytes = Np * (IN_P * 4 + LAT_P * 4 + IN_P * 4 + 2 * LAT_P * 4)
    cost = pl.CostEstimate(
        flops=2 * Np * _MACS_PER_ROW,
        transcendentals=Np * (LAT_P + IN_P),
        bytes_accessed=weight_bytes + io_bytes,
    )

    xhat_p, mu_p, logvar_p = pl.pallas_call(
        _vae_kernel,
        out_shape=out_shapes,
        grid=grid,
        in_specs=act_in_specs + weight_specs,
        out_specs=out_specs,
        compiler_params=pltpu.CompilerParams(
            dimension_semantics=("parallel",),
            vmem_limit_bytes=32 * 1024 * 1024,
        ),
        cost_estimate=cost,
    )(xp, epsp, *padded_params)

    x_hat = xhat_p[:N, :INPUT_SIZE].reshape(N, 1, 28, 28)
    mu = mu_p[:N, :LATENT_SIZE]
    logvar = logvar_p[:N, :LATENT_SIZE]
    return x_hat, mu, logvar


if __name__ == "__main__":
    key = jax.random.PRNGKey(0)
    kx, keps, kparams = jax.random.split(key, 3)

    N = 2
    x = jax.random.uniform(kx, (N, 1, 28, 28), jnp.float32)
    # eps plays the role of torch.randn_like(logvar) in reparametrize; sampled
    # deterministically outside the kernel for reproducibility.
    eps = jax.random.normal(keps, (N, LATENT_SIZE), jnp.float32)

    params = make_params(kparams)
    padded_params = prepare_params(params)          # one-time pad + bf16 cast
    padded_params = jax.block_until_ready(padded_params)

    x_hat, mu, logvar = vae_forward(x, eps, padded_params)
    jax.block_until_ready((x_hat, mu, logvar))

    assert x_hat.shape == (N, 1, 28, 28)
    assert mu.shape == (N, LATENT_SIZE)
    assert logvar.shape == (N, LATENT_SIZE)
    assert bool(jnp.all(jnp.isfinite(x_hat)))
    assert bool(jnp.all((x_hat >= 0.0) & (x_hat <= 1.0)))
    print("KERNEL_OK")
</pallas_src>

<mosaic_0001>
module attributes {stable_mosaic.version = 11 : i64} {
  func.func @_vae_kernel(%arg0: i32, %arg1: memref<8x896xf32, #tpu.memory_space<vmem>>, %arg2: memref<8x128xf32, #tpu.memory_space<vmem>>, %arg3: memref<896x512xbf16, #tpu.memory_space<vmem>>, %arg4: memref<1x512xf32, #tpu.memory_space<vmem>>, %arg5: memref<512x512xbf16, #tpu.memory_space<vmem>>, %arg6: memref<1x512xf32, #tpu.memory_space<vmem>>, %arg7: memref<512x512xbf16, #tpu.memory_space<vmem>>, %arg8: memref<1x512xf32, #tpu.memory_space<vmem>>, %arg9: memref<512x256xbf16, #tpu.memory_space<vmem>>, %arg10: memref<1x256xf32, #tpu.memory_space<vmem>>, %arg11: memref<128x512xbf16, #tpu.memory_space<vmem>>, %arg12: memref<1x512xf32, #tpu.memory_space<vmem>>, %arg13: memref<512x512xbf16, #tpu.memory_space<vmem>>, %arg14: memref<1x512xf32, #tpu.memory_space<vmem>>, %arg15: memref<512x512xbf16, #tpu.memory_space<vmem>>, %arg16: memref<1x512xf32, #tpu.memory_space<vmem>>, %arg17: memref<512x896xbf16, #tpu.memory_space<vmem>>, %arg18: memref<1x896xf32, #tpu.memory_space<vmem>>, %arg19: memref<8x896xf32, #tpu.memory_space<vmem>>, %arg20: memref<8x128xf32, #tpu.memory_space<vmem>>, %arg21: memref<8x128xf32, #tpu.memory_space<vmem>>) attributes {dimension_semantics = [#tpu.dimension_semantics<parallel>], iteration_bounds = array<i64: 1>, scalar_prefetch = 0 : i64, scratch_operands = 0 : i64, tpu.core_type = #tpu.core_type<tc>, window_params = [{transform_indices = @transform_0, window_bounds = array<i64: 8, 896>}, {transform_indices = @transform_1, window_bounds = array<i64: 8, 128>}, {pipeline_mode = #tpu.pipeline_mode<synchronous>, transform_indices = @transform_2, window_bounds = array<i64: 896, 512>}, {pipeline_mode = #tpu.pipeline_mode<synchronous>, transform_indices = @transform_3, window_bounds = array<i64: 1, 512>}, {pipeline_mode = #tpu.pipeline_mode<synchronous>, transform_indices = @transform_4, window_bounds = array<i64: 512, 512>}, {pipeline_mode = #tpu.pipeline_mode<synchronous>, transform_indices = @transform_5, window_bounds = array<i64: 1, 512>}, {pipeline_mode = #tpu.pipeline_mode<synchronous>, transform_indices = @transform_6, window_bounds = array<i64: 512, 512>}, {pipeline_mode = #tpu.pipeline_mode<synchronous>, transform_indices = @transform_7, window_bounds = array<i64: 1, 512>}, {pipeline_mode = #tpu.pipeline_mode<synchronous>, transform_indices = @transform_8, window_bounds = array<i64: 512, 256>}, {pipeline_mode = #tpu.pipeline_mode<synchronous>, transform_indices = @transform_9, window_bounds = array<i64: 1, 256>}, {pipeline_mode = #tpu.pipeline_mode<synchronous>, transform_indices = @transform_10, window_bounds = array<i64: 128, 512>}, {pipeline_mode = #tpu.pipeline_mode<synchronous>, transform_indices = @transform_11, window_bounds = array<i64: 1, 512>}, {pipeline_mode = #tpu.pipeline_mode<synchronous>, transform_indices = @transform_12, window_bounds = array<i64: 512, 512>}, {pipeline_mode = #tpu.pipeline_mode<synchronous>, transform_indices = @transform_13, window_bounds = array<i64: 1, 512>}, {pipeline_mode = #tpu.pipeline_mode<synchronous>, transform_indices = @transform_14, window_bounds = array<i64: 512, 512>}, {pipeline_mode = #tpu.pipeline_mode<synchronous>, transform_indices = @transform_15, window_bounds = array<i64: 1, 512>}, {pipeline_mode = #tpu.pipeline_mode<synchronous>, transform_indices = @transform_16, window_bounds = array<i64: 512, 896>}, {pipeline_mode = #tpu.pipeline_mode<synchronous>, transform_indices = @transform_17, window_bounds = array<i64: 1, 896>}, {transform_indices = @transform_18, window_bounds = array<i64: 8, 896>}, {transform_indices = @transform_19, window_bounds = array<i64: 8, 128>}, {transform_indices = @transform_20, window_bounds = array<i64: 8, 128>}]} {
    %c0 = arith.constant 0 : index
    %c0_0 = arith.constant 0 : index
    %0 = vector.load %arg1[%c0, %c0_0] : memref<8x896xf32, #tpu.memory_space<vmem>>, vector<8x896xf32>
    %1 = arith.truncf %0 : vector<8x896xf32> to vector<8x896xbf16>
    %c0_1 = arith.constant 0 : index
    %c0_2 = arith.constant 0 : index
    %2 = vector.load %arg3[%c0_1, %c0_2] : memref<896x512xbf16, #tpu.memory_space<vmem>>, vector<896x512xbf16>
    %cst = arith.constant dense<0.000000e+00> : vector<8x512xf32>
    %3 = tpu.matmul %1, %2, %cst {dimension_numbers = #tpu.dot_dimension_numbers<[1], [0], [0], [1], [0, 0, 1, 1], [], []>} : vector<8x896xbf16>, vector<896x512xbf16>, vector<8x512xf32> -> vector<8x512xf32>
    %c0_3 = arith.constant 0 : index
    %c0_4 = arith.constant 0 : index
    %4 = vector.load %arg4[%c0_3, %c0_4] : memref<1x512xf32, #tpu.memory_space<vmem>>, vector<1x512xf32>
    %5 = vector.broadcast %4 : vector<1x512xf32> to vector<8x512xf32>
    %6 = arith.addf %3, %5 : vector<8x512xf32>
    %cst_5 = arith.constant 0.000000e+00 : f32
    %7 = vector.broadcast %cst_5 : f32 to vector<8x512xf32>
    %8 = arith.maximumf %6, %7 : vector<8x512xf32>
    %9 = arith.truncf %8 : vector<8x512xf32> to vector<8x512xbf16>
    %c0_6 = arith.constant 0 : index
    %c0_7 = arith.constant 0 : index
    %10 = vector.load %arg5[%c0_6, %c0_7] : memref<512x512xbf16, #tpu.memory_space<vmem>>, vector<512x512xbf16>
    %cst_8 = arith.constant dense<0.000000e+00> : vector<8x512xf32>
    %11 = tpu.matmul %9, %10, %cst_8 {dimension_numbers = #tpu.dot_dimension_numbers<[1], [0], [0], [1], [0, 0, 1, 1], [], []>} : vector<8x512xbf16>, vector<512x512xbf16>, vector<8x512xf32> -> vector<8x512xf32>
    %c0_9 = arith.constant 0 : index
    %c0_10 = arith.constant 0 : index
    %12 = vector.load %arg6[%c0_9, %c0_10] : memref<1x512xf32, #tpu.memory_space<vmem>>, vector<1x512xf32>
    %13 = vector.broadcast %12 : vector<1x512xf32> to vector<8x512xf32>
    %14 = arith.addf %11, %13 : vector<8x512xf32>
    %cst_11 = arith.constant 0.000000e+00 : f32
    %15 = vector.broadcast %cst_11 : f32 to vector<8x512xf32>
    %16 = arith.maximumf %14, %15 : vector<8x512xf32>
    %17 = arith.truncf %16 : vector<8x512xf32> to vector<8x512xbf16>
    %c0_12 = arith.constant 0 : index
    %c0_13 = arith.constant 0 : index
    %18 = vector.load %arg7[%c0_12, %c0_13] : memref<512x512xbf16, #tpu.memory_space<vmem>>, vector<512x512xbf16>
    %cst_14 = arith.constant dense<0.000000e+00> : vector<8x512xf32>
    %19 = tpu.matmul %17, %18, %cst_14 {dimension_numbers = #tpu.dot_dimension_numbers<[1], [0], [0], [1], [0, 0, 1, 1], [], []>} : vector<8x512xbf16>, vector<512x512xbf16>, vector<8x512xf32> -> vector<8x512xf32>
    %c0_15 = arith.constant 0 : index
    %c0_16 = arith.constant 0 : index
    %20 = vector.load %arg8[%c0_15, %c0_16] : memref<1x512xf32, #tpu.memory_space<vmem>>, vector<1x512xf32>
    %21 = vector.broadcast %20 : vector<1x512xf32> to vector<8x512xf32>
    %22 = arith.addf %19, %21 : vector<8x512xf32>
    %cst_17 = arith.constant 0.000000e+00 : f32
    %23 = vector.broadcast %cst_17 : f32 to vector<8x512xf32>
    %24 = arith.maximumf %22, %23 : vector<8x512xf32>
    %25 = arith.truncf %24 : vector<8x512xf32> to vector<8x512xbf16>
    %c0_18 = arith.constant 0 : index
    %c0_19 = arith.constant 0 : index
    %26 = vector.load %arg9[%c0_18, %c0_19] : memref<512x256xbf16, #tpu.memory_space<vmem>>, vector<512x256xbf16>
    %cst_20 = arith.constant dense<0.000000e+00> : vector<8x256xf32>
    %27 = tpu.matmul %25, %26, %cst_20 {dimension_numbers = #tpu.dot_dimension_numbers<[1], [0], [0], [1], [0, 0, 1, 1], [], []>} : vector<8x512xbf16>, vector<512x256xbf16>, vector<8x256xf32> -> vector<8x256xf32>
    %c0_21 = arith.constant 0 : index
    %c0_22 = arith.constant 0 : index
    %28 = vector.load %arg10[%c0_21, %c0_22] : memref<1x256xf32, #tpu.memory_space<vmem>>, vector<1x256xf32>
    %29 = vector.broadcast %28 : vector<1x256xf32> to vector<8x256xf32>
    %30 = arith.addf %27, %29 : vector<8x256xf32>
    %31 = vector.extract_strided_slice %30 {offsets = [0, 0], sizes = [8, 128], strides = [1, 1]} : vector<8x256xf32> to vector<8x128xf32>
    %32 = vector.extract_strided_slice %30 {offsets = [0, 128], sizes = [8, 128], strides = [1, 1]} : vector<8x256xf32> to vector<8x128xf32>
    %cst_23 = arith.constant 5.000000e-01 : f32
    %33 = vector.broadcast %cst_23 : f32 to vector<8x128xf32>
    %34 = arith.mulf %33, %32 : vector<8x128xf32>
    %35 = math.exp %34 : vector<8x128xf32>
    %c0_24 = arith.constant 0 : index
    %c0_25 = arith.constant 0 : index
    %36 = vector.load %arg2[%c0_24, %c0_25] : memref<8x128xf32, #tpu.memory_space<vmem>>, vector<8x128xf32>
    %37 = arith.mulf %35, %36 : vector<8x128xf32>
    %38 = arith.addf %37, %31 : vector<8x128xf32>
    %39 = arith.truncf %38 : vector<8x128xf32> to vector<8x128xbf16>
    %c0_26 = arith.constant 0 : index
    %c0_27 = arith.constant 0 : index
    %40 = vector.load %arg11[%c0_26, %c0_27] : memref<128x512xbf16, #tpu.memory_space<vmem>>, vector<128x512xbf16>
    %cst_28 = arith.constant dense<0.000000e+00> : vector<8x512xf32>
    %41 = tpu.matmul %39, %40, %cst_28 {dimension_numbers = #tpu.dot_dimension_numbers<[1], [0], [0], [1], [0, 0, 1, 1], [], []>} : vector<8x128xbf16>, vector<128x512xbf16>, vector<8x512xf32> -> vector<8x512xf32>
    %c0_29 = arith.constant 0 : index
    %c0_30 = arith.constant 0 : index
    %42 = vector.load %arg12[%c0_29, %c0_30] : memref<1x512xf32, #tpu.memory_space<vmem>>, vector<1x512xf32>
    %43 = vector.broadcast %42 : vector<1x512xf32> to vector<8x512xf32>
    %44 = arith.addf %41, %43 : vector<8x512xf32>
    %cst_31 = arith.constant 0.000000e+00 : f32
    %45 = vector.broadcast %cst_31 : f32 to vector<8x512xf32>
    %46 = arith.maximumf %44, %45 : vector<8x512xf32>
    %47 = arith.truncf %46 : vector<8x512xf32> to vector<8x512xbf16>
    %c0_32 = arith.constant 0 : index
    %c0_33 = arith.constant 0 : index
    %48 = vector.load %arg13[%c0_32, %c0_33] : memref<512x512xbf16, #tpu.memory_space<vmem>>, vector<512x512xbf16>
    %cst_34 = arith.constant dense<0.000000e+00> : vector<8x512xf32>
    %49 = tpu.matmul %47, %48, %cst_34 {dimension_numbers = #tpu.dot_dimension_numbers<[1], [0], [0], [1], [0, 0, 1, 1], [], []>} : vector<8x512xbf16>, vector<512x512xbf16>, vector<8x512xf32> -> vector<8x512xf32>
    %c0_35 = arith.constant 0 : index
    %c0_36 = arith.constant 0 : index
    %50 = vector.load %arg14[%c0_35, %c0_36] : memref<1x512xf32, #tpu.memory_space<vmem>>, vector<1x512xf32>
    %51 = vector.broadcast %50 : vector<1x512xf32> to vector<8x512xf32>
    %52 = arith.addf %49, %51 : vector<8x512xf32>
    %cst_37 = arith.constant 0.000000e+00 : f32
    %53 = vector.broadcast %cst_37 : f32 to vector<8x512xf32>
    %54 = arith.maximumf %52, %53 : vector<8x512xf32>
    %55 = arith.truncf %54 : vector<8x512xf32> to vector<8x512xbf16>
    %c0_38 = arith.constant 0 : index
    %c0_39 = arith.constant 0 : index
    %56 = vector.load %arg15[%c0_38, %c0_39] : memref<512x512xbf16, #tpu.memory_space<vmem>>, vector<512x512xbf16>
    %cst_40 = arith.constant dense<0.000000e+00> : vector<8x512xf32>
    %57 = tpu.matmul %55, %56, %cst_40 {dimension_numbers = #tpu.dot_dimension_numbers<[1], [0], [0], [1], [0, 0, 1, 1], [], []>} : vector<8x512xbf16>, vector<512x512xbf16>, vector<8x512xf32> -> vector<8x512xf32>
    %c0_41 = arith.constant 0 : index
    %c0_42 = arith.constant 0 : index
    %58 = vector.load %arg16[%c0_41, %c0_42] : memref<1x512xf32, #tpu.memory_space<vmem>>, vector<1x512xf32>
    %59 = vector.broadcast %58 : vector<1x512xf32> to vector<8x512xf32>
    %60 = arith.addf %57, %59 : vector<8x512xf32>
    %cst_43 = arith.constant 0.000000e+00 : f32
    %61 = vector.broadcast %cst_43 : f32 to vector<8x512xf32>
    %62 = arith.maximumf %60, %61 : vector<8x512xf32>
    %63 = arith.truncf %62 : vector<8x512xf32> to vector<8x512xbf16>
    %c0_44 = arith.constant 0 : index
    %c0_45 = arith.constant 0 : index
    %64 = vector.load %arg17[%c0_44, %c0_45] : memref<512x896xbf16, #tpu.memory_space<vmem>>, vector<512x896xbf16>
    %cst_46 = arith.constant dense<0.000000e+00> : vector<8x896xf32>
    %65 = tpu.matmul %63, %64, %cst_46 {dimension_numbers = #tpu.dot_dimension_numbers<[1], [0], [0], [1], [0, 0, 1, 1], [], []>} : vector<8x512xbf16>, vector<512x896xbf16>, vector<8x896xf32> -> vector<8x896xf32>
    %c0_47 = arith.constant 0 : index
    %c0_48 = arith.constant 0 : index
    %66 = vector.load %arg18[%c0_47, %c0_48] : memref<1x896xf32, #tpu.memory_space<vmem>>, vector<1x896xf32>
    %67 = vector.broadcast %66 : vector<1x896xf32> to vector<8x896xf32>
    %68 = arith.addf %65, %67 : vector<8x896xf32>
    %69 = arith.negf %68 : vector<8x896xf32>
    %70 = math.exp %69 : vector<8x896xf32>
    %cst_49 = arith.constant 1.000000e+00 : f32
    %71 = vector.broadcast %cst_49 : f32 to vector<8x896xf32>
    %72 = arith.addf %71, %70 : vector<8x896xf32>
    %73 = arith.divf %71, %72 : vector<8x896xf32>
    %c0_50 = arith.constant 0 : index
    %c0_51 = arith.constant 0 : index
    %74 = vector.load %arg19[%c0_50, %c0_51] : memref<8x896xf32, #tpu.memory_space<vmem>>, vector<8x896xf32>
    tpu.vector_store %arg19[%c0_50, %c0_51], %73 {strides = array<i32>} : memref<8x896xf32, #tpu.memory_space<vmem>>, vector<8x896xf32>,
    %c0_52 = arith.constant 0 : index
    %c0_53 = arith.constant 0 : index
    %75 = vector.load %arg20[%c0_52, %c0_53] : memref<8x128xf32, #tpu.memory_space<vmem>>, vector<8x128xf32>
    tpu.vector_store %arg20[%c0_52, %c0_53], %31 {strides = array<i32>} : memref<8x128xf32, #tpu.memory_space<vmem>>, vector<8x128xf32>,
    %c0_54 = arith.constant 0 : index
    %c0_55 = arith.constant 0 : index
    %76 = vector.load %arg21[%c0_54, %c0_55] : memref<8x128xf32, #tpu.memory_space<vmem>>, vector<8x128xf32>
    tpu.vector_store %arg21[%c0_54, %c0_55], %32 {strides = array<i32>} : memref<8x128xf32, #tpu.memory_space<vmem>>, vector<8x128xf32>,
    return
  }
  func.func @transform_0(%arg0: i32) -> (i32, i32) {
    %c0_i32 = arith.constant 0 : i32
    %c0_i32_0 = arith.constant 0 : i32
    return %arg0, %c0_i32 : i32, i32
  }
  func.func @transform_1(%arg0: i32) -> (i32, i32) {
    %c0_i32 = arith.constant 0 : i32
    %c0_i32_0 = arith.constant 0 : i32
    return %arg0, %c0_i32 : i32, i32
  }
  func.func @transform_2(%arg0: i32) -> (i32, i32) {
    %c0_i32 = arith.constant 0 : i32
    %c0_i32_0 = arith.constant 0 : i32
    %c0_i32_1 = arith.constant 0 : i32
    return %c0_i32, %c0_i32_0 : i32, i32
  }
  func.func @transform_3(%arg0: i32) -> (i32, i32) {
    %c0_i32 = arith.constant 0 : i32
    %c0_i32_0 = arith.constant 0 : i32
    %c0_i32_1 = arith.constant 0 : i32
    return %c0_i32, %c0_i32_0 : i32, i32
  }
  func.func @transform_4(%arg0: i32) -> (i32, i32) {
    %c0_i32 = arith.constant 0 : i32
    %c0_i32_0 = arith.constant 0 : i32
    %c0_i32_1 = arith.constant 0 : i32
    return %c0_i32, %c0_i32_0 : i32, i32
  }
  func.func @transform_5(%arg0: i32) -> (i32, i32) {
    %c0_i32 = arith.constant 0 : i32
    %c0_i32_0 = arith.constant 0 : i32
    %c0_i32_1 = arith.constant 0 : i32
    return %c0_i32, %c0_i32_0 : i32, i32
  }
  func.func @transform_6(%arg0: i32) -> (i32, i32) {
    %c0_i32 = arith.constant 0 : i32
    %c0_i32_0 = arith.constant 0 : i32
    %c0_i32_1 = arith.constant 0 : i32
    return %c0_i32, %c0_i32_0 : i32, i32
  }
  func.func @transform_7(%arg0: i32) -> (i32, i32) {
    %c0_i32 = arith.constant 0 : i32
    %c0_i32_0 = arith.constant 0 : i32
    %c0_i32_1 = arith.constant 0 : i32
    return %c0_i32, %c0_i32_0 : i32, i32
  }
  func.func @transform_8(%arg0: i32) -> (i32, i32) {
    %c0_i32 = arith.constant 0 : i32
    %c0_i32_0 = arith.constant 0 : i32
    %c0_i32_1 = arith.constant 0 : i32
    return %c0_i32, %c0_i32_0 : i32, i32
  }
  func.func @transform_9(%arg0: i32) -> (i32, i32) {
    %c0_i32 = arith.constant 0 : i32
    %c0_i32_0 = arith.constant 0 : i32
    %c0_i32_1 = arith.constant 0 : i32
    return %c0_i32, %c0_i32_0 : i32, i32
  }
  func.func @transform_10(%arg0: i32) -> (i32, i32) {
    %c0_i32 = arith.constant 0 : i32
    %c0_i32_0 = arith.constant 0 : i32
    %c0_i32_1 = arith.constant 0 : i32
    return %c0_i32, %c0_i32_0 : i32, i32
  }
  func.func @transform_11(%arg0: i32) -> (i32, i32) {
    %c0_i32 = arith.constant 0 : i32
    %c0_i32_0 = arith.constant 0 : i32
    %c0_i32_1 = arith.constant 0 : i32
    return %c0_i32, %c0_i32_0 : i32, i32
  }
  func.func @transform_12(%arg0: i32) -> (i32, i32) {
    %c0_i32 = arith.constant 0 : i32
    %c0_i32_0 = arith.constant 0 : i32
    %c0_i32_1 = arith.constant 0 : i32
    return %c0_i32, %c0_i32_0 : i32, i32
  }
  func.func @transform_13(%arg0: i32) -> (i32, i32) {
    %c0_i32 = arith.constant 0 : i32
    %c0_i32_0 = arith.constant 0 : i32
    %c0_i32_1 = arith.constant 0 : i32
    return %c0_i32, %c0_i32_0 : i32, i32
  }
  func.func @transform_14(%arg0: i32) -> (i32, i32) {
    %c0_i32 = arith.constant 0 : i32
    %c0_i32_0 = arith.constant 0 : i32
    %c0_i32_1 = arith.constant 0 : i32
    return %c0_i32, %c0_i32_0 : i32, i32
  }
  func.func @transform_15(%arg0: i32) -> (i32, i32) {
    %c0_i32 = arith.constant 0 : i32
    %c0_i32_0 = arith.constant 0 : i32
    %c0_i32_1 = arith.constant 0 : i32
    return %c0_i32, %c0_i32_0 : i32, i32
  }
  func.func @transform_16(%arg0: i32) -> (i32, i32) {
    %c0_i32 = arith.constant 0 : i32
    %c0_i32_0 = arith.constant 0 : i32
    %c0_i32_1 = arith.constant 0 : i32
    return %c0_i32, %c0_i32_0 : i32, i32
  }
  func.func @transform_17(%arg0: i32) -> (i32, i32) {
    %c0_i32 = arith.constant 0 : i32
    %c0_i32_0 = arith.constant 0 : i32
    %c0_i32_1 = arith.constant 0 : i32
    return %c0_i32, %c0_i32_0 : i32, i32
  }
  func.func @transform_18(%arg0: i32) -> (i32, i32) {
    %c0_i32 = arith.constant 0 : i32
    %c0_i32_0 = arith.constant 0 : i32
    return %arg0, %c0_i32 : i32, i32
  }
  func.func @transform_19(%arg0: i32) -> (i32, i32) {
    %c0_i32 = arith.constant 0 : i32
    %c0_i32_0 = arith.constant 0 : i32
    return %arg0, %c0_i32 : i32, i32
  }
  func.func @transform_20(%arg0: i32) -> (i32, i32) {
    %c0_i32 = arith.constant 0 : i32
    %c0_i32_0 = arith.constant 0 : i32
    return %arg0, %c0_i32 : i32, i32
  }
}

</mosaic_0001>

<llo_original>
// kernel: vae_forward.1
$region0: #{vae_forward.1}
  #allocation0 [shape = 'u32[]', space=smem, size = 0x4, offset = 0x4, fixed_abs, tag = 'smem constant byte address 0x4 - core index']
  #allocation1 [shape = 'u32[144,128]{1,0:T(1,128)}', space=vmem, size = 0x12000, scoped, tag = 'internal scratch']
  %s0 = inlined_call_operand.vmem [shape: f32[8,896], index: 0, kind: input, shape index: {}]
  %s1 = inlined_call_operand.vmem [shape: f32[8,128], index: 1, kind: input, shape index: {}]
  %s2 = inlined_call_operand.hbm [shape: bf16[896,512], index: 2, kind: input, shape index: {}]
  %s3 = inlined_call_operand.vmem [shape: f32[1,512], index: 3, kind: input, shape index: {}]
  %s4 = inlined_call_operand.hbm [shape: bf16[512,512], index: 4, kind: input, shape index: {}]
  %s5 = inlined_call_operand.vmem [shape: f32[1,512], index: 5, kind: input, shape index: {}]
  %s6 = inlined_call_operand.hbm [shape: bf16[512,512], index: 6, kind: input, shape index: {}]
  %s7 = inlined_call_operand.vmem [shape: f32[1,512], index: 7, kind: input, shape index: {}]
  %s8 = inlined_call_operand.hbm [shape: bf16[512,256], index: 8, kind: input, shape index: {}]
  %s9 = inlined_call_operand.vmem [shape: f32[1,256], index: 9, kind: input, shape index: {}]
  %s10 = inlined_call_operand.vmem [shape: bf16[128,512], index: 10, kind: input, shape index: {}]
  %s11 = inlined_call_operand.vmem [shape: f32[1,512], index: 11, kind: input, shape index: {}]
  %s12 = inlined_call_operand.hbm [shape: bf16[512,512], index: 12, kind: input, shape index: {}]
  %s13 = inlined_call_operand.vmem [shape: f32[1,512], index: 13, kind: input, shape index: {}]
  %s14 = inlined_call_operand.hbm [shape: bf16[512,512], index: 14, kind: input, shape index: {}]
  %s15 = inlined_call_operand.vmem [shape: f32[1,512], index: 15, kind: input, shape index: {}]
  %s16 = inlined_call_operand.hbm [shape: bf16[512,896], index: 16, kind: input, shape index: {}]
  %s17 = inlined_call_operand.vmem [shape: f32[1,896], index: 17, kind: input, shape index: {}]
  %s18 = inlined_call_operand.vmem [shape: f32[8,896], index: 18, kind: output, shape index: {0}]
  %s19 = inlined_call_operand.vmem [shape: f32[8,128], index: 19, kind: output, shape index: {1}]
  %s20 = inlined_call_operand.vmem [shape: f32[8,128], index: 20, kind: output, shape index: {2}]
  %21 = xla_tuple %s18, %s19, %s20
  %s22 = sld [smem:[#allocation0]]
  $region126: #{vae_forward.1} parent=0
    _
  %s24 = ssub.s32 1, %s22
  %s25 = scalar_select 0, %s24, %s22
  $region1: #{vae_forward.1} parent=0
    #allocation2 [shape = 'u8[917504]{0}', space=vmem, size = 0xe0000, scoped, tag = 'input window, operand 2, single buffered']
    #allocation3 [shape = 's32[1]{0}', space=sflag, size = 0x4, scoped, tag = 'scoped memory for vae_forward.1']
    #allocation4 [shape = 'u8[524288]{0}', space=vmem, size = 0x80000, scoped, tag = 'input window, operand 4, single buffered']
    #allocation5 [shape = 's32[1]{0}', space=sflag, size = 0x4, scoped, tag = 'scoped memory for vae_forward.1']
    #allocation6 [shape = 'u8[524288]{0}', space=vmem, size = 0x80000, scoped, tag = 'input window, operand 6, single buffered']
    #allocation7 [shape = 'u8[262144]{0}', space=vmem, size = 0x40000, scoped, tag = 'input window, operand 8, single buffered']
    #allocation8 [shape = 's32[1]{0}', space=sflag, size = 0x4, scoped, tag = 'scoped memory for vae_forward.1']
    #allocation9 [shape = 'u8[524288]{0}', space=vmem, size = 0x80000, scoped, tag = 'input window, operand 12, single buffered']
    #allocation10 [shape = 'u8[524288]{0}', space=vmem, size = 0x80000, scoped, tag = 'input window, operand 14, single buffered']
    #allocation11 [shape = 's32[1]{0}', space=sflag, size = 0x4, scoped, tag = 'scoped memory for vae_forward.1']
    #allocation12 [shape = 'u8[917504]{0}', space=vmem, size = 0xe0000, scoped, tag = 'input window, operand 16, single buffered']
    %26 = vsyncpa [#allocation3], 0
    %27 = vsyncpa [#allocation5], 0
    %28 = vsyncpa [#allocation8], 0
    %29 = vsyncpa [#allocation11], 0
    // Predicated region
    $region2: #{vae_forward.1} parent=1 // pred_check
      _
    $region3: #{vae_forward.1} parent=1 // pred_check_branch
      %31 = sbr.rel (0) target = $region5
    $region4: #{vae_forward.1} parent=1 // pred_region
      _
    $region5: #{vae_forward.1} parent=1 // pred_fallthru
      _
    // Predicated region
    $region6: #{vae_forward.1} parent=1 // pred_check
      _
    $region7: #{vae_forward.1} parent=1 // pred_check_branch
      %33 = sbr.rel (0) target = $region9
    $region8: #{vae_forward.1} parent=1 // pred_region
      _
    $region9: #{vae_forward.1} parent=1 // pred_fallthru
      _
    // Predicated region
    $region10: #{vae_forward.1} parent=1 // pred_check
      _
    $region11: #{vae_forward.1} parent=1 // pred_check_branch
      %35 = sbr.rel (0) target = $region13
    $region12: #{vae_forward.1} parent=1 // pred_region
      %s37 = ssub.s32 28672, 28672
      %38 = vsyncadd [#allocation3], %s37
      %s39 = sshll.u32 [#allocation2], 4
      %s40 = int_to_ptr.vmem [resolvable:$true] %s39
      %45 = dma.hbm_to_vmem [thread:$0]  %s2, 28672, %s40, [#allocation3], 256, 256, 16
    $region13: #{vae_forward.1} parent=1 // pred_fallthru
      _
    // Predicated region
    $region14: #{vae_forward.1} parent=1 // pred_check
      _
    $region15: #{vae_forward.1} parent=1 // pred_check_branch
      %47 = sbr.rel (0) target = $region17
    $region16: #{vae_forward.1} parent=1 // pred_region
      _
    $region17: #{vae_forward.1} parent=1 // pred_fallthru
      _
    // Predicated region
    $region18: #{vae_forward.1} parent=1 // pred_check
      _
    $region19: #{vae_forward.1} parent=1 // pred_check_branch
      %49 = sbr.rel (0) target = $region21
    $region20: #{vae_forward.1} parent=1 // pred_region
      %s51 = ssub.s32 16384, 16384
      %52 = vsyncadd [#allocation5], %s51
      %s53 = sshll.u32 [#allocation4], 4
      %s54 = int_to_ptr.vmem [resolvable:$true] %s53
      %59 = dma.hbm_to_vmem [thread:$0]  %s4, 16384, %s54, [#allocation5], 256, 256, 16
    $region21: #{vae_forward.1} parent=1 // pred_fallthru
      _
    // Predicated region
    $region22: #{vae_forward.1} parent=1 // pred_check
      _
    $region23: #{vae_forward.1} parent=1 // pred_check_branch
      %61 = sbr.rel (0) target = $region25
    $region24: #{vae_forward.1} parent=1 // pred_region
      _
    $region25: #{vae_forward.1} parent=1 // pred_fallthru
      _
    // Predicated region
    $region26: #{vae_forward.1} parent=1 // pred_check
      _
    $region27: #{vae_forward.1} parent=1 // pred_check_branch
      %63 = sbr.rel (0) target = $region29
    $region28: #{vae_forward.1} parent=1 // pred_region
      %s65 = ssub.s32 16384, 16384
      %66 = vsyncadd [#allocation5], %s65
      %s67 = sshll.u32 [#allocation6], 4
      %s68 = int_to_ptr.vmem [resolvable:$true] %s67
      %73 = dma.hbm_to_vmem [thread:$0]  %s6, 16384, %s68, [#allocation5], 256, 256, 16
    $region29: #{vae_forward.1} parent=1 // pred_fallthru
      _
    // Predicated region
    $region30: #{vae_forward.1} parent=1 // pred_check
      _
    $region31: #{vae_forward.1} parent=1 // pred_check_branch
      %75 = sbr.rel (0) target = $region33
    $region32: #{vae_forward.1} parent=1 // pred_region
      _
    $region33: #{vae_forward.1} parent=1 // pred_fallthru
      _
    // Predicated region
    $region34: #{vae_forward.1} parent=1 // pred_check
      _
    $region35: #{vae_forward.1} parent=1 // pred_check_branch
      %77 = sbr.rel (0) target = $region37
    $region36: #{vae_forward.1} parent=1 // pred_region
      %s79 = ssub.s32 8192, 8192
      %80 = vsyncadd [#allocation8], %s79
      %s81 = sshll.u32 [#allocation7], 4
      %s82 = int_to_ptr.vmem [resolvable:$true] %s81
      %87 = dma.hbm_to_vmem [thread:$0]  %s8, 8192, %s82, [#allocation8], 128, 128, 8
    $region37: #{vae_forward.1} parent=1 // pred_fallthru
      _
    // Predicated region
    $region38: #{vae_forward.1} parent=1 // pred_check
      _
    $region39: #{vae_forward.1} parent=1 // pred_check_branch
      %89 = sbr.rel (0) target = $region41
    $region40: #{vae_forward.1} parent=1 // pred_region
      _
    $region41: #{vae_forward.1} parent=1 // pred_fallthru
      _
    // Predicated region
    $region42: #{vae_forward.1} parent=1 // pred_check
      _
    $region43: #{vae_forward.1} parent=1 // pred_check_branch
      %91 = sbr.rel (0) target = $region45
    $region44: #{vae_forward.1} parent=1 // pred_region
      _
    $region45: #{vae_forward.1} parent=1 // pred_fallthru
      _
    // Predicated region
    $region46: #{vae_forward.1} parent=1 // pred_check
      _
    $region47: #{vae_forward.1} parent=1 // pred_check_branch
      %93 = sbr.rel (0) target = $region49
    $region48: #{vae_forward.1} parent=1 // pred_region
      _
    $region49: #{vae_forward.1} parent=1 // pred_fallthru
      _
    // Predicated region
    $region50: #{vae_forward.1} parent=1 // pred_check
      _
    $region51: #{vae_forward.1} parent=1 // pred_check_branch
      %95 = sbr.rel (0) target = $region53
    $region52: #{vae_forward.1} parent=1 // pred_region
      %s97 = ssub.s32 16384, 16384
      %98 = vsyncadd [#allocation8], %s97
      %s99 = sshll.u32 [#allocation9], 4
      %s100 = int_to_ptr.vmem [resolvable:$true] %s99
      %105 = dma.hbm_to_vmem [thread:$0]  %s12, 16384, %s100, [#allocation8], 256, 256, 16
    $region53: #{vae_forward.1} parent=1 // pred_fallthru
      _
    // Predicated region
    $region54: #{vae_forward.1} parent=1 // pred_check
      _
    $region55: #{vae_forward.1} parent=1 // pred_check_branch
      %107 = sbr.rel (0) target = $region57
    $region56: #{vae_forward.1} parent=1 // pred_region
      _
    $region57: #{vae_forward.1} parent=1 // pred_fallthru
      _
    // Predicated region
    $region58: #{vae_forward.1} parent=1 // pred_check
      _
    $region59: #{vae_forward.1} parent=1 // pred_check_branch
      %109 = sbr.rel (0) target = $region61
    $region60: #{vae_forward.1} parent=1 // pred_region
      %s111 = ssub.s32 16384, 16384
      %112 = vsyncadd [#allocation11], %s111
      %s113 = sshll.u32 [#allocation10], 4
      %s114 = int_to_ptr.vmem [resolvable:$true] %s113
      %119 = dma.hbm_to_vmem [thread:$0]  %s14, 16384, %s114, [#allocation11], 256, 256, 16
    $region61: #{vae_forward.1} parent=1 // pred_fallthru
      _
    // Predicated region
    $region62: #{vae_forward.1} parent=1 // pred_check
      _
    $region63: #{vae_forward.1} parent=1 // pred_check_branch
      %121 = sbr.rel (0) target = $region65
    $region64: #{vae_forward.1} parent=1 // pred_region
      _
    $region65: #{vae_forward.1} parent=1 // pred_fallthru
      _
    // Predicated region
    $region66: #{vae_forward.1} parent=1 // pred_check
      _
    $region67: #{vae_forward.1} parent=1 // pred_check_branch
      %123 = sbr.rel (0) target = $region69
    $region68: #{vae_forward.1} parent=1 // pred_region
      %s125 = ssub.s32 28672, 28672
      %126 = vsyncadd [#allocation11], %s125
      %s127 = sshll.u32 [#allocation12], 4
      %s128 = int_to_ptr.vmem [resolvable:$true] %s127
      %133 = dma.hbm_to_vmem [thread:$0]  %s16, 28672, %s128, [#allocation11], 448, 448, 28
    $region69: #{vae_forward.1} parent=1 // pred_fallthru
      _
    // Predicated region
    $region70: #{vae_forward.1} parent=1 // pred_check
      _
    $region71: #{vae_forward.1} parent=1 // pred_check_branch
      %135 = sbr.rel (0) target = $region73
    $region72: #{vae_forward.1} parent=1 // pred_region
      _
    $region73: #{vae_forward.1} parent=1 // pred_fallthru
      _
    // Predicated region
    $region74: #{vae_forward.1} parent=1 // pred_check
      _
    $region75: #{vae_forward.1} parent=1 // pred_check_branch
      %137 = sbr.rel (0) target = $region77
    $region76: #{vae_forward.1} parent=1 // pred_region
      %138 = dma.done [#allocation3], 28672
    $region77: #{vae_forward.1} parent=1 // pred_fallthru
      _
    // Predicated region
    $region78: #{vae_forward.1} parent=1 // pred_check
      _
    $region79: #{vae_forward.1} parent=1 // pred_check_branch
      %140 = sbr.rel (0) target = $region81
    $region80: #{vae_forward.1} parent=1 // pred_region
      %141 = dma.done [#allocation5], 16384
    $region81: #{vae_forward.1} parent=1 // pred_fallthru
      _
    // Predicated region
    $region82: #{vae_forward.1} parent=1 // pred_check
      _
    $region83: #{vae_forward.1} parent=1 // pred_check_branch
      %143 = sbr.rel (0) target = $region85
    $region84: #{vae_forward.1} parent=1 // pred_region
      %144 = dma.done [#allocation5], 16384
    $region85: #{vae_forward.1} parent=1 // pred_fallthru
      _
    // Predicated region
    $region86: #{vae_forward.1} parent=1 // pred_check
      _
    $region87: #{vae_forward.1} parent=1 // pred_check_branch
      %146 = sbr.rel (0) target = $region89
    $region88: #{vae_forward.1} parent=1 // pred_region
      %147 = dma.done [#allocation8], 8192
    $region89: #{vae_forward.1} parent=1 // pred_fallthru
      _
    // Predicated region
    $region90: #{vae_forward.1} parent=1 // pred_check
      _
    $region91: #{vae_forward.1} parent=1 // pred_check_branch
      %149 = sbr.rel (0) target = $region93
    $region92: #{vae_forward.1} parent=1 // pred_region
      %150 = dma.done [#allocation8], 16384
    $region93: #{vae_forward.1} parent=1 // pred_fallthru
      _
    // Predicated region
    $region94: #{vae_forward.1} parent=1 // pred_check
      _
    $region95: #{vae_forward.1} parent=1 // pred_check_branch
      %152 = sbr.rel (0) target = $region97
    $region96: #{vae_forward.1} parent=1 // pred_region
      %153 = dma.done [#allocation11], 16384
    $region97: #{vae_forward.1} parent=1 // pred_fallthru
      _
    // Predicated region
    $region98: #{vae_forward.1} parent=1 // pred_check
      _
    $region99: #{vae_forward.1} parent=1 // pred_check_branch
      %155 = sbr.rel (0) target = $region101
    $region100: #{vae_forward.1} parent=1 // pred_region
      %156 = dma.done [#allocation11], 28672
    $region101: #{vae_forward.1} parent=1 // pred_fallthru
      _
    %v158 = vld [vmem:[%s0] sm:$0xff]
    %v159 = vld [vmem:[%s0 + $0x8] sm:$0xff]
    %v160 = vld [vmem:[%s0 + $0x10] sm:$0xff]
    %v161 = vld [vmem:[%s0 + $0x18] sm:$0xff]
    %v162 = vld [vmem:[%s0 + $0x20] sm:$0xff]
    %v163 = vld [vmem:[%s0 + $0x28] sm:$0xff]
    %v164 = vld [vmem:[%s0 + $0x30] sm:$0xff]
    %v165 = vpack.c.bf16 %v158, %v158
    %v166 = vpack.c.bf16 %v159, %v159
    %v167 = vpack.c.bf16 %v160, %v160
    %v168 = vpack.c.bf16 %v161, %v161
    %v169 = vpack.c.bf16 %v162, %v162
    %v170 = vpack.c.bf16 %v163, %v163
    %v171 = vpack.c.bf16 %v164, %v164
    %v172 = vld [vmem:[#allocation2] sm:$0xff]
    %v173 = vld [vmem:[#allocation2 + $0x8] sm:$0xff]
    %v174 = vld [vmem:[#allocation2 + $0x10] sm:$0xff]
    %v175 = vld [vmem:[#allocation2 + $0x18] sm:$0xff]
    %v176 = vld [vmem:[#allocation2 + $0x20] sm:$0xff]
    %v177 = vld [vmem:[#allocation2 + $0x28] sm:$0xff]
    %v178 = vld [vmem:[#allocation2 + $0x30] sm:$0xff]
    %v179 = vld [vmem:[#allocation2 + $0x38] sm:$0xff]
    %v180 = vld [vmem:[#allocation2 + $0x40] sm:$0xff]
    %v181 = vld [vmem:[#allocation2 + $0x48] sm:$0xff]
    %v182 = vld [vmem:[#allocation2 + $0x50] sm:$0xff]
    %v183 = vld [vmem:[#allocation2 + $0x58] sm:$0xff]
    %v184 = vld [vmem:[#allocation2 + $0x60] sm:$0xff]
    %v185 = vld [vmem:[#allocation2 + $0x68] sm:$0xff]
    %v186 = vld [vmem:[#allocation2 + $0x70] sm:$0xff]
    %v187 = vld [vmem:[#allocation2 + $0x78] sm:$0xff]
    %v188 = vld [vmem:[#allocation2 + $0x80] sm:$0xff]
    %v189 = vld [vmem:[#allocation2 + $0x88] sm:$0xff]
    %v190 = vld [vmem:[#allocation2 + $0x90] sm:$0xff]
    %v191 = vld [vmem:[#allocation2 + $0x98] sm:$0xff]
    %v192 = vld [vmem:[#allocation2 + $0xa0] sm:$0xff]
    %v193 = vld [vmem:[#allocation2 + $0xa8] sm:$0xff]
    %v194 = vld [vmem:[#allocation2 + $0xb0] sm:$0xff]
    %v195 = vld [vmem:[#allocation2 + $0xb8] sm:$0xff]
    %v196 = vld [vmem:[#allocation2 + $0xc0] sm:$0xff]
    %v197 = vld [vmem:[#allocation2 + $0xc8] sm:$0xff]
    %v198 = vld [vmem:[#allocation2 + $0xd0] sm:$0xff]
    %v199 = vld [vmem:[#allocation2 + $0xd8] sm:$0xff]
    %v200 = vld [vmem:[#allocation2 + $0xe0] sm:$0xff]
    %v201 = vld [vmem:[#allocation2 + $0xe8] sm:$0xff]
    %v202 = vld [vmem:[#allocation2 + $0xf0] sm:$0xff]
    %v203 = vld [vmem:[#allocation2 + $0xf8] sm:$0xff]
    %v204 = vld [vmem:[#allocation2 + $0x100] sm:$0xff]
    %v205 = vld [vmem:[#allocation2 + $0x108] sm:$0xff]
    %v206 = vld [vmem:[#allocation2 + $0x110] sm:$0xff]
    %v207 = vld [vmem:[#allocation2 + $0x118] sm:$0xff]
    %v208 = vld [vmem:[#allocation2 + $0x120] sm:$0xff]
    %v209 = vld [vmem:[#allocation2 + $0x128] sm:$0xff]
    %v210 = vld [vmem:[#allocation2 + $0x130] sm:$0xff]
    %v211 = vld [vmem:[#allocation2 + $0x138] sm:$0xff]
    %v212 = vld [vmem:[#allocation2 + $0x140] sm:$0xff]
    %v213 = vld [vmem:[#allocation2 + $0x148] sm:$0xff]
    %v214 = vld [vmem:[#allocation2 + $0x150] sm:$0xff]
    %v215 = vld [vmem:[#allocation2 + $0x158] sm:$0xff]
    %v216 = vld [vmem:[#allocation2 + $0x160] sm:$0xff]
    %v217 = vld [vmem:[#allocation2 + $0x168] sm:$0xff]
    %v218 = vld [vmem:[#allocation2 + $0x170] sm:$0xff]
    %v219 = vld [vmem:[#allocation2 + $0x178] sm:$0xff]
    %v220 = vld [vmem:[#allocation2 + $0x180] sm:$0xff]
    %v221 = vld [vmem:[#allocation2 + $0x188] sm:$0xff]
    %v222 = vld [vmem:[#allocation2 + $0x190] sm:$0xff]
    %v223 = vld [vmem:[#allocation2 + $0x198] sm:$0xff]
    %v224 = vld [vmem:[#allocation2 + $0x1a0] sm:$0xff]
    %v225 = vld [vmem:[#allocation2 + $0x1a8] sm:$0xff]
    %v226 = vld [vmem:[#allocation2 + $0x1b0] sm:$0xff]
    %v227 = vld [vmem:[#allocation2 + $0x1b8] sm:$0xff]
    %v228 = vld [vmem:[#allocation2 + $0x1c0] sm:$0xff]
    %v229 = vld [vmem:[#allocation2 + $0x1c8] sm:$0xff]
    %v230 = vld [vmem:[#allocation2 + $0x1d0] sm:$0xff]
    %v231 = vld [vmem:[#allocation2 + $0x1d8] sm:$0xff]
    %v232 = vld [vmem:[#allocation2 + $0x1e0] sm:$0xff]
    %v233 = vld [vmem:[#allocation2 + $0x1e8] sm:$0xff]
    %v234 = vld [vmem:[#allocation2 + $0x1f0] sm:$0xff]
    %v235 = vld [vmem:[#allocation2 + $0x1f8] sm:$0xff]
    %v236 = vld [vmem:[#allocation2 + $0x200] sm:$0xff]
    %v237 = vld [vmem:[#allocation2 + $0x208] sm:$0xff]
    %v238 = vld [vmem:[#allocation2 + $0x210] sm:$0xff]
    %v239 = vld [vmem:[#allocation2 + $0x218] sm:$0xff]
    %v240 = vld [vmem:[#allocation2 + $0x220] sm:$0xff]
    %v241 = vld [vmem:[#allocation2 + $0x228] sm:$0xff]
    %v242 = vld [vmem:[#allocation2 + $0x230] sm:$0xff]
    %v243 = vld [vmem:[#allocation2 + $0x238] sm:$0xff]
    %v244 = vld [vmem:[#allocation2 + $0x240] sm:$0xff]
    %v245 = vld [vmem:[#allocation2 + $0x248] sm:$0xff]
    %v246 = vld [vmem:[#allocation2 + $0x250] sm:$0xff]
    %v247 = vld [vmem:[#allocation2 + $0x258] sm:$0xff]
    %v248 = vld [vmem:[#allocation2 + $0x260] sm:$0xff]
    %v249 = vld [vmem:[#allocation2 + $0x268] sm:$0xff]
    %v250 = vld [vmem:[#allocation2 + $0x270] sm:$0xff]
    %v251 = vld [vmem:[#allocation2 + $0x278] sm:$0xff]
    %v252 = vld [vmem:[#allocation2 + $0x280] sm:$0xff]
    %v253 = vld [vmem:[#allocation2 + $0x288] sm:$0xff]
    %v254 = vld [vmem:[#allocation2 + $0x290] sm:$0xff]
    %v255 = vld [vmem:[#allocation2 + $0x298] sm:$0xff]
    %v256 = vld [vmem:[#allocation2 + $0x2a0] sm:$0xff]
    %v257 = vld [vmem:[#allocation2 + $0x2a8] sm:$0xff]
    %v258 = vld [vmem:[#allocation2 + $0x2b0] sm:$0xff]
    %v259 = vld [vmem:[#allocation2 + $0x2b8] sm:$0xff]
    %v260 = vld [vmem:[#allocation2 + $0x2c0] sm:$0xff]
    %v261 = vld [vmem:[#allocation2 + $0x2c8] sm:$0xff]
    %v262 = vld [vmem:[#allocation2 + $0x2d0] sm:$0xff]
    %v263 = vld [vmem:[#allocation2 + $0x2d8] sm:$0xff]
    %v264 = vld [vmem:[#allocation2 + $0x2e0] sm:$0xff]
    %v265 = vld [vmem:[#allocation2 + $0x2e8] sm:$0xff]
    %v266 = vld [vmem:[#allocation2 + $0x2f0] sm:$0xff]
    %v267 = vld [vmem:[#allocation2 + $0x2f8] sm:$0xff]
    %v268 = vld [vmem:[#allocation2 + $0x300] sm:$0xff]
    %v269 = vld [vmem:[#allocation2 + $0x308] sm:$0xff]
    %v270 = vld [vmem:[#allocation2 + $0x310] sm:$0xff]
    %v271 = vld [vmem:[#allocation2 + $0x318] sm:$0xff]
    %v272 = vld [vmem:[#allocation2 + $0x320] sm:$0xff]
    %v273 = vld [vmem:[#allocation2 + $0x328] sm:$0xff]
    %v274 = vld [vmem:[#allocation2 + $0x330] sm:$0xff]
    %v275 = vld [vmem:[#allocation2 + $0x338] sm:$0xff]
    %v276 = vld [vmem:[#allocation2 + $0x340] sm:$0xff]
    %v277 = vld [vmem:[#allocation2 + $0x348] sm:$0xff]
    %v278 = vld [vmem:[#allocation2 + $0x350] sm:$0xff]
    %v279 = vld [vmem:[#allocation2 + $0x358] sm:$0xff]
    %v280 = vld [vmem:[#allocation2 + $0x360] sm:$0xff]
    %v281 = vld [vmem:[#allocation2 + $0x368] sm:$0xff]
    %v282 = vld [vmem:[#allocation2 + $0x370] sm:$0xff]
    %v283 = vld [vmem:[#allocation2 + $0x378] sm:$0xff]
    %v284 = vld [vmem:[#allocation2 + $0x380] sm:$0xff]
    %v285 = vld [vmem:[#allocation2 + $0x388] sm:$0xff]
    %v286 = vld [vmem:[#allocation2 + $0x390] sm:$0xff]
    %v287 = vld [vmem:[#allocation2 + $0x398] sm:$0xff]
    %v288 = vld [vmem:[#allocation2 + $0x3a0] sm:$0xff]
    %v289 = vld [vmem:[#allocation2 + $0x3a8] sm:$0xff]
    %v290 = vld [vmem:[#allocation2 + $0x3b0] sm:$0xff]
    %v291 = vld [vmem:[#allocation2 + $0x3b8] sm:$0xff]
    %v292 = vld [vmem:[#allocation2 + $0x3c0] sm:$0xff]
    %v293 = vld [vmem:[#allocation2 + $0x3c8] sm:$0xff]
    %v294 = vld [vmem:[#allocation2 + $0x3d0] sm:$0xff]
    %v295 = vld [vmem:[#allocation2 + $0x3d8] sm:$0xff]
    %v296 = vld [vmem:[#allocation2 + $0x3e0] sm:$0xff]
    %v297 = vld [vmem:[#allocation2 + $0x3e8] sm:$0xff]
    %v298 = vld [vmem:[#allocation2 + $0x3f0] sm:$0xff]
    %v299 = vld [vmem:[#allocation2 + $0x3f8] sm:$0xff]
    %v300 = vld [vmem:[#allocation2 + $0x400] sm:$0xff]
    %v301 = vld [vmem:[#allocation2 + $0x408] sm:$0xff]
    %v302 = vld [vmem:[#allocation2 + $0x410] sm:$0xff]
    %v303 = vld [vmem:[#allocation2 + $0x418] sm:$0xff]
    %v304 = vld [vmem:[#allocation2 + $0x420] sm:$0xff]
    %v305 = vld [vmem:[#allocation2 + $0x428] sm:$0xff]
    %v306 = vld [vmem:[#allocation2 + $0x430] sm:$0xff]
    %v307 = vld [vmem:[#allocation2 + $0x438] sm:$0xff]
    %v308 = vld [vmem:[#allocation2 + $0x440] sm:$0xff]
    %v309 = vld [vmem:[#allocation2 + $0x448] sm:$0xff]
    %v310 = vld [vmem:[#allocation2 + $0x450] sm:$0xff]
    %v311 = vld [vmem:[#allocation2 + $0x458] sm:$0xff]
    %v312 = vld [vmem:[#allocation2 + $0x460] sm:$0xff]
    %v313 = vld [vmem:[#allocation2 + $0x468] sm:$0xff]
    %v314 = vld [vmem:[#allocation2 + $0x470] sm:$0xff]
    %v315 = vld [vmem:[#allocation2 + $0x478] sm:$0xff]
    %v316 = vld [vmem:[#allocation2 + $0x480] sm:$0xff]
    %v317 = vld [vmem:[#allocation2 + $0x488] sm:$0xff]
    %v318 = vld [vmem:[#allocation2 + $0x490] sm:$0xff]
    %v319 = vld [vmem:[#allocation2 + $0x498] sm:$0xff]
    %v320 = vld [vmem:[#allocation2 + $0x4a0] sm:$0xff]
    %v321 = vld [vmem:[#allocation2 + $0x4a8] sm:$0xff]
    %v322 = vld [vmem:[#allocation2 + $0x4b0] sm:$0xff]
    %v323 = vld [vmem:[#allocation2 + $0x4b8] sm:$0xff]
    %v324 = vld [vmem:[#allocation2 + $0x4c0] sm:$0xff]
    %v325 = vld [vmem:[#allocation2 + $0x4c8] sm:$0xff]
    %v326 = vld [vmem:[#allocation2 + $0x4d0] sm:$0xff]
    %v327 = vld [vmem:[#allocation2 + $0x4d8] sm:$0xff]
    %v328 = vld [vmem:[#allocation2 + $0x4e0] sm:$0xff]
    %v329 = vld [vmem:[#allocation2 + $0x4e8] sm:$0xff]
    %v330 = vld [vmem:[#allocation2 + $0x4f0] sm:$0xff]
    %v331 = vld [vmem:[#allocation2 + $0x4f8] sm:$0xff]
    %v332 = vld [vmem:[#allocation2 + $0x500] sm:$0xff]
    %v333 = vld [vmem:[#allocation2 + $0x508] sm:$0xff]
    %v334 = vld [vmem:[#allocation2 + $0x510] sm:$0xff]
    %v335 = vld [vmem:[#allocation2 + $0x518] sm:$0xff]
    %v336 = vld [vmem:[#allocation2 + $0x520] sm:$0xff]
    %v337 = vld [vmem:[#allocation2 + $0x528] sm:$0xff]
    %v338 = vld [vmem:[#allocation2 + $0x530] sm:$0xff]
    %v339 = vld [vmem:[#allocation2 + $0x538] sm:$0xff]
    %v340 = vld [vmem:[#allocation2 + $0x540] sm:$0xff]
    %v341 = vld [vmem:[#allocation2 + $0x548] sm:$0xff]
    %v342 = vld [vmem:[#allocation2 + $0x550] sm:$0xff]
    %v343 = vld [vmem:[#allocation2 + $0x558] sm:$0xff]
    %v344 = vld [vmem:[#allocation2 + $0x560] sm:$0xff]
    %v345 = vld [vmem:[#allocation2 + $0x568] sm:$0xff]
    %v346 = vld [vmem:[#allocation2 + $0x570] sm:$0xff]
    %v347 = vld [vmem:[#allocation2 + $0x578] sm:$0xff]
    %v348 = vld [vmem:[#allocation2 + $0x580] sm:$0xff]
    %v349 = vld [vmem:[#allocation2 + $0x588] sm:$0xff]
    %v350 = vld [vmem:[#allocation2 + $0x590] sm:$0xff]
    %v351 = vld [vmem:[#allocation2 + $0x598] sm:$0xff]
    %v352 = vld [vmem:[#allocation2 + $0x5a0] sm:$0xff]
    %v353 = vld [vmem:[#allocation2 + $0x5a8] sm:$0xff]
    %v354 = vld [vmem:[#allocation2 + $0x5b0] sm:$0xff]
    %v355 = vld [vmem:[#allocation2 + $0x5b8] sm:$0xff]
    %v356 = vld [vmem:[#allocation2 + $0x5c0] sm:$0xff]
    %v357 = vld [vmem:[#allocation2 + $0x5c8] sm:$0xff]
    %v358 = vld [vmem:[#allocation2 + $0x5d0] sm:$0xff]
    %v359 = vld [vmem:[#allocation2 + $0x5d8] sm:$0xff]
    %v360 = vld [vmem:[#allocation2 + $0x5e0] sm:$0xff]
    %v361 = vld [vmem:[#allocation2 + $0x5e8] sm:$0xff]
    %v362 = vld [vmem:[#allocation2 + $0x5f0] sm:$0xff]
    %v363 = vld [vmem:[#allocation2 + $0x5f8] sm:$0xff]
    %v364 = vld [vmem:[#allocation2 + $0x600] sm:$0xff]
    %v365 = vld [vmem:[#allocation2 + $0x608] sm:$0xff]
    %v366 = vld [vmem:[#allocation2 + $0x610] sm:$0xff]
    %v367 = vld [vmem:[#allocation2 + $0x618] sm:$0xff]
    %v368 = vld [vmem:[#allocation2 + $0x620] sm:$0xff]
    %v369 = vld [vmem:[#allocation2 + $0x628] sm:$0xff]
    %v370 = vld [vmem:[#allocation2 + $0x630] sm:$0xff]
    %v371 = vld [vmem:[#allocation2 + $0x638] sm:$0xff]
    %v372 = vld [vmem:[#allocation2 + $0x640] sm:$0xff]
    %v373 = vld [vmem:[#allocation2 + $0x648] sm:$0xff]
    %v374 = vld [vmem:[#allocation2 + $0x650] sm:$0xff]
    %v375 = vld [vmem:[#allocation2 + $0x658] sm:$0xff]
    %v376 = vld [vmem:[#allocation2 + $0x660] sm:$0xff]
    %v377 = vld [vmem:[#allocation2 + $0x668] sm:$0xff]
    %v378 = vld [vmem:[#allocation2 + $0x670] sm:$0xff]
    %v379 = vld [vmem:[#allocation2 + $0x678] sm:$0xff]
    %v380 = vld [vmem:[#allocation2 + $0x680] sm:$0xff]
    %v381 = vld [vmem:[#allocation2 + $0x688] sm:$0xff]
    %v382 = vld [vmem:[#allocation2 + $0x690] sm:$0xff]
    %v383 = vld [vmem:[#allocation2 + $0x698] sm:$0xff]
    %v384 = vld [vmem:[#allocation2 + $0x6a0] sm:$0xff]
    %v385 = vld [vmem:[#allocation2 + $0x6a8] sm:$0xff]
    %v386 = vld [vmem:[#allocation2 + $0x6b0] sm:$0xff]
    %v387 = vld [vmem:[#allocation2 + $0x6b8] sm:$0xff]
    %v388 = vld [vmem:[#allocation2 + $0x6c0] sm:$0xff]
    %v389 = vld [vmem:[#allocation2 + $0x6c8] sm:$0xff]
    %v390 = vld [vmem:[#allocation2 + $0x6d0] sm:$0xff]
    %v391 = vld [vmem:[#allocation2 + $0x6d8] sm:$0xff]
    %v392 = vld [vmem:[#allocation2 + $0x6e0] sm:$0xff]
    %v393 = vld [vmem:[#allocation2 + $0x6e8] sm:$0xff]
    %v394 = vld [vmem:[#allocation2 + $0x6f0] sm:$0xff]
    %v395 = vld [vmem:[#allocation2 + $0x6f8] sm:$0xff]
    %v396 = vld [vmem:[%s3] sm:$0xf]
    %v398 = vlaneseq
    %v399 = vshrl.u32 %v398, 7
    %v400 = vsub.s32 0, %v399
    %v401 = vrot.slane %v396, %v400
    %v402 = vlaneseq
    %v403 = vshrl.u32 %v402, 7
    %v404 = vsub.s32 1, %v403
    %v405 = vrot.slane %v396, %v404
    %v406 = vlaneseq
    %v407 = vshrl.u32 %v406, 7
    %v408 = vsub.s32 2, %v407
    %v409 = vrot.slane %v396, %v408
    %v410 = vlaneseq
    %v411 = vshrl.u32 %v410, 7
    %v412 = vsub.s32 3, %v411
    %v413 = vrot.slane %v396, %v412
    %v642 = vunpack.c.l.b16 %v172
    %v643 = vunpack.c.h.b16 %v172
    %v644 = vunpack.c.l.b16 %v173
    %v645 = vunpack.c.h.b16 %v173
    %v646 = vunpack.c.l.b16 %v174
    %v647 = vunpack.c.h.b16 %v174
    %v648 = vunpack.c.l.b16 %v175
    %v649 = vunpack.c.h.b16 %v175
    %v650 = vunpack.c.l.b16 %v176
    %v651 = vunpack.c.h.b16 %v176
    %v652 = vunpack.c.l.b16 %v177
    %v653 = vunpack.c.h.b16 %v177
    %v654 = vunpack.c.l.b16 %v178
    %v655 = vunpack.c.h.b16 %v178
    %v656 = vunpack.c.l.b16 %v179
    %v657 = vunpack.c.h.b16 %v179
    %v658 = vunpack.c.l.b16 %v180
    %v659 = vunpack.c.h.b16 %v180
    %v660 = vunpack.c.l.b16 %v181
    %v661 = vunpack.c.h.b16 %v181
    %v662 = vunpack.c.l.b16 %v182
    %v663 = vunpack.c.h.b16 %v182
    %v664 = vunpack.c.l.b16 %v183
    %v665 = vunpack.c.h.b16 %v183
    %v666 = vunpack.c.l.b16 %v184
    %v667 = vunpack.c.h.b16 %v184
    %v668 = vunpack.c.l.b16 %v185
    %v669 = vunpack.c.h.b16 %v185
    %v670 = vunpack.c.l.b16 %v186
    %v671 = vunpack.c.h.b16 %v186
    %v672 = vunpack.c.l.b16 %v187
    %v673 = vunpack.c.h.b16 %v187
    %v674 = vunpack.c.l.b16 %v188
    %v675 = vunpack.c.h.b16 %v188
    %v676 = vunpack.c.l.b16 %v189
    %v677 = vunpack.c.h.b16 %v189
    %v678 = vunpack.c.l.b16 %v190
    %v679 = vunpack.c.h.b16 %v190
    %v680 = vunpack.c.l.b16 %v191
    %v681 = vunpack.c.h.b16 %v191
    %v682 = vunpack.c.l.b16 %v192
    %v683 = vunpack.c.h.b16 %v192
    %v684 = vunpack.c.l.b16 %v193
    %v685 = vunpack.c.h.b16 %v193
    %v686 = vunpack.c.l.b16 %v194
    %v687 = vunpack.c.h.b16 %v194
    %v688 = vunpack.c.l.b16 %v195
    %v689 = vunpack.c.h.b16 %v195
    %v690 = vunpack.c.l.b16 %v196
    %v691 = vunpack.c.h.b16 %v196
    %v692 = vunpack.c.l.b16 %v197
    %v693 = vunpack.c.h.b16 %v197
    %v694 = vunpack.c.l.b16 %v198
    %v695 = vunpack.c.h.b16 %v198
    %v696 = vunpack.c.l.b16 %v199
    %v697 = vunpack.c.h.b16 %v199
    %v698 = vunpack.c.l.b16 %v200
    %v699 = vunpack.c.h.b16 %v200
    %v700 = vunpack.c.l.b16 %v201
    %v701 = vunpack.c.h.b16 %v201
    %v702 = vunpack.c.l.b16 %v202
    %v703 = vunpack.c.h.b16 %v202
    %v704 = vunpack.c.l.b16 %v203
    %v705 = vunpack.c.h.b16 %v203
    %v706 = vunpack.c.l.b16 %v204
    %v707 = vunpack.c.h.b16 %v204
    %v708 = vunpack.c.l.b16 %v205
    %v709 = vunpack.c.h.b16 %v205
    %v710 = vunpack.c.l.b16 %v206
    %v711 = vunpack.c.h.b16 %v206
    %v712 = vunpack.c.l.b16 %v207
    %v713 = vunpack.c.h.b16 %v207
    %v714 = vunpack.c.l.b16 %v208
    %v715 = vunpack.c.h.b16 %v208
    %v716 = vunpack.c.l.b16 %v209
    %v717 = vunpack.c.h.b16 %v209
    %v718 = vunpack.c.l.b16 %v210
    %v719 = vunpack.c.h.b16 %v210
    %v720 = vunpack.c.l.b16 %v211
    %v721 = vunpack.c.h.b16 %v211
    %v722 = vunpack.c.l.b16 %v212
    %v723 = vunpack.c.h.b16 %v212
    %v724 = vunpack.c.l.b16 %v213
    %v725 = vunpack.c.h.b16 %v213
    %v726 = vunpack.c.l.b16 %v214
    %v727 = vunpack.c.h.b16 %v214
    %v728 = vunpack.c.l.b16 %v215
    %v729 = vunpack.c.h.b16 %v215
    %v730 = vunpack.c.l.b16 %v216
    %v731 = vunpack.c.h.b16 %v216
    %v732 = vunpack.c.l.b16 %v217
    %v733 = vunpack.c.h.b16 %v217
    %v734 = vunpack.c.l.b16 %v218
    %v735 = vunpack.c.h.b16 %v218
    %v736 = vunpack.c.l.b16 %v219
    %v737 = vunpack.c.h.b16 %v219
    %v738 = vunpack.c.l.b16 %v220
    %v739 = vunpack.c.h.b16 %v220
    %v740 = vunpack.c.l.b16 %v221
    %v741 = vunpack.c.h.b16 %v221
    %v742 = vunpack.c.l.b16 %v222
    %v743 = vunpack.c.h.b16 %v222
    %v744 = vunpack.c.l.b16 %v223
    %v745 = vunpack.c.h.b16 %v223
    %v746 = vunpack.c.l.b16 %v224
    %v747 = vunpack.c.h.b16 %v224
    %v748 = vunpack.c.l.b16 %v225
    %v749 = vunpack.c.h.b16 %v225
    %v750 = vunpack.c.l.b16 %v226
    %v751 = vunpack.c.h.b16 %v226
    %v752 = vunpack.c.l.b16 %v227
    %v753 = vunpack.c.h.b16 %v227
    %v754 = vunpack.c.l.b16 %v228
    %v755 = vunpack.c.h.b16 %v228
    %v756 = vunpack.c.l.b16 %v229
    %v757 = vunpack.c.h.b16 %v229
    %v758 = vunpack.c.l.b16 %v230
    %v759 = vunpack.c.h.b16 %v230
    %v760 = vunpack.c.l.b16 %v231
    %v761 = vunpack.c.h.b16 %v231
    %v762 = vunpack.c.l.b16 %v232
    %v763 = vunpack.c.h.b16 %v232
    %v764 = vunpack.c.l.b16 %v233
    %v765 = vunpack.c.h.b16 %v233
    %v766 = vunpack.c.l.b16 %v234
    %v767 = vunpack.c.h.b16 %v234
    %v768 = vunpack.c.l.b16 %v235
    %v769 = vunpack.c.h.b16 %v235
    %v770 = vunpack.c.l.b16 %v236
    %v771 = vunpack.c.h.b16 %v236
    %v772 = vunpack.c.l.b16 %v237
    %v773 = vunpack.c.h.b16 %v237
    %v774 = vunpack.c.l.b16 %v238
    %v775 = vunpack.c.h.b16 %v238
    %v776 = vunpack.c.l.b16 %v239
    %v777 = vunpack.c.h.b16 %v239
    %v778 = vunpack.c.l.b16 %v240
    %v779 = vunpack.c.h.b16 %v240
    %v780 = vunpack.c.l.b16 %v241
    %v781 = vunpack.c.h.b16 %v241
    %v782 = vunpack.c.l.b16 %v242
    %v783 = vunpack.c.h.b16 %v242
    %v784 = vunpack.c.l.b16 %v243
    %v785 = vunpack.c.h.b16 %v243
    %v786 = vunpack.c.l.b16 %v244
    %v787 = vunpack.c.h.b16 %v244
    %v788 = vunpack.c.l.b16 %v245
    %v789 = vunpack.c.h.b16 %v245
    %v790 = vunpack.c.l.b16 %v246
    %v791 = vunpack.c.h.b16 %v246
    %v792 = vunpack.c.l.b16 %v247
    %v793 = vunpack.c.h.b16 %v247
    %v794 = vunpack.c.l.b16 %v248
    %v795 = vunpack.c.h.b16 %v248
    %v796 = vunpack.c.l.b16 %v249
    %v797 = vunpack.c.h.b16 %v249
    %v798 = vunpack.c.l.b16 %v250
    %v799 = vunpack.c.h.b16 %v250
    %v800 = vunpack.c.l.b16 %v251
    %v801 = vunpack.c.h.b16 %v251
    %v802 = vunpack.c.l.b16 %v252
    %v803 = vunpack.c.h.b16 %v252
    %v804 = vunpack.c.l.b16 %v253
    %v805 = vunpack.c.h.b16 %v253
    %v806 = vunpack.c.l.b16 %v254
    %v807 = vunpack.c.h.b16 %v254
    %v808 = vunpack.c.l.b16 %v255
    %v809 = vunpack.c.h.b16 %v255
    %v810 = vunpack.c.l.b16 %v256
    %v811 = vunpack.c.h.b16 %v256
    %v812 = vunpack.c.l.b16 %v257
    %v813 = vunpack.c.h.b16 %v257
    %v814 = vunpack.c.l.b16 %v258
    %v815 = vunpack.c.h.b16 %v258
    %v816 = vunpack.c.l.b16 %v259
    %v817 = vunpack.c.h.b16 %v259
    %v818 = vunpack.c.l.b16 %v260
    %v819 = vunpack.c.h.b16 %v260
    %v820 = vunpack.c.l.b16 %v261
    %v821 = vunpack.c.h.b16 %v261
    %v822 = vunpack.c.l.b16 %v262
    %v823 = vunpack.c.h.b16 %v262
    %v824 = vunpack.c.l.b16 %v263
    %v825 = vunpack.c.h.b16 %v263
    %v826 = vunpack.c.l.b16 %v264
    %v827 = vunpack.c.h.b16 %v264
    %v828 = vunpack.c.l.b16 %v265
    %v829 = vunpack.c.h.b16 %v265
    %v830 = vunpack.c.l.b16 %v266
    %v831 = vunpack.c.h.b16 %v266
    %v832 = vunpack.c.l.b16 %v267
    %v833 = vunpack.c.h.b16 %v267
    %v834 = vunpack.c.l.b16 %v268
    %v835 = vunpack.c.h.b16 %v268
    %v836 = vunpack.c.l.b16 %v269
    %v837 = vunpack.c.h.b16 %v269
    %v838 = vunpack.c.l.b16 %v270
    %v839 = vunpack.c.h.b16 %v270
    %v840 = vunpack.c.l.b16 %v271
    %v841 = vunpack.c.h.b16 %v271
    %v842 = vunpack.c.l.b16 %v272
    %v843 = vunpack.c.h.b16 %v272
    %v844 = vunpack.c.l.b16 %v273
    %v845 = vunpack.c.h.b16 %v273
    %v846 = vunpack.c.l.b16 %v274
    %v847 = vunpack.c.h.b16 %v274
    %v848 = vunpack.c.l.b16 %v275
    %v849 = vunpack.c.h.b16 %v275
    %v850 = vunpack.c.l.b16 %v276
    %v851 = vunpack.c.h.b16 %v276
    %v852 = vunpack.c.l.b16 %v277
    %v853 = vunpack.c.h.b16 %v277
    %v854 = vunpack.c.l.b16 %v278
    %v855 = vunpack.c.h.b16 %v278
    %v856 = vunpack.c.l.b16 %v279
    %v857 = vunpack.c.h.b16 %v279
    %v858 = vunpack.c.l.b16 %v280
    %v859 = vunpack.c.h.b16 %v280
    %v860 = vunpack.c.l.b16 %v281
    %v861 = vunpack.c.h.b16 %v281
    %v862 = vunpack.c.l.b16 %v282
    %v863 = vunpack.c.h.b16 %v282
    %v864 = vunpack.c.l.b16 %v283
    %v865 = vunpack.c.h.b16 %v283
    %v866 = vunpack.c.l.b16 %v284
    %v867 = vunpack.c.h.b16 %v284
    %v868 = vunpack.c.l.b16 %v285
    %v869 = vunpack.c.h.b16 %v285
    %v870 = vunpack.c.l.b16 %v286
    %v871 = vunpack.c.h.b16 %v286
    %v872 = vunpack.c.l.b16 %v287
    %v873 = vunpack.c.h.b16 %v287
    %v874 = vunpack.c.l.b16 %v288
    %v875 = vunpack.c.h.b16 %v288
    %v876 = vunpack.c.l.b16 %v289
    %v877 = vunpack.c.h.b16 %v289
    %v878 = vunpack.c.l.b16 %v290
    %v879 = vunpack.c.h.b16 %v290
    %v880 = vunpack.c.l.b16 %v291
    %v881 = vunpack.c.h.b16 %v291
    %v882 = vunpack.c.l.b16 %v292
    %v883 = vunpack.c.h.b16 %v292
    %v884 = vunpack.c.l.b16 %v293
    %v885 = vunpack.c.h.b16 %v293
    %v886 = vunpack.c.l.b16 %v294
    %v887 = vunpack.c.h.b16 %v294
    %v888 = vunpack.c.l.b16 %v295
    %v889 = vunpack.c.h.b16 %v295
    %v890 = vunpack.c.l.b16 %v296
    %v891 = vunpack.c.h.b16 %v296
    %v892 = vunpack.c.l.b16 %v297
    %v893 = vunpack.c.h.b16 %v297
    %v894 = vunpack.c.l.b16 %v298
    %v895 = vunpack.c.h.b16 %v298
    %v896 = vunpack.c.l.b16 %v299
    %v897 = vunpack.c.h.b16 %v299
    %v898 = vunpack.c.l.b16 %v300
    %v899 = vunpack.c.h.b16 %v300
    %v900 = vunpack.c.l.b16 %v301
    %v901 = vunpack.c.h.b16 %v301
    %v902 = vunpack.c.l.b16 %v302
    %v903 = vunpack.c.h.b16 %v302
    %v904 = vunpack.c.l.b16 %v303
    %v905 = vunpack.c.h.b16 %v303
    %v906 = vunpack.c.l.b16 %v304
    %v907 = vunpack.c.h.b16 %v304
    %v908 = vunpack.c.l.b16 %v305
    %v909 = vunpack.c.h.b16 %v305
    %v910 = vunpack.c.l.b16 %v306
    %v911 = vunpack.c.h.b16 %v306
    %v912 = vunpack.c.l.b16 %v307
    %v913 = vunpack.c.h.b16 %v307
    %v914 = vunpack.c.l.b16 %v308
    %v915 = vunpack.c.h.b16 %v308
    %v916 = vunpack.c.l.b16 %v309
    %v917 = vunpack.c.h.b16 %v309
    %v918 = vunpack.c.l.b16 %v310
    %v919 = vunpack.c.h.b16 %v310
    %v920 = vunpack.c.l.b16 %v311
    %v921 = vunpack.c.h.b16 %v311
    %v922 = vunpack.c.l.b16 %v312
    %v923 = vunpack.c.h.b16 %v312
    %v924 = vunpack.c.l.b16 %v313
    %v925 = vunpack.c.h.b16 %v313
    %v926 = vunpack.c.l.b16 %v314
    %v927 = vunpack.c.h.b16 %v314
    %v928 = vunpack.c.l.b16 %v315
    %v929 = vunpack.c.h.b16 %v315
    %v930 = vunpack.c.l.b16 %v316
    %v931 = vunpack.c.h.b16 %v316
    %v932 = vunpack.c.l.b16 %v317
    %v933 = vunpack.c.h.b16 %v317
    %v934 = vunpack.c.l.b16 %v318
    %v935 = vunpack.c.h.b16 %v318
    %v936 = vunpack.c.l.b16 %v319
    %v937 = vunpack.c.h.b16 %v319
    %v938 = vunpack.c.l.b16 %v320
    %v939 = vunpack.c.h.b16 %v320
    %v940 = vunpack.c.l.b16 %v321
    %v941 = vunpack.c.h.b16 %v321
    %v942 = vunpack.c.l.b16 %v322
    %v943 = vunpack.c.h.b16 %v322
    %v944 = vunpack.c.l.b16 %v323
    %v945 = vunpack.c.h.b16 %v323
    %v946 = vunpack.c.l.b16 %v324
    %v947 = vunpack.c.h.b16 %v324
    %v948 = vunpack.c.l.b16 %v325
    %v949 = vunpack.c.h.b16 %v325
    %v950 = vunpack.c.l.b16 %v326
    %v951 = vunpack.c.h.b16 %v326
    %v952 = vunpack.c.l.b16 %v327
    %v953 = vunpack.c.h.b16 %v327
    %v954 = vunpack.c.l.b16 %v328
    %v955 = vunpack.c.h.b16 %v328
    %v956 = vunpack.c.l.b16 %v329
    %v957 = vunpack.c.h.b16 %v329
    %v958 = vunpack.c.l.b16 %v330
    %v959 = vunpack.c.h.b16 %v330
    %v960 = vunpack.c.l.b16 %v331
    %v961 = vunpack.c.h.b16 %v331
    %v962 = vunpack.c.l.b16 %v332
    %v963 = vunpack.c.h.b16 %v332
    %v964 = vunpack.c.l.b16 %v333
    %v965 = vunpack.c.h.b16 %v333
    %v966 = vunpack.c.l.b16 %v334
    %v967 = vunpack.c.h.b16 %v334
    %v968 = vunpack.c.l.b16 %v335
    %v969 = vunpack.c.h.b16 %v335
    %v970 = vunpack.c.l.b16 %v336
    %v971 = vunpack.c.h.b16 %v336
    %v972 = vunpack.c.l.b16 %v337
    %v973 = vunpack.c.h.b16 %v337
    %v974 = vunpack.c.l.b16 %v338
    %v975 = vunpack.c.h.b16 %v338
    %v976 = vunpack.c.l.b16 %v339
    %v977 = vunpack.c.h.b16 %v339
    %v978 = vunpack.c.l.b16 %v340
    %v979 = vunpack.c.h.b16 %v340
    %v980 = vunpack.c.l.b16 %v341
    %v981 = vunpack.c.h.b16 %v341
    %v982 = vunpack.c.l.b16 %v342
    %v983 = vunpack.c.h.b16 %v342
    %v984 = vunpack.c.l.b16 %v343
    %v985 = vunpack.c.h.b16 %v343
    %v986 = vunpack.c.l.b16 %v344
    %v987 = vunpack.c.h.b16 %v344
    %v988 = vunpack.c.l.b16 %v345
    %v989 = vunpack.c.h.b16 %v345
    %v990 = vunpack.c.l.b16 %v346
    %v991 = vunpack.c.h.b16 %v346
    %v992 = vunpack.c.l.b16 %v347
    %v993 = vunpack.c.h.b16 %v347
    %v994 = vunpack.c.l.b16 %v348
    %v995 = vunpack.c.h.b16 %v348
    %v996 = vunpack.c.l.b16 %v349
    %v997 = vunpack.c.h.b16 %v349
    %v998 = vunpack.c.l.b16 %v350
    %v999 = vunpack.c.h.b16 %v350
    %v1000 = vunpack.c.l.b16 %v351
    %v1001 = vunpack.c.h.b16 %v351
    %v1002 = vunpack.c.l.b16 %v352
    %v1003 = vunpack.c.h.b16 %v352
    %v1004 = vunpack.c.l.b16 %v353
    %v1005 = vunpack.c.h.b16 %v353
    %v1006 = vunpack.c.l.b16 %v354
    %v1007 = vunpack.c.h.b16 %v354
    %v1008 = vunpack.c.l.b16 %v355
    %v1009 = vunpack.c.h.b16 %v355
    %v1010 = vunpack.c.l.b16 %v356
    %v1011 = vunpack.c.h.b16 %v356
    %v1012 = vunpack.c.l.b16 %v357
    %v1013 = vunpack.c.h.b16 %v357
    %v1014 = vunpack.c.l.b16 %v358
    %v1015 = vunpack.c.h.b16 %v358
    %v1016 = vunpack.c.l.b16 %v359
    %v1017 = vunpack.c.h.b16 %v359
    %v1018 = vunpack.c.l.b16 %v360
    %v1019 = vunpack.c.h.b16 %v360
    %v1020 = vunpack.c.l.b16 %v361
    %v1021 = vunpack.c.h.b16 %v361
    %v1022 = vunpack.c.l.b16 %v362
    %v1023 = vunpack.c.h.b16 %v362
    %v1024 = vunpack.c.l.b16 %v363
    %v1025 = vunpack.c.h.b16 %v363
    %v1026 = vunpack.c.l.b16 %v364
    %v1027 = vunpack.c.h.b16 %v364
    %v1028 = vunpack.c.l.b16 %v365
    %v1029 = vunpack.c.h.b16 %v365
    %v1030 = vunpack.c.l.b16 %v366
    %v1031 = vunpack.c.h.b16 %v366
    %v1032 = vunpack.c.l.b16 %v367
    %v1033 = vunpack.c.h.b16 %v367
    %v1034 = vunpack.c.l.b16 %v368
    %v1035 = vunpack.c.h.b16 %v368
    %v1036 = vunpack.c.l.b16 %v369
    %v1037 = vunpack.c.h.b16 %v369
    %v1038 = vunpack.c.l.b16 %v370
    %v1039 = vunpack.c.h.b16 %v370
    %v1040 = vunpack.c.l.b16 %v371
    %v1041 = vunpack.c.h.b16 %v371
    %v1042 = vunpack.c.l.b16 %v372
    %v1043 = vunpack.c.h.b16 %v372
    %v1044 = vunpack.c.l.b16 %v373
    %v1045 = vunpack.c.h.b16 %v373
    %v1046 = vunpack.c.l.b16 %v374
    %v1047 = vunpack.c.h.b16 %v374
    %v1048 = vunpack.c.l.b16 %v375
    %v1049 = vunpack.c.h.b16 %v375
    %v1050 = vunpack.c.l.b16 %v376
    %v1051 = vunpack.c.h.b16 %v376
    %v1052 = vunpack.c.l.b16 %v377
    %v1053 = vunpack.c.h.b16 %v377
    %v1054 = vunpack.c.l.b16 %v378
    %v1055 = vunpack.c.h.b16 %v378
    %v1056 = vunpack.c.l.b16 %v379
    %v1057 = vunpack.c.h.b16 %v379
    %v1058 = vunpack.c.l.b16 %v380
    %v1059 = vunpack.c.h.b16 %v380
    %v1060 = vunpack.c.l.b16 %v381
    %v1061 = vunpack.c.h.b16 %v381
    %v1062 = vunpack.c.l.b16 %v382
    %v1063 = vunpack.c.h.b16 %v382
    %v1064 = vunpack.c.l.b16 %v383
    %v1065 = vunpack.c.h.b16 %v383
    %v1066 = vunpack.c.l.b16 %v384
    %v1067 = vunpack.c.h.b16 %v384
    %v1068 = vunpack.c.l.b16 %v385
    %v1069 = vunpack.c.h.b16 %v385
    %v1070 = vunpack.c.l.b16 %v386
    %v1071 = vunpack.c.h.b16 %v386
    %v1072 = vunpack.c.l.b16 %v387
    %v1073 = vunpack.c.h.b16 %v387
    %v1074 = vunpack.c.l.b16 %v388
    %v1075 = vunpack.c.h.b16 %v388
    %v1076 = vunpack.c.l.b16 %v389
    %v1077 = vunpack.c.h.b16 %v389
    %v1078 = vunpack.c.l.b16 %v390
    %v1079 = vunpack.c.h.b16 %v390
    %v1080 = vunpack.c.l.b16 %v391
    %v1081 = vunpack.c.h.b16 %v391
    %v1082 = vunpack.c.l.b16 %v392
    %v1083 = vunpack.c.h.b16 %v392
    %v1084 = vunpack.c.l.b16 %v393
    %v1085 = vunpack.c.h.b16 %v393
    %v1086 = vunpack.c.l.b16 %v394
    %v1087 = vunpack.c.h.b16 %v394
    %v1088 = vunpack.c.l.b16 %v395
    %v1089 = vunpack.c.h.b16 %v395
    %v1090 = vpack.c.b16 %v646, %v642
    %v1091 = vpack.c.b16 %v647, %v643
    %v1092 = vpack.c.b16 %v648, %v644
    %v1093 = vpack.c.b16 %v649, %v645
    %v1094 = vpack.c.b16 %v654, %v650
    %v1095 = vpack.c.b16 %v655, %v651
    %v1096 = vpack.c.b16 %v656, %v652
    %v1097 = vpack.c.b16 %v657, %v653
    %v1098 = vpack.c.b16 %v662, %v658
    %v1099 = vpack.c.b16 %v663, %v659
    %v1100 = vpack.c.b16 %v664, %v660
    %v1101 = vpack.c.b16 %v665, %v661
    %v1102 = vpack.c.b16 %v670, %v666
    %v1103 = vpack.c.b16 %v671, %v667
    %v1104 = vpack.c.b16 %v672, %v668
    %v1105 = vpack.c.b16 %v673, %v669
    %v1106 = vpack.c.b16 %v678, %v674
    %v1107 = vpack.c.b16 %v679, %v675
    %v1108 = vpack.c.b16 %v680, %v676
    %v1109 = vpack.c.b16 %v681, %v677
    %v1110 = vpack.c.b16 %v686, %v682
    %v1111 = vpack.c.b16 %v687, %v683
    %v1112 = vpack.c.b16 %v688, %v684
    %v1113 = vpack.c.b16 %v689, %v685
    %v1114 = vpack.c.b16 %v694, %v690
    %v1115 = vpack.c.b16 %v695, %v691
    %v1116 = vpack.c.b16 %v696, %v692
    %v1117 = vpack.c.b16 %v697, %v693
    %v1118 = vpack.c.b16 %v702, %v698
    %v1119 = vpack.c.b16 %v703, %v699
    %v1120 = vpack.c.b16 %v704, %v700
    %v1121 = vpack.c.b16 %v705, %v701
    %v1122 = vpack.c.b16 %v710, %v706
    %v1123 = vpack.c.b16 %v711, %v707
    %v1124 = vpack.c.b16 %v712, %v708
    %v1125 = vpack.c.b16 %v713, %v709
    %v1126 = vpack.c.b16 %v718, %v714
    %v1127 = vpack.c.b16 %v719, %v715
    %v1128 = vpack.c.b16 %v720, %v716
    %v1129 = vpack.c.b16 %v721, %v717
    %v1130 = vpack.c.b16 %v726, %v722
    %v1131 = vpack.c.b16 %v727, %v723
    %v1132 = vpack.c.b16 %v728, %v724
    %v1133 = vpack.c.b16 %v729, %v725
    %v1134 = vpack.c.b16 %v734, %v730
    %v1135 = vpack.c.b16 %v735, %v731
    %v1136 = vpack.c.b16 %v736, %v732
    %v1137 = vpack.c.b16 %v737, %v733
    %v1138 = vpack.c.b16 %v742, %v738
    %v1139 = vpack.c.b16 %v743, %v739
    %v1140 = vpack.c.b16 %v744, %v740
    %v1141 = vpack.c.b16 %v745, %v741
    %v1142 = vpack.c.b16 %v750, %v746
    %v1143 = vpack.c.b16 %v751, %v747
    %v1144 = vpack.c.b16 %v752, %v748
    %v1145 = vpack.c.b16 %v753, %v749
    %v1146 = vpack.c.b16 %v758, %v754
    %v1147 = vpack.c.b16 %v759, %v755
    %v1148 = vpack.c.b16 %v760, %v756
    %v1149 = vpack.c.b16 %v761, %v757
    %v1150 = vpack.c.b16 %v766, %v762
    %v1151 = vpack.c.b16 %v767, %v763
    %v1152 = vpack.c.b16 %v768, %v764
    %v1153 = vpack.c.b16 %v769, %v765
    %v1154 = vpack.c.b16 %v774, %v770
    %v1155 = vpack.c.b16 %v775, %v771
    %v1156 = vpack.c.b16 %v776, %v772
    %v1157 = vpack.c.b16 %v777, %v773
    %v1158 = vpack.c.b16 %v782, %v778
    %v1159 = vpack.c.b16 %v783, %v779
    %v1160 = vpack.c.b16 %v784, %v780
    %v1161 = vpack.c.b16 %v785, %v781
    %v1162 = vpack.c.b16 %v790, %v786
    %v1163 = vpack.c.b16 %v791, %v787
    %v1164 = vpack.c.b16 %v792, %v788
    %v1165 = vpack.c.b16 %v793, %v789
    %v1166 = vpack.c.b16 %v798, %v794
    %v1167 = vpack.c.b16 %v799, %v795
    %v1168 = vpack.c.b16 %v800, %v796
    %v1169 = vpack.c.b16 %v801, %v797
    %v1170 = vpack.c.b16 %v806, %v802
    %v1171 = vpack.c.b16 %v807, %v803
    %v1172 = vpack.c.b16 %v808, %v804
    %v1173 = vpack.c.b16 %v809, %v805
    %v1174 = vpack.c.b16 %v814, %v810
    %v1175 = vpack.c.b16 %v815, %v811
    %v1176 = vpack.c.b16 %v816, %v812
    %v1177 = vpack.c.b16 %v817, %v813
    %v1178 = vpack.c.b16 %v822, %v818
    %v1179 = vpack.c.b16 %v823, %v819
    %v1180 = vpack.c.b16 %v824, %v820
    %v1181 = vpack.c.b16 %v825, %v821
    %v1182 = vpack.c.b16 %v830, %v826
    %v1183 = vpack.c.b16 %v831, %v827
    %v1184 = vpack.c.b16 %v832, %v828
    %v1185 = vpack.c.b16 %v833, %v829
    %v1186 = vpack.c.b16 %v838, %v834
    %v1187 = vpack.c.b16 %v839, %v835
    %v1188 = vpack.c.b16 %v840, %v836
    %v1189 = vpack.c.b16 %v841, %v837
    %v1190 = vpack.c.b16 %v846, %v842
    %v1191 = vpack.c.b16 %v847, %v843
    %v1192 = vpack.c.b16 %v848, %v844
    %v1193 = vpack.c.b16 %v849, %v845
    %v1194 = vpack.c.b16 %v854, %v850
    %v1195 = vpack.c.b16 %v855, %v851
    %v1196 = vpack.c.b16 %v856, %v852
    %v1197 = vpack.c.b16 %v857, %v853
    %v1198 = vpack.c.b16 %v862, %v858
    %v1199 = vpack.c.b16 %v863, %v859
    %v1200 = vpack.c.b16 %v864, %v860
    %v1201 = vpack.c.b16 %v865, %v861
    %v1202 = vpack.c.b16 %v870, %v866
    %v1203 = vpack.c.b16 %v871, %v867
    %v1204 = vpack.c.b16 %v872, %v868
    %v1205 = vpack.c.b16 %v873, %v869
    %v1206 = vpack.c.b16 %v878, %v874
    %v1207 = vpack.c.b16 %v879, %v875
    %v1208 = vpack.c.b16 %v880, %v876
    %v1209 = vpack.c.b16 %v881, %v877
    %v1210 = vpack.c.b16 %v886, %v882
    %v1211 = vpack.c.b16 %v887, %v883
    %v1212 = vpack.c.b16 %v888, %v884
    %v1213 = vpack.c.b16 %v889, %v885
    %v1214 = vpack.c.b16 %v894, %v890
    %v1215 = vpack.c.b16 %v895, %v891
    %v1216 = vpack.c.b16 %v896, %v892
    %v1217 = vpack.c.b16 %v897, %v893
    %v1218 = vpack.c.b16 %v902, %v898
    %v1219 = vpack.c.b16 %v903, %v899
    %v1220 = vpack.c.b16 %v904, %v900
    %v1221 = vpack.c.b16 %v905, %v901
    %v1222 = vpack.c.b16 %v910, %v906
    %v1223 = vpack.c.b16 %v911, %v907
    %v1224 = vpack.c.b16 %v912, %v908
    %v1225 = vpack.c.b16 %v913, %v909
    %v1226 = vpack.c.b16 %v918, %v914
    %v1227 = vpack.c.b16 %v919, %v915
    %v1228 = vpack.c.b16 %v920, %v916
    %v1229 = vpack.c.b16 %v921, %v917
    %v1230 = vpack.c.b16 %v926, %v922
    %v1231 = vpack.c.b16 %v927, %v923
    %v1232 = vpack.c.b16 %v928, %v924
    %v1233 = vpack.c.b16 %v929, %v925
    %v1234 = vpack.c.b16 %v934, %v930
    %v1235 = vpack.c.b16 %v935, %v931
    %v1236 = vpack.c.b16 %v936, %v932
    %v1237 = vpack.c.b16 %v937, %v933
    %v1238 = vpack.c.b16 %v942, %v938
    %v1239 = vpack.c.b16 %v943, %v939
    %v1240 = vpack.c.b16 %v944, %v940
    %v1241 = vpack.c.b16 %v945, %v941
    %v1242 = vpack.c.b16 %v950, %v946
    %v1243 = vpack.c.b16 %v951, %v947
    %v1244 = vpack.c.b16 %v952, %v948
    %v1245 = vpack.c.b16 %v953, %v949
    %v1246 = vpack.c.b16 %v958, %v954
    %v1247 = vpack.c.b16 %v959, %v955
    %v1248 = vpack.c.b16 %v960, %v956
    %v1249 = vpack.c.b16 %v961, %v957
    %v1250 = vpack.c.b16 %v966, %v962
    %v1251 = vpack.c.b16 %v967, %v963
    %v1252 = vpack.c.b16 %v968, %v964
    %v1253 = vpack.c.b16 %v969, %v965
    %v1254 = vpack.c.b16 %v974, %v970
    %v1255 = vpack.c.b16 %v975, %v971
    %v1256 = vpack.c.b16 %v976, %v972
    %v1257 = vpack.c.b16 %v977, %v973
    %v1258 = vpack.c.b16 %v982, %v978
    %v1259 = vpack.c.b16 %v983, %v979
    %v1260 = vpack.c.b16 %v984, %v980
    %v1261 = vpack.c.b16 %v985, %v981
    %v1262 = vpack.c.b16 %v990, %v986
    %v1263 = vpack.c.b16 %v991, %v987
    %v1264 = vpack.c.b16 %v992, %v988
    %v1265 = vpack.c.b16 %v993, %v989
    %v1266 = vpack.c.b16 %v998, %v994
    %v1267 = vpack.c.b16 %v999, %v995
    %v1268 = vpack.c.b16 %v1000, %v996
    %v1269 = vpack.c.b16 %v1001, %v997
    %v1270 = vpack.c.b16 %v1006, %v1002
    %v1271 = vpack.c.b16 %v1007, %v1003
    %v1272 = vpack.c.b16 %v1008, %v1004
    %v1273 = vpack.c.b16 %v1009, %v1005
    %v1274 = vpack.c.b16 %v1014, %v1010
    %v1275 = vpack.c.b16 %v1015, %v1011
    %v1276 = vpack.c.b16 %v1016, %v1012
    %v1277 = vpack.c.b16 %v1017, %v1013
    %v1278 = vpack.c.b16 %v1022, %v1018
    %v1279 = vpack.c.b16 %v1023, %v1019
    %v1280 = vpack.c.b16 %v1024, %v1020
    %v1281 = vpack.c.b16 %v1025, %v1021
    %v1282 = vpack.c.b16 %v1030, %v1026
    %v1283 = vpack.c.b16 %v1031, %v1027
    %v1284 = vpack.c.b16 %v1032, %v1028
    %v1285 = vpack.c.b16 %v1033, %v1029
    %v1286 = vpack.c.b16 %v1038, %v1034
    %v1287 = vpack.c.b16 %v1039, %v1035
    %v1288 = vpack.c.b16 %v1040, %v1036
    %v1289 = vpack.c.b16 %v1041, %v1037
    %v1290 = vpack.c.b16 %v1046, %v1042
    %v1291 = vpack.c.b16 %v1047, %v1043
    %v1292 = vpack.c.b16 %v1048, %v1044
    %v1293 = vpack.c.b16 %v1049, %v1045
    %v1294 = vpack.c.b16 %v1054, %v1050
    %v1295 = vpack.c.b16 %v1055, %v1051
    %v1296 = vpack.c.b16 %v1056, %v1052
    %v1297 = vpack.c.b16 %v1057, %v1053
    %v1298 = vpack.c.b16 %v1062, %v1058
    %v1299 = vpack.c.b16 %v1063, %v1059
    %v1300 = vpack.c.b16 %v1064, %v1060
    %v1301 = vpack.c.b16 %v1065, %v1061
    %v1302 = vpack.c.b16 %v1070, %v1066
    %v1303 = vpack.c.b16 %v1071, %v1067
    %v1304 = vpack.c.b16 %v1072, %v1068
    %v1305 = vpack.c.b16 %v1073, %v1069
    %v1306 = vpack.c.b16 %v1078, %v1074
    %v1307 = vpack.c.b16 %v1079, %v1075
    %v1308 = vpack.c.b16 %v1080, %v1076
    %v1309 = vpack.c.b16 %v1081, %v1077
    %v1310 = vpack.c.b16 %v1086, %v1082
    %v1311 = vpack.c.b16 %v1087, %v1083
    %v1312 = vpack.c.b16 %v1088, %v1084
    %v1313 = vpack.c.b16 %v1089, %v1085
    %1538 = vmatprep.subr.bf16.mxu0 %v1119
    %1539 = vmatpush1.bf16.msra.mxu0 %v1118
    %1540 = vmatprep.subr.bf16.mxu0 %v1115
    %1541 = vmatpush1.bf16.msra.mxu0 %v1114
    %1542 = vmatprep.subr.bf16.mxu0 %v1111
    %1543 = vmatpush1.bf16.msra.mxu0 %v1110
    %1544 = vmatprep.subr.bf16.mxu0 %v1107
    %1545 = vmatpush1.bf16.msra.mxu0 %v1106
    %1546 = vmatprep.subr.bf16.mxu0 %v1103
    %1547 = vmatpush1.bf16.msra.mxu0 %v1102
    %1548 = vmatprep.subr.bf16.mxu0 %v1099
    %1549 = vmatpush1.bf16.msra.mxu0 %v1098
    %1550 = vmatprep.subr.bf16.mxu0 %v1095
    %1551 = vmatpush1.bf16.msra.mxu0 %v1094
    %1552 = vmatprep.subr.bf16.mxu0 %v1091
    %1553 = vmatpush1.bf16.msra.mxu0 %v1090
    %1554 = vmatprep.subr.bf16.mxu0 %v1151
    %1555 = vmatpush2.bf16.msra.mxu0 %v1150
    %1556 = vmatprep.subr.bf16.mxu0 %v1147
    %1557 = vmatpush2.bf16.msra.mxu0 %v1146
    %1558 = vmatprep.subr.bf16.mxu0 %v1143
    %1559 = vmatpush2.bf16.msra.mxu0 %v1142
    %1560 = vmatprep.subr.bf16.mxu0 %v1139
    %1561 = vmatpush2.bf16.msra.mxu0 %v1138
    %1562 = vmatprep.subr.bf16.mxu0 %v1135
    %1563 = vmatpush2.bf16.msra.mxu0 %v1134
    %1564 = vmatprep.subr.bf16.mxu0 %v1131
    %1565 = vmatpush2.bf16.msra.mxu0 %v1130
    %1566 = vmatprep.subr.bf16.mxu0 %v1127
    %1567 = vmatpush2.bf16.msra.mxu0 %v1126
    %1568 = vmatprep.subr.bf16.mxu0 %v1123
    %1569 = vmatpush2.bf16.msra.mxu0 %v1122
    %1570 = vmatprep.mubr.bf16.mxu0 %v166
    %1571 = vmatmul.mubr.bf16.gmra.mxu0 %v165
    %v1572 = vpop.f32.mrf.mxu0
    %v1573 = vadd.f32 %v401, %v1572
    %v1574 = vpop.f32.mrf.mxu0
    %v1575 = vadd.f32 %v405, %v1574
    %v1576 = vpop.f32.mrf.mxu0
    %v1577 = vpop.f32.mrf.mxu0
    %1578 = vdwg.mxu0
    %1579 = vmatprep.subr.bf16.mxu0 %v1183
    %1580 = vmatpush1.bf16.msra.mxu0 %v1182
    %1581 = vmatprep.subr.bf16.mxu0 %v1179
    %1582 = vmatpush1.bf16.msra.mxu0 %v1178
    %1583 = vmatprep.subr.bf16.mxu0 %v1175
    %1584 = vmatpush1.bf16.msra.mxu0 %v1174
    %1585 = vmatprep.subr.bf16.mxu0 %v1171
    %1586 = vmatpush1.bf16.msra.mxu0 %v1170
    %1587 = vmatprep.subr.bf16.mxu0 %v1167
    %1588 = vmatpush1.bf16.msra.mxu0 %v1166
    %1589 = vmatprep.subr.bf16.mxu0 %v1163
    %1590 = vmatpush1.bf16.msra.mxu0 %v1162
    %1591 = vmatprep.subr.bf16.mxu0 %v1159
    %1592 = vmatpush1.bf16.msra.mxu0 %v1158
    %1593 = vmatprep.subr.bf16.mxu0 %v1155
    %1594 = vmatpush1.bf16.msra.mxu0 %v1154
    %1595 = vmatprep.subr.bf16.mxu0 %v1215
    %1596 = vmatpush2.bf16.msra.mxu0 %v1214
    %1597 = vmatprep.subr.bf16.mxu0 %v1211
    %1598 = vmatpush2.bf16.msra.mxu0 %v1210
    %1599 = vmatprep.subr.bf16.mxu0 %v1207
    %1600 = vmatpush2.bf16.msra.mxu0 %v1206
    %1601 = vmatprep.subr.bf16.mxu0 %v1203
    %1602 = vmatpush2.bf16.msra.mxu0 %v1202
    %1603 = vmatprep.subr.bf16.mxu0 %v1199
    %1604 = vmatpush2.bf16.msra.mxu0 %v1198
    %1605 = vmatprep.subr.bf16.mxu0 %v1195
    %1606 = vmatpush2.bf16.msra.mxu0 %v1194
    %1607 = vmatprep.subr.bf16.mxu0 %v1191
    %1608 = vmatpush2.bf16.msra.mxu0 %v1190
    %1609 = vmatprep.subr.bf16.mxu0 %v1187
    %1610 = vmatpush2.bf16.msra.mxu0 %v1186
    %1611 = vmatprep.mubr.bf16.mxu0 %v168
    %1612 = vmatmul.mubr.bf16.gmra.mxu0 %v167
    %v1613 = vpop.f32.mrf.mxu0
    %v1614 = vadd.f32 %v1573, %v1613
    %v1615 = vpop.f32.mrf.mxu0
    %v1616 = vadd.f32 %v1575, %v1615
    %v1617 = vpop.f32.mrf.mxu0
    %v1618 = vpop.f32.mrf.mxu0
    %1619 = vdwg.mxu0
    %1620 = vmatprep.subr.bf16.mxu0 %v1247
    %1621 = vmatpush1.bf16.msra.mxu0 %v1246
    %1622 = vmatprep.subr.bf16.mxu0 %v1243
    %1623 = vmatpush1.bf16.msra.mxu0 %v1242
    %1624 = vmatprep.subr.bf16.mxu0 %v1239
    %1625 = vmatpush1.bf16.msra.mxu0 %v1238
    %1626 = vmatprep.subr.bf16.mxu0 %v1235
    %1627 = vmatpush1.bf16.msra.mxu0 %v1234
    %1628 = vmatprep.subr.bf16.mxu0 %v1231
    %1629 = vmatpush1.bf16.msra.mxu0 %v1230
    %1630 = vmatprep.subr.bf16.mxu0 %v1227
    %1631 = vmatpush1.bf16.msra.mxu0 %v1226
    %1632 = vmatprep.subr.bf16.mxu0 %v1223
    %1633 = vmatpush1.bf16.msra.mxu0 %v1222
    %1634 = vmatprep.subr.bf16.mxu0 %v1219
    %1635 = vmatpush1.bf16.msra.mxu0 %v1218
    %1636 = vmatprep.subr.bf16.mxu0 %v1279
    %1637 = vmatpush2.bf16.msra.mxu0 %v1278
    %1638 = vmatprep.subr.bf16.mxu0 %v1275
    %1639 = vmatpush2.bf16.msra.mxu0 %v1274
    %1640 = vmatprep.subr.bf16.mxu0 %v1271
    %1641 = vmatpush2.bf16.msra.mxu0 %v1270
    %1642 = vmatprep.subr.bf16.mxu0 %v1267
    %1643 = vmatpush2.bf16.msra.mxu0 %v1266
    %1644 = vmatprep.subr.bf16.mxu0 %v1263
    %1645 = vmatpush2.bf16.msra.mxu0 %v1262
    %1646 = vmatprep.subr.bf16.mxu0 %v1259
    %1647 = vmatpush2.bf16.msra.mxu0 %v1258
    %1648 = vmatprep.subr.bf16.mxu0 %v1255
    %1649 = vmatpush2.bf16.msra.mxu0 %v1254
    %1650 = vmatprep.subr.bf16.mxu0 %v1251
    %1651 = vmatpush2.bf16.msra.mxu0 %v1250
    %1652 = vmatprep.mubr.bf16.mxu0 %v170
    %1653 = vmatmul.mubr.bf16.gmra.mxu0 %v169
    %v1654 = vpop.f32.mrf.mxu0
    %v1655 = vadd.f32 %v1614, %v1654
    %v1656 = vpop.f32.mrf.mxu0
    %v1657 = vadd.f32 %v1616, %v1656
    %v1658 = vpop.f32.mrf.mxu0
    %v1659 = vpop.f32.mrf.mxu0
    %1660 = vdwg.mxu0
    %1661 = vmatprep.subr.bf16.mxu0 %v1311
    %1662 = vmatpush1.bf16.msra.mxu0 %v1310
    %1663 = vmatprep.subr.bf16.mxu0 %v1307
    %1664 = vmatpush1.bf16.msra.mxu0 %v1306
    %1665 = vmatprep.subr.bf16.mxu0 %v1303
    %1666 = vmatpush1.bf16.msra.mxu0 %v1302
    %1667 = vmatprep.subr.bf16.mxu0 %v1299
    %1668 = vmatpush1.bf16.msra.mxu0 %v1298
    %1669 = vmatprep.subr.bf16.mxu0 %v1295
    %1670 = vmatpush1.bf16.msra.mxu0 %v1294
    %1671 = vmatprep.subr.bf16.mxu0 %v1291
    %1672 = vmatpush1.bf16.msra.mxu0 %v1290
    %1673 = vmatprep.subr.bf16.mxu0 %v1287
    %1674 = vmatpush1.bf16.msra.mxu0 %v1286
    %1675 = vmatprep.subr.bf16.mxu0 %v1283
    %1676 = vmatpush1.bf16.msra.mxu0 %v1282
    %1677 = vmatprep.subr.bf16.mxu0 0
    %1678 = vmatpush2.bf16.msra.mxu0 0
    %1679 = vmatprep.subr.bf16.mxu0 0
    %1680 = vmatpush2.bf16.msra.mxu0 0
    %1681 = vmatprep.subr.bf16.mxu0 0
    %1682 = vmatpush2.bf16.msra.mxu0 0
    %1683 = vmatprep.subr.bf16.mxu0 0
    %1684 = vmatpush2.bf16.msra.mxu0 0
    %1685 = vmatprep.subr.bf16.mxu0 0
    %1686 = vmatpush2.bf16.msra.mxu0 0
    %1687 = vmatprep.subr.bf16.mxu0 0
    %1688 = vmatpush2.bf16.msra.mxu0 0
    %1689 = vmatprep.subr.bf16.mxu0 0
    %1690 = vmatpush2.bf16.msra.mxu0 0
    %1691 = vmatprep.subr.bf16.mxu0 0
    %1692 = vmatpush2.bf16.msra.mxu0 0
    %1693 = vmatprep.mubr.bf16.mxu0 0
    %1694 = vmatmul.mubr.bf16.gmra.mxu0 %v171
    %v1695 = vpop.f32.mrf.mxu0
    %v1696 = vadd.f32 %v1655, %v1695
    %v1697 = vpop.f32.mrf.mxu0
    %v1698 = vadd.f32 %v1657, %v1697
    %v1699 = vpop.f32.mrf.mxu0
    %v1700 = vpop.f32.mrf.mxu0
    %1701 = vdwg.mxu0
    %1702 = vmatprep.subr.bf16.mxu0 %v1121
    %1703 = vmatpush1.bf16.msra.mxu0 %v1120
    %1704 = vmatprep.subr.bf16.mxu0 %v1117
    %1705 = vmatpush1.bf16.msra.mxu0 %v1116
    %1706 = vmatprep.subr.bf16.mxu0 %v1113
    %1707 = vmatpush1.bf16.msra.mxu0 %v1112
    %1708 = vmatprep.subr.bf16.mxu0 %v1109
    %1709 = vmatpush1.bf16.msra.mxu0 %v1108
    %1710 = vmatprep.subr.bf16.mxu0 %v1105
    %1711 = vmatpush1.bf16.msra.mxu0 %v1104
    %1712 = vmatprep.subr.bf16.mxu0 %v1101
    %1713 = vmatpush1.bf16.msra.mxu0 %v1100
    %1714 = vmatprep.subr.bf16.mxu0 %v1097
    %1715 = vmatpush1.bf16.msra.mxu0 %v1096
    %1716 = vmatprep.subr.bf16.mxu0 %v1093
    %1717 = vmatpush1.bf16.msra.mxu0 %v1092
    %1718 = vmatprep.subr.bf16.mxu0 %v1153
    %1719 = vmatpush2.bf16.msra.mxu0 %v1152
    %1720 = vmatprep.subr.bf16.mxu0 %v1149
    %1721 = vmatpush2.bf16.msra.mxu0 %v1148
    %1722 = vmatprep.subr.bf16.mxu0 %v1145
    %1723 = vmatpush2.bf16.msra.mxu0 %v1144
    %1724 = vmatprep.subr.bf16.mxu0 %v1141
    %1725 = vmatpush2.bf16.msra.mxu0 %v1140
    %1726 = vmatprep.subr.bf16.mxu0 %v1137
    %1727 = vmatpush2.bf16.msra.mxu0 %v1136
    %1728 = vmatprep.subr.bf16.mxu0 %v1133
    %1729 = vmatpush2.bf16.msra.mxu0 %v1132
    %1730 = vmatprep.subr.bf16.mxu0 %v1129
    %1731 = vmatpush2.bf16.msra.mxu0 %v1128
    %1732 = vmatprep.subr.bf16.mxu0 %v1125
    %1733 = vmatpush2.bf16.msra.mxu0 %v1124
    %1734 = vmatprep.mubr.bf16.mxu0 %v166
    %1735 = vmatmul.mubr.bf16.gmra.mxu0 %v165
    %v1736 = vpop.f32.mrf.mxu0
    %v1737 = vadd.f32 %v409, %v1736
    %v1738 = vpop.f32.mrf.mxu0
    %v1739 = vadd.f32 %v413, %v1738
    %v1740 = vpop.f32.mrf.mxu0
    %v1741 = vpop.f32.mrf.mxu0
    %1742 = vdwg.mxu0
    %1743 = vmatprep.subr.bf16.mxu0 %v1185
    %1744 = vmatpush1.bf16.msra.mxu0 %v1184
    %1745 = vmatprep.subr.bf16.mxu0 %v1181
    %1746 = vmatpush1.bf16.msra.mxu0 %v1180
    %1747 = vmatprep.subr.bf16.mxu0 %v1177
    %1748 = vmatpush1.bf16.msra.mxu0 %v1176
    %1749 = vmatprep.subr.bf16.mxu0 %v1173
    %1750 = vmatpush1.bf16.msra.mxu0 %v1172
    %1751 = vmatprep.subr.bf16.mxu0 %v1169
    %1752 = vmatpush1.bf16.msra.mxu0 %v1168
    %1753 = vmatprep.subr.bf16.mxu0 %v1165
    %1754 = vmatpush1.bf16.msra.mxu0 %v1164
    %1755 = vmatprep.subr.bf16.mxu0 %v1161
    %1756 = vmatpush1.bf16.msra.mxu0 %v1160
    %1757 = vmatprep.subr.bf16.mxu0 %v1157
    %1758 = vmatpush1.bf16.msra.mxu0 %v1156
    %1759 = vmatprep.subr.bf16.mxu0 %v1217
    %1760 = vmatpush2.bf16.msra.mxu0 %v1216
    %1761 = vmatprep.subr.bf16.mxu0 %v1213
    %1762 = vmatpush2.bf16.msra.mxu0 %v1212
    %1763 = vmatprep.subr.bf16.mxu0 %v1209
    %1764 = vmatpush2.bf16.msra.mxu0 %v1208
    %1765 = vmatprep.subr.bf16.mxu0 %v1205
    %1766 = vmatpush2.bf16.msra.mxu0 %v1204
    %1767 = vmatprep.subr.bf16.mxu0 %v1201
    %1768 = vmatpush2.bf16.msra.mxu0 %v1200
    %1769 = vmatprep.subr.bf16.mxu0 %v1197
    %1770 = vmatpush2.bf16.msra.mxu0 %v1196
    %1771 = vmatprep.subr.bf16.mxu0 %v1193
    %1772 = vmatpush2.bf16.msra.mxu0 %v1192
    %1773 = vmatprep.subr.bf16.mxu0 %v1189
    %1774 = vmatpush2.bf16.msra.mxu0 %v1188
    %1775 = vmatprep.mubr.bf16.mxu0 %v168
    %1776 = vmatmul.mubr.bf16.gmra.mxu0 %v167
    %v1777 = vpop.f32.mrf.mxu0
    %v1778 = vadd.f32 %v1737, %v1777
    %v1779 = vpop.f32.mrf.mxu0
    %v1780 = vadd.f32 %v1739, %v1779
    %v1781 = vpop.f32.mrf.mxu0
    %v1782 = vpop.f32.mrf.mxu0
    %1783 = vdwg.mxu0
    %1784 = vmatprep.subr.bf16.mxu0 %v1249
    %1785 = vmatpush1.bf16.msra.mxu0 %v1248
    %1786 = vmatprep.subr.bf16.mxu0 %v1245
    %1787 = vmatpush1.bf16.msra.mxu0 %v1244
    %1788 = vmatprep.subr.bf16.mxu0 %v1241
    %1789 = vmatpush1.bf16.msra.mxu0 %v1240
    %1790 = vmatprep.subr.bf16.mxu0 %v1237
    %1791 = vmatpush1.bf16.msra.mxu0 %v1236
    %1792 = vmatprep.subr.bf16.mxu0 %v1233
    %1793 = vmatpush1.bf16.msra.mxu0 %v1232
    %1794 = vmatprep.subr.bf16.mxu0 %v1229
    %1795 = vmatpush1.bf16.msra.mxu0 %v1228
    %1796 = vmatprep.subr.bf16.mxu0 %v1225
    %1797 = vmatpush1.bf16.msra.mxu0 %v1224
    %1798 = vmatprep.subr.bf16.mxu0 %v1221
    %1799 = vmatpush1.bf16.msra.mxu0 %v1220
    %1800 = vmatprep.subr.bf16.mxu0 %v1281
    %1801 = vmatpush2.bf16.msra.mxu0 %v1280
    %1802 = vmatprep.subr.bf16.mxu0 %v1277
    %1803 = vmatpush2.bf16.msra.mxu0 %v1276
    %1804 = vmatprep.subr.bf16.mxu0 %v1273
    %1805 = vmatpush2.bf16.msra.mxu0 %v1272
    %1806 = vmatprep.subr.bf16.mxu0 %v1269
    %1807 = vmatpush2.bf16.msra.mxu0 %v1268
    %1808 = vmatprep.subr.bf16.mxu0 %v1265
    %1809 = vmatpush2.bf16.msra.mxu0 %v1264
    %1810 = vmatprep.subr.bf16.mxu0 %v1261
    %1811 = vmatpush2.bf16.msra.mxu0 %v1260
    %1812 = vmatprep.subr.bf16.mxu0 %v1257
    %1813 = vmatpush2.bf16.msra.mxu0 %v1256
    %1814 = vmatprep.subr.bf16.mxu0 %v1253
    %1815 = vmatpush2.bf16.msra.mxu0 %v1252
    %1816 = vmatprep.mubr.bf16.mxu0 %v170
    %1817 = vmatmul.mubr.bf16.gmra.mxu0 %v169
    %v1818 = vpop.f32.mrf.mxu0
    %v1819 = vadd.f32 %v1778, %v1818
    %v1820 = vpop.f32.mrf.mxu0
    %v1821 = vadd.f32 %v1780, %v1820
    %v1822 = vpop.f32.mrf.mxu0
    %v1823 = vpop.f32.mrf.mxu0
    %1824 = vdwg.mxu0
    %1825 = vmatprep.subr.bf16.mxu0 %v1313
    %1826 = vmatpush1.bf16.msra.mxu0 %v1312
    %1827 = vmatprep.subr.bf16.mxu0 %v1309
    %1828 = vmatpush1.bf16.msra.mxu0 %v1308
    %1829 = vmatprep.subr.bf16.mxu0 %v1305
    %1830 = vmatpush1.bf16.msra.mxu0 %v1304
    %1831 = vmatprep.subr.bf16.mxu0 %v1301
    %1832 = vmatpush1.bf16.msra.mxu0 %v1300
    %1833 = vmatprep.subr.bf16.mxu0 %v1297
    %1834 = vmatpush1.bf16.msra.mxu0 %v1296
    %1835 = vmatprep.subr.bf16.mxu0 %v1293
    %1836 = vmatpush1.bf16.msra.mxu0 %v1292
    %1837 = vmatprep.subr.bf16.mxu0 %v1289
    %1838 = vmatpush1.bf16.msra.mxu0 %v1288
    %1839 = vmatprep.subr.bf16.mxu0 %v1285
    %1840 = vmatpush1.bf16.msra.mxu0 %v1284
    %1841 = vmatprep.subr.bf16.mxu0 0
    %1842 = vmatpush2.bf16.msra.mxu0 0
    %1843 = vmatprep.subr.bf16.mxu0 0
    %1844 = vmatpush2.bf16.msra.mxu0 0
    %1845 = vmatprep.subr.bf16.mxu0 0
    %1846 = vmatpush2.bf16.msra.mxu0 0
    %1847 = vmatprep.subr.bf16.mxu0 0
    %1848 = vmatpush2.bf16.msra.mxu0 0
    %1849 = vmatprep.subr.bf16.mxu0 0
    %1850 = vmatpush2.bf16.msra.mxu0 0
    %1851 = vmatprep.subr.bf16.mxu0 0
    %1852 = vmatpush2.bf16.msra.mxu0 0
    %1853 = vmatprep.subr.bf16.mxu0 0
    %1854 = vmatpush2.bf16.msra.mxu0 0
    %1855 = vmatprep.subr.bf16.mxu0 0
    %1856 = vmatpush2.bf16.msra.mxu0 0
    %1857 = vmatprep.mubr.bf16.mxu0 0
    %1858 = vmatmul.mubr.bf16.gmra.mxu0 %v171
    %v1859 = vpop.f32.mrf.mxu0
    %v1860 = vadd.f32 %v1819, %v1859
    %v1861 = vpop.f32.mrf.mxu0
    %v1862 = vadd.f32 %v1821, %v1861
    %v1863 = vpop.f32.mrf.mxu0
    %v1864 = vpop.f32.mrf.mxu0
    %1865 = vdwg.mxu0
    %v1866 = vmax.f32 %v1696, 0.0
    %v1867 = vmax.f32 %v1698, 0.0
    %v1868 = vmax.f32 %v1860, 0.0
    %v1869 = vmax.f32 %v1862, 0.0
    %v1870 = vpack.c.bf16 %v1866, %v1866
    %v1871 = vpack.c.bf16 %v1867, %v1867
    %v1872 = vpack.c.bf16 %v1868, %v1868
    %v1873 = vpack.c.bf16 %v1869, %v1869
    %v1874 = vld [vmem:[#allocation4] sm:$0xff]
    %v1875 = vld [vmem:[#allocation4 + $0x8] sm:$0xff]
    %v1876 = vld [vmem:[#allocation4 + $0x10] sm:$0xff]
    %v1877 = vld [vmem:[#allocation4 + $0x18] sm:$0xff]
    %v1878 = vld [vmem:[#allocation4 + $0x20] sm:$0xff]
    %v1879 = vld [vmem:[#allocation4 + $0x28] sm:$0xff]
    %v1880 = vld [vmem:[#allocation4 + $0x30] sm:$0xff]
    %v1881 = vld [vmem:[#allocation4 + $0x38] sm:$0xff]
    %v1882 = vld [vmem:[#allocation4 + $0x40] sm:$0xff]
    %v1883 = vld [vmem:[#allocation4 + $0x48] sm:$0xff]
    %v1884 = vld [vmem:[#allocation4 + $0x50] sm:$0xff]
    %v1885 = vld [vmem:[#allocation4 + $0x58] sm:$0xff]
    %v1886 = vld [vmem:[#allocation4 + $0x60] sm:$0xff]
    %v1887 = vld [vmem:[#allocation4 + $0x68] sm:$0xff]
    %v1888 = vld [vmem:[#allocation4 + $0x70] sm:$0xff]
    %v1889 = vld [vmem:[#allocation4 + $0x78] sm:$0xff]
    %v1890 = vld [vmem:[#allocation4 + $0x80] sm:$0xff]
    %v1891 = vld [vmem:[#allocation4 + $0x88] sm:$0xff]
    %v1892 = vld [vmem:[#allocation4 + $0x90] sm:$0xff]
    %v1893 = vld [vmem:[#allocation4 + $0x98] sm:$0xff]
    %v1894 = vld [vmem:[#allocation4 + $0xa0] sm:$0xff]
    %v1895 = vld [vmem:[#allocation4 + $0xa8] sm:$0xff]
    %v1896 = vld [vmem:[#allocation4 + $0xb0] sm:$0xff]
    %v1897 = vld [vmem:[#allocation4 + $0xb8] sm:$0xff]
    %v1898 = vld [vmem:[#allocation4 + $0xc0] sm:$0xff]
    %v1899 = vld [vmem:[#allocation4 + $0xc8] sm:$0xff]
    %v1900 = vld [vmem:[#allocation4 + $0xd0] sm:$0xff]
    %v1901 = vld [vmem:[#allocation4 + $0xd8] sm:$0xff]
    %v1902 = vld [vmem:[#allocation4 + $0xe0] sm:$0xff]
    %v1903 = vld [vmem:[#allocation4 + $0xe8] sm:$0xff]
    %v1904 = vld [vmem:[#allocation4 + $0xf0] sm:$0xff]
    %v1905 = vld [vmem:[#allocation4 + $0xf8] sm:$0xff]
    %v1906 = vld [vmem:[#allocation4 + $0x100] sm:$0xff]
    %v1907 = vld [vmem:[#allocation4 + $0x108] sm:$0xff]
    %v1908 = vld [vmem:[#allocation4 + $0x110] sm:$0xff]
    %v1909 = vld [vmem:[#allocation4 + $0x118] sm:$0xff]
    %v1910 = vld [vmem:[#allocation4 + $0x120] sm:$0xff]
    %v1911 = vld [vmem:[#allocation4 + $0x128] sm:$0xff]
    %v1912 = vld [vmem:[#allocation4 + $0x130] sm:$0xff]
    %v1913 = vld [vmem:[#allocation4 + $0x138] sm:$0xff]
    %v1914 = vld [vmem:[#allocation4 + $0x140] sm:$0xff]
    %v1915 = vld [vmem:[#allocation4 + $0x148] sm:$0xff]
    %v1916 = vld [vmem:[#allocation4 + $0x150] sm:$0xff]
    %v1917 = vld [vmem:[#allocation4 + $0x158] sm:$0xff]
    %v1918 = vld [vmem:[#allocation4 + $0x160] sm:$0xff]
    %v1919 = vld [vmem:[#allocation4 + $0x168] sm:$0xff]
    %v1920 = vld [vmem:[#allocation4 + $0x170] sm:$0xff]
    %v1921 = vld [vmem:[#allocation4 + $0x178] sm:$0xff]
    %v1922 = vld [vmem:[#allocation4 + $0x180] sm:$0xff]
    %v1923 = vld [vmem:[#allocation4 + $0x188] sm:$0xff]
    %v1924 = vld [vmem:[#allocation4 + $0x190] sm:$0xff]
    %v1925 = vld [vmem:[#allocation4 + $0x198] sm:$0xff]
    %v1926 = vld [vmem:[#allocation4 + $0x1a0] sm:$0xff]
    %v1927 = vld [vmem:[#allocation4 + $0x1a8] sm:$0xff]
    %v1928 = vld [vmem:[#allocation4 + $0x1b0] sm:$0xff]
    %v1929 = vld [vmem:[#allocation4 + $0x1b8] sm:$0xff]
    %v1930 = vld [vmem:[#allocation4 + $0x1c0] sm:$0xff]
    %v1931 = vld [vmem:[#allocation4 + $0x1c8] sm:$0xff]
    %v1932 = vld [vmem:[#allocation4 + $0x1d0] sm:$0xff]
    %v1933 = vld [vmem:[#allocation4 + $0x1d8] sm:$0xff]
    %v1934 = vld [vmem:[#allocation4 + $0x1e0] sm:$0xff]
    %v1935 = vld [vmem:[#allocation4 + $0x1e8] sm:$0xff]
    %v1936 = vld [vmem:[#allocation4 + $0x1f0] sm:$0xff]
    %v1937 = vld [vmem:[#allocation4 + $0x1f8] sm:$0xff]
    %v1938 = vld [vmem:[#allocation4 + $0x200] sm:$0xff]
    %v1939 = vld [vmem:[#allocation4 + $0x208] sm:$0xff]
    %v1940 = vld [vmem:[#allocation4 + $0x210] sm:$0xff]
    %v1941 = vld [vmem:[#allocation4 + $0x218] sm:$0xff]
    %v1942 = vld [vmem:[#allocation4 + $0x220] sm:$0xff]
    %v1943 = vld [vmem:[#allocation4 + $0x228] sm:$0xff]
    %v1944 = vld [vmem:[#allocation4 + $0x230] sm:$0xff]
    %v1945 = vld [vmem:[#allocation4 + $0x238] sm:$0xff]
    %v1946 = vld [vmem:[#allocation4 + $0x240] sm:$0xff]
    %v1947 = vld [vmem:[#allocation4 + $0x248] sm:$0xff]
    %v1948 = vld [vmem:[#allocation4 + $0x250] sm:$0xff]
    %v1949 = vld [vmem:[#allocation4 + $0x258] sm:$0xff]
    %v1950 = vld [vmem:[#allocation4 + $0x260] sm:$0xff]
    %v1951 = vld [vmem:[#allocation4 + $0x268] sm:$0xff]
    %v1952 = vld [vmem:[#allocation4 + $0x270] sm:$0xff]
    %v1953 = vld [vmem:[#allocation4 + $0x278] sm:$0xff]
    %v1954 = vld [vmem:[#allocation4 + $0x280] sm:$0xff]
    %v1955 = vld [vmem:[#allocation4 + $0x288] sm:$0xff]
    %v1956 = vld [vmem:[#allocation4 + $0x290] sm:$0xff]
    %v1957 = vld [vmem:[#allocation4 + $0x298] sm:$0xff]
    %v1958 = vld [vmem:[#allocation4 + $0x2a0] sm:$0xff]
    %v1959 = vld [vmem:[#allocation4 + $0x2a8] sm:$0xff]
    %v1960 = vld [vmem:[#allocation4 + $0x2b0] sm:$0xff]
    %v1961 = vld [vmem:[#allocation4 + $0x2b8] sm:$0xff]
    %v1962 = vld [vmem:[#allocation4 + $0x2c0] sm:$0xff]
    %v1963 = vld [vmem:[#allocation4 + $0x2c8] sm:$0xff]
    %v1964 = vld [vmem:[#allocation4 + $0x2d0] sm:$0xff]
    %v1965 = vld [vmem:[#allocation4 + $0x2d8] sm:$0xff]
    %v1966 = vld [vmem:[#allocation4 + $0x2e0] sm:$0xff]
    %v1967 = vld [vmem:[#allocation4 + $0x2e8] sm:$0xff]
    %v1968 = vld [vmem:[#allocation4 + $0x2f0] sm:$0xff]
    %v1969 = vld [vmem:[#allocation4 + $0x2f8] sm:$0xff]
    %v1970 = vld [vmem:[#allocation4 + $0x300] sm:$0xff]
    %v1971 = vld [vmem:[#allocation4 + $0x308] sm:$0xff]
    %v1972 = vld [vmem:[#allocation4 + $0x310] sm:$0xff]
    %v1973 = vld [vmem:[#allocation4 + $0x318] sm:$0xff]
    %v1974 = vld [vmem:[#allocation4 + $0x320] sm:$0xff]
    %v1975 = vld [vmem:[#allocation4 + $0x328] sm:$0xff]
    %v1976 = vld [vmem:[#allocation4 + $0x330] sm:$0xff]
    %v1977 = vld [vmem:[#allocation4 + $0x338] sm:$0xff]
    %v1978 = vld [vmem:[#allocation4 + $0x340] sm:$0xff]
    %v1979 = vld [vmem:[#allocation4 + $0x348] sm:$0xff]
    %v1980 = vld [vmem:[#allocation4 + $0x350] sm:$0xff]
    %v1981 = vld [vmem:[#allocation4 + $0x358] sm:$0xff]
    %v1982 = vld [vmem:[#allocation4 + $0x360] sm:$0xff]
    %v1983 = vld [vmem:[#allocation4 + $0x368] sm:$0xff]
    %v1984 = vld [vmem:[#allocation4 + $0x370] sm:$0xff]
    %v1985 = vld [vmem:[#allocation4 + $0x378] sm:$0xff]
    %v1986 = vld [vmem:[#allocation4 + $0x380] sm:$0xff]
    %v1987 = vld [vmem:[#allocation4 + $0x388] sm:$0xff]
    %v1988 = vld [vmem:[#allocation4 + $0x390] sm:$0xff]
    %v1989 = vld [vmem:[#allocation4 + $0x398] sm:$0xff]
    %v1990 = vld [vmem:[#allocation4 + $0x3a0] sm:$0xff]
    %v1991 = vld [vmem:[#allocation4 + $0x3a8] sm:$0xff]
    %v1992 = vld [vmem:[#allocation4 + $0x3b0] sm:$0xff]
    %v1993 = vld [vmem:[#allocation4 + $0x3b8] sm:$0xff]
    %v1994 = vld [vmem:[#allocation4 + $0x3c0] sm:$0xff]
    %v1995 = vld [vmem:[#allocation4 + $0x3c8] sm:$0xff]
    %v1996 = vld [vmem:[#allocation4 + $0x3d0] sm:$0xff]
    %v1997 = vld [vmem:[#allocation4 + $0x3d8] sm:$0xff]
    %v1998 = vld [vmem:[#allocation4 + $0x3e0] sm:$0xff]
    %v1999 = vld [vmem:[#allocation4 + $0x3e8] sm:$0xff]
    %v2000 = vld [vmem:[#allocation4 + $0x3f0] sm:$0xff]
    %v2001 = vld [vmem:[#allocation4 + $0x3f8] sm:$0xff]
    %v2002 = vld [vmem:[%s5] sm:$0xf]
    %v2004 = vlaneseq
    %v2005 = vshrl.u32 %v2004, 7
    %v2006 = vsub.s32 0, %v2005
    %v2007 = vrot.slane %v2002, %v2006
    %v2008 = vlaneseq
    %v2009 = vshrl.u32 %v2008, 7
    %v2010 = vsub.s32 1, %v2009
    %v2011 = vrot.slane %v2002, %v2010
    %v2012 = vlaneseq
    %v2013 = vshrl.u32 %v2012, 7
    %v2014 = vsub.s32 2, %v2013
    %v2015 = vrot.slane %v2002, %v2014
    %v2016 = vlaneseq
    %v2017 = vshrl.u32 %v2016, 7
    %v2018 = vsub.s32 3, %v2017
    %v2019 = vrot.slane %v2002, %v2018
    %v2152 = vunpack.c.l.b16 %v1874
    %v2153 = vunpack.c.h.b16 %v1874
    %v2154 = vunpack.c.l.b16 %v1875
    %v2155 = vunpack.c.h.b16 %v1875
    %v2156 = vunpack.c.l.b16 %v1876
    %v2157 = vunpack.c.h.b16 %v1876
    %v2158 = vunpack.c.l.b16 %v1877
    %v2159 = vunpack.c.h.b16 %v1877
    %v2160 = vunpack.c.l.b16 %v1878
    %v2161 = vunpack.c.h.b16 %v1878
    %v2162 = vunpack.c.l.b16 %v1879
    %v2163 = vunpack.c.h.b16 %v1879
    %v2164 = vunpack.c.l.b16 %v1880
    %v2165 = vunpack.c.h.b16 %v1880
    %v2166 = vunpack.c.l.b16 %v1881
    %v2167 = vunpack.c.h.b16 %v1881
    %v2168 = vunpack.c.l.b16 %v1882
    %v2169 = vunpack.c.h.b16 %v1882
    %v2170 = vunpack.c.l.b16 %v1883
    %v2171 = vunpack.c.h.b16 %v1883
    %v2172 = vunpack.c.l.b16 %v1884
    %v2173 = vunpack.c.h.b16 %v1884
    %v2174 = vunpack.c.l.b16 %v1885
    %v2175 = vunpack.c.h.b16 %v1885
    %v2176 = vunpack.c.l.b16 %v1886
    %v2177 = vunpack.c.h.b16 %v1886
    %v2178 = vunpack.c.l.b16 %v1887
    %v2179 = vunpack.c.h.b16 %v1887
    %v2180 = vunpack.c.l.b16 %v1888
    %v2181 = vunpack.c.h.b16 %v1888
    %v2182 = vunpack.c.l.b16 %v1889
    %v2183 = vunpack.c.h.b16 %v1889
    %v2184 = vunpack.c.l.b16 %v1890
    %v2185 = vunpack.c.h.b16 %v1890
    %v2186 = vunpack.c.l.b16 %v1891
    %v2187 = vunpack.c.h.b16 %v1891
    %v2188 = vunpack.c.l.b16 %v1892
    %v2189 = vunpack.c.h.b16 %v1892
    %v2190 = vunpack.c.l.b16 %v1893
    %v2191 = vunpack.c.h.b16 %v1893
    %v2192 = vunpack.c.l.b16 %v1894
    %v2193 = vunpack.c.h.b16 %v1894
    %v2194 = vunpack.c.l.b16 %v1895
    %v2195 = vunpack.c.h.b16 %v1895
    %v2196 = vunpack.c.l.b16 %v1896
    %v2197 = vunpack.c.h.b16 %v1896
    %v2198 = vunpack.c.l.b16 %v1897
    %v2199 = vunpack.c.h.b16 %v1897
    %v2200 = vunpack.c.l.b16 %v1898
    %v2201 = vunpack.c.h.b16 %v1898
    %v2202 = vunpack.c.l.b16 %v1899
    %v2203 = vunpack.c.h.b16 %v1899
    %v2204 = vunpack.c.l.b16 %v1900
    %v2205 = vunpack.c.h.b16 %v1900
    %v2206 = vunpack.c.l.b16 %v1901
    %v2207 = vunpack.c.h.b16 %v1901
    %v2208 = vunpack.c.l.b16 %v1902
    %v2209 = vunpack.c.h.b16 %v1902
    %v2210 = vunpack.c.l.b16 %v1903
    %v2211 = vunpack.c.h.b16 %v1903
    %v2212 = vunpack.c.l.b16 %v1904
    %v2213 = vunpack.c.h.b16 %v1904
    %v2214 = vunpack.c.l.b16 %v1905
    %v2215 = vunpack.c.h.b16 %v1905
    %v2216 = vunpack.c.l.b16 %v1906
    %v2217 = vunpack.c.h.b16 %v1906
    %v2218 = vunpack.c.l.b16 %v1907
    %v2219 = vunpack.c.h.b16 %v1907
    %v2220 = vunpack.c.l.b16 %v1908
    %v2221 = vunpack.c.h.b16 %v1908
    %v2222 = vunpack.c.l.b16 %v1909
    %v2223 = vunpack.c.h.b16 %v1909
    %v2224 = vunpack.c.l.b16 %v1910
    %v2225 = vunpack.c.h.b16 %v1910
    %v2226 = vunpack.c.l.b16 %v1911
    %v2227 = vunpack.c.h.b16 %v1911
    %v2228 = vunpack.c.l.b16 %v1912
    %v2229 = vunpack.c.h.b16 %v1912
    %v2230 = vunpack.c.l.b16 %v1913
    %v2231 = vunpack.c.h.b16 %v1913
    %v2232 = vunpack.c.l.b16 %v1914
    %v2233 = vunpack.c.h.b16 %v1914
    %v2234 = vunpack.c.l.b16 %v1915
    %v2235 = vunpack.c.h.b16 %v1915
    %v2236 = vunpack.c.l.b16 %v1916
    %v2237 = vunpack.c.h.b16 %v1916
    %v2238 = vunpack.c.l.b16 %v1917
    %v2239 = vunpack.c.h.b16 %v1917
    %v2240 = vunpack.c.l.b16 %v1918
    %v2241 = vunpack.c.h.b16 %v1918
    %v2242 = vunpack.c.l.b16 %v1919
    %v2243 = vunpack.c.h.b16 %v1919
    %v2244 = vunpack.c.l.b16 %v1920
    %v2245 = vunpack.c.h.b16 %v1920
    %v2246 = vunpack.c.l.b16 %v1921
    %v2247 = vunpack.c.h.b16 %v1921
    %v2248 = vunpack.c.l.b16 %v1922
    %v2249 = vunpack.c.h.b16 %v1922
    %v2250 = vunpack.c.l.b16 %v1923
    %v2251 = vunpack.c.h.b16 %v1923
    %v2252 = vunpack.c.l.b16 %v1924
    %v2253 = vunpack.c.h.b16 %v1924
    %v2254 = vunpack.c.l.b16 %v1925
    %v2255 = vunpack.c.h.b16 %v1925
    %v2256 = vunpack.c.l.b16 %v1926
    %v2257 = vunpack.c.h.b16 %v1926
    %v2258 = vunpack.c.l.b16 %v1927
    %v2259 = vunpack.c.h.b16 %v1927
    %v2260 = vunpack.c.l.b16 %v1928
    %v2261 = vunpack.c.h.b16 %v1928
    %v2262 = vunpack.c.l.b16 %v1929
    %v2263 = vunpack.c.h.b16 %v1929
    %v2264 = vunpack.c.l.b16 %v1930
    %v2265 = vunpack.c.h.b16 %v1930
    %v2266 = vunpack.c.l.b16 %v1931
    %v2267 = vunpack.c.h.b16 %v1931
    %v2268 = vunpack.c.l.b16 %v1932
    %v2269 = vunpack.c.h.b16 %v1932
    %v2270 = vunpack.c.l.b16 %v1933
    %v2271 = vunpack.c.h.b16 %v1933
    %v2272 = vunpack.c.l.b16 %v1934
    %v2273 = vunpack.c.h.b16 %v1934
    %v2274 = vunpack.c.l.b16 %v1935
    %v2275 = vunpack.c.h.b16 %v1935
    %v2276 = vunpack.c.l.b16 %v1936
    %v2277 = vunpack.c.h.b16 %v1936
    %v2278 = vunpack.c.l.b16 %v1937
    %v2279 = vunpack.c.h.b16 %v1937
    %v2280 = vunpack.c.l.b16 %v1938
    %v2281 = vunpack.c.h.b16 %v1938
    %v2282 = vunpack.c.l.b16 %v1939
    %v2283 = vunpack.c.h.b16 %v1939
    %v2284 = vunpack.c.l.b16 %v1940
    %v2285 = vunpack.c.h.b16 %v1940
    %v2286 = vunpack.c.l.b16 %v1941
    %v2287 = vunpack.c.h.b16 %v1941
    %v2288 = vunpack.c.l.b16 %v1942
    %v2289 = vunpack.c.h.b16 %v1942
    %v2290 = vunpack.c.l.b16 %v1943
    %v2291 = vunpack.c.h.b16 %v1943
    %v2292 = vunpack.c.l.b16 %v1944
    %v2293 = vunpack.c.h.b16 %v1944
    %v2294 = vunpack.c.l.b16 %v1945
    %v2295 = vunpack.c.h.b16 %v1945
    %v2296 = vunpack.c.l.b16 %v1946
    %v2297 = vunpack.c.h.b16 %v1946
    %v2298 = vunpack.c.l.b16 %v1947
    %v2299 = vunpack.c.h.b16 %v1947
    %v2300 = vunpack.c.l.b16 %v1948
    %v2301 = vunpack.c.h.b16 %v1948
    %v2302 = vunpack.c.l.b16 %v1949
    %v2303 = vunpack.c.h.b16 %v1949
    %v2304 = vunpack.c.l.b16 %v1950
    %v2305 = vunpack.c.h.b16 %v1950
    %v2306 = vunpack.c.l.b16 %v1951
    %v2307 = vunpack.c.h.b16 %v1951
    %v2308 = vunpack.c.l.b16 %v1952
    %v2309 = vunpack.c.h.b16 %v1952
    %v2310 = vunpack.c.l.b16 %v1953
    %v2311 = vunpack.c.h.b16 %v1953
    %v2312 = vunpack.c.l.b16 %v1954
    %v2313 = vunpack.c.h.b16 %v1954
    %v2314 = vunpack.c.l.b16 %v1955
    %v2315 = vunpack.c.h.b16 %v1955
    %v2316 = vunpack.c.l.b16 %v1956
    %v2317 = vunpack.c.h.b16 %v1956
    %v2318 = vunpack.c.l.b16 %v1957
    %v2319 = vunpack.c.h.b16 %v1957
    %v2320 = vunpack.c.l.b16 %v1958
    %v2321 = vunpack.c.h.b16 %v1958
    %v2322 = vunpack.c.l.b16 %v1959
    %v2323 = vunpack.c.h.b16 %v1959
    %v2324 = vunpack.c.l.b16 %v1960
    %v2325 = vunpack.c.h.b16 %v1960
    %v2326 = vunpack.c.l.b16 %v1961
    %v2327 = vunpack.c.h.b16 %v1961
    %v2328 = vunpack.c.l.b16 %v1962
    %v2329 = vunpack.c.h.b16 %v1962
    %v2330 = vunpack.c.l.b16 %v1963
    %v2331 = vunpack.c.h.b16 %v1963
    %v2332 = vunpack.c.l.b16 %v1964
    %v2333 = vunpack.c.h.b16 %v1964
    %v2334 = vunpack.c.l.b16 %v1965
    %v2335 = vunpack.c.h.b16 %v1965
    %v2336 = vunpack.c.l.b16 %v1966
    %v2337 = vunpack.c.h.b16 %v1966
    %v2338 = vunpack.c.l.b16 %v1967
    %v2339 = vunpack.c.h.b16 %v1967
    %v2340 = vunpack.c.l.b16 %v1968
    %v2341 = vunpack.c.h.b16 %v1968
    %v2342 = vunpack.c.l.b16 %v1969
    %v2343 = vunpack.c.h.b16 %v1969
    %v2344 = vunpack.c.l.b16 %v1970
    %v2345 = vunpack.c.h.b16 %v1970
    %v2346 = vunpack.c.l.b16 %v1971
    %v2347 = vunpack.c.h.b16 %v1971
    %v2348 = vunpack.c.l.b16 %v1972
    %v2349 = vunpack.c.h.b16 %v1972
    %v2350 = vunpack.c.l.b16 %v1973
    %v2351 = vunpack.c.h.b16 %v1973
    %v2352 = vunpack.c.l.b16 %v1974
    %v2353 = vunpack.c.h.b16 %v1974
    %v2354 = vunpack.c.l.b16 %v1975
    %v2355 = vunpack.c.h.b16 %v1975
    %v2356 = vunpack.c.l.b16 %v1976
    %v2357 = vunpack.c.h.b16 %v1976
    %v2358 = vunpack.c.l.b16 %v1977
    %v2359 = vunpack.c.h.b16 %v1977
    %v2360 = vunpack.c.l.b16 %v1978
    %v2361 = vunpack.c.h.b16 %v1978
    %v2362 = vunpack.c.l.b16 %v1979
    %v2363 = vunpack.c.h.b16 %v1979
    %v2364 = vunpack.c.l.b16 %v1980
    %v2365 = vunpack.c.h.b16 %v1980
    %v2366 = vunpack.c.l.b16 %v1981
    %v2367 = vunpack.c.h.b16 %v1981
    %v2368 = vunpack.c.l.b16 %v1982
    %v2369 = vunpack.c.h.b16 %v1982
    %v2370 = vunpack.c.l.b16 %v1983
    %v2371 = vunpack.c.h.b16 %v1983
    %v2372 = vunpack.c.l.b16 %v1984
    %v2373 = vunpack.c.h.b16 %v1984
    %v2374 = vunpack.c.l.b16 %v1985
    %v2375 = vunpack.c.h.b16 %v1985
    %v2376 = vunpack.c.l.b16 %v1986
    %v2377 = vunpack.c.h.b16 %v1986
    %v2378 = vunpack.c.l.b16 %v1987
    %v2379 = vunpack.c.h.b16 %v1987
    %v2380 = vunpack.c.l.b16 %v1988
    %v2381 = vunpack.c.h.b16 %v1988
    %v2382 = vunpack.c.l.b16 %v1989
    %v2383 = vunpack.c.h.b16 %v1989
    %v2384 = vunpack.c.l.b16 %v1990
    %v2385 = vunpack.c.h.b16 %v1990
    %v2386 = vunpack.c.l.b16 %v1991
    %v2387 = vunpack.c.h.b16 %v1991
    %v2388 = vunpack.c.l.b16 %v1992
    %v2389 = vunpack.c.h.b16 %v1992
    %v2390 = vunpack.c.l.b16 %v1993
    %v2391 = vunpack.c.h.b16 %v1993
    %v2392 = vunpack.c.l.b16 %v1994
    %v2393 = vunpack.c.h.b16 %v1994
    %v2394 = vunpack.c.l.b16 %v1995
    %v2395 = vunpack.c.h.b16 %v1995
    %v2396 = vunpack.c.l.b16 %v1996
    %v2397 = vunpack.c.h.b16 %v1996
    %v2398 = vunpack.c.l.b16 %v1997
    %v2399 = vunpack.c.h.b16 %v1997
    %v2400 = vunpack.c.l.b16 %v1998
    %v2401 = vunpack.c.h.b16 %v1998
    %v2402 = vunpack.c.l.b16 %v1999
    %v2403 = vunpack.c.h.b16 %v1999
    %v2404 = vunpack.c.l.b16 %v2000
    %v2405 = vunpack.c.h.b16 %v2000
    %v2406 = vunpack.c.l.b16 %v2001
    %v2407 = vunpack.c.h.b16 %v2001
    %v2408 = vpack.c.b16 %v2156, %v2152
    %v2409 = vpack.c.b16 %v2157, %v2153
    %v2410 = vpack.c.b16 %v2158, %v2154
    %v2411 = vpack.c.b16 %v2159, %v2155
    %v2412 = vpack.c.b16 %v2164, %v2160
    %v2413 = vpack.c.b16 %v2165, %v2161
    %v2414 = vpack.c.b16 %v2166, %v2162
    %v2415 = vpack.c.b16 %v2167, %v2163
    %v2416 = vpack.c.b16 %v2172, %v2168
    %v2417 = vpack.c.b16 %v2173, %v2169
    %v2418 = vpack.c.b16 %v2174, %v2170
    %v2419 = vpack.c.b16 %v2175, %v2171
    %v2420 = vpack.c.b16 %v2180, %v2176
    %v2421 = vpack.c.b16 %v2181, %v2177
    %v2422 = vpack.c.b16 %v2182, %v2178
    %v2423 = vpack.c.b16 %v2183, %v2179
    %v2424 = vpack.c.b16 %v2188, %v2184
    %v2425 = vpack.c.b16 %v2189, %v2185
    %v2426 = vpack.c.b16 %v2190, %v2186
    %v2427 = vpack.c.b16 %v2191, %v2187
    %v2428 = vpack.c.b16 %v2196, %v2192
    %v2429 = vpack.c.b16 %v2197, %v2193
    %v2430 = vpack.c.b16 %v2198, %v2194
    %v2431 = vpack.c.b16 %v2199, %v2195
    %v2432 = vpack.c.b16 %v2204, %v2200
    %v2433 = vpack.c.b16 %v2205, %v2201
    %v2434 = vpack.c.b16 %v2206, %v2202
    %v2435 = vpack.c.b16 %v2207, %v2203
    %v2436 = vpack.c.b16 %v2212, %v2208
    %v2437 = vpack.c.b16 %v2213, %v2209
    %v2438 = vpack.c.b16 %v2214, %v2210
    %v2439 = vpack.c.b16 %v2215, %v2211
    %v2440 = vpack.c.b16 %v2220, %v2216
    %v2441 = vpack.c.b16 %v2221, %v2217
    %v2442 = vpack.c.b16 %v2222, %v2218
    %v2443 = vpack.c.b16 %v2223, %v2219
    %v2444 = vpack.c.b16 %v2228, %v2224
    %v2445 = vpack.c.b16 %v2229, %v2225
    %v2446 = vpack.c.b16 %v2230, %v2226
    %v2447 = vpack.c.b16 %v2231, %v2227
    %v2448 = vpack.c.b16 %v2236, %v2232
    %v2449 = vpack.c.b16 %v2237, %v2233
    %v2450 = vpack.c.b16 %v2238, %v2234
    %v2451 = vpack.c.b16 %v2239, %v2235
    %v2452 = vpack.c.b16 %v2244, %v2240
    %v2453 = vpack.c.b16 %v2245, %v2241
    %v2454 = vpack.c.b16 %v2246, %v2242
    %v2455 = vpack.c.b16 %v2247, %v2243
    %v2456 = vpack.c.b16 %v2252, %v2248
    %v2457 = vpack.c.b16 %v2253, %v2249
    %v2458 = vpack.c.b16 %v2254, %v2250
    %v2459 = vpack.c.b16 %v2255, %v2251
    %v2460 = vpack.c.b16 %v2260, %v2256
    %v2461 = vpack.c.b16 %v2261, %v2257
    %v2462 = vpack.c.b16 %v2262, %v2258
    %v2463 = vpack.c.b16 %v2263, %v2259
    %v2464 = vpack.c.b16 %v2268, %v2264
    %v2465 = vpack.c.b16 %v2269, %v2265
    %v2466 = vpack.c.b16 %v2270, %v2266
    %v2467 = vpack.c.b16 %v2271, %v2267
    %v2468 = vpack.c.b16 %v2276, %v2272
    %v2469 = vpack.c.b16 %v2277, %v2273
    %v2470 = vpack.c.b16 %v2278, %v2274
    %v2471 = vpack.c.b16 %v2279, %v2275
    %v2472 = vpack.c.b16 %v2284, %v2280
    %v2473 = vpack.c.b16 %v2285, %v2281
    %v2474 = vpack.c.b16 %v2286, %v2282
    %v2475 = vpack.c.b16 %v2287, %v2283
    %v2476 = vpack.c.b16 %v2292, %v2288
    %v2477 = vpack.c.b16 %v2293, %v2289
    %v2478 = vpack.c.b16 %v2294, %v2290
    %v2479 = vpack.c.b16 %v2295, %v2291
    %v2480 = vpack.c.b16 %v2300, %v2296
    %v2481 = vpack.c.b16 %v2301, %v2297
    %v2482 = vpack.c.b16 %v2302, %v2298
    %v2483 = vpack.c.b16 %v2303, %v2299
    %v2484 = vpack.c.b16 %v2308, %v2304
    %v2485 = vpack.c.b16 %v2309, %v2305
    %v2486 = vpack.c.b16 %v2310, %v2306
    %v2487 = vpack.c.b16 %v2311, %v2307
    %v2488 = vpack.c.b16 %v2316, %v2312
    %v2489 = vpack.c.b16 %v2317, %v2313
    %v2490 = vpack.c.b16 %v2318, %v2314
    %v2491 = vpack.c.b16 %v2319, %v2315
    %v2492 = vpack.c.b16 %v2324, %v2320
    %v2493 = vpack.c.b16 %v2325, %v2321
    %v2494 = vpack.c.b16 %v2326, %v2322
    %v2495 = vpack.c.b16 %v2327, %v2323
    %v2496 = vpack.c.b16 %v2332, %v2328
    %v2497 = vpack.c.b16 %v2333, %v2329
    %v2498 = vpack.c.b16 %v2334, %v2330
    %v2499 = vpack.c.b16 %v2335, %v2331
    %v2500 = vpack.c.b16 %v2340, %v2336
    %v2501 = vpack.c.b16 %v2341, %v2337
    %v2502 = vpack.c.b16 %v2342, %v2338
    %v2503 = vpack.c.b16 %v2343, %v2339
    %v2504 = vpack.c.b16 %v2348, %v2344
    %v2505 = vpack.c.b16 %v2349, %v2345
    %v2506 = vpack.c.b16 %v2350, %v2346
    %v2507 = vpack.c.b16 %v2351, %v2347
    %v2508 = vpack.c.b16 %v2356, %v2352
    %v2509 = vpack.c.b16 %v2357, %v2353
    %v2510 = vpack.c.b16 %v2358, %v2354
    %v2511 = vpack.c.b16 %v2359, %v2355
    %v2512 = vpack.c.b16 %v2364, %v2360
    %v2513 = vpack.c.b16 %v2365, %v2361
    %v2514 = vpack.c.b16 %v2366, %v2362
    %v2515 = vpack.c.b16 %v2367, %v2363
    %v2516 = vpack.c.b16 %v2372, %v2368
    %v2517 = vpack.c.b16 %v2373, %v2369
    %v2518 = vpack.c.b16 %v2374, %v2370
    %v2519 = vpack.c.b16 %v2375, %v2371
    %v2520 = vpack.c.b16 %v2380, %v2376
    %v2521 = vpack.c.b16 %v2381, %v2377
    %v2522 = vpack.c.b16 %v2382, %v2378
    %v2523 = vpack.c.b16 %v2383, %v2379
    %v2524 = vpack.c.b16 %v2388, %v2384
    %v2525 = vpack.c.b16 %v2389, %v2385
    %v2526 = vpack.c.b16 %v2390, %v2386
    %v2527 = vpack.c.b16 %v2391, %v2387
    %v2528 = vpack.c.b16 %v2396, %v2392
    %v2529 = vpack.c.b16 %v2397, %v2393
    %v2530 = vpack.c.b16 %v2398, %v2394
    %v2531 = vpack.c.b16 %v2399, %v2395
    %v2532 = vpack.c.b16 %v2404, %v2400
    %v2533 = vpack.c.b16 %v2405, %v2401
    %v2534 = vpack.c.b16 %v2406, %v2402
    %v2535 = vpack.c.b16 %v2407, %v2403
    %2664 = vmatprep.subr.bf16.mxu0 %v2437
    %2665 = vmatpush1.bf16.msra.mxu0 %v2436
    %2666 = vmatprep.subr.bf16.mxu0 %v2433
    %2667 = vmatpush1.bf16.msra.mxu0 %v2432
    %2668 = vmatprep.subr.bf16.mxu0 %v2429
    %2669 = vmatpush1.bf16.msra.mxu0 %v2428
    %2670 = vmatprep.subr.bf16.mxu0 %v2425
    %2671 = vmatpush1.bf16.msra.mxu0 %v2424
    %2672 = vmatprep.subr.bf16.mxu0 %v2421
    %2673 = vmatpush1.bf16.msra.mxu0 %v2420
    %2674 = vmatprep.subr.bf16.mxu0 %v2417
    %2675 = vmatpush1.bf16.msra.mxu0 %v2416
    %2676 = vmatprep.subr.bf16.mxu0 %v2413
    %2677 = vmatpush1.bf16.msra.mxu0 %v2412
    %2678 = vmatprep.subr.bf16.mxu0 %v2409
    %2679 = vmatpush1.bf16.msra.mxu0 %v2408
    %2680 = vmatprep.subr.bf16.mxu0 %v2469
    %2681 = vmatpush2.bf16.msra.mxu0 %v2468
    %2682 = vmatprep.subr.bf16.mxu0 %v2465
    %2683 = vmatpush2.bf16.msra.mxu0 %v2464
    %2684 = vmatprep.subr.bf16.mxu0 %v2461
    %2685 = vmatpush2.bf16.msra.mxu0 %v2460
    %2686 = vmatprep.subr.bf16.mxu0 %v2457
    %2687 = vmatpush2.bf16.msra.mxu0 %v2456
    %2688 = vmatprep.subr.bf16.mxu0 %v2453
    %2689 = vmatpush2.bf16.msra.mxu0 %v2452
    %2690 = vmatprep.subr.bf16.mxu0 %v2449
    %2691 = vmatpush2.bf16.msra.mxu0 %v2448
    %2692 = vmatprep.subr.bf16.mxu0 %v2445
    %2693 = vmatpush2.bf16.msra.mxu0 %v2444
    %2694 = vmatprep.subr.bf16.mxu0 %v2441
    %2695 = vmatpush2.bf16.msra.mxu0 %v2440
    %2696 = vmatprep.mubr.bf16.mxu0 %v1871
    %2697 = vmatmul.mubr.bf16.gmra.mxu0 %v1870
    %v2698 = vpop.f32.mrf.mxu0
    %v2699 = vadd.f32 %v2007, %v2698
    %v2700 = vpop.f32.mrf.mxu0
    %v2701 = vadd.f32 %v2011, %v2700
    %v2702 = vpop.f32.mrf.mxu0
    %v2703 = vpop.f32.mrf.mxu0
    %2704 = vdwg.mxu0
    %2705 = vmatprep.subr.bf16.mxu0 %v2501
    %2706 = vmatpush1.bf16.msra.mxu0 %v2500
    %2707 = vmatprep.subr.bf16.mxu0 %v2497
    %2708 = vmatpush1.bf16.msra.mxu0 %v2496
    %2709 = vmatprep.subr.bf16.mxu0 %v2493
    %2710 = vmatpush1.bf16.msra.mxu0 %v2492
    %2711 = vmatprep.subr.bf16.mxu0 %v2489
    %2712 = vmatpush1.bf16.msra.mxu0 %v2488
    %2713 = vmatprep.subr.bf16.mxu0 %v2485
    %2714 = vmatpush1.bf16.msra.mxu0 %v2484
    %2715 = vmatprep.subr.bf16.mxu0 %v2481
    %2716 = vmatpush1.bf16.msra.mxu0 %v2480
    %2717 = vmatprep.subr.bf16.mxu0 %v2477
    %2718 = vmatpush1.bf16.msra.mxu0 %v2476
    %2719 = vmatprep.subr.bf16.mxu0 %v2473
    %2720 = vmatpush1.bf16.msra.mxu0 %v2472
    %2721 = vmatprep.subr.bf16.mxu0 %v2533
    %2722 = vmatpush2.bf16.msra.mxu0 %v2532
    %2723 = vmatprep.subr.bf16.mxu0 %v2529
    %2724 = vmatpush2.bf16.msra.mxu0 %v2528
    %2725 = vmatprep.subr.bf16.mxu0 %v2525
    %2726 = vmatpush2.bf16.msra.mxu0 %v2524
    %2727 = vmatprep.subr.bf16.mxu0 %v2521
    %2728 = vmatpush2.bf16.msra.mxu0 %v2520
    %2729 = vmatprep.subr.bf16.mxu0 %v2517
    %2730 = vmatpush2.bf16.msra.mxu0 %v2516
    %2731 = vmatprep.subr.bf16.mxu0 %v2513
    %2732 = vmatpush2.bf16.msra.mxu0 %v2512
    %2733 = vmatprep.subr.bf16.mxu0 %v2509
    %2734 = vmatpush2.bf16.msra.mxu0 %v2508
    %2735 = vmatprep.subr.bf16.mxu0 %v2505
    %2736 = vmatpush2.bf16.msra.mxu0 %v2504
    %2737 = vmatprep.mubr.bf16.mxu0 %v1873
    %2738 = vmatmul.mubr.bf16.gmra.mxu0 %v1872
    %v2739 = vpop.f32.mrf.mxu0
    %v2740 = vadd.f32 %v2699, %v2739
    %v2741 = vpop.f32.mrf.mxu0
    %v2742 = vadd.f32 %v2701, %v2741
    %v2743 = vpop.f32.mrf.mxu0
    %v2744 = vpop.f32.mrf.mxu0
    %2745 = vdwg.mxu0
    %2746 = vmatprep.subr.bf16.mxu0 %v2439
    %2747 = vmatpush1.bf16.msra.mxu0 %v2438
    %2748 = vmatprep.subr.bf16.mxu0 %v2435
    %2749 = vmatpush1.bf16.msra.mxu0 %v2434
    %2750 = vmatprep.subr.bf16.mxu0 %v2431
    %2751 = vmatpush1.bf16.msra.mxu0 %v2430
    %2752 = vmatprep.subr.bf16.mxu0 %v2427
    %2753 = vmatpush1.bf16.msra.mxu0 %v2426
    %2754 = vmatprep.subr.bf16.mxu0 %v2423
    %2755 = vmatpush1.bf16.msra.mxu0 %v2422
    %2756 = vmatprep.subr.bf16.mxu0 %v2419
    %2757 = vmatpush1.bf16.msra.mxu0 %v2418
    %2758 = vmatprep.subr.bf16.mxu0 %v2415
    %2759 = vmatpush1.bf16.msra.mxu0 %v2414
    %2760 = vmatprep.subr.bf16.mxu0 %v2411
    %2761 = vmatpush1.bf16.msra.mxu0 %v2410
    %2762 = vmatprep.subr.bf16.mxu0 %v2471
    %2763 = vmatpush2.bf16.msra.mxu0 %v2470
    %2764 = vmatprep.subr.bf16.mxu0 %v2467
    %2765 = vmatpush2.bf16.msra.mxu0 %v2466
    %2766 = vmatprep.subr.bf16.mxu0 %v2463
    %2767 = vmatpush2.bf16.msra.mxu0 %v2462
    %2768 = vmatprep.subr.bf16.mxu0 %v2459
    %2769 = vmatpush2.bf16.msra.mxu0 %v2458
    %2770 = vmatprep.subr.bf16.mxu0 %v2455
    %2771 = vmatpush2.bf16.msra.mxu0 %v2454
    %2772 = vmatprep.subr.bf16.mxu0 %v2451
    %2773 = vmatpush2.bf16.msra.mxu0 %v2450
    %2774 = vmatprep.subr.bf16.mxu0 %v2447
    %2775 = vmatpush2.bf16.msra.mxu0 %v2446
    %2776 = vmatprep.subr.bf16.mxu0 %v2443
    %2777 = vmatpush2.bf16.msra.mxu0 %v2442
    %2778 = vmatprep.mubr.bf16.mxu0 %v1871
    %2779 = vmatmul.mubr.bf16.gmra.mxu0 %v1870
    %v2780 = vpop.f32.mrf.mxu0
    %v2781 = vadd.f32 %v2015, %v2780
    %v2782 = vpop.f32.mrf.mxu0
    %v2783 = vadd.f32 %v2019, %v2782
    %v2784 = vpop.f32.mrf.mxu0
    %v2785 = vpop.f32.mrf.mxu0
    %2786 = vdwg.mxu0
    %2787 = vmatprep.subr.bf16.mxu0 %v2503
    %2788 = vmatpush1.bf16.msra.mxu0 %v2502
    %2789 = vmatprep.subr.bf16.mxu0 %v2499
    %2790 = vmatpush1.bf16.msra.mxu0 %v2498
    %2791 = vmatprep.subr.bf16.mxu0 %v2495
    %2792 = vmatpush1.bf16.msra.mxu0 %v2494
    %2793 = vmatprep.subr.bf16.mxu0 %v2491
    %2794 = vmatpush1.bf16.msra.mxu0 %v2490
    %2795 = vmatprep.subr.bf16.mxu0 %v2487
    %2796 = vmatpush1.bf16.msra.mxu0 %v2486
    %2797 = vmatprep.subr.bf16.mxu0 %v2483
    %2798 = vmatpush1.bf16.msra.mxu0 %v2482
    %2799 = vmatprep.subr.bf16.mxu0 %v2479
    %2800 = vmatpush1.bf16.msra.mxu0 %v2478
    %2801 = vmatprep.subr.bf16.mxu0 %v2475
    %2802 = vmatpush1.bf16.msra.mxu0 %v2474
    %2803 = vmatprep.subr.bf16.mxu0 %v2535
    %2804 = vmatpush2.bf16.msra.mxu0 %v2534
    %2805 = vmatprep.subr.bf16.mxu0 %v2531
    %2806 = vmatpush2.bf16.msra.mxu0 %v2530
    %2807 = vmatprep.subr.bf16.mxu0 %v2527
    %2808 = vmatpush2.bf16.msra.mxu0 %v2526
    %2809 = vmatprep.subr.bf16.mxu0 %v2523
    %2810 = vmatpush2.bf16.msra.mxu0 %v2522
    %2811 = vmatprep.subr.bf16.mxu0 %v2519
    %2812 = vmatpush2.bf16.msra.mxu0 %v2518
    %2813 = vmatprep.subr.bf16.mxu0 %v2515
    %2814 = vmatpush2.bf16.msra.mxu0 %v2514
    %2815 = vmatprep.subr.bf16.mxu0 %v2511
    %2816 = vmatpush2.bf16.msra.mxu0 %v2510
    %2817 = vmatprep.subr.bf16.mxu0 %v2507
    %2818 = vmatpush2.bf16.msra.mxu0 %v2506
    %2819 = vmatprep.mubr.bf16.mxu0 %v1873
    %2820 = vmatmul.mubr.bf16.gmra.mxu0 %v1872
    %v2821 = vpop.f32.mrf.mxu0
    %v2822 = vadd.f32 %v2781, %v2821
    %v2823 = vpop.f32.mrf.mxu0
    %v2824 = vadd.f32 %v2783, %v2823
    %v2825 = vpop.f32.mrf.mxu0
    %v2826 = vpop.f32.mrf.mxu0
    %2827 = vdwg.mxu0
    %v2828 = vmax.f32 %v2740, 0.0
    %v2829 = vmax.f32 %v2742, 0.0
    %v2830 = vmax.f32 %v2822, 0.0
    %v2831 = vmax.f32 %v2824, 0.0
    %v2832 = vpack.c.bf16 %v2828, %v2828
    %v2833 = vpack.c.bf16 %v2829, %v2829
    %v2834 = vpack.c.bf16 %v2830, %v2830
    %v2835 = vpack.c.bf16 %v2831, %v2831
    %v2836 = vld [vmem:[#allocation6] sm:$0xff]
    %v2837 = vld [vmem:[#allocation6 + $0x8] sm:$0xff]
    %v2838 = vld [vmem:[#allocation6 + $0x10] sm:$0xff]
    %v2839 = vld [vmem:[#allocation6 + $0x18] sm:$0xff]
    %v2840 = vld [vmem:[#allocation6 + $0x20] sm:$0xff]
    %v2841 = vld [vmem:[#allocation6 + $0x28] sm:$0xff]
    %v2842 = vld [vmem:[#allocation6 + $0x30] sm:$0xff]
    %v2843 = vld [vmem:[#allocation6 + $0x38] sm:$0xff]
    %v2844 = vld [vmem:[#allocation6 + $0x40] sm:$0xff]
    %v2845 = vld [vmem:[#allocation6 + $0x48] sm:$0xff]
    %v2846 = vld [vmem:[#allocation6 + $0x50] sm:$0xff]
    %v2847 = vld [vmem:[#allocation6 + $0x58] sm:$0xff]
    %v2848 = vld [vmem:[#allocation6 + $0x60] sm:$0xff]
    %v2849 = vld [vmem:[#allocation6 + $0x68] sm:$0xff]
    %v2850 = vld [vmem:[#allocation6 + $0x70] sm:$0xff]
    %v2851 = vld [vmem:[#allocation6 + $0x78] sm:$0xff]
    %v2852 = vld [vmem:[#allocation6 + $0x80] sm:$0xff]
    %v2853 = vld [vmem:[#allocation6 + $0x88] sm:$0xff]
    %v2854 = vld [vmem:[#allocation6 + $0x90] sm:$0xff]
    %v2855 = vld [vmem:[#allocation6 + $0x98] sm:$0xff]
    %v2856 = vld [vmem:[#allocation6 + $0xa0] sm:$0xff]
    %v2857 = vld [vmem:[#allocation6 + $0xa8] sm:$0xff]
    %v2858 = vld [vmem:[#allocation6 + $0xb0] sm:$0xff]
    %v2859 = vld [vmem:[#allocation6 + $0xb8] sm:$0xff]
    %v2860 = vld [vmem:[#allocation6 + $0xc0] sm:$0xff]
    %v2861 = vld [vmem:[#allocation6 + $0xc8] sm:$0xff]
    %v2862 = vld [vmem:[#allocation6 + $0xd0] sm:$0xff]
    %v2863 = vld [vmem:[#allocation6 + $0xd8] sm:$0xff]
    %v2864 = vld [vmem:[#allocation6 + $0xe0] sm:$0xff]
    %v2865 = vld [vmem:[#allocation6 + $0xe8] sm:$0xff]
    %v2866 = vld [vmem:[#allocation6 + $0xf0] sm:$0xff]
    %v2867 = vld [vmem:[#allocation6 + $0xf8] sm:$0xff]
    %v2868 = vld [vmem:[#allocation6 + $0x100] sm:$0xff]
    %v2869 = vld [vmem:[#allocation6 + $0x108] sm:$0xff]
    %v2870 = vld [vmem:[#allocation6 + $0x110] sm:$0xff]
    %v2871 = vld [vmem:[#allocation6 + $0x118] sm:$0xff]
    %v2872 = vld [vmem:[#allocation6 + $0x120] sm:$0xff]
    %v2873 = vld [vmem:[#allocation6 + $0x128] sm:$0xff]
    %v2874 = vld [vmem:[#allocation6 + $0x130] sm:$0xff]
    %v2875 = vld [vmem:[#allocation6 + $0x138] sm:$0xff]
    %v2876 = vld [vmem:[#allocation6 + $0x140] sm:$0xff]
    %v2877 = vld [vmem:[#allocation6 + $0x148] sm:$0xff]
    %v2878 = vld [vmem:[#allocation6 + $0x150] sm:$0xff]
    %v2879 = vld [vmem:[#allocation6 + $0x158] sm:$0xff]
    %v2880 = vld [vmem:[#allocation6 + $0x160] sm:$0xff]
    %v2881 = vld [vmem:[#allocation6 + $0x168] sm:$0xff]
    %v2882 = vld [vmem:[#allocation6 + $0x170] sm:$0xff]
    %v2883 = vld [vmem:[#allocation6 + $0x178] sm:$0xff]
    %v2884 = vld [vmem:[#allocation6 + $0x180] sm:$0xff]
    %v2885 = vld [vmem:[#allocation6 + $0x188] sm:$0xff]
    %v2886 = vld [vmem:[#allocation6 + $0x190] sm:$0xff]
    %v2887 = vld [vmem:[#allocation6 + $0x198] sm:$0xff]
    %v2888 = vld [vmem:[#allocation6 + $0x1a0] sm:$0xff]
    %v2889 = vld [vmem:[#allocation6 + $0x1a8] sm:$0xff]
    %v2890 = vld [vmem:[#allocation6 + $0x1b0] sm:$0xff]
    %v2891 = vld [vmem:[#allocation6 + $0x1b8] sm:$0xff]
    %v2892 = vld [vmem:[#allocation6 + $0x1c0] sm:$0xff]
    %v2893 = vld [vmem:[#allocation6 + $0x1c8] sm:$0xff]
    %v2894 = vld [vmem:[#allocation6 + $0x1d0] sm:$0xff]
    %v2895 = vld [vmem:[#allocation6 + $0x1d8] sm:$0xff]
    %v2896 = vld [vmem:[#allocation6 + $0x1e0] sm:$0xff]
    %v2897 = vld [vmem:[#allocation6 + $0x1e8] sm:$0xff]
    %v2898 = vld [vmem:[#allocation6 + $0x1f0] sm:$0xff]
    %v2899 = vld [vmem:[#allocation6 + $0x1f8] sm:$0xff]
    %v2900 = vld [vmem:[#allocation6 + $0x200] sm:$0xff]
    %v2901 = vld [vmem:[#allocation6 + $0x208] sm:$0xff]
    %v2902 = vld [vmem:[#allocation6 + $0x210] sm:$0xff]
    %v2903 = vld [vmem:[#allocation6 + $0x218] sm:$0xff]
    %v2904 = vld [vmem:[#allocation6 + $0x220] sm:$0xff]
    %v2905 = vld [vmem:[#allocation6 + $0x228] sm:$0xff]
    %v2906 = vld [vmem:[#allocation6 + $0x230] sm:$0xff]
    %v2907 = vld [vmem:[#allocation6 + $0x238] sm:$0xff]
    %v2908 = vld [vmem:[#allocation6 + $0x240] sm:$0xff]
    %v2909 = vld [vmem:[#allocation6 + $0x248] sm:$0xff]
    %v2910 = vld [vmem:[#allocation6 + $0x250] sm:$0xff]
    %v2911 = vld [vmem:[#allocation6 + $0x258] sm:$0xff]
    %v2912 = vld [vmem:[#allocation6 + $0x260] sm:$0xff]
    %v2913 = vld [vmem:[#allocation6 + $0x268] sm:$0xff]
    %v2914 = vld [vmem:[#allocation6 + $0x270] sm:$0xff]
    %v2915 = vld [vmem:[#allocation6 + $0x278] sm:$0xff]
    %v2916 = vld [vmem:[#allocation6 + $0x280] sm:$0xff]
    %v2917 = vld [vmem:[#allocation6 + $0x288] sm:$0xff]
    %v2918 = vld [vmem:[#allocation6 + $0x290] sm:$0xff]
    %v2919 = vld [vmem:[#allocation6 + $0x298] sm:$0xff]
    %v2920 = vld [vmem:[#allocation6 + $0x2a0] sm:$0xff]
    %v2921 = vld [vmem:[#allocation6 + $0x2a8] sm:$0xff]
    %v2922 = vld [vmem:[#allocation6 + $0x2b0] sm:$0xff]
    %v2923 = vld [vmem:[#allocation6 + $0x2b8] sm:$0xff]
    %v2924 = vld [vmem:[#allocation6 + $0x2c0] sm:$0xff]
    %v2925 = vld [vmem:[#allocation6 + $0x2c8] sm:$0xff]
    %v2926 = vld [vmem:[#allocation6 + $0x2d0] sm:$0xff]
    %v2927 = vld [vmem:[#allocation6 + $0x2d8] sm:$0xff]
    %v2928 = vld [vmem:[#allocation6 + $0x2e0] sm:$0xff]
    %v2929 = vld [vmem:[#allocation6 + $0x2e8] sm:$0xff]
    %v2930 = vld [vmem:[#allocation6 + $0x2f0] sm:$0xff]
    %v2931 = vld [vmem:[#allocation6 + $0x2f8] sm:$0xff]
    %v2932 = vld [vmem:[#allocation6 + $0x300] sm:$0xff]
    %v2933 = vld [vmem:[#allocation6 + $0x308] sm:$0xff]
    %v2934 = vld [vmem:[#allocation6 + $0x310] sm:$0xff]
    %v2935 = vld [vmem:[#allocation6 + $0x318] sm:$0xff]
    %v2936 = vld [vmem:[#allocation6 + $0x320] sm:$0xff]
    %v2937 = vld [vmem:[#allocation6 + $0x328] sm:$0xff]
    %v2938 = vld [vmem:[#allocation6 + $0x330] sm:$0xff]
    %v2939 = vld [vmem:[#allocation6 + $0x338] sm:$0xff]
    %v2940 = vld [vmem:[#allocation6 + $0x340] sm:$0xff]
    %v2941 = vld [vmem:[#allocation6 + $0x348] sm:$0xff]
    %v2942 = vld [vmem:[#allocation6 + $0x350] sm:$0xff]
    %v2943 = vld [vmem:[#allocation6 + $0x358] sm:$0xff]
    %v2944 = vld [vmem:[#allocation6 + $0x360] sm:$0xff]
    %v2945 = vld [vmem:[#allocation6 + $0x368] sm:$0xff]
    %v2946 = vld [vmem:[#allocation6 + $0x370] sm:$0xff]
    %v2947 = vld [vmem:[#allocation6 + $0x378] sm:$0xff]
    %v2948 = vld [vmem:[#allocation6 + $0x380] sm:$0xff]
    %v2949 = vld [vmem:[#allocation6 + $0x388] sm:$0xff]
    %v2950 = vld [vmem:[#allocation6 + $0x390] sm:$0xff]
    %v2951 = vld [vmem:[#allocation6 + $0x398] sm:$0xff]
    %v2952 = vld [vmem:[#allocation6 + $0x3a0] sm:$0xff]
    %v2953 = vld [vmem:[#allocation6 + $0x3a8] sm:$0xff]
    %v2954 = vld [vmem:[#allocation6 + $0x3b0] sm:$0xff]
    %v2955 = vld [vmem:[#allocation6 + $0x3b8] sm:$0xff]
    %v2956 = vld [vmem:[#allocation6 + $0x3c0] sm:$0xff]
    %v2957 = vld [vmem:[#allocation6 + $0x3c8] sm:$0xff]
    %v2958 = vld [vmem:[#allocation6 + $0x3d0] sm:$0xff]
    %v2959 = vld [vmem:[#allocation6 + $0x3d8] sm:$0xff]
    %v2960 = vld [vmem:[#allocation6 + $0x3e0] sm:$0xff]
    %v2961 = vld [vmem:[#allocation6 + $0x3e8] sm:$0xff]
    %v2962 = vld [vmem:[#allocation6 + $0x3f0] sm:$0xff]
    %v2963 = vld [vmem:[#allocation6 + $0x3f8] sm:$0xff]
    %v2964 = vld [vmem:[%s7] sm:$0xf]
    %v2966 = vlaneseq
    %v2967 = vshrl.u32 %v2966, 7
    %v2968 = vsub.s32 0, %v2967
    %v2969 = vrot.slane %v2964, %v2968
    %v2970 = vlaneseq
    %v2971 = vshrl.u32 %v2970, 7
    %v2972 = vsub.s32 1, %v2971
    %v2973 = vrot.slane %v2964, %v2972
    %v2974 = vlaneseq
    %v2975 = vshrl.u32 %v2974, 7
    %v2976 = vsub.s32 2, %v2975
    %v2977 = vrot.slane %v2964, %v2976
    %v2978 = vlaneseq
    %v2979 = vshrl.u32 %v2978, 7
    %v2980 = vsub.s32 3, %v2979
    %v2981 = vrot.slane %v2964, %v2980
    %v3114 = vunpack.c.l.b16 %v2836
    %v3115 = vunpack.c.h.b16 %v2836
    %v3116 = vunpack.c.l.b16 %v2837
    %v3117 = vunpack.c.h.b16 %v2837
    %v3118 = vunpack.c.l.b16 %v2838
    %v3119 = vunpack.c.h.b16 %v2838
    %v3120 = vunpack.c.l.b16 %v2839
    %v3121 = vunpack.c.h.b16 %v2839
    %v3122 = vunpack.c.l.b16 %v2840
    %v3123 = vunpack.c.h.b16 %v2840
    %v3124 = vunpack.c.l.b16 %v2841
    %v3125 = vunpack.c.h.b16 %v2841
    %v3126 = vunpack.c.l.b16 %v2842
    %v3127 = vunpack.c.h.b16 %v2842
    %v3128 = vunpack.c.l.b16 %v2843
    %v3129 = vunpack.c.h.b16 %v2843
    %v3130 = vunpack.c.l.b16 %v2844
    %v3131 = vunpack.c.h.b16 %v2844
    %v3132 = vunpack.c.l.b16 %v2845
    %v3133 = vunpack.c.h.b16 %v2845
    %v3134 = vunpack.c.l.b16 %v2846
    %v3135 = vunpack.c.h.b16 %v2846
    %v3136 = vunpack.c.l.b16 %v2847
    %v3137 = vunpack.c.h.b16 %v2847
    %v3138 = vunpack.c.l.b16 %v2848
    %v3139 = vunpack.c.h.b16 %v2848
    %v3140 = vunpack.c.l.b16 %v2849
    %v3141 = vunpack.c.h.b16 %v2849
    %v3142 = vunpack.c.l.b16 %v2850
    %v3143 = vunpack.c.h.b16 %v2850
    %v3144 = vunpack.c.l.b16 %v2851
    %v3145 = vunpack.c.h.b16 %v2851
    %v3146 = vunpack.c.l.b16 %v2852
    %v3147 = vunpack.c.h.b16 %v2852
    %v3148 = vunpack.c.l.b16 %v2853
    %v3149 = vunpack.c.h.b16 %v2853
    %v3150 = vunpack.c.l.b16 %v2854
    %v3151 = vunpack.c.h.b16 %v2854
    %v3152 = vunpack.c.l.b16 %v2855
    %v3153 = vunpack.c.h.b16 %v2855
    %v3154 = vunpack.c.l.b16 %v2856
    %v3155 = vunpack.c.h.b16 %v2856
    %v3156 = vunpack.c.l.b16 %v2857
    %v3157 = vunpack.c.h.b16 %v2857
    %v3158 = vunpack.c.l.b16 %v2858
    %v3159 = vunpack.c.h.b16 %v2858
    %v3160 = vunpack.c.l.b16 %v2859
    %v3161 = vunpack.c.h.b16 %v2859
    %v3162 = vunpack.c.l.b16 %v2860
    %v3163 = vunpack.c.h.b16 %v2860
    %v3164 = vunpack.c.l.b16 %v2861
    %v3165 = vunpack.c.h.b16 %v2861
    %v3166 = vunpack.c.l.b16 %v2862
    %v3167 = vunpack.c.h.b16 %v2862
    %v3168 = vunpack.c.l.b16 %v2863
    %v3169 = vunpack.c.h.b16 %v2863
    %v3170 = vunpack.c.l.b16 %v2864
    %v3171 = vunpack.c.h.b16 %v2864
    %v3172 = vunpack.c.l.b16 %v2865
    %v3173 = vunpack.c.h.b16 %v2865
    %v3174 = vunpack.c.l.b16 %v2866
    %v3175 = vunpack.c.h.b16 %v2866
    %v3176 = vunpack.c.l.b16 %v2867
    %v3177 = vunpack.c.h.b16 %v2867
    %v3178 = vunpack.c.l.b16 %v2868
    %v3179 = vunpack.c.h.b16 %v2868
    %v3180 = vunpack.c.l.b16 %v2869
    %v3181 = vunpack.c.h.b16 %v2869
    %v3182 = vunpack.c.l.b16 %v2870
    %v3183 = vunpack.c.h.b16 %v2870
    %v3184 = vunpack.c.l.b16 %v2871
    %v3185 = vunpack.c.h.b16 %v2871
    %v3186 = vunpack.c.l.b16 %v2872
    %v3187 = vunpack.c.h.b16 %v2872
    %v3188 = vunpack.c.l.b16 %v2873
    %v3189 = vunpack.c.h.b16 %v2873
    %v3190 = vunpack.c.l.b16 %v2874
    %v3191 = vunpack.c.h.b16 %v2874
    %v3192 = vunpack.c.l.b16 %v2875
    %v3193 = vunpack.c.h.b16 %v2875
    %v3194 = vunpack.c.l.b16 %v2876
    %v3195 = vunpack.c.h.b16 %v2876
    %v3196 = vunpack.c.l.b16 %v2877
    %v3197 = vunpack.c.h.b16 %v2877
    %v3198 = vunpack.c.l.b16 %v2878
    %v3199 = vunpack.c.h.b16 %v2878
    %v3200 = vunpack.c.l.b16 %v2879
    %v3201 = vunpack.c.h.b16 %v2879
    %v3202 = vunpack.c.l.b16 %v2880
    %v3203 = vunpack.c.h.b16 %v2880
    %v3204 = vunpack.c.l.b16 %v2881
    %v3205 = vunpack.c.h.b16 %v2881
    %v3206 = vunpack.c.l.b16 %v2882
    %v3207 = vunpack.c.h.b16 %v2882
    %v3208 = vunpack.c.l.b16 %v2883
    %v3209 = vunpack.c.h.b16 %v2883
    %v3210 = vunpack.c.l.b16 %v2884
    %v3211 = vunpack.c.h.b16 %v2884
    %v3212 = vunpack.c.l.b16 %v2885
    %v3213 = vunpack.c.h.b16 %v2885
    %v3214 = vunpack.c.l.b16 %v2886
    %v3215 = vunpack.c.h.b16 %v2886
    %v3216 = vunpack.c.l.b16 %v2887
    %v3217 = vunpack.c.h.b16 %v2887
    %v3218 = vunpack.c.l.b16 %v2888
    %v3219 = vunpack.c.h.b16 %v2888
    %v3220 = vunpack.c.l.b16 %v2889
    %v3221 = vunpack.c.h.b16 %v2889
    %v3222 = vunpack.c.l.b16 %v2890
    %v3223 = vunpack.c.h.b16 %v2890
    %v3224 = vunpack.c.l.b16 %v2891
    %v3225 = vunpack.c.h.b16 %v2891
    %v3226 = vunpack.c.l.b16 %v2892
    %v3227 = vunpack.c.h.b16 %v2892
    %v3228 = vunpack.c.l.b16 %v2893
    %v3229 = vunpack.c.h.b16 %v2893
    %v3230 = vunpack.c.l.b16 %v2894
    %v3231 = vunpack.c.h.b16 %v2894
    %v3232 = vunpack.c.l.b16 %v2895
    %v3233 = vunpack.c.h.b16 %v2895
    %v3234 = vunpack.c.l.b16 %v2896
    %v3235 = vunpack.c.h.b16 %v2896
    %v3236 = vunpack.c.l.b16 %v2897
    %v3237 = vunpack.c.h.b16 %v2897
    %v3238 = vunpack.c.l.b16 %v2898
    %v3239 = vunpack.c.h.b16 %v2898
    %v3240 = vunpack.c.l.b16 %v2899
    %v3241 = vunpack.c.h.b16 %v2899
    %v3242 = vunpack.c.l.b16 %v2900
    %v3243 = vunpack.c.h.b16 %v2900
    %v3244 = vunpack.c.l.b16 %v2901
    %v3245 = vunpack.c.h.b16 %v2901
    %v3246 = vunpack.c.l.b16 %v2902
    %v3247 = vunpack.c.h.b16 %v2902
    %v3248 = vunpack.c.l.b16 %v2903
    %v3249 = vunpack.c.h.b16 %v2903
    %v3250 = vunpack.c.l.b16 %v2904
    %v3251 = vunpack.c.h.b16 %v2904
    %v3252 = vunpack.c.l.b16 %v2905
    %v3253 = vunpack.c.h.b16 %v2905
    %v3254 = vunpack.c.l.b16 %v2906
    %v3255 = vunpack.c.h.b16 %v2906
    %v3256 = vunpack.c.l.b16 %v2907
    %v3257 = vunpack.c.h.b16 %v2907
    %v3258 = vunpack.c.l.b16 %v2908
    %v3259 = vunpack.c.h.b16 %v2908
    %v3260 = vunpack.c.l.b16 %v2909
    %v3261 = vunpack.c.h.b16 %v2909
    %v3262 = vunpack.c.l.b16 %v2910
    %v3263 = vunpack.c.h.b16 %v2910
    %v3264 = vunpack.c.l.b16 %v2911
    %v3265 = vunpack.c.h.b16 %v2911
    %v3266 = vunpack.c.l.b16 %v2912
    %v3267 = vunpack.c.h.b16 %v2912
    %v3268 = vunpack.c.l.b16 %v2913
    %v3269 = vunpack.c.h.b16 %v2913
    %v3270 = vunpack.c.l.b16 %v2914
    %v3271 = vunpack.c.h.b16 %v2914
    %v3272 = vunpack.c.l.b16 %v2915
    %v3273 = vunpack.c.h.b16 %v2915
    %v3274 = vunpack.c.l.b16 %v2916
    %v3275 = vunpack.c.h.b16 %v2916
    %v3276 = vunpack.c.l.b16 %v2917
    %v3277 = vunpack.c.h.b16 %v2917
    %v3278 = vunpack.c.l.b16 %v2918
    %v3279 = vunpack.c.h.b16 %v2918
    %v3280 = vunpack.c.l.b16 %v2919
    %v3281 = vunpack.c.h.b16 %v2919
    %v3282 = vunpack.c.l.b16 %v2920
    %v3283 = vunpack.c.h.b16 %v2920
    %v3284 = vunpack.c.l.b16 %v2921
    %v3285 = vunpack.c.h.b16 %v2921
    %v3286 = vunpack.c.l.b16 %v2922
    %v3287 = vunpack.c.h.b16 %v2922
    %v3288 = vunpack.c.l.b16 %v2923
    %v3289 = vunpack.c.h.b16 %v2923
    %v3290 = vunpack.c.l.b16 %v2924
    %v3291 = vunpack.c.h.b16 %v2924
    %v3292 = vunpack.c.l.b16 %v2925
    %v3293 = vunpack.c.h.b16 %v2925
    %v3294 = vunpack.c.l.b16 %v2926
    %v3295 = vunpack.c.h.b16 %v2926
    %v3296 = vunpack.c.l.b16 %v2927
    %v3297 = vunpack.c.h.b16 %v2927
    %v3298 = vunpack.c.l.b16 %v2928
    %v3299 = vunpack.c.h.b16 %v2928
    %v3300 = vunpack.c.l.b16 %v2929
    %v3301 = vunpack.c.h.b16 %v2929
    %v3302 = vunpack.c.l.b16 %v2930
    %v3303 = vunpack.c.h.b16 %v2930
    %v3304 = vunpack.c.l.b16 %v2931
    %v3305 = vunpack.c.h.b16 %v2931
    %v3306 = vunpack.c.l.b16 %v2932
    %v3307 = vunpack.c.h.b16 %v2932
    %v3308 = vunpack.c.l.b16 %v2933
    %v3309 = vunpack.c.h.b16 %v2933
    %v3310 = vunpack.c.l.b16 %v2934
    %v3311 = vunpack.c.h.b16 %v2934
    %v3312 = vunpack.c.l.b16 %v2935
    %v3313 = vunpack.c.h.b16 %v2935
    %v3314 = vunpack.c.l.b16 %v2936
    %v3315 = vunpack.c.h.b16 %v2936
    %v3316 = vunpack.c.l.b16 %v2937
    %v3317 = vunpack.c.h.b16 %v2937
    %v3318 = vunpack.c.l.b16 %v2938
    %v3319 = vunpack.c.h.b16 %v2938
    %v3320 = vunpack.c.l.b16 %v2939
    %v3321 = vunpack.c.h.b16 %v2939
    %v3322 = vunpack.c.l.b16 %v2940
    %v3323 = vunpack.c.h.b16 %v2940
    %v3324 = vunpack.c.l.b16 %v2941
    %v3325 = vunpack.c.h.b16 %v2941
    %v3326 = vunpack.c.l.b16 %v2942
    %v3327 = vunpack.c.h.b16 %v2942
    %v3328 = vunpack.c.l.b16 %v2943
    %v3329 = vunpack.c.h.b16 %v2943
    %v3330 = vunpack.c.l.b16 %v2944
    %v3331 = vunpack.c.h.b16 %v2944
    %v3332 = vunpack.c.l.b16 %v2945
    %v3333 = vunpack.c.h.b16 %v2945
    %v3334 = vunpack.c.l.b16 %v2946
    %v3335 = vunpack.c.h.b16 %v2946
    %v3336 = vunpack.c.l.b16 %v2947
    %v3337 = vunpack.c.h.b16 %v2947
    %v3338 = vunpack.c.l.b16 %v2948
    %v3339 = vunpack.c.h.b16 %v2948
    %v3340 = vunpack.c.l.b16 %v2949
    %v3341 = vunpack.c.h.b16 %v2949
    %v3342 = vunpack.c.l.b16 %v2950
    %v3343 = vunpack.c.h.b16 %v2950
    %v3344 = vunpack.c.l.b16 %v2951
    %v3345 = vunpack.c.h.b16 %v2951
    %v3346 = vunpack.c.l.b16 %v2952
    %v3347 = vunpack.c.h.b16 %v2952
    %v3348 = vunpack.c.l.b16 %v2953
    %v3349 = vunpack.c.h.b16 %v2953
    %v3350 = vunpack.c.l.b16 %v2954
    %v3351 = vunpack.c.h.b16 %v2954
    %v3352 = vunpack.c.l.b16 %v2955
    %v3353 = vunpack.c.h.b16 %v2955
    %v3354 = vunpack.c.l.b16 %v2956
    %v3355 = vunpack.c.h.b16 %v2956
    %v3356 = vunpack.c.l.b16 %v2957
    %v3357 = vunpack.c.h.b16 %v2957
    %v3358 = vunpack.c.l.b16 %v2958
    %v3359 = vunpack.c.h.b16 %v2958
    %v3360 = vunpack.c.l.b16 %v2959
    %v3361 = vunpack.c.h.b16 %v2959
    %v3362 = vunpack.c.l.b16 %v2960
    %v3363 = vunpack.c.h.b16 %v2960
    %v3364 = vunpack.c.l.b16 %v2961
    %v3365 = vunpack.c.h.b16 %v2961
    %v3366 = vunpack.c.l.b16 %v2962
    %v3367 = vunpack.c.h.b16 %v2962
    %v3368 = vunpack.c.l.b16 %v2963
    %v3369 = vunpack.c.h.b16 %v2963
    %v3370 = vpack.c.b16 %v3118, %v3114
    %v3371 = vpack.c.b16 %v3119, %v3115
    %v3372 = vpack.c.b16 %v3120, %v3116
    %v3373 = vpack.c.b16 %v3121, %v3117
    %v3374 = vpack.c.b16 %v3126, %v3122
    %v3375 = vpack.c.b16 %v3127, %v3123
    %v3376 = vpack.c.b16 %v3128, %v3124
    %v3377 = vpack.c.b16 %v3129, %v3125
    %v3378 = vpack.c.b16 %v3134, %v3130
    %v3379 = vpack.c.b16 %v3135, %v3131
    %v3380 = vpack.c.b16 %v3136, %v3132
    %v3381 = vpack.c.b16 %v3137, %v3133
    %v3382 = vpack.c.b16 %v3142, %v3138
    %v3383 = vpack.c.b16 %v3143, %v3139
    %v3384 = vpack.c.b16 %v3144, %v3140
    %v3385 = vpack.c.b16 %v3145, %v3141
    %v3386 = vpack.c.b16 %v3150, %v3146
    %v3387 = vpack.c.b16 %v3151, %v3147
    %v3388 = vpack.c.b16 %v3152, %v3148
    %v3389 = vpack.c.b16 %v3153, %v3149
    %v3390 = vpack.c.b16 %v3158, %v3154
    %v3391 = vpack.c.b16 %v3159, %v3155
    %v3392 = vpack.c.b16 %v3160, %v3156
    %v3393 = vpack.c.b16 %v3161, %v3157
    %v3394 = vpack.c.b16 %v3166, %v3162
    %v3395 = vpack.c.b16 %v3167, %v3163
    %v3396 = vpack.c.b16 %v3168, %v3164
    %v3397 = vpack.c.b16 %v3169, %v3165
    %v3398 = vpack.c.b16 %v3174, %v3170
    %v3399 = vpack.c.b16 %v3175, %v3171
    %v3400 = vpack.c.b16 %v3176, %v3172
    %v3401 = vpack.c.b16 %v3177, %v3173
    %v3402 = vpack.c.b16 %v3182, %v3178
    %v3403 = vpack.c.b16 %v3183, %v3179
    %v3404 = vpack.c.b16 %v3184, %v3180
    %v3405 = vpack.c.b16 %v3185, %v3181
    %v3406 = vpack.c.b16 %v3190, %v3186
    %v3407 = vpack.c.b16 %v3191, %v3187
    %v3408 = vpack.c.b16 %v3192, %v3188
    %v3409 = vpack.c.b16 %v3193, %v3189
    %v3410 = vpack.c.b16 %v3198, %v3194
    %v3411 = vpack.c.b16 %v3199, %v3195
    %v3412 = vpack.c.b16 %v3200, %v3196
    %v3413 = vpack.c.b16 %v3201, %v3197
    %v3414 = vpack.c.b16 %v3206, %v3202
    %v3415 = vpack.c.b16 %v3207, %v3203
    %v3416 = vpack.c.b16 %v3208, %v3204
    %v3417 = vpack.c.b16 %v3209, %v3205
    %v3418 = vpack.c.b16 %v3214, %v3210
    %v3419 = vpack.c.b16 %v3215, %v3211
    %v3420 = vpack.c.b16 %v3216, %v3212
    %v3421 = vpack.c.b16 %v3217, %v3213
    %v3422 = vpack.c.b16 %v3222, %v3218
    %v3423 = vpack.c.b16 %v3223, %v3219
    %v3424 = vpack.c.b16 %v3224, %v3220
    %v3425 = vpack.c.b16 %v3225, %v3221
    %v3426 = vpack.c.b16 %v3230, %v3226
    %v3427 = vpack.c.b16 %v3231, %v3227
    %v3428 = vpack.c.b16 %v3232, %v3228
    %v3429 = vpack.c.b16 %v3233, %v3229
    %v3430 = vpack.c.b16 %v3238, %v3234
    %v3431 = vpack.c.b16 %v3239, %v3235
    %v3432 = vpack.c.b16 %v3240, %v3236
    %v3433 = vpack.c.b16 %v3241, %v3237
    %v3434 = vpack.c.b16 %v3246, %v3242
    %v3435 = vpack.c.b16 %v3247, %v3243
    %v3436 = vpack.c.b16 %v3248, %v3244
    %v3437 = vpack.c.b16 %v3249, %v3245
    %v3438 = vpack.c.b16 %v3254, %v3250
    %v3439 = vpack.c.b16 %v3255, %v3251
    %v3440 = vpack.c.b16 %v3256, %v3252
    %v3441 = vpack.c.b16 %v3257, %v3253
    %v3442 = vpack.c.b16 %v3262, %v3258
    %v3443 = vpack.c.b16 %v3263, %v3259
    %v3444 = vpack.c.b16 %v3264, %v3260
    %v3445 = vpack.c.b16 %v3265, %v3261
    %v3446 = vpack.c.b16 %v3270, %v3266
    %v3447 = vpack.c.b16 %v3271, %v3267
    %v3448 = vpack.c.b16 %v3272, %v3268
    %v3449 = vpack.c.b16 %v3273, %v3269
    %v3450 = vpack.c.b16 %v3278, %v3274
    %v3451 = vpack.c.b16 %v3279, %v3275
    %v3452 = vpack.c.b16 %v3280, %v3276
    %v3453 = vpack.c.b16 %v3281, %v3277
    %v3454 = vpack.c.b16 %v3286, %v3282
    %v3455 = vpack.c.b16 %v3287, %v3283
    %v3456 = vpack.c.b16 %v3288, %v3284
    %v3457 = vpack.c.b16 %v3289, %v3285
    %v3458 = vpack.c.b16 %v3294, %v3290
    %v3459 = vpack.c.b16 %v3295, %v3291
    %v3460 = vpack.c.b16 %v3296, %v3292
    %v3461 = vpack.c.b16 %v3297, %v3293
    %v3462 = vpack.c.b16 %v3302, %v3298
    %v3463 = vpack.c.b16 %v3303, %v3299
    %v3464 = vpack.c.b16 %v3304, %v3300
    %v3465 = vpack.c.b16 %v3305, %v3301
    %v3466 = vpack.c.b16 %v3310, %v3306
    %v3467 = vpack.c.b16 %v3311, %v3307
    %v3468 = vpack.c.b16 %v3312, %v3308
    %v3469 = vpack.c.b16 %v3313, %v3309
    %v3470 = vpack.c.b16 %v3318, %v3314
    %v3471 = vpack.c.b16 %v3319, %v3315
    %v3472 = vpack.c.b16 %v3320, %v3316
    %v3473 = vpack.c.b16 %v3321, %v3317
    %v3474 = vpack.c.b16 %v3326, %v3322
    %v3475 = vpack.c.b16 %v3327, %v3323
    %v3476 = vpack.c.b16 %v3328, %v3324
    %v3477 = vpack.c.b16 %v3329, %v3325
    %v3478 = vpack.c.b16 %v3334, %v3330
    %v3479 = vpack.c.b16 %v3335, %v3331
    %v3480 = vpack.c.b16 %v3336, %v3332
    %v3481 = vpack.c.b16 %v3337, %v3333
    %v3482 = vpack.c.b16 %v3342, %v3338
    %v3483 = vpack.c.b16 %v3343, %v3339
    %v3484 = vpack.c.b16 %v3344, %v3340
    %v3485 = vpack.c.b16 %v3345, %v3341
    %v3486 = vpack.c.b16 %v3350, %v3346
    %v3487 = vpack.c.b16 %v3351, %v3347
    %v3488 = vpack.c.b16 %v3352, %v3348
    %v3489 = vpack.c.b16 %v3353, %v3349
    %v3490 = vpack.c.b16 %v3358, %v3354
    %v3491 = vpack.c.b16 %v3359, %v3355
    %v3492 = vpack.c.b16 %v3360, %v3356
    %v3493 = vpack.c.b16 %v3361, %v3357
    %v3494 = vpack.c.b16 %v3366, %v3362
    %v3495 = vpack.c.b16 %v3367, %v3363
    %v3496 = vpack.c.b16 %v3368, %v3364
    %v3497 = vpack.c.b16 %v3369, %v3365
    %3626 = vmatprep.subr.bf16.mxu0 %v3399
    %3627 = vmatpush1.bf16.msra.mxu0 %v3398
    %3628 = vmatprep.subr.bf16.mxu0 %v3395
    %3629 = vmatpush1.bf16.msra.mxu0 %v3394
    %3630 = vmatprep.subr.bf16.mxu0 %v3391
    %3631 = vmatpush1.bf16.msra.mxu0 %v3390
    %3632 = vmatprep.subr.bf16.mxu0 %v3387
    %3633 = vmatpush1.bf16.msra.mxu0 %v3386
    %3634 = vmatprep.subr.bf16.mxu0 %v3383
    %3635 = vmatpush1.bf16.msra.mxu0 %v3382
    %3636 = vmatprep.subr.bf16.mxu0 %v3379
    %3637 = vmatpush1.bf16.msra.mxu0 %v3378
    %3638 = vmatprep.subr.bf16.mxu0 %v3375
    %3639 = vmatpush1.bf16.msra.mxu0 %v3374
    %3640 = vmatprep.subr.bf16.mxu0 %v3371
    %3641 = vmatpush1.bf16.msra.mxu0 %v3370
    %3642 = vmatprep.subr.bf16.mxu0 %v3431
    %3643 = vmatpush2.bf16.msra.mxu0 %v3430
    %3644 = vmatprep.subr.bf16.mxu0 %v3427
    %3645 = vmatpush2.bf16.msra.mxu0 %v3426
    %3646 = vmatprep.subr.bf16.mxu0 %v3423
    %3647 = vmatpush2.bf16.msra.mxu0 %v3422
    %3648 = vmatprep.subr.bf16.mxu0 %v3419
    %3649 = vmatpush2.bf16.msra.mxu0 %v3418
    %3650 = vmatprep.subr.bf16.mxu0 %v3415
    %3651 = vmatpush2.bf16.msra.mxu0 %v3414
    %3652 = vmatprep.subr.bf16.mxu0 %v3411
    %3653 = vmatpush2.bf16.msra.mxu0 %v3410
    %3654 = vmatprep.subr.bf16.mxu0 %v3407
    %3655 = vmatpush2.bf16.msra.mxu0 %v3406
    %3656 = vmatprep.subr.bf16.mxu0 %v3403
    %3657 = vmatpush2.bf16.msra.mxu0 %v3402
    %3658 = vmatprep.mubr.bf16.mxu0 %v2833
    %3659 = vmatmul.mubr.bf16.gmra.mxu0 %v2832
    %v3660 = vpop.f32.mrf.mxu0
    %v3661 = vadd.f32 %v2969, %v3660
    %v3662 = vpop.f32.mrf.mxu0
    %v3663 = vadd.f32 %v2973, %v3662
    %v3664 = vpop.f32.mrf.mxu0
    %v3665 = vpop.f32.mrf.mxu0
    %3666 = vdwg.mxu0
    %3667 = vmatprep.subr.bf16.mxu0 %v3463
    %3668 = vmatpush1.bf16.msra.mxu0 %v3462
    %3669 = vmatprep.subr.bf16.mxu0 %v3459
    %3670 = vmatpush1.bf16.msra.mxu0 %v3458
    %3671 = vmatprep.subr.bf16.mxu0 %v3455
    %3672 = vmatpush1.bf16.msra.mxu0 %v3454
    %3673 = vmatprep.subr.bf16.mxu0 %v3451
    %3674 = vmatpush1.bf16.msra.mxu0 %v3450
    %3675 = vmatprep.subr.bf16.mxu0 %v3447
    %3676 = vmatpush1.bf16.msra.mxu0 %v3446
    %3677 = vmatprep.subr.bf16.mxu0 %v3443
    %3678 = vmatpush1.bf16.msra.mxu0 %v3442
    %3679 = vmatprep.subr.bf16.mxu0 %v3439
    %3680 = vmatpush1.bf16.msra.mxu0 %v3438
    %3681 = vmatprep.subr.bf16.mxu0 %v3435
    %3682 = vmatpush1.bf16.msra.mxu0 %v3434
    %3683 = vmatprep.subr.bf16.mxu0 %v3495
    %3684 = vmatpush2.bf16.msra.mxu0 %v3494
    %3685 = vmatprep.subr.bf16.mxu0 %v3491
    %3686 = vmatpush2.bf16.msra.mxu0 %v3490
    %3687 = vmatprep.subr.bf16.mxu0 %v3487
    %3688 = vmatpush2.bf16.msra.mxu0 %v3486
    %3689 = vmatprep.subr.bf16.mxu0 %v3483
    %3690 = vmatpush2.bf16.msra.mxu0 %v3482
    %3691 = vmatprep.subr.bf16.mxu0 %v3479
    %3692 = vmatpush2.bf16.msra.mxu0 %v3478
    %3693 = vmatprep.subr.bf16.mxu0 %v3475
    %3694 = vmatpush2.bf16.msra.mxu0 %v3474
    %3695 = vmatprep.subr.bf16.mxu0 %v3471
    %3696 = vmatpush2.bf16.msra.mxu0 %v3470
    %3697 = vmatprep.subr.bf16.mxu0 %v3467
    %3698 = vmatpush2.bf16.msra.mxu0 %v3466
    %3699 = vmatprep.mubr.bf16.mxu0 %v2835
    %3700 = vmatmul.mubr.bf16.gmra.mxu0 %v2834
    %v3701 = vpop.f32.mrf.mxu0
    %v3702 = vadd.f32 %v3661, %v3701
    %v3703 = vpop.f32.mrf.mxu0
    %v3704 = vadd.f32 %v3663, %v3703
    %v3705 = vpop.f32.mrf.mxu0
    %v3706 = vpop.f32.mrf.mxu0
    %3707 = vdwg.mxu0
    %3708 = vmatprep.subr.bf16.mxu0 %v3401
    %3709 = vmatpush1.bf16.msra.mxu0 %v3400
    %3710 = vmatprep.subr.bf16.mxu0 %v3397
    %3711 = vmatpush1.bf16.msra.mxu0 %v3396
    %3712 = vmatprep.subr.bf16.mxu0 %v3393
    %3713 = vmatpush1.bf16.msra.mxu0 %v3392
    %3714 = vmatprep.subr.bf16.mxu0 %v3389
    %3715 = vmatpush1.bf16.msra.mxu0 %v3388
    %3716 = vmatprep.subr.bf16.mxu0 %v3385
    %3717 = vmatpush1.bf16.msra.mxu0 %v3384
    %3718 = vmatprep.subr.bf16.mxu0 %v3381
    %3719 = vmatpush1.bf16.msra.mxu0 %v3380
    %3720 = vmatprep.subr.bf16.mxu0 %v3377
    %3721 = vmatpush1.bf16.msra.mxu0 %v3376
    %3722 = vmatprep.subr.bf16.mxu0 %v3373
    %3723 = vmatpush1.bf16.msra.mxu0 %v3372
    %3724 = vmatprep.subr.bf16.mxu0 %v3433
    %3725 = vmatpush2.bf16.msra.mxu0 %v3432
    %3726 = vmatprep.subr.bf16.mxu0 %v3429
    %3727 = vmatpush2.bf16.msra.mxu0 %v3428
    %3728 = vmatprep.subr.bf16.mxu0 %v3425
    %3729 = vmatpush2.bf16.msra.mxu0 %v3424
    %3730 = vmatprep.subr.bf16.mxu0 %v3421
    %3731 = vmatpush2.bf16.msra.mxu0 %v3420
    %3732 = vmatprep.subr.bf16.mxu0 %v3417
    %3733 = vmatpush2.bf16.msra.mxu0 %v3416
    %3734 = vmatprep.subr.bf16.mxu0 %v3413
    %3735 = vmatpush2.bf16.msra.mxu0 %v3412
    %3736 = vmatprep.subr.bf16.mxu0 %v3409
    %3737 = vmatpush2.bf16.msra.mxu0 %v3408
    %3738 = vmatprep.subr.bf16.mxu0 %v3405
    %3739 = vmatpush2.bf16.msra.mxu0 %v3404
    %3740 = vmatprep.mubr.bf16.mxu0 %v2833
    %3741 = vmatmul.mubr.bf16.gmra.mxu0 %v2832
    %v3742 = vpop.f32.mrf.mxu0
    %v3743 = vadd.f32 %v2977, %v3742
    %v3744 = vpop.f32.mrf.mxu0
    %v3745 = vadd.f32 %v2981, %v3744
    %v3746 = vpop.f32.mrf.mxu0
    %v3747 = vpop.f32.mrf.mxu0
    %3748 = vdwg.mxu0
    %3749 = vmatprep.subr.bf16.mxu0 %v3465
    %3750 = vmatpush1.bf16.msra.mxu0 %v3464
    %3751 = vmatprep.subr.bf16.mxu0 %v3461
    %3752 = vmatpush1.bf16.msra.mxu0 %v3460
    %3753 = vmatprep.subr.bf16.mxu0 %v3457
    %3754 = vmatpush1.bf16.msra.mxu0 %v3456
    %3755 = vmatprep.subr.bf16.mxu0 %v3453
    %3756 = vmatpush1.bf16.msra.mxu0 %v3452
    %3757 = vmatprep.subr.bf16.mxu0 %v3449
    %3758 = vmatpush1.bf16.msra.mxu0 %v3448
    %3759 = vmatprep.subr.bf16.mxu0 %v3445
    %3760 = vmatpush1.bf16.msra.mxu0 %v3444
    %3761 = vmatprep.subr.bf16.mxu0 %v3441
    %3762 = vmatpush1.bf16.msra.mxu0 %v3440
    %3763 = vmatprep.subr.bf16.mxu0 %v3437
    %3764 = vmatpush1.bf16.msra.mxu0 %v3436
    %3765 = vmatprep.subr.bf16.mxu0 %v3497
    %3766 = vmatpush2.bf16.msra.mxu0 %v3496
    %3767 = vmatprep.subr.bf16.mxu0 %v3493
    %3768 = vmatpush2.bf16.msra.mxu0 %v3492
    %3769 = vmatprep.subr.bf16.mxu0 %v3489
    %3770 = vmatpush2.bf16.msra.mxu0 %v3488
    %3771 = vmatprep.subr.bf16.mxu0 %v3485
    %3772 = vmatpush2.bf16.msra.mxu0 %v3484
    %3773 = vmatprep.subr.bf16.mxu0 %v3481
    %3774 = vmatpush2.bf16.msra.mxu0 %v3480
    %3775 = vmatprep.subr.bf16.mxu0 %v3477
    %3776 = vmatpush2.bf16.msra.mxu0 %v3476
    %3777 = vmatprep.subr.bf16.mxu0 %v3473
    %3778 = vmatpush2.bf16.msra.mxu0 %v3472
    %3779 = vmatprep.subr.bf16.mxu0 %v3469
    %3780 = vmatpush2.bf16.msra.mxu0 %v3468
    %3781 = vmatprep.mubr.bf16.mxu0 %v2835
    %3782 = vmatmul.mubr.bf16.gmra.mxu0 %v2834
    %v3783 = vpop.f32.mrf.mxu0
    %v3784 = vadd.f32 %v3743, %v3783
    %v3785 = vpop.f32.mrf.mxu0
    %v3786 = vadd.f32 %v3745, %v3785
    %v3787 = vpop.f32.mrf.mxu0
    %v3788 = vpop.f32.mrf.mxu0
    %3789 = vdwg.mxu0
    %v3790 = vmax.f32 %v3702, 0.0
    %v3791 = vmax.f32 %v3704, 0.0
    %v3792 = vmax.f32 %v3784, 0.0
    %v3793 = vmax.f32 %v3786, 0.0
    %v3794 = vpack.c.bf16 %v3790, %v3790
    %v3795 = vpack.c.bf16 %v3791, %v3791
    %v3796 = vpack.c.bf16 %v3792, %v3792
    %v3797 = vpack.c.bf16 %v3793, %v3793
    %v3798 = vld [vmem:[#allocation7] sm:$0xff]
    %v3799 = vld [vmem:[#allocation7 + $0x8] sm:$0xff]
    %v3800 = vld [vmem:[#allocation7 + $0x10] sm:$0xff]
    %v3801 = vld [vmem:[#allocation7 + $0x18] sm:$0xff]
    %v3802 = vld [vmem:[#allocation7 + $0x20] sm:$0xff]
    %v3803 = vld [vmem:[#allocation7 + $0x28] sm:$0xff]
    %v3804 = vld [vmem:[#allocation7 + $0x30] sm:$0xff]
    %v3805 = vld [vmem:[#allocation7 + $0x38] sm:$0xff]
    %v3806 = vld [vmem:[#allocation7 + $0x40] sm:$0xff]
    %v3807 = vld [vmem:[#allocation7 + $0x48] sm:$0xff]
    %v3808 = vld [vmem:[#allocation7 + $0x50] sm:$0xff]
    %v3809 = vld [vmem:[#allocation7 + $0x58] sm:$0xff]
    %v3810 = vld [vmem:[#allocation7 + $0x60] sm:$0xff]
    %v3811 = vld [vmem:[#allocation7 + $0x68] sm:$0xff]
    %v3812 = vld [vmem:[#allocation7 + $0x70] sm:$0xff]
    %v3813 = vld [vmem:[#allocation7 + $0x78] sm:$0xff]
    %v3814 = vld [vmem:[#allocation7 + $0x80] sm:$0xff]
    %v3815 = vld [vmem:[#allocation7 + $0x88] sm:$0xff]
    %v3816 = vld [vmem:[#allocation7 + $0x90] sm:$0xff]
    %v3817 = vld [vmem:[#allocation7 + $0x98] sm:$0xff]
    %v3818 = vld [vmem:[#allocation7 + $0xa0] sm:$0xff]
    %v3819 = vld [vmem:[#allocation7 + $0xa8] sm:$0xff]
    %v3820 = vld [vmem:[#allocation7 + $0xb0] sm:$0xff]
    %v3821 = vld [vmem:[#allocation7 + $0xb8] sm:$0xff]
    %v3822 = vld [vmem:[#allocation7 + $0xc0] sm:$0xff]
    %v3823 = vld [vmem:[#allocation7 + $0xc8] sm:$0xff]
    %v3824 = vld [vmem:[#allocation7 + $0xd0] sm:$0xff]
    %v3825 = vld [vmem:[#allocation7 + $0xd8] sm:$0xff]
    %v3826 = vld [vmem:[#allocation7 + $0xe0] sm:$0xff]
    %v3827 = vld [vmem:[#allocation7 + $0xe8] sm:$0xff]
    %v3828 = vld [vmem:[#allocation7 + $0xf0] sm:$0xff]
    %v3829 = vld [vmem:[#allocation7 + $0xf8] sm:$0xff]
    %v3830 = vld [vmem:[#allocation7 + $0x100] sm:$0xff]
    %v3831 = vld [vmem:[#allocation7 + $0x108] sm:$0xff]
    %v3832 = vld [vmem:[#allocation7 + $0x110] sm:$0xff]
    %v3833 = vld [vmem:[#allocation7 + $0x118] sm:$0xff]
    %v3834 = vld [vmem:[#allocation7 + $0x120] sm:$0xff]
    %v3835 = vld [vmem:[#allocation7 + $0x128] sm:$0xff]
    %v3836 = vld [vmem:[#allocation7 + $0x130] sm:$0xff]
    %v3837 = vld [vmem:[#allocation7 + $0x138] sm:$0xff]
    %v3838 = vld [vmem:[#allocation7 + $0x140] sm:$0xff]
    %v3839 = vld [vmem:[#allocation7 + $0x148] sm:$0xff]
    %v3840 = vld [vmem:[#allocation7 + $0x150] sm:$0xff]
    %v3841 = vld [vmem:[#allocation7 + $0x158] sm:$0xff]
    %v3842 = vld [vmem:[#allocation7 + $0x160] sm:$0xff]
    %v3843 = vld [vmem:[#allocation7 + $0x168] sm:$0xff]
    %v3844 = vld [vmem:[#allocation7 + $0x170] sm:$0xff]
    %v3845 = vld [vmem:[#allocation7 + $0x178] sm:$0xff]
    %v3846 = vld [vmem:[#allocation7 + $0x180] sm:$0xff]
    %v3847 = vld [vmem:[#allocation7 + $0x188] sm:$0xff]
    %v3848 = vld [vmem:[#allocation7 + $0x190] sm:$0xff]
    %v3849 = vld [vmem:[#allocation7 + $0x198] sm:$0xff]
    %v3850 = vld [vmem:[#allocation7 + $0x1a0] sm:$0xff]
    %v3851 = vld [vmem:[#allocation7 + $0x1a8] sm:$0xff]
    %v3852 = vld [vmem:[#allocation7 + $0x1b0] sm:$0xff]
    %v3853 = vld [vmem:[#allocation7 + $0x1b8] sm:$0xff]
    %v3854 = vld [vmem:[#allocation7 + $0x1c0] sm:$0xff]
    %v3855 = vld [vmem:[#allocation7 + $0x1c8] sm:$0xff]
    %v3856 = vld [vmem:[#allocation7 + $0x1d0] sm:$0xff]
    %v3857 = vld [vmem:[#allocation7 + $0x1d8] sm:$0xff]
    %v3858 = vld [vmem:[#allocation7 + $0x1e0] sm:$0xff]
    %v3859 = vld [vmem:[#allocation7 + $0x1e8] sm:$0xff]
    %v3860 = vld [vmem:[#allocation7 + $0x1f0] sm:$0xff]
    %v3861 = vld [vmem:[#allocation7 + $0x1f8] sm:$0xff]
    %v3862 = vld [vmem:[%s9] sm:$0x3]
    %v3864 = vlaneseq
    %v3865 = vshrl.u32 %v3864, 7
    %v3866 = vsub.s32 0, %v3865
    %v3867 = vrot.slane %v3862, %v3866
    %v3868 = vlaneseq
    %v3869 = vshrl.u32 %v3868, 7
    %v3870 = vsub.s32 1, %v3869
    %v3871 = vrot.slane %v3862, %v3870
    %v3938 = vunpack.c.l.b16 %v3798
    %v3939 = vunpack.c.h.b16 %v3798
    %v3940 = vunpack.c.l.b16 %v3799
    %v3941 = vunpack.c.h.b16 %v3799
    %v3942 = vunpack.c.l.b16 %v3800
    %v3943 = vunpack.c.h.b16 %v3800
    %v3944 = vunpack.c.l.b16 %v3801
    %v3945 = vunpack.c.h.b16 %v3801
    %v3946 = vunpack.c.l.b16 %v3802
    %v3947 = vunpack.c.h.b16 %v3802
    %v3948 = vunpack.c.l.b16 %v3803
    %v3949 = vunpack.c.h.b16 %v3803
    %v3950 = vunpack.c.l.b16 %v3804
    %v3951 = vunpack.c.h.b16 %v3804
    %v3952 = vunpack.c.l.b16 %v3805
    %v3953 = vunpack.c.h.b16 %v3805
    %v3954 = vunpack.c.l.b16 %v3806
    %v3955 = vunpack.c.h.b16 %v3806
    %v3956 = vunpack.c.l.b16 %v3807
    %v3957 = vunpack.c.h.b16 %v3807
    %v3958 = vunpack.c.l.b16 %v3808
    %v3959 = vunpack.c.h.b16 %v3808
    %v3960 = vunpack.c.l.b16 %v3809
    %v3961 = vunpack.c.h.b16 %v3809
    %v3962 = vunpack.c.l.b16 %v3810
    %v3963 = vunpack.c.h.b16 %v3810
    %v3964 = vunpack.c.l.b16 %v3811
    %v3965 = vunpack.c.h.b16 %v3811
    %v3966 = vunpack.c.l.b16 %v3812
    %v3967 = vunpack.c.h.b16 %v3812
    %v3968 = vunpack.c.l.b16 %v3813
    %v3969 = vunpack.c.h.b16 %v3813
    %v3970 = vunpack.c.l.b16 %v3814
    %v3971 = vunpack.c.h.b16 %v3814
    %v3972 = vunpack.c.l.b16 %v3815
    %v3973 = vunpack.c.h.b16 %v3815
    %v3974 = vunpack.c.l.b16 %v3816
    %v3975 = vunpack.c.h.b16 %v3816
    %v3976 = vunpack.c.l.b16 %v3817
    %v3977 = vunpack.c.h.b16 %v3817
    %v3978 = vunpack.c.l.b16 %v3818
    %v3979 = vunpack.c.h.b16 %v3818
    %v3980 = vunpack.c.l.b16 %v3819
    %v3981 = vunpack.c.h.b16 %v3819
    %v3982 = vunpack.c.l.b16 %v3820
    %v3983 = vunpack.c.h.b16 %v3820
    %v3984 = vunpack.c.l.b16 %v3821
    %v3985 = vunpack.c.h.b16 %v3821
    %v3986 = vunpack.c.l.b16 %v3822
    %v3987 = vunpack.c.h.b16 %v3822
    %v3988 = vunpack.c.l.b16 %v3823
    %v3989 = vunpack.c.h.b16 %v3823
    %v3990 = vunpack.c.l.b16 %v3824
    %v3991 = vunpack.c.h.b16 %v3824
    %v3992 = vunpack.c.l.b16 %v3825
    %v3993 = vunpack.c.h.b16 %v3825
    %v3994 = vunpack.c.l.b16 %v3826
    %v3995 = vunpack.c.h.b16 %v3826
    %v3996 = vunpack.c.l.b16 %v3827
    %v3997 = vunpack.c.h.b16 %v3827
    %v3998 = vunpack.c.l.b16 %v3828
    %v3999 = vunpack.c.h.b16 %v3828
    %v4000 = vunpack.c.l.b16 %v3829
    %v4001 = vunpack.c.h.b16 %v3829
    %v4002 = vunpack.c.l.b16 %v3830
    %v4003 = vunpack.c.h.b16 %v3830
    %v4004 = vunpack.c.l.b16 %v3831
    %v4005 = vunpack.c.h.b16 %v3831
    %v4006 = vunpack.c.l.b16 %v3832
    %v4007 = vunpack.c.h.b16 %v3832
    %v4008 = vunpack.c.l.b16 %v3833
    %v4009 = vunpack.c.h.b16 %v3833
    %v4010 = vunpack.c.l.b16 %v3834
    %v4011 = vunpack.c.h.b16 %v3834
    %v4012 = vunpack.c.l.b16 %v3835
    %v4013 = vunpack.c.h.b16 %v3835
    %v4014 = vunpack.c.l.b16 %v3836
    %v4015 = vunpack.c.h.b16 %v3836
    %v4016 = vunpack.c.l.b16 %v3837
    %v4017 = vunpack.c.h.b16 %v3837
    %v4018 = vunpack.c.l.b16 %v3838
    %v4019 = vunpack.c.h.b16 %v3838
    %v4020 = vunpack.c.l.b16 %v3839
    %v4021 = vunpack.c.h.b16 %v3839
    %v4022 = vunpack.c.l.b16 %v3840
    %v4023 = vunpack.c.h.b16 %v3840
    %v4024 = vunpack.c.l.b16 %v3841
    %v4025 = vunpack.c.h.b16 %v3841
    %v4026 = vunpack.c.l.b16 %v3842
    %v4027 = vunpack.c.h.b16 %v3842
    %v4028 = vunpack.c.l.b16 %v3843
    %v4029 = vunpack.c.h.b16 %v3843
    %v4030 = vunpack.c.l.b16 %v3844
    %v4031 = vunpack.c.h.b16 %v3844
    %v4032 = vunpack.c.l.b16 %v3845
    %v4033 = vunpack.c.h.b16 %v3845
    %v4034 = vunpack.c.l.b16 %v3846
    %v4035 = vunpack.c.h.b16 %v3846
    %v4036 = vunpack.c.l.b16 %v3847
    %v4037 = vunpack.c.h.b16 %v3847
    %v4038 = vunpack.c.l.b16 %v3848
    %v4039 = vunpack.c.h.b16 %v3848
    %v4040 = vunpack.c.l.b16 %v3849
    %v4041 = vunpack.c.h.b16 %v3849
    %v4042 = vunpack.c.l.b16 %v3850
    %v4043 = vunpack.c.h.b16 %v3850
    %v4044 = vunpack.c.l.b16 %v3851
    %v4045 = vunpack.c.h.b16 %v3851
    %v4046 = vunpack.c.l.b16 %v3852
    %v4047 = vunpack.c.h.b16 %v3852
    %v4048 = vunpack.c.l.b16 %v3853
    %v4049 = vunpack.c.h.b16 %v3853
    %v4050 = vunpack.c.l.b16 %v3854
    %v4051 = vunpack.c.h.b16 %v3854
    %v4052 = vunpack.c.l.b16 %v3855
    %v4053 = vunpack.c.h.b16 %v3855
    %v4054 = vunpack.c.l.b16 %v3856
    %v4055 = vunpack.c.h.b16 %v3856
    %v4056 = vunpack.c.l.b16 %v3857
    %v4057 = vunpack.c.h.b16 %v3857
    %v4058 = vunpack.c.l.b16 %v3858
    %v4059 = vunpack.c.h.b16 %v3858
    %v4060 = vunpack.c.l.b16 %v3859
    %v4061 = vunpack.c.h.b16 %v3859
    %v4062 = vunpack.c.l.b16 %v3860
    %v4063 = vunpack.c.h.b16 %v3860
    %v4064 = vunpack.c.l.b16 %v3861
    %v4065 = vunpack.c.h.b16 %v3861
    %v4066 = vpack.c.b16 %v3940, %v3938
    %v4067 = vpack.c.b16 %v3941, %v3939
    %v4068 = vpack.c.b16 %v3944, %v3942
    %v4069 = vpack.c.b16 %v3945, %v3943
    %v4070 = vpack.c.b16 %v3948, %v3946
    %v4071 = vpack.c.b16 %v3949, %v3947
    %v4072 = vpack.c.b16 %v3952, %v3950
    %v4073 = vpack.c.b16 %v3953, %v3951
    %v4074 = vpack.c.b16 %v3956, %v3954
    %v4075 = vpack.c.b16 %v3957, %v3955
    %v4076 = vpack.c.b16 %v3960, %v3958
    %v4077 = vpack.c.b16 %v3961, %v3959
    %v4078 = vpack.c.b16 %v3964, %v3962
    %v4079 = vpack.c.b16 %v3965, %v3963
    %v4080 = vpack.c.b16 %v3968, %v3966
    %v4081 = vpack.c.b16 %v3969, %v3967
    %v4082 = vpack.c.b16 %v3972, %v3970
    %v4083 = vpack.c.b16 %v3973, %v3971
    %v4084 = vpack.c.b16 %v3976, %v3974
    %v4085 = vpack.c.b16 %v3977, %v3975
    %v4086 = vpack.c.b16 %v3980, %v3978
    %v4087 = vpack.c.b16 %v3981, %v3979
    %v4088 = vpack.c.b16 %v3984, %v3982
    %v4089 = vpack.c.b16 %v3985, %v3983
    %v4090 = vpack.c.b16 %v3988, %v3986
    %v4091 = vpack.c.b16 %v3989, %v3987
    %v4092 = vpack.c.b16 %v3992, %v3990
    %v4093 = vpack.c.b16 %v3993, %v3991
    %v4094 = vpack.c.b16 %v3996, %v3994
    %v4095 = vpack.c.b16 %v3997, %v3995
    %v4096 = vpack.c.b16 %v4000, %v3998
    %v4097 = vpack.c.b16 %v4001, %v3999
    %v4098 = vpack.c.b16 %v4004, %v4002
    %v4099 = vpack.c.b16 %v4005, %v4003
    %v4100 = vpack.c.b16 %v4008, %v4006
    %v4101 = vpack.c.b16 %v4009, %v4007
    %v4102 = vpack.c.b16 %v4012, %v4010
    %v4103 = vpack.c.b16 %v4013, %v4011
    %v4104 = vpack.c.b16 %v4016, %v4014
    %v4105 = vpack.c.b16 %v4017, %v4015
    %v4106 = vpack.c.b16 %v4020, %v4018
    %v4107 = vpack.c.b16 %v4021, %v4019
    %v4108 = vpack.c.b16 %v4024, %v4022
    %v4109 = vpack.c.b16 %v4025, %v4023
    %v4110 = vpack.c.b16 %v4028, %v4026
    %v4111 = vpack.c.b16 %v4029, %v4027
    %v4112 = vpack.c.b16 %v4032, %v4030
    %v4113 = vpack.c.b16 %v4033, %v4031
    %v4114 = vpack.c.b16 %v4036, %v4034
    %v4115 = vpack.c.b16 %v4037, %v4035
    %v4116 = vpack.c.b16 %v4040, %v4038
    %v4117 = vpack.c.b16 %v4041, %v4039
    %v4118 = vpack.c.b16 %v4044, %v4042
    %v4119 = vpack.c.b16 %v4045, %v4043
    %v4120 = vpack.c.b16 %v4048, %v4046
    %v4121 = vpack.c.b16 %v4049, %v4047
    %v4122 = vpack.c.b16 %v4052, %v4050
    %v4123 = vpack.c.b16 %v4053, %v4051
    %v4124 = vpack.c.b16 %v4056, %v4054
    %v4125 = vpack.c.b16 %v4057, %v4055
    %v4126 = vpack.c.b16 %v4060, %v4058
    %v4127 = vpack.c.b16 %v4061, %v4059
    %v4128 = vpack.c.b16 %v4064, %v4062
    %v4129 = vpack.c.b16 %v4065, %v4063
    %4194 = vmatprep.subr.bf16.mxu0 %v4081
    %4195 = vmatpush1.bf16.msra.mxu0 %v4080
    %4196 = vmatprep.subr.bf16.mxu0 %v4079
    %4197 = vmatpush1.bf16.msra.mxu0 %v4078
    %4198 = vmatprep.subr.bf16.mxu0 %v4077
    %4199 = vmatpush1.bf16.msra.mxu0 %v4076
    %4200 = vmatprep.subr.bf16.mxu0 %v4075
    %4201 = vmatpush1.bf16.msra.mxu0 %v4074
    %4202 = vmatprep.subr.bf16.mxu0 %v4073
    %4203 = vmatpush1.bf16.msra.mxu0 %v4072
    %4204 = vmatprep.subr.bf16.mxu0 %v4071
    %4205 = vmatpush1.bf16.msra.mxu0 %v4070
    %4206 = vmatprep.subr.bf16.mxu0 %v4069
    %4207 = vmatpush1.bf16.msra.mxu0 %v4068
    %4208 = vmatprep.subr.bf16.mxu0 %v4067
    %4209 = vmatpush1.bf16.msra.mxu0 %v4066
    %4210 = vmatprep.subr.bf16.mxu0 %v4097
    %4211 = vmatpush2.bf16.msra.mxu0 %v4096
    %4212 = vmatprep.subr.bf16.mxu0 %v4095
    %4213 = vmatpush2.bf16.msra.mxu0 %v4094
    %4214 = vmatprep.subr.bf16.mxu0 %v4093
    %4215 = vmatpush2.bf16.msra.mxu0 %v4092
    %4216 = vmatprep.subr.bf16.mxu0 %v4091
    %4217 = vmatpush2.bf16.msra.mxu0 %v4090
    %4218 = vmatprep.subr.bf16.mxu0 %v4089
    %4219 = vmatpush2.bf16.msra.mxu0 %v4088
    %4220 = vmatprep.subr.bf16.mxu0 %v4087
    %4221 = vmatpush2.bf16.msra.mxu0 %v4086
    %4222 = vmatprep.subr.bf16.mxu0 %v4085
    %4223 = vmatpush2.bf16.msra.mxu0 %v4084
    %4224 = vmatprep.subr.bf16.mxu0 %v4083
    %4225 = vmatpush2.bf16.msra.mxu0 %v4082
    %4226 = vmatprep.mubr.bf16.mxu0 %v3795
    %4227 = vmatmul.mubr.bf16.gmra.mxu0 %v3794
    %v4228 = vpop.f32.mrf.mxu0
    %v4229 = vadd.f32 %v3867, %v4228
    %v4230 = vpop.f32.mrf.mxu0
    %v4231 = vadd.f32 %v3871, %v4230
    %v4232 = vpop.f32.mrf.mxu0
    %v4233 = vpop.f32.mrf.mxu0
    %4234 = vdwg.mxu0
    %4235 = vmatprep.subr.bf16.mxu0 %v4113
    %4236 = vmatpush1.bf16.msra.mxu0 %v4112
    %4237 = vmatprep.subr.bf16.mxu0 %v4111
    %4238 = vmatpush1.bf16.msra.mxu0 %v4110
    %4239 = vmatprep.subr.bf16.mxu0 %v4109
    %4240 = vmatpush1.bf16.msra.mxu0 %v4108
    %4241 = vmatprep.subr.bf16.mxu0 %v4107
    %4242 = vmatpush1.bf16.msra.mxu0 %v4106
    %4243 = vmatprep.subr.bf16.mxu0 %v4105
    %4244 = vmatpush1.bf16.msra.mxu0 %v4104
    %4245 = vmatprep.subr.bf16.mxu0 %v4103
    %4246 = vmatpush1.bf16.msra.mxu0 %v4102
    %4247 = vmatprep.subr.bf16.mxu0 %v4101
    %4248 = vmatpush1.bf16.msra.mxu0 %v4100
    %4249 = vmatprep.subr.bf16.mxu0 %v4099
    %4250 = vmatpush1.bf16.msra.mxu0 %v4098
    %4251 = vmatprep.subr.bf16.mxu0 %v4129
    %4252 = vmatpush2.bf16.msra.mxu0 %v4128
    %4253 = vmatprep.subr.bf16.mxu0 %v4127
    %4254 = vmatpush2.bf16.msra.mxu0 %v4126
    %4255 = vmatprep.subr.bf16.mxu0 %v4125
    %4256 = vmatpush2.bf16.msra.mxu0 %v4124
    %4257 = vmatprep.subr.bf16.mxu0 %v4123
    %4258 = vmatpush2.bf16.msra.mxu0 %v4122
    %4259 = vmatprep.subr.bf16.mxu0 %v4121
    %4260 = vmatpush2.bf16.msra.mxu0 %v4120
    %4261 = vmatprep.subr.bf16.mxu0 %v4119
    %4262 = vmatpush2.bf16.msra.mxu0 %v4118
    %4263 = vmatprep.subr.bf16.mxu0 %v4117
    %4264 = vmatpush2.bf16.msra.mxu0 %v4116
    %4265 = vmatprep.subr.bf16.mxu0 %v4115
    %4266 = vmatpush2.bf16.msra.mxu0 %v4114
    %4267 = vmatprep.mubr.bf16.mxu0 %v3797
    %4268 = vmatmul.mubr.bf16.gmra.mxu0 %v3796
    %v4269 = vpop.f32.mrf.mxu0
    %v4270 = vadd.f32 %v4229, %v4269
    %v4271 = vpop.f32.mrf.mxu0
    %v4272 = vadd.f32 %v4231, %v4271
    %v4273 = vpop.f32.mrf.mxu0
    %v4274 = vpop.f32.mrf.mxu0
    %4275 = vdwg.mxu0
    %v4276 = vmul.f32 %v4272, 0.5
    %v4277 = vmul.f32 %v4276, 1.442695
    %v4278 = vpow.pop %v4277
    %v4279 = vld [vmem:[%s1] sm:$0xff]
    %v4280 = vmul.f32 %v4278, %v4279
    %v4281 = vadd.f32 %v4280, %v4270
    %v4282 = vpack.c.bf16 %v4281, %v4281
    %v4283 = vld [vmem:[%s10] sm:$0xff]
    %v4284 = vld [vmem:[%s10 + $0x8] sm:$0xff]
    %v4285 = vld [vmem:[%s10 + $0x10] sm:$0xff]
    %v4286 = vld [vmem:[%s10 + $0x18] sm:$0xff]
    %v4287 = vld [vmem:[%s10 + $0x20] sm:$0xff]
    %v4288 = vld [vmem:[%s10 + $0x28] sm:$0xff]
    %v4289 = vld [vmem:[%s10 + $0x30] sm:$0xff]
    %v4290 = vld [vmem:[%s10 + $0x38] sm:$0xff]
    %v4291 = vld [vmem:[%s10 + $0x40] sm:$0xff]
    %v4292 = vld [vmem:[%s10 + $0x48] sm:$0xff]
    %v4293 = vld [vmem:[%s10 + $0x50] sm:$0xff]
    %v4294 = vld [vmem:[%s10 + $0x58] sm:$0xff]
    %v4295 = vld [vmem:[%s10 + $0x60] sm:$0xff]
    %v4296 = vld [vmem:[%s10 + $0x68] sm:$0xff]
    %v4297 = vld [vmem:[%s10 + $0x70] sm:$0xff]
    %v4298 = vld [vmem:[%s10 + $0x78] sm:$0xff]
    %v4299 = vld [vmem:[%s10 + $0x80] sm:$0xff]
    %v4300 = vld [vmem:[%s10 + $0x88] sm:$0xff]
    %v4301 = vld [vmem:[%s10 + $0x90] sm:$0xff]
    %v4302 = vld [vmem:[%s10 + $0x98] sm:$0xff]
    %v4303 = vld [vmem:[%s10 + $0xa0] sm:$0xff]
    %v4304 = vld [vmem:[%s10 + $0xa8] sm:$0xff]
    %v4305 = vld [vmem:[%s10 + $0xb0] sm:$0xff]
    %v4306 = vld [vmem:[%s10 + $0xb8] sm:$0xff]
    %v4307 = vld [vmem:[%s10 + $0xc0] sm:$0xff]
    %v4308 = vld [vmem:[%s10 + $0xc8] sm:$0xff]
    %v4309 = vld [vmem:[%s10 + $0xd0] sm:$0xff]
    %v4310 = vld [vmem:[%s10 + $0xd8] sm:$0xff]
    %v4311 = vld [vmem:[%s10 + $0xe0] sm:$0xff]
    %v4312 = vld [vmem:[%s10 + $0xe8] sm:$0xff]
    %v4313 = vld [vmem:[%s10 + $0xf0] sm:$0xff]
    %v4314 = vld [vmem:[%s10 + $0xf8] sm:$0xff]
    %v4315 = vld [vmem:[%s11] sm:$0xf]
    %v4317 = vlaneseq
    %v4318 = vshrl.u32 %v4317, 7
    %v4319 = vsub.s32 0, %v4318
    %v4320 = vrot.slane %v4315, %v4319
    %v4321 = vlaneseq
    %v4322 = vshrl.u32 %v4321, 7
    %v4323 = vsub.s32 1, %v4322
    %v4324 = vrot.slane %v4315, %v4323
    %v4325 = vlaneseq
    %v4326 = vshrl.u32 %v4325, 7
    %v4327 = vsub.s32 2, %v4326
    %v4328 = vrot.slane %v4315, %v4327
    %v4329 = vlaneseq
    %v4330 = vshrl.u32 %v4329, 7
    %v4331 = vsub.s32 3, %v4330
    %v4332 = vrot.slane %v4315, %v4331
    %v4369 = vunpack.c.l.b16 %v4283
    %v4370 = vunpack.c.h.b16 %v4283
    %v4371 = vunpack.c.l.b16 %v4284
    %v4372 = vunpack.c.h.b16 %v4284
    %v4373 = vunpack.c.l.b16 %v4285
    %v4374 = vunpack.c.h.b16 %v4285
    %v4375 = vunpack.c.l.b16 %v4286
    %v4376 = vunpack.c.h.b16 %v4286
    %v4377 = vunpack.c.l.b16 %v4287
    %v4378 = vunpack.c.h.b16 %v4287
    %v4379 = vunpack.c.l.b16 %v4288
    %v4380 = vunpack.c.h.b16 %v4288
    %v4381 = vunpack.c.l.b16 %v4289
    %v4382 = vunpack.c.h.b16 %v4289
    %v4383 = vunpack.c.l.b16 %v4290
    %v4384 = vunpack.c.h.b16 %v4290
    %v4385 = vunpack.c.l.b16 %v4291
    %v4386 = vunpack.c.h.b16 %v4291
    %v4387 = vunpack.c.l.b16 %v4292
    %v4388 = vunpack.c.h.b16 %v4292
    %v4389 = vunpack.c.l.b16 %v4293
    %v4390 = vunpack.c.h.b16 %v4293
    %v4391 = vunpack.c.l.b16 %v4294
    %v4392 = vunpack.c.h.b16 %v4294
    %v4393 = vunpack.c.l.b16 %v4295
    %v4394 = vunpack.c.h.b16 %v4295
    %v4395 = vunpack.c.l.b16 %v4296
    %v4396 = vunpack.c.h.b16 %v4296
    %v4397 = vunpack.c.l.b16 %v4297
    %v4398 = vunpack.c.h.b16 %v4297
    %v4399 = vunpack.c.l.b16 %v4298
    %v4400 = vunpack.c.h.b16 %v4298
    %v4401 = vunpack.c.l.b16 %v4299
    %v4402 = vunpack.c.h.b16 %v4299
    %v4403 = vunpack.c.l.b16 %v4300
    %v4404 = vunpack.c.h.b16 %v4300
    %v4405 = vunpack.c.l.b16 %v4301
    %v4406 = vunpack.c.h.b16 %v4301
    %v4407 = vunpack.c.l.b16 %v4302
    %v4408 = vunpack.c.h.b16 %v4302
    %v4409 = vunpack.c.l.b16 %v4303
    %v4410 = vunpack.c.h.b16 %v4303
    %v4411 = vunpack.c.l.b16 %v4304
    %v4412 = vunpack.c.h.b16 %v4304
    %v4413 = vunpack.c.l.b16 %v4305
    %v4414 = vunpack.c.h.b16 %v4305
    %v4415 = vunpack.c.l.b16 %v4306
    %v4416 = vunpack.c.h.b16 %v4306
    %v4417 = vunpack.c.l.b16 %v4307
    %v4418 = vunpack.c.h.b16 %v4307
    %v4419 = vunpack.c.l.b16 %v4308
    %v4420 = vunpack.c.h.b16 %v4308
    %v4421 = vunpack.c.l.b16 %v4309
    %v4422 = vunpack.c.h.b16 %v4309
    %v4423 = vunpack.c.l.b16 %v4310
    %v4424 = vunpack.c.h.b16 %v4310
    %v4425 = vunpack.c.l.b16 %v4311
    %v4426 = vunpack.c.h.b16 %v4311
    %v4427 = vunpack.c.l.b16 %v4312
    %v4428 = vunpack.c.h.b16 %v4312
    %v4429 = vunpack.c.l.b16 %v4313
    %v4430 = vunpack.c.h.b16 %v4313
    %v4431 = vunpack.c.l.b16 %v4314
    %v4432 = vunpack.c.h.b16 %v4314
    %v4433 = vpack.c.b16 %v4373, %v4369
    %v4434 = vpack.c.b16 %v4374, %v4370
    %v4435 = vpack.c.b16 %v4375, %v4371
    %v4436 = vpack.c.b16 %v4376, %v4372
    %v4437 = vpack.c.b16 %v4381, %v4377
    %v4438 = vpack.c.b16 %v4382, %v4378
    %v4439 = vpack.c.b16 %v4383, %v4379
    %v4440 = vpack.c.b16 %v4384, %v4380
    %v4441 = vpack.c.b16 %v4389, %v4385
    %v4442 = vpack.c.b16 %v4390, %v4386
    %v4443 = vpack.c.b16 %v4391, %v4387
    %v4444 = vpack.c.b16 %v4392, %v4388
    %v4445 = vpack.c.b16 %v4397, %v4393
    %v4446 = vpack.c.b16 %v4398, %v4394
    %v4447 = vpack.c.b16 %v4399, %v4395
    %v4448 = vpack.c.b16 %v4400, %v4396
    %v4449 = vpack.c.b16 %v4405, %v4401
    %v4450 = vpack.c.b16 %v4406, %v4402
    %v4451 = vpack.c.b16 %v4407, %v4403
    %v4452 = vpack.c.b16 %v4408, %v4404
    %v4453 = vpack.c.b16 %v4413, %v4409
    %v4454 = vpack.c.b16 %v4414, %v4410
    %v4455 = vpack.c.b16 %v4415, %v4411
    %v4456 = vpack.c.b16 %v4416, %v4412
    %v4457 = vpack.c.b16 %v4421, %v4417
    %v4458 = vpack.c.b16 %v4422, %v4418
    %v4459 = vpack.c.b16 %v4423, %v4419
    %v4460 = vpack.c.b16 %v4424, %v4420
    %v4461 = vpack.c.b16 %v4429, %v4425
    %v4462 = vpack.c.b16 %v4430, %v4426
    %v4463 = vpack.c.b16 %v4431, %v4427
    %v4464 = vpack.c.b16 %v4432, %v4428
    %4497 = vmatprep.subr.bf16.mxu0 %v4462
    %4498 = vmatpush1.bf16.msra.mxu0 %v4461
    %4499 = vmatprep.subr.bf16.mxu0 %v4458
    %4500 = vmatpush1.bf16.msra.mxu0 %v4457
    %4501 = vmatprep.subr.bf16.mxu0 %v4454
    %4502 = vmatpush1.bf16.msra.mxu0 %v4453
    %4503 = vmatprep.subr.bf16.mxu0 %v4450
    %4504 = vmatpush1.bf16.msra.mxu0 %v4449
    %4505 = vmatprep.subr.bf16.mxu0 %v4446
    %4506 = vmatpush1.bf16.msra.mxu0 %v4445
    %4507 = vmatprep.subr.bf16.mxu0 %v4442
    %4508 = vmatpush1.bf16.msra.mxu0 %v4441
    %4509 = vmatprep.subr.bf16.mxu0 %v4438
    %4510 = vmatpush1.bf16.msra.mxu0 %v4437
    %4511 = vmatprep.subr.bf16.mxu0 %v4434
    %4512 = vmatpush1.bf16.msra.mxu0 %v4433
    %4513 = vmatprep.subr.bf16.mxu0 0
    %4514 = vmatpush2.bf16.msra.mxu0 0
    %4515 = vmatprep.subr.bf16.mxu0 0
    %4516 = vmatpush2.bf16.msra.mxu0 0
    %4517 = vmatprep.subr.bf16.mxu0 0
    %4518 = vmatpush2.bf16.msra.mxu0 0
    %4519 = vmatprep.subr.bf16.mxu0 0
    %4520 = vmatpush2.bf16.msra.mxu0 0
    %4521 = vmatprep.subr.bf16.mxu0 0
    %4522 = vmatpush2.bf16.msra.mxu0 0
    %4523 = vmatprep.subr.bf16.mxu0 0
    %4524 = vmatpush2.bf16.msra.mxu0 0
    %4525 = vmatprep.subr.bf16.mxu0 0
    %4526 = vmatpush2.bf16.msra.mxu0 0
    %4527 = vmatprep.subr.bf16.mxu0 0
    %4528 = vmatpush2.bf16.msra.mxu0 0
    %4529 = vmatprep.mubr.bf16.mxu0 0
    %4530 = vmatmul.mubr.bf16.gmra.mxu0 %v4282
    %v4531 = vpop.f32.mrf.mxu0
    %v4532 = vadd.f32 %v4320, %v4531
    %v4533 = vpop.f32.mrf.mxu0
    %v4534 = vadd.f32 %v4324, %v4533
    %v4535 = vpop.f32.mrf.mxu0
    %v4536 = vpop.f32.mrf.mxu0
    %4537 = vdwg.mxu0
    %4538 = vmatprep.subr.bf16.mxu0 %v4464
    %4539 = vmatpush1.bf16.msra.mxu0 %v4463
    %4540 = vmatprep.subr.bf16.mxu0 %v4460
    %4541 = vmatpush1.bf16.msra.mxu0 %v4459
    %4542 = vmatprep.subr.bf16.mxu0 %v4456
    %4543 = vmatpush1.bf16.msra.mxu0 %v4455
    %4544 = vmatprep.subr.bf16.mxu0 %v4452
    %4545 = vmatpush1.bf16.msra.mxu0 %v4451
    %4546 = vmatprep.subr.bf16.mxu0 %v4448
    %4547 = vmatpush1.bf16.msra.mxu0 %v4447
    %4548 = vmatprep.subr.bf16.mxu0 %v4444
    %4549 = vmatpush1.bf16.msra.mxu0 %v4443
    %4550 = vmatprep.subr.bf16.mxu0 %v4440
    %4551 = vmatpush1.bf16.msra.mxu0 %v4439
    %4552 = vmatprep.subr.bf16.mxu0 %v4436
    %4553 = vmatpush1.bf16.msra.mxu0 %v4435
    %4554 = vmatprep.subr.bf16.mxu0 0
    %4555 = vmatpush2.bf16.msra.mxu0 0
    %4556 = vmatprep.subr.bf16.mxu0 0
    %4557 = vmatpush2.bf16.msra.mxu0 0
    %4558 = vmatprep.subr.bf16.mxu0 0
    %4559 = vmatpush2.bf16.msra.mxu0 0
    %4560 = vmatprep.subr.bf16.mxu0 0
    %4561 = vmatpush2.bf16.msra.mxu0 0
    %4562 = vmatprep.subr.bf16.mxu0 0
    %4563 = vmatpush2.bf16.msra.mxu0 0
    %4564 = vmatprep.subr.bf16.mxu0 0
    %4565 = vmatpush2.bf16.msra.mxu0 0
    %4566 = vmatprep.subr.bf16.mxu0 0
    %4567 = vmatpush2.bf16.msra.mxu0 0
    %4568 = vmatprep.subr.bf16.mxu0 0
    %4569 = vmatpush2.bf16.msra.mxu0 0
    %4570 = vmatprep.mubr.bf16.mxu0 0
    %4571 = vmatmul.mubr.bf16.gmra.mxu0 %v4282
    %v4572 = vpop.f32.mrf.mxu0
    %v4573 = vadd.f32 %v4328, %v4572
    %v4574 = vpop.f32.mrf.mxu0
    %v4575 = vadd.f32 %v4332, %v4574
    %v4576 = vpop.f32.mrf.mxu0
    %v4577 = vpop.f32.mrf.mxu0
    %4578 = vdwg.mxu0
    %v4579 = vmax.f32 %v4532, 0.0
    %v4580 = vmax.f32 %v4534, 0.0
    %v4581 = vmax.f32 %v4573, 0.0
    %v4582 = vmax.f32 %v4575, 0.0
    %v4583 = vpack.c.bf16 %v4579, %v4579
    %v4584 = vpack.c.bf16 %v4580, %v4580
    %v4585 = vpack.c.bf16 %v4581, %v4581
    %v4586 = vpack.c.bf16 %v4582, %v4582
    %v4587 = vld [vmem:[#allocation9] sm:$0xff]
    %v4588 = vld [vmem:[#allocation9 + $0x8] sm:$0xff]
    %v4589 = vld [vmem:[#allocation9 + $0x10] sm:$0xff]
    %v4590 = vld [vmem:[#allocation9 + $0x18] sm:$0xff]
    %v4591 = vld [vmem:[#allocation9 + $0x20] sm:$0xff]
    %v4592 = vld [vmem:[#allocation9 + $0x28] sm:$0xff]
    %v4593 = vld [vmem:[#allocation9 + $0x30] sm:$0xff]
    %v4594 = vld [vmem:[#allocation9 + $0x38] sm:$0xff]
    %v4595 = vld [vmem:[#allocation9 + $0x40] sm:$0xff]
    %v4596 = vld [vmem:[#allocation9 + $0x48] sm:$0xff]
    %v4597 = vld [vmem:[#allocation9 + $0x50] sm:$0xff]
    %v4598 = vld [vmem:[#allocation9 + $0x58] sm:$0xff]
    %v4599 = vld [vmem:[#allocation9 + $0x60] sm:$0xff]
    %v4600 = vld [vmem:[#allocation9 + $0x68] sm:$0xff]
    %v4601 = vld [vmem:[#allocation9 + $0x70] sm:$0xff]
    %v4602 = vld [vmem:[#allocation9 + $0x78] sm:$0xff]
    %v4603 = vld [vmem:[#allocation9 + $0x80] sm:$0xff]
    %v4604 = vld [vmem:[#allocation9 + $0x88] sm:$0xff]
    %v4605 = vld [vmem:[#allocation9 + $0x90] sm:$0xff]
    %v4606 = vld [vmem:[#allocation9 + $0x98] sm:$0xff]
    %v4607 = vld [vmem:[#allocation9 + $0xa0] sm:$0xff]
    %v4608 = vld [vmem:[#allocation9 + $0xa8] sm:$0xff]
    %v4609 = vld [vmem:[#allocation9 + $0xb0] sm:$0xff]
    %v4610 = vld [vmem:[#allocation9 + $0xb8] sm:$0xff]
    %v4611 = vld [vmem:[#allocation9 + $0xc0] sm:$0xff]
    %v4612 = vld [vmem:[#allocation9 + $0xc8] sm:$0xff]
    %v4613 = vld [vmem:[#allocation9 + $0xd0] sm:$0xff]
    %v4614 = vld [vmem:[#allocation9 + $0xd8] sm:$0xff]
    %v4615 = vld [vmem:[#allocation9 + $0xe0] sm:$0xff]
    %v4616 = vld [vmem:[#allocation9 + $0xe8] sm:$0xff]
    %v4617 = vld [vmem:[#allocation9 + $0xf0] sm:$0xff]
    %v4618 = vld [vmem:[#allocation9 + $0xf8] sm:$0xff]
    %v4619 = vld [vmem:[#allocation9 + $0x100] sm:$0xff]
    %v4620 = vld [vmem:[#allocation9 + $0x108] sm:$0xff]
    %v4621 = vld [vmem:[#allocation9 + $0x110] sm:$0xff]
    %v4622 = vld [vmem:[#allocation9 + $0x118] sm:$0xff]
    %v4623 = vld [vmem:[#allocation9 + $0x120] sm:$0xff]
    %v4624 = vld [vmem:[#allocation9 + $0x128] sm:$0xff]
    %v4625 = vld [vmem:[#allocation9 + $0x130] sm:$0xff]
    %v4626 = vld [vmem:[#allocation9 + $0x138] sm:$0xff]
    %v4627 = vld [vmem:[#allocation9 + $0x140] sm:$0xff]
    %v4628 = vld [vmem:[#allocation9 + $0x148] sm:$0xff]
    %v4629 = vld [vmem:[#allocation9 + $0x150] sm:$0xff]
    %v4630 = vld [vmem:[#allocation9 + $0x158] sm:$0xff]
    %v4631 = vld [vmem:[#allocation9 + $0x160] sm:$0xff]
    %v4632 = vld [vmem:[#allocation9 + $0x168] sm:$0xff]
    %v4633 = vld [vmem:[#allocation9 + $0x170] sm:$0xff]
    %v4634 = vld [vmem:[#allocation9 + $0x178] sm:$0xff]
    %v4635 = vld [vmem:[#allocation9 + $0x180] sm:$0xff]
    %v4636 = vld [vmem:[#allocation9 + $0x188] sm:$0xff]
    %v4637 = vld [vmem:[#allocation9 + $0x190] sm:$0xff]
    %v4638 = vld [vmem:[#allocation9 + $0x198] sm:$0xff]
    %v4639 = vld [vmem:[#allocation9 + $0x1a0] sm:$0xff]
    %v4640 = vld [vmem:[#allocation9 + $0x1a8] sm:$0xff]
    %v4641 = vld [vmem:[#allocation9 + $0x1b0] sm:$0xff]
    %v4642 = vld [vmem:[#allocation9 + $0x1b8] sm:$0xff]
    %v4643 = vld [vmem:[#allocation9 + $0x1c0] sm:$0xff]
    %v4644 = vld [vmem:[#allocation9 + $0x1c8] sm:$0xff]
    %v4645 = vld [vmem:[#allocation9 + $0x1d0] sm:$0xff]
    %v4646 = vld [vmem:[#allocation9 + $0x1d8] sm:$0xff]
    %v4647 = vld [vmem:[#allocation9 + $0x1e0] sm:$0xff]
    %v4648 = vld [vmem:[#allocation9 + $0x1e8] sm:$0xff]
    %v4649 = vld [vmem:[#allocation9 + $0x1f0] sm:$0xff]
    %v4650 = vld [vmem:[#allocation9 + $0x1f8] sm:$0xff]
    %v4651 = vld [vmem:[#allocation9 + $0x200] sm:$0xff]
    %v4652 = vld [vmem:[#allocation9 + $0x208] sm:$0xff]
    %v4653 = vld [vmem:[#allocation9 + $0x210] sm:$0xff]
    %v4654 = vld [vmem:[#allocation9 + $0x218] sm:$0xff]
    %v4655 = vld [vmem:[#allocation9 + $0x220] sm:$0xff]
    %v4656 = vld [vmem:[#allocation9 + $0x228] sm:$0xff]
    %v4657 = vld [vmem:[#allocation9 + $0x230] sm:$0xff]
    %v4658 = vld [vmem:[#allocation9 + $0x238] sm:$0xff]
    %v4659 = vld [vmem:[#allocation9 + $0x240] sm:$0xff]
    %v4660 = vld [vmem:[#allocation9 + $0x248] sm:$0xff]
    %v4661 = vld [vmem:[#allocation9 + $0x250] sm:$0xff]
    %v4662 = vld [vmem:[#allocation9 + $0x258] sm:$0xff]
    %v4663 = vld [vmem:[#allocation9 + $0x260] sm:$0xff]
    %v4664 = vld [vmem:[#allocation9 + $0x268] sm:$0xff]
    %v4665 = vld [vmem:[#allocation9 + $0x270] sm:$0xff]
    %v4666 = vld [vmem:[#allocation9 + $0x278] sm:$0xff]
    %v4667 = vld [vmem:[#allocation9 + $0x280] sm:$0xff]
    %v4668 = vld [vmem:[#allocation9 + $0x288] sm:$0xff]
    %v4669 = vld [vmem:[#allocation9 + $0x290] sm:$0xff]
    %v4670 = vld [vmem:[#allocation9 + $0x298] sm:$0xff]
    %v4671 = vld [vmem:[#allocation9 + $0x2a0] sm:$0xff]
    %v4672 = vld [vmem:[#allocation9 + $0x2a8] sm:$0xff]
    %v4673 = vld [vmem:[#allocation9 + $0x2b0] sm:$0xff]
    %v4674 = vld [vmem:[#allocation9 + $0x2b8] sm:$0xff]
    %v4675 = vld [vmem:[#allocation9 + $0x2c0] sm:$0xff]
    %v4676 = vld [vmem:[#allocation9 + $0x2c8] sm:$0xff]
    %v4677 = vld [vmem:[#allocation9 + $0x2d0] sm:$0xff]
    %v4678 = vld [vmem:[#allocation9 + $0x2d8] sm:$0xff]
    %v4679 = vld [vmem:[#allocation9 + $0x2e0] sm:$0xff]
    %v4680 = vld [vmem:[#allocation9 + $0x2e8] sm:$0xff]
    %v4681 = vld [vmem:[#allocation9 + $0x2f0] sm:$0xff]
    %v4682 = vld [vmem:[#allocation9 + $0x2f8] sm:$0xff]
    %v4683 = vld [vmem:[#allocation9 + $0x300] sm:$0xff]
    %v4684 = vld [vmem:[#allocation9 + $0x308] sm:$0xff]
    %v4685 = vld [vmem:[#allocation9 + $0x310] sm:$0xff]
    %v4686 = vld [vmem:[#allocation9 + $0x318] sm:$0xff]
    %v4687 = vld [vmem:[#allocation9 + $0x320] sm:$0xff]
    %v4688 = vld [vmem:[#allocation9 + $0x328] sm:$0xff]
    %v4689 = vld [vmem:[#allocation9 + $0x330] sm:$0xff]
    %v4690 = vld [vmem:[#allocation9 + $0x338] sm:$0xff]
    %v4691 = vld [vmem:[#allocation9 + $0x340] sm:$0xff]
    %v4692 = vld [vmem:[#allocation9 + $0x348] sm:$0xff]
    %v4693 = vld [vmem:[#allocation9 + $0x350] sm:$0xff]
    %v4694 = vld [vmem:[#allocation9 + $0x358] sm:$0xff]
    %v4695 = vld [vmem:[#allocation9 + $0x360] sm:$0xff]
    %v4696 = vld [vmem:[#allocation9 + $0x368] sm:$0xff]
    %v4697 = vld [vmem:[#allocation9 + $0x370] sm:$0xff]
    %v4698 = vld [vmem:[#allocation9 + $0x378] sm:$0xff]
    %v4699 = vld [vmem:[#allocation9 + $0x380] sm:$0xff]
    %v4700 = vld [vmem:[#allocation9 + $0x388] sm:$0xff]
    %v4701 = vld [vmem:[#allocation9 + $0x390] sm:$0xff]
    %v4702 = vld [vmem:[#allocation9 + $0x398] sm:$0xff]
    %v4703 = vld [vmem:[#allocation9 + $0x3a0] sm:$0xff]
    %v4704 = vld [vmem:[#allocation9 + $0x3a8] sm:$0xff]
    %v4705 = vld [vmem:[#allocation9 + $0x3b0] sm:$0xff]
    %v4706 = vld [vmem:[#allocation9 + $0x3b8] sm:$0xff]
    %v4707 = vld [vmem:[#allocation9 + $0x3c0] sm:$0xff]
    %v4708 = vld [vmem:[#allocation9 + $0x3c8] sm:$0xff]
    %v4709 = vld [vmem:[#allocation9 + $0x3d0] sm:$0xff]
    %v4710 = vld [vmem:[#allocation9 + $0x3d8] sm:$0xff]
    %v4711 = vld [vmem:[#allocation9 + $0x3e0] sm:$0xff]
    %v4712 = vld [vmem:[#allocation9 + $0x3e8] sm:$0xff]
    %v4713 = vld [vmem:[#allocation9 + $0x3f0] sm:$0xff]
    %v4714 = vld [vmem:[#allocation9 + $0x3f8] sm:$0xff]
    %v4715 = vld [vmem:[%s13] sm:$0xf]
    %v4717 = vlaneseq
    %v4718 = vshrl.u32 %v4717, 7
    %v4719 = vsub.s32 0, %v4718
    %v4720 = vrot.slane %v4715, %v4719
    %v4721 = vlaneseq
    %v4722 = vshrl.u32 %v4721, 7
    %v4723 = vsub.s32 1, %v4722
    %v4724 = vrot.slane %v4715, %v4723
    %v4725 = vlaneseq
    %v4726 = vshrl.u32 %v4725, 7
    %v4727 = vsub.s32 2, %v4726
    %v4728 = vrot.slane %v4715, %v4727
    %v4729 = vlaneseq
    %v4730 = vshrl.u32 %v4729, 7
    %v4731 = vsub.s32 3, %v4730
    %v4732 = vrot.slane %v4715, %v4731
    %v4865 = vunpack.c.l.b16 %v4587
    %v4866 = vunpack.c.h.b16 %v4587
    %v4867 = vunpack.c.l.b16 %v4588
    %v4868 = vunpack.c.h.b16 %v4588
    %v4869 = vunpack.c.l.b16 %v4589
    %v4870 = vunpack.c.h.b16 %v4589
    %v4871 = vunpack.c.l.b16 %v4590
    %v4872 = vunpack.c.h.b16 %v4590
    %v4873 = vunpack.c.l.b16 %v4591
    %v4874 = vunpack.c.h.b16 %v4591
    %v4875 = vunpack.c.l.b16 %v4592
    %v4876 = vunpack.c.h.b16 %v4592
    %v4877 = vunpack.c.l.b16 %v4593
    %v4878 = vunpack.c.h.b16 %v4593
    %v4879 = vunpack.c.l.b16 %v4594
    %v4880 = vunpack.c.h.b16 %v4594
    %v4881 = vunpack.c.l.b16 %v4595
    %v4882 = vunpack.c.h.b16 %v4595
    %v4883 = vunpack.c.l.b16 %v4596
    %v4884 = vunpack.c.h.b16 %v4596
    %v4885 = vunpack.c.l.b16 %v4597
    %v4886 = vunpack.c.h.b16 %v4597
    %v4887 = vunpack.c.l.b16 %v4598
    %v4888 = vunpack.c.h.b16 %v4598
    %v4889 = vunpack.c.l.b16 %v4599
    %v4890 = vunpack.c.h.b16 %v4599
    %v4891 = vunpack.c.l.b16 %v4600
    %v4892 = vunpack.c.h.b16 %v4600
    %v4893 = vunpack.c.l.b16 %v4601
    %v4894 = vunpack.c.h.b16 %v4601
    %v4895 = vunpack.c.l.b16 %v4602
    %v4896 = vunpack.c.h.b16 %v4602
    %v4897 = vunpack.c.l.b16 %v4603
    %v4898 = vunpack.c.h.b16 %v4603
    %v4899 = vunpack.c.l.b16 %v4604
    %v4900 = vunpack.c.h.b16 %v4604
    %v4901 = vunpack.c.l.b16 %v4605
    %v4902 = vunpack.c.h.b16 %v4605
    %v4903 = vunpack.c.l.b16 %v4606
    %v4904 = vunpack.c.h.b16 %v4606
    %v4905 = vunpack.c.l.b16 %v4607
    %v4906 = vunpack.c.h.b16 %v4607
    %v4907 = vunpack.c.l.b16 %v4608
    %v4908 = vunpack.c.h.b16 %v4608
    %v4909 = vunpack.c.l.b16 %v4609
    %v4910 = vunpack.c.h.b16 %v4609
    %v4911 = vunpack.c.l.b16 %v4610
    %v4912 = vunpack.c.h.b16 %v4610
    %v4913 = vunpack.c.l.b16 %v4611
    %v4914 = vunpack.c.h.b16 %v4611
    %v4915 = vunpack.c.l.b16 %v4612
    %v4916 = vunpack.c.h.b16 %v4612
    %v4917 = vunpack.c.l.b16 %v4613
    %v4918 = vunpack.c.h.b16 %v4613
    %v4919 = vunpack.c.l.b16 %v4614
    %v4920 = vunpack.c.h.b16 %v4614
    %v4921 = vunpack.c.l.b16 %v4615
    %v4922 = vunpack.c.h.b16 %v4615
    %v4923 = vunpack.c.l.b16 %v4616
    %v4924 = vunpack.c.h.b16 %v4616
    %v4925 = vunpack.c.l.b16 %v4617
    %v4926 = vunpack.c.h.b16 %v4617
    %v4927 = vunpack.c.l.b16 %v4618
    %v4928 = vunpack.c.h.b16 %v4618
    %v4929 = vunpack.c.l.b16 %v4619
    %v4930 = vunpack.c.h.b16 %v4619
    %v4931 = vunpack.c.l.b16 %v4620
    %v4932 = vunpack.c.h.b16 %v4620
    %v4933 = vunpack.c.l.b16 %v4621
    %v4934 = vunpack.c.h.b16 %v4621
    %v4935 = vunpack.c.l.b16 %v4622
    %v4936 = vunpack.c.h.b16 %v4622
    %v4937 = vunpack.c.l.b16 %v4623
    %v4938 = vunpack.c.h.b16 %v4623
    %v4939 = vunpack.c.l.b16 %v4624
    %v4940 = vunpack.c.h.b16 %v4624
    %v4941 = vunpack.c.l.b16 %v4625
    %v4942 = vunpack.c.h.b16 %v4625
    %v4943 = vunpack.c.l.b16 %v4626
    %v4944 = vunpack.c.h.b16 %v4626
    %v4945 = vunpack.c.l.b16 %v4627
    %v4946 = vunpack.c.h.b16 %v4627
    %v4947 = vunpack.c.l.b16 %v4628
    %v4948 = vunpack.c.h.b16 %v4628
    %v4949 = vunpack.c.l.b16 %v4629
    %v4950 = vunpack.c.h.b16 %v4629
    %v4951 = vunpack.c.l.b16 %v4630
    %v4952 = vunpack.c.h.b16 %v4630
    %v4953 = vunpack.c.l.b16 %v4631
    %v4954 = vunpack.c.h.b16 %v4631
    %v4955 = vunpack.c.l.b16 %v4632
    %v4956 = vunpack.c.h.b16 %v4632
    %v4957 = vunpack.c.l.b16 %v4633
    %v4958 = vunpack.c.h.b16 %v4633
    %v4959 = vunpack.c.l.b16 %v4634
    %v4960 = vunpack.c.h.b16 %v4634
    %v4961 = vunpack.c.l.b16 %v4635
    %v4962 = vunpack.c.h.b16 %v4635
    %v4963 = vunpack.c.l.b16 %v4636
    %v4964 = vunpack.c.h.b16 %v4636
    %v4965 = vunpack.c.l.b16 %v4637
    %v4966 = vunpack.c.h.b16 %v4637
    %v4967 = vunpack.c.l.b16 %v4638
    %v4968 = vunpack.c.h.b16 %v4638
    %v4969 = vunpack.c.l.b16 %v4639
    %v4970 = vunpack.c.h.b16 %v4639
    %v4971 = vunpack.c.l.b16 %v4640
    %v4972 = vunpack.c.h.b16 %v4640
    %v4973 = vunpack.c.l.b16 %v4641
    %v4974 = vunpack.c.h.b16 %v4641
    %v4975 = vunpack.c.l.b16 %v4642
    %v4976 = vunpack.c.h.b16 %v4642
    %v4977 = vunpack.c.l.b16 %v4643
    %v4978 = vunpack.c.h.b16 %v4643
    %v4979 = vunpack.c.l.b16 %v4644
    %v4980 = vunpack.c.h.b16 %v4644
    %v4981 = vunpack.c.l.b16 %v4645
    %v4982 = vunpack.c.h.b16 %v4645
    %v4983 = vunpack.c.l.b16 %v4646
    %v4984 = vunpack.c.h.b16 %v4646
    %v4985 = vunpack.c.l.b16 %v4647
    %v4986 = vunpack.c.h.b16 %v4647
    %v4987 = vunpack.c.l.b16 %v4648
    %v4988 = vunpack.c.h.b16 %v4648
    %v4989 = vunpack.c.l.b16 %v4649
    %v4990 = vunpack.c.h.b16 %v4649
    %v4991 = vunpack.c.l.b16 %v4650
    %v4992 = vunpack.c.h.b16 %v4650
    %v4993 = vunpack.c.l.b16 %v4651
    %v4994 = vunpack.c.h.b16 %v4651
    %v4995 = vunpack.c.l.b16 %v4652
    %v4996 = vunpack.c.h.b16 %v4652
    %v4997 = vunpack.c.l.b16 %v4653
    %v4998 = vunpack.c.h.b16 %v4653
    %v4999 = vunpack.c.l.b16 %v4654
    %v5000 = vunpack.c.h.b16 %v4654
    %v5001 = vunpack.c.l.b16 %v4655
    %v5002 = vunpack.c.h.b16 %v4655
    %v5003 = vunpack.c.l.b16 %v4656
    %v5004 = vunpack.c.h.b16 %v4656
    %v5005 = vunpack.c.l.b16 %v4657
    %v5006 = vunpack.c.h.b16 %v4657
    %v5007 = vunpack.c.l.b16 %v4658
    %v5008 = vunpack.c.h.b16 %v4658
    %v5009 = vunpack.c.l.b16 %v4659
    %v5010 = vunpack.c.h.b16 %v4659
    %v5011 = vunpack.c.l.b16 %v4660
    %v5012 = vunpack.c.h.b16 %v4660
    %v5013 = vunpack.c.l.b16 %v4661
    %v5014 = vunpack.c.h.b16 %v4661
    %v5015 = vunpack.c.l.b16 %v4662
    %v5016 = vunpack.c.h.b16 %v4662
    %v5017 = vunpack.c.l.b16 %v4663
    %v5018 = vunpack.c.h.b16 %v4663
    %v5019 = vunpack.c.l.b16 %v4664
    %v5020 = vunpack.c.h.b16 %v4664
    %v5021 = vunpack.c.l.b16 %v4665
    %v5022 = vunpack.c.h.b16 %v4665
    %v5023 = vunpack.c.l.b16 %v4666
    %v5024 = vunpack.c.h.b16 %v4666
    %v5025 = vunpack.c.l.b16 %v4667
    %v5026 = vunpack.c.h.b16 %v4667
    %v5027 = vunpack.c.l.b16 %v4668
    %v5028 = vunpack.c.h.b16 %v4668
    %v5029 = vunpack.c.l.b16 %v4669
    %v5030 = vunpack.c.h.b16 %v4669
    %v5031 = vunpack.c.l.b16 %v4670
    %v5032 = vunpack.c.h.b16 %v4670
    %v5033 = vunpack.c.l.b16 %v4671
    %v5034 = vunpack.c.h.b16 %v4671
    %v5035 = vunpack.c.l.b16 %v4672
    %v5036 = vunpack.c.h.b16 %v4672
    %v5037 = vunpack.c.l.b16 %v4673
    %v5038 = vunpack.c.h.b16 %v4673
    %v5039 = vunpack.c.l.b16 %v4674
    %v5040 = vunpack.c.h.b16 %v4674
    %v5041 = vunpack.c.l.b16 %v4675
    %v5042 = vunpack.c.h.b16 %v4675
    %v5043 = vunpack.c.l.b16 %v4676
    %v5044 = vunpack.c.h.b16 %v4676
    %v5045 = vunpack.c.l.b16 %v4677
    %v5046 = vunpack.c.h.b16 %v4677
    %v5047 = vunpack.c.l.b16 %v4678
    %v5048 = vunpack.c.h.b16 %v4678
    %v5049 = vunpack.c.l.b16 %v4679
    %v5050 = vunpack.c.h.b16 %v4679
    %v5051 = vunpack.c.l.b16 %v4680
    %v5052 = vunpack.c.h.b16 %v4680
    %v5053 = vunpack.c.l.b16 %v4681
    %v5054 = vunpack.c.h.b16 %v4681
    %v5055 = vunpack.c.l.b16 %v4682
    %v5056 = vunpack.c.h.b16 %v4682
    %v5057 = vunpack.c.l.b16 %v4683
    %v5058 = vunpack.c.h.b16 %v4683
    %v5059 = vunpack.c.l.b16 %v4684
    %v5060 = vunpack.c.h.b16 %v4684
    %v5061 = vunpack.c.l.b16 %v4685
    %v5062 = vunpack.c.h.b16 %v4685
    %v5063 = vunpack.c.l.b16 %v4686
    %v5064 = vunpack.c.h.b16 %v4686
    %v5065 = vunpack.c.l.b16 %v4687
    %v5066 = vunpack.c.h.b16 %v4687
    %v5067 = vunpack.c.l.b16 %v4688
    %v5068 = vunpack.c.h.b16 %v4688
    %v5069 = vunpack.c.l.b16 %v4689
    %v5070 = vunpack.c.h.b16 %v4689
    %v5071 = vunpack.c.l.b16 %v4690
    %v5072 = vunpack.c.h.b16 %v4690
    %v5073 = vunpack.c.l.b16 %v4691
    %v5074 = vunpack.c.h.b16 %v4691
    %v5075 = vunpack.c.l.b16 %v4692
    %v5076 = vunpack.c.h.b16 %v4692
    %v5077 = vunpack.c.l.b16 %v4693
    %v5078 = vunpack.c.h.b16 %v4693
    %v5079 = vunpack.c.l.b16 %v4694
    %v5080 = vunpack.c.h.b16 %v4694
    %v5081 = vunpack.c.l.b16 %v4695
    %v5082 = vunpack.c.h.b16 %v4695
    %v5083 = vunpack.c.l.b16 %v4696
    %v5084 = vunpack.c.h.b16 %v4696
    %v5085 = vunpack.c.l.b16 %v4697
    %v5086 = vunpack.c.h.b16 %v4697
    %v5087 = vunpack.c.l.b16 %v4698
    %v5088 = vunpack.c.h.b16 %v4698
    %v5089 = vunpack.c.l.b16 %v4699
    %v5090 = vunpack.c.h.b16 %v4699
    %v5091 = vunpack.c.l.b16 %v4700
    %v5092 = vunpack.c.h.b16 %v4700
    %v5093 = vunpack.c.l.b16 %v4701
    %v5094 = vunpack.c.h.b16 %v4701
    %v5095 = vunpack.c.l.b16 %v4702
    %v5096 = vunpack.c.h.b16 %v4702
    %v5097 = vunpack.c.l.b16 %v4703
    %v5098 = vunpack.c.h.b16 %v4703
    %v5099 = vunpack.c.l.b16 %v4704
    %v5100 = vunpack.c.h.b16 %v4704
    %v5101 = vunpack.c.l.b16 %v4705
    %v5102 = vunpack.c.h.b16 %v4705
    %v5103 = vunpack.c.l.b16 %v4706
    %v5104 = vunpack.c.h.b16 %v4706
    %v5105 = vunpack.c.l.b16 %v4707
    %v5106 = vunpack.c.h.b16 %v4707
    %v5107 = vunpack.c.l.b16 %v4708
    %v5108 = vunpack.c.h.b16 %v4708
    %v5109 = vunpack.c.l.b16 %v4709
    %v5110 = vunpack.c.h.b16 %v4709
    %v5111 = vunpack.c.l.b16 %v4710
    %v5112 = vunpack.c.h.b16 %v4710
    %v5113 = vunpack.c.l.b16 %v4711
    %v5114 = vunpack.c.h.b16 %v4711
    %v5115 = vunpack.c.l.b16 %v4712
    %v5116 = vunpack.c.h.b16 %v4712
    %v5117 = vunpack.c.l.b16 %v4713
    %v5118 = vunpack.c.h.b16 %v4713
    %v5119 = vunpack.c.l.b16 %v4714
    %v5120 = vunpack.c.h.b16 %v4714
    %v5121 = vpack.c.b16 %v4869, %v4865
    %v5122 = vpack.c.b16 %v4870, %v4866
    %v5123 = vpack.c.b16 %v4871, %v4867
    %v5124 = vpack.c.b16 %v4872, %v4868
    %v5125 = vpack.c.b16 %v4877, %v4873
    %v5126 = vpack.c.b16 %v4878, %v4874
    %v5127 = vpack.c.b16 %v4879, %v4875
    %v5128 = vpack.c.b16 %v4880, %v4876
    %v5129 = vpack.c.b16 %v4885, %v4881
    %v5130 = vpack.c.b16 %v4886, %v4882
    %v5131 = vpack.c.b16 %v4887, %v4883
    %v5132 = vpack.c.b16 %v4888, %v4884
    %v5133 = vpack.c.b16 %v4893, %v4889
    %v5134 = vpack.c.b16 %v4894, %v4890
    %v5135 = vpack.c.b16 %v4895, %v4891
    %v5136 = vpack.c.b16 %v4896, %v4892
    %v5137 = vpack.c.b16 %v4901, %v4897
    %v5138 = vpack.c.b16 %v4902, %v4898
    %v5139 = vpack.c.b16 %v4903, %v4899
    %v5140 = vpack.c.b16 %v4904, %v4900
    %v5141 = vpack.c.b16 %v4909, %v4905
    %v5142 = vpack.c.b16 %v4910, %v4906
    %v5143 = vpack.c.b16 %v4911, %v4907
    %v5144 = vpack.c.b16 %v4912, %v4908
    %v5145 = vpack.c.b16 %v4917, %v4913
    %v5146 = vpack.c.b16 %v4918, %v4914
    %v5147 = vpack.c.b16 %v4919, %v4915
    %v5148 = vpack.c.b16 %v4920, %v4916
    %v5149 = vpack.c.b16 %v4925, %v4921
    %v5150 = vpack.c.b16 %v4926, %v4922
    %v5151 = vpack.c.b16 %v4927, %v4923
    %v5152 = vpack.c.b16 %v4928, %v4924
    %v5153 = vpack.c.b16 %v4933, %v4929
    %v5154 = vpack.c.b16 %v4934, %v4930
    %v5155 = vpack.c.b16 %v4935, %v4931
    %v5156 = vpack.c.b16 %v4936, %v4932
    %v5157 = vpack.c.b16 %v4941, %v4937
    %v5158 = vpack.c.b16 %v4942, %v4938
    %v5159 = vpack.c.b16 %v4943, %v4939
    %v5160 = vpack.c.b16 %v4944, %v4940
    %v5161 = vpack.c.b16 %v4949, %v4945
    %v5162 = vpack.c.b16 %v4950, %v4946
    %v5163 = vpack.c.b16 %v4951, %v4947
    %v5164 = vpack.c.b16 %v4952, %v4948
    %v5165 = vpack.c.b16 %v4957, %v4953
    %v5166 = vpack.c.b16 %v4958, %v4954
    %v5167 = vpack.c.b16 %v4959, %v4955
    %v5168 = vpack.c.b16 %v4960, %v4956
    %v5169 = vpack.c.b16 %v4965, %v4961
    %v5170 = vpack.c.b16 %v4966, %v4962
    %v5171 = vpack.c.b16 %v4967, %v4963
    %v5172 = vpack.c.b16 %v4968, %v4964
    %v5173 = vpack.c.b16 %v4973, %v4969
    %v5174 = vpack.c.b16 %v4974, %v4970
    %v5175 = vpack.c.b16 %v4975, %v4971
    %v5176 = vpack.c.b16 %v4976, %v4972
    %v5177 = vpack.c.b16 %v4981, %v4977
    %v5178 = vpack.c.b16 %v4982, %v4978
    %v5179 = vpack.c.b16 %v4983, %v4979
    %v5180 = vpack.c.b16 %v4984, %v4980
    %v5181 = vpack.c.b16 %v4989, %v4985
    %v5182 = vpack.c.b16 %v4990, %v4986
    %v5183 = vpack.c.b16 %v4991, %v4987
    %v5184 = vpack.c.b16 %v4992, %v4988
    %v5185 = vpack.c.b16 %v4997, %v4993
    %v5186 = vpack.c.b16 %v4998, %v4994
    %v5187 = vpack.c.b16 %v4999, %v4995
    %v5188 = vpack.c.b16 %v5000, %v4996
    %v5189 = vpack.c.b16 %v5005, %v5001
    %v5190 = vpack.c.b16 %v5006, %v5002
    %v5191 = vpack.c.b16 %v5007, %v5003
    %v5192 = vpack.c.b16 %v5008, %v5004
    %v5193 = vpack.c.b16 %v5013, %v5009
    %v5194 = vpack.c.b16 %v5014, %v5010
    %v5195 = vpack.c.b16 %v5015, %v5011
    %v5196 = vpack.c.b16 %v5016, %v5012
    %v5197 = vpack.c.b16 %v5021, %v5017
    %v5198 = vpack.c.b16 %v5022, %v5018
    %v5199 = vpack.c.b16 %v5023, %v5019
    %v5200 = vpack.c.b16 %v5024, %v5020
    %v5201 = vpack.c.b16 %v5029, %v5025
    %v5202 = vpack.c.b16 %v5030, %v5026
    %v5203 = vpack.c.b16 %v5031, %v5027
    %v5204 = vpack.c.b16 %v5032, %v5028
    %v5205 = vpack.c.b16 %v5037, %v5033
    %v5206 = vpack.c.b16 %v5038, %v5034
    %v5207 = vpack.c.b16 %v5039, %v5035
    %v5208 = vpack.c.b16 %v5040, %v5036
    %v5209 = vpack.c.b16 %v5045, %v5041
    %v5210 = vpack.c.b16 %v5046, %v5042
    %v5211 = vpack.c.b16 %v5047, %v5043
    %v5212 = vpack.c.b16 %v5048, %v5044
    %v5213 = vpack.c.b16 %v5053, %v5049
    %v5214 = vpack.c.b16 %v5054, %v5050
    %v5215 = vpack.c.b16 %v5055, %v5051
    %v5216 = vpack.c.b16 %v5056, %v5052
    %v5217 = vpack.c.b16 %v5061, %v5057
    %v5218 = vpack.c.b16 %v5062, %v5058
    %v5219 = vpack.c.b16 %v5063, %v5059
    %v5220 = vpack.c.b16 %v5064, %v5060
    %v5221 = vpack.c.b16 %v5069, %v5065
    %v5222 = vpack.c.b16 %v5070, %v5066
    %v5223 = vpack.c.b16 %v5071, %v5067
    %v5224 = vpack.c.b16 %v5072, %v5068
    %v5225 = vpack.c.b16 %v5077, %v5073
    %v5226 = vpack.c.b16 %v5078, %v5074
    %v5227 = vpack.c.b16 %v5079, %v5075
    %v5228 = vpack.c.b16 %v5080, %v5076
    %v5229 = vpack.c.b16 %v5085, %v5081
    %v5230 = vpack.c.b16 %v5086, %v5082
    %v5231 = vpack.c.b16 %v5087, %v5083
    %v5232 = vpack.c.b16 %v5088, %v5084
    %v5233 = vpack.c.b16 %v5093, %v5089
    %v5234 = vpack.c.b16 %v5094, %v5090
    %v5235 = vpack.c.b16 %v5095, %v5091
    %v5236 = vpack.c.b16 %v5096, %v5092
    %v5237 = vpack.c.b16 %v5101, %v5097
    %v5238 = vpack.c.b16 %v5102, %v5098
    %v5239 = vpack.c.b16 %v5103, %v5099
    %v5240 = vpack.c.b16 %v5104, %v5100
    %v5241 = vpack.c.b16 %v5109, %v5105
    %v5242 = vpack.c.b16 %v5110, %v5106
    %v5243 = vpack.c.b16 %v5111, %v5107
    %v5244 = vpack.c.b16 %v5112, %v5108
    %v5245 = vpack.c.b16 %v5117, %v5113
    %v5246 = vpack.c.b16 %v5118, %v5114
    %v5247 = vpack.c.b16 %v5119, %v5115
    %v5248 = vpack.c.b16 %v5120, %v5116
    %5377 = vmatprep.subr.bf16.mxu0 %v5150
    %5378 = vmatpush1.bf16.msra.mxu0 %v5149
    %5379 = vmatprep.subr.bf16.mxu0 %v5146
    %5380 = vmatpush1.bf16.msra.mxu0 %v5145
    %5381 = vmatprep.subr.bf16.mxu0 %v5142
    %5382 = vmatpush1.bf16.msra.mxu0 %v5141
    %5383 = vmatprep.subr.bf16.mxu0 %v5138
    %5384 = vmatpush1.bf16.msra.mxu0 %v5137
    %5385 = vmatprep.subr.bf16.mxu0 %v5134
    %5386 = vmatpush1.bf16.msra.mxu0 %v5133
    %5387 = vmatprep.subr.bf16.mxu0 %v5130
    %5388 = vmatpush1.bf16.msra.mxu0 %v5129
    %5389 = vmatprep.subr.bf16.mxu0 %v5126
    %5390 = vmatpush1.bf16.msra.mxu0 %v5125
    %5391 = vmatprep.subr.bf16.mxu0 %v5122
    %5392 = vmatpush1.bf16.msra.mxu0 %v5121
    %5393 = vmatprep.subr.bf16.mxu0 %v5182
    %5394 = vmatpush2.bf16.msra.mxu0 %v5181
    %5395 = vmatprep.subr.bf16.mxu0 %v5178
    %5396 = vmatpush2.bf16.msra.mxu0 %v5177
    %5397 = vmatprep.subr.bf16.mxu0 %v5174
    %5398 = vmatpush2.bf16.msra.mxu0 %v5173
    %5399 = vmatprep.subr.bf16.mxu0 %v5170
    %5400 = vmatpush2.bf16.msra.mxu0 %v5169
    %5401 = vmatprep.subr.bf16.mxu0 %v5166
    %5402 = vmatpush2.bf16.msra.mxu0 %v5165
    %5403 = vmatprep.subr.bf16.mxu0 %v5162
    %5404 = vmatpush2.bf16.msra.mxu0 %v5161
    %5405 = vmatprep.subr.bf16.mxu0 %v5158
    %5406 = vmatpush2.bf16.msra.mxu0 %v5157
    %5407 = vmatprep.subr.bf16.mxu0 %v5154
    %5408 = vmatpush2.bf16.msra.mxu0 %v5153
    %5409 = vmatprep.mubr.bf16.mxu0 %v4584
    %5410 = vmatmul.mubr.bf16.gmra.mxu0 %v4583
    %v5411 = vpop.f32.mrf.mxu0
    %v5412 = vadd.f32 %v4720, %v5411
    %v5413 = vpop.f32.mrf.mxu0
    %v5414 = vadd.f32 %v4724, %v5413
    %v5415 = vpop.f32.mrf.mxu0
    %v5416 = vpop.f32.mrf.mxu0
    %5417 = vdwg.mxu0
    %5418 = vmatprep.subr.bf16.mxu0 %v5214
    %5419 = vmatpush1.bf16.msra.mxu0 %v5213
    %5420 = vmatprep.subr.bf16.mxu0 %v5210
    %5421 = vmatpush1.bf16.msra.mxu0 %v5209
    %5422 = vmatprep.subr.bf16.mxu0 %v5206
    %5423 = vmatpush1.bf16.msra.mxu0 %v5205
    %5424 = vmatprep.subr.bf16.mxu0 %v5202
    %5425 = vmatpush1.bf16.msra.mxu0 %v5201
    %5426 = vmatprep.subr.bf16.mxu0 %v5198
    %5427 = vmatpush1.bf16.msra.mxu0 %v5197
    %5428 = vmatprep.subr.bf16.mxu0 %v5194
    %5429 = vmatpush1.bf16.msra.mxu0 %v5193
    %5430 = vmatprep.subr.bf16.mxu0 %v5190
    %5431 = vmatpush1.bf16.msra.mxu0 %v5189
    %5432 = vmatprep.subr.bf16.mxu0 %v5186
    %5433 = vmatpush1.bf16.msra.mxu0 %v5185
    %5434 = vmatprep.subr.bf16.mxu0 %v5246
    %5435 = vmatpush2.bf16.msra.mxu0 %v5245
    %5436 = vmatprep.subr.bf16.mxu0 %v5242
    %5437 = vmatpush2.bf16.msra.mxu0 %v5241
    %5438 = vmatprep.subr.bf16.mxu0 %v5238
    %5439 = vmatpush2.bf16.msra.mxu0 %v5237
    %5440 = vmatprep.subr.bf16.mxu0 %v5234
    %5441 = vmatpush2.bf16.msra.mxu0 %v5233
    %5442 = vmatprep.subr.bf16.mxu0 %v5230
    %5443 = vmatpush2.bf16.msra.mxu0 %v5229
    %5444 = vmatprep.subr.bf16.mxu0 %v5226
    %5445 = vmatpush2.bf16.msra.mxu0 %v5225
    %5446 = vmatprep.subr.bf16.mxu0 %v5222
    %5447 = vmatpush2.bf16.msra.mxu0 %v5221
    %5448 = vmatprep.subr.bf16.mxu0 %v5218
    %5449 = vmatpush2.bf16.msra.mxu0 %v5217
    %5450 = vmatprep.mubr.bf16.mxu0 %v4586
    %5451 = vmatmul.mubr.bf16.gmra.mxu0 %v4585
    %v5452 = vpop.f32.mrf.mxu0
    %v5453 = vadd.f32 %v5412, %v5452
    %v5454 = vpop.f32.mrf.mxu0
    %v5455 = vadd.f32 %v5414, %v5454
    %v5456 = vpop.f32.mrf.mxu0
    %v5457 = vpop.f32.mrf.mxu0
    %5458 = vdwg.mxu0
    %5459 = vmatprep.subr.bf16.mxu0 %v5152
    %5460 = vmatpush1.bf16.msra.mxu0 %v5151
    %5461 = vmatprep.subr.bf16.mxu0 %v5148
    %5462 = vmatpush1.bf16.msra.mxu0 %v5147
    %5463 = vmatprep.subr.bf16.mxu0 %v5144
    %5464 = vmatpush1.bf16.msra.mxu0 %v5143
    %5465 = vmatprep.subr.bf16.mxu0 %v5140
    %5466 = vmatpush1.bf16.msra.mxu0 %v5139
    %5467 = vmatprep.subr.bf16.mxu0 %v5136
    %5468 = vmatpush1.bf16.msra.mxu0 %v5135
    %5469 = vmatprep.subr.bf16.mxu0 %v5132
    %5470 = vmatpush1.bf16.msra.mxu0 %v5131
    %5471 = vmatprep.subr.bf16.mxu0 %v5128
    %5472 = vmatpush1.bf16.msra.mxu0 %v5127
    %5473 = vmatprep.subr.bf16.mxu0 %v5124
    %5474 = vmatpush1.bf16.msra.mxu0 %v5123
    %5475 = vmatprep.subr.bf16.mxu0 %v5184
    %5476 = vmatpush2.bf16.msra.mxu0 %v5183
    %5477 = vmatprep.subr.bf16.mxu0 %v5180
    %5478 = vmatpush2.bf16.msra.mxu0 %v5179
    %5479 = vmatprep.subr.bf16.mxu0 %v5176
    %5480 = vmatpush2.bf16.msra.mxu0 %v5175
    %5481 = vmatprep.subr.bf16.mxu0 %v5172
    %5482 = vmatpush2.bf16.msra.mxu0 %v5171
    %5483 = vmatprep.subr.bf16.mxu0 %v5168
    %5484 = vmatpush2.bf16.msra.mxu0 %v5167
    %5485 = vmatprep.subr.bf16.mxu0 %v5164
    %5486 = vmatpush2.bf16.msra.mxu0 %v5163
    %5487 = vmatprep.subr.bf16.mxu0 %v5160
    %5488 = vmatpush2.bf16.msra.mxu0 %v5159
    %5489 = vmatprep.subr.bf16.mxu0 %v5156
    %5490 = vmatpush2.bf16.msra.mxu0 %v5155
    %5491 = vmatprep.mubr.bf16.mxu0 %v4584
    %5492 = vmatmul.mubr.bf16.gmra.mxu0 %v4583
    %v5493 = vpop.f32.mrf.mxu0
    %v5494 = vadd.f32 %v4728, %v5493
    %v5495 = vpop.f32.mrf.mxu0
    %v5496 = vadd.f32 %v4732, %v5495
    %v5497 = vpop.f32.mrf.mxu0
    %v5498 = vpop.f32.mrf.mxu0
    %5499 = vdwg.mxu0
    %5500 = vmatprep.subr.bf16.mxu0 %v5216
    %5501 = vmatpush1.bf16.msra.mxu0 %v5215
    %5502 = vmatprep.subr.bf16.mxu0 %v5212
    %5503 = vmatpush1.bf16.msra.mxu0 %v5211
    %5504 = vmatprep.subr.bf16.mxu0 %v5208
    %5505 = vmatpush1.bf16.msra.mxu0 %v5207
    %5506 = vmatprep.subr.bf16.mxu0 %v5204
    %5507 = vmatpush1.bf16.msra.mxu0 %v5203
    %5508 = vmatprep.subr.bf16.mxu0 %v5200
    %5509 = vmatpush1.bf16.msra.mxu0 %v5199
    %5510 = vmatprep.subr.bf16.mxu0 %v5196
    %5511 = vmatpush1.bf16.msra.mxu0 %v5195
    %5512 = vmatprep.subr.bf16.mxu0 %v5192
    %5513 = vmatpush1.bf16.msra.mxu0 %v5191
    %5514 = vmatprep.subr.bf16.mxu0 %v5188
    %5515 = vmatpush1.bf16.msra.mxu0 %v5187
    %5516 = vmatprep.subr.bf16.mxu0 %v5248
    %5517 = vmatpush2.bf16.msra.mxu0 %v5247
    %5518 = vmatprep.subr.bf16.mxu0 %v5244
    %5519 = vmatpush2.bf16.msra.mxu0 %v5243
    %5520 = vmatprep.subr.bf16.mxu0 %v5240
    %5521 = vmatpush2.bf16.msra.mxu0 %v5239
    %5522 = vmatprep.subr.bf16.mxu0 %v5236
    %5523 = vmatpush2.bf16.msra.mxu0 %v5235
    %5524 = vmatprep.subr.bf16.mxu0 %v5232
    %5525 = vmatpush2.bf16.msra.mxu0 %v5231
    %5526 = vmatprep.subr.bf16.mxu0 %v5228
    %5527 = vmatpush2.bf16.msra.mxu0 %v5227
    %5528 = vmatprep.subr.bf16.mxu0 %v5224
    %5529 = vmatpush2.bf16.msra.mxu0 %v5223
    %5530 = vmatprep.subr.bf16.mxu0 %v5220
    %5531 = vmatpush2.bf16.msra.mxu0 %v5219
    %5532 = vmatprep.mubr.bf16.mxu0 %v4586
    %5533 = vmatmul.mubr.bf16.gmra.mxu0 %v4585
    %v5534 = vpop.f32.mrf.mxu0
    %v5535 = vadd.f32 %v5494, %v5534
    %v5536 = vpop.f32.mrf.mxu0
    %v5537 = vadd.f32 %v5496, %v5536
    %v5538 = vpop.f32.mrf.mxu0
    %v5539 = vpop.f32.mrf.mxu0
    %5540 = vdwg.mxu0
    %v5541 = vmax.f32 %v5453, 0.0
    %v5542 = vmax.f32 %v5455, 0.0
    %v5543 = vmax.f32 %v5535, 0.0
    %v5544 = vmax.f32 %v5537, 0.0
    %v5545 = vpack.c.bf16 %v5541, %v5541
    %v5546 = vpack.c.bf16 %v5542, %v5542
    %v5547 = vpack.c.bf16 %v5543, %v5543
    %v5548 = vpack.c.bf16 %v5544, %v5544
    %v5549 = vld [vmem:[#allocation10] sm:$0xff]
    %v5550 = vld [vmem:[#allocation10 + $0x8] sm:$0xff]
    %v5551 = vld [vmem:[#allocation10 + $0x10] sm:$0xff]
    %v5552 = vld [vmem:[#allocation10 + $0x18] sm:$0xff]
    %v5553 = vld [vmem:[#allocation10 + $0x20] sm:$0xff]
    %v5554 = vld [vmem:[#allocation10 + $0x28] sm:$0xff]
    %v5555 = vld [vmem:[#allocation10 + $0x30] sm:$0xff]
    %v5556 = vld [vmem:[#allocation10 + $0x38] sm:$0xff]
    %v5557 = vld [vmem:[#allocation10 + $0x40] sm:$0xff]
    %v5558 = vld [vmem:[#allocation10 + $0x48] sm:$0xff]
    %v5559 = vld [vmem:[#allocation10 + $0x50] sm:$0xff]
    %v5560 = vld [vmem:[#allocation10 + $0x58] sm:$0xff]
    %v5561 = vld [vmem:[#allocation10 + $0x60] sm:$0xff]
    %v5562 = vld [vmem:[#allocation10 + $0x68] sm:$0xff]
    %v5563 = vld [vmem:[#allocation10 + $0x70] sm:$0xff]
    %v5564 = vld [vmem:[#allocation10 + $0x78] sm:$0xff]
    %v5565 = vld [vmem:[#allocation10 + $0x80] sm:$0xff]
    %v5566 = vld [vmem:[#allocation10 + $0x88] sm:$0xff]
    %v5567 = vld [vmem:[#allocation10 + $0x90] sm:$0xff]
    %v5568 = vld [vmem:[#allocation10 + $0x98] sm:$0xff]
    %v5569 = vld [vmem:[#allocation10 + $0xa0] sm:$0xff]
    %v5570 = vld [vmem:[#allocation10 + $0xa8] sm:$0xff]
    %v5571 = vld [vmem:[#allocation10 + $0xb0] sm:$0xff]
    %v5572 = vld [vmem:[#allocation10 + $0xb8] sm:$0xff]
    %v5573 = vld [vmem:[#allocation10 + $0xc0] sm:$0xff]
    %v5574 = vld [vmem:[#allocation10 + $0xc8] sm:$0xff]
    %v5575 = vld [vmem:[#allocation10 + $0xd0] sm:$0xff]
    %v5576 = vld [vmem:[#allocation10 + $0xd8] sm:$0xff]
    %v5577 = vld [vmem:[#allocation10 + $0xe0] sm:$0xff]
    %v5578 = vld [vmem:[#allocation10 + $0xe8] sm:$0xff]
    %v5579 = vld [vmem:[#allocation10 + $0xf0] sm:$0xff]
    %v5580 = vld [vmem:[#allocation10 + $0xf8] sm:$0xff]
    %v5581 = vld [vmem:[#allocation10 + $0x100] sm:$0xff]
    %v5582 = vld [vmem:[#allocation10 + $0x108] sm:$0xff]
    %v5583 = vld [vmem:[#allocation10 + $0x110] sm:$0xff]
    %v5584 = vld [vmem:[#allocation10 + $0x118] sm:$0xff]
    %v5585 = vld [vmem:[#allocation10 + $0x120] sm:$0xff]
    %v5586 = vld [vmem:[#allocation10 + $0x128] sm:$0xff]
    %v5587 = vld [vmem:[#allocation10 + $0x130] sm:$0xff]
    %v5588 = vld [vmem:[#allocation10 + $0x138] sm:$0xff]
    %v5589 = vld [vmem:[#allocation10 + $0x140] sm:$0xff]
    %v5590 = vld [vmem:[#allocation10 + $0x148] sm:$0xff]
    %v5591 = vld [vmem:[#allocation10 + $0x150] sm:$0xff]
    %v5592 = vld [vmem:[#allocation10 + $0x158] sm:$0xff]
    %v5593 = vld [vmem:[#allocation10 + $0x160] sm:$0xff]
    %v5594 = vld [vmem:[#allocation10 + $0x168] sm:$0xff]
    %v5595 = vld [vmem:[#allocation10 + $0x170] sm:$0xff]
    %v5596 = vld [vmem:[#allocation10 + $0x178] sm:$0xff]
    %v5597 = vld [vmem:[#allocation10 + $0x180] sm:$0xff]
    %v5598 = vld [vmem:[#allocation10 + $0x188] sm:$0xff]
    %v5599 = vld [vmem:[#allocation10 + $0x190] sm:$0xff]
    %v5600 = vld [vmem:[#allocation10 + $0x198] sm:$0xff]
    %v5601 = vld [vmem:[#allocation10 + $0x1a0] sm:$0xff]
    %v5602 = vld [vmem:[#allocation10 + $0x1a8] sm:$0xff]
    %v5603 = vld [vmem:[#allocation10 + $0x1b0] sm:$0xff]
    %v5604 = vld [vmem:[#allocation10 + $0x1b8] sm:$0xff]
    %v5605 = vld [vmem:[#allocation10 + $0x1c0] sm:$0xff]
    %v5606 = vld [vmem:[#allocation10 + $0x1c8] sm:$0xff]
    %v5607 = vld [vmem:[#allocation10 + $0x1d0] sm:$0xff]
    %v5608 = vld [vmem:[#allocation10 + $0x1d8] sm:$0xff]
    %v5609 = vld [vmem:[#allocation10 + $0x1e0] sm:$0xff]
    %v5610 = vld [vmem:[#allocation10 + $0x1e8] sm:$0xff]
    %v5611 = vld [vmem:[#allocation10 + $0x1f0] sm:$0xff]
    %v5612 = vld [vmem:[#allocation10 + $0x1f8] sm:$0xff]
    %v5613 = vld [vmem:[#allocation10 + $0x200] sm:$0xff]
    %v5614 = vld [vmem:[#allocation10 + $0x208] sm:$0xff]
    %v5615 = vld [vmem:[#allocation10 + $0x210] sm:$0xff]
    %v5616 = vld [vmem:[#allocation10 + $0x218] sm:$0xff]
    %v5617 = vld [vmem:[#allocation10 + $0x220] sm:$0xff]
    %v5618 = vld [vmem:[#allocation10 + $0x228] sm:$0xff]
    %v5619 = vld [vmem:[#allocation10 + $0x230] sm:$0xff]
    %v5620 = vld [vmem:[#allocation10 + $0x238] sm:$0xff]
    %v5621 = vld [vmem:[#allocation10 + $0x240] sm:$0xff]
    %v5622 = vld [vmem:[#allocation10 + $0x248] sm:$0xff]
    %v5623 = vld [vmem:[#allocation10 + $0x250] sm:$0xff]
    %v5624 = vld [vmem:[#allocation10 + $0x258] sm:$0xff]
    %v5625 = vld [vmem:[#allocation10 + $0x260] sm:$0xff]
    %v5626 = vld [vmem:[#allocation10 + $0x268] sm:$0xff]
    %v5627 = vld [vmem:[#allocation10 + $0x270] sm:$0xff]
    %v5628 = vld [vmem:[#allocation10 + $0x278] sm:$0xff]
    %v5629 = vld [vmem:[#allocation10 + $0x280] sm:$0xff]
    %v5630 = vld [vmem:[#allocation10 + $0x288] sm:$0xff]
    %v5631 = vld [vmem:[#allocation10 + $0x290] sm:$0xff]
    %v5632 = vld [vmem:[#allocation10 + $0x298] sm:$0xff]
    %v5633 = vld [vmem:[#allocation10 + $0x2a0] sm:$0xff]
    %v5634 = vld [vmem:[#allocation10 + $0x2a8] sm:$0xff]
    %v5635 = vld [vmem:[#allocation10 + $0x2b0] sm:$0xff]
    %v5636 = vld [vmem:[#allocation10 + $0x2b8] sm:$0xff]
    %v5637 = vld [vmem:[#allocation10 + $0x2c0] sm:$0xff]
    %v5638 = vld [vmem:[#allocation10 + $0x2c8] sm:$0xff]
    %v5639 = vld [vmem:[#allocation10 + $0x2d0] sm:$0xff]
    %v5640 = vld [vmem:[#allocation10 + $0x2d8] sm:$0xff]
    %v5641 = vld [vmem:[#allocation10 + $0x2e0] sm:$0xff]
    %v5642 = vld [vmem:[#allocation10 + $0x2e8] sm:$0xff]
    %v5643 = vld [vmem:[#allocation10 + $0x2f0] sm:$0xff]
    %v5644 = vld [vmem:[#allocation10 + $0x2f8] sm:$0xff]
    %v5645 = vld [vmem:[#allocation10 + $0x300] sm:$0xff]
    %v5646 = vld [vmem:[#allocation10 + $0x308] sm:$0xff]
    %v5647 = vld [vmem:[#allocation10 + $0x310] sm:$0xff]
    %v5648 = vld [vmem:[#allocation10 + $0x318] sm:$0xff]
    %v5649 = vld [vmem:[#allocation10 + $0x320] sm:$0xff]
    %v5650 = vld [vmem:[#allocation10 + $0x328] sm:$0xff]
    %v5651 = vld [vmem:[#allocation10 + $0x330] sm:$0xff]
    %v5652 = vld [vmem:[#allocation10 + $0x338] sm:$0xff]
    %v5653 = vld [vmem:[#allocation10 + $0x340] sm:$0xff]
    %v5654 = vld [vmem:[#allocation10 + $0x348] sm:$0xff]
    %v5655 = vld [vmem:[#allocation10 + $0x350] sm:$0xff]
    %v5656 = vld [vmem:[#allocation10 + $0x358] sm:$0xff]
    %v5657 = vld [vmem:[#allocation10 + $0x360] sm:$0xff]
    %v5658 = vld [vmem:[#allocation10 + $0x368] sm:$0xff]
    %v5659 = vld [vmem:[#allocation10 + $0x370] sm:$0xff]
    %v5660 = vld [vmem:[#allocation10 + $0x378] sm:$0xff]
    %v5661 = vld [vmem:[#allocation10 + $0x380] sm:$0xff]
    %v5662 = vld [vmem:[#allocation10 + $0x388] sm:$0xff]
    %v5663 = vld [vmem:[#allocation10 + $0x390] sm:$0xff]
    %v5664 = vld [vmem:[#allocation10 + $0x398] sm:$0xff]
    %v5665 = vld [vmem:[#allocation10 + $0x3a0] sm:$0xff]
    %v5666 = vld [vmem:[#allocation10 + $0x3a8] sm:$0xff]
    %v5667 = vld [vmem:[#allocation10 + $0x3b0] sm:$0xff]
    %v5668 = vld [vmem:[#allocation10 + $0x3b8] sm:$0xff]
    %v5669 = vld [vmem:[#allocation10 + $0x3c0] sm:$0xff]
    %v5670 = vld [vmem:[#allocation10 + $0x3c8] sm:$0xff]
    %v5671 = vld [vmem:[#allocation10 + $0x3d0] sm:$0xff]
    %v5672 = vld [vmem:[#allocation10 + $0x3d8] sm:$0xff]
    %v5673 = vld [vmem:[#allocation10 + $0x3e0] sm:$0xff]
    %v5674 = vld [vmem:[#allocation10 + $0x3e8] sm:$0xff]
    %v5675 = vld [vmem:[#allocation10 + $0x3f0] sm:$0xff]
    %v5676 = vld [vmem:[#allocation10 + $0x3f8] sm:$0xff]
    %v5677 = vld [vmem:[%s15] sm:$0xf]
    %v5679 = vlaneseq
    %v5680 = vshrl.u32 %v5679, 7
    %v5681 = vsub.s32 0, %v5680
    %v5682 = vrot.slane %v5677, %v5681
    %v5683 = vlaneseq
    %v5684 = vshrl.u32 %v5683, 7
    %v5685 = vsub.s32 1, %v5684
    %v5686 = vrot.slane %v5677, %v5685
    %v5687 = vlaneseq
    %v5688 = vshrl.u32 %v5687, 7
    %v5689 = vsub.s32 2, %v5688
    %v5690 = vrot.slane %v5677, %v5689
    %v5691 = vlaneseq
    %v5692 = vshrl.u32 %v5691, 7
    %v5693 = vsub.s32 3, %v5692
    %v5694 = vrot.slane %v5677, %v5693
    %v5827 = vunpack.c.l.b16 %v5549
    %v5828 = vunpack.c.h.b16 %v5549
    %v5829 = vunpack.c.l.b16 %v5550
    %v5830 = vunpack.c.h.b16 %v5550
    %v5831 = vunpack.c.l.b16 %v5551
    %v5832 = vunpack.c.h.b16 %v5551
    %v5833 = vunpack.c.l.b16 %v5552
    %v5834 = vunpack.c.h.b16 %v5552
    %v5835 = vunpack.c.l.b16 %v5553
    %v5836 = vunpack.c.h.b16 %v5553
    %v5837 = vunpack.c.l.b16 %v5554
    %v5838 = vunpack.c.h.b16 %v5554
    %v5839 = vunpack.c.l.b16 %v5555
    %v5840 = vunpack.c.h.b16 %v5555
    %v5841 = vunpack.c.l.b16 %v5556
    %v5842 = vunpack.c.h.b16 %v5556
    %v5843 = vunpack.c.l.b16 %v5557
    %v5844 = vunpack.c.h.b16 %v5557
    %v5845 = vunpack.c.l.b16 %v5558
    %v5846 = vunpack.c.h.b16 %v5558
    %v5847 = vunpack.c.l.b16 %v5559
    %v5848 = vunpack.c.h.b16 %v5559
    %v5849 = vunpack.c.l.b16 %v5560
    %v5850 = vunpack.c.h.b16 %v5560
    %v5851 = vunpack.c.l.b16 %v5561
    %v5852 = vunpack.c.h.b16 %v5561
    %v5853 = vunpack.c.l.b16 %v5562
    %v5854 = vunpack.c.h.b16 %v5562
    %v5855 = vunpack.c.l.b16 %v5563
    %v5856 = vunpack.c.h.b16 %v5563
    %v5857 = vunpack.c.l.b16 %v5564
    %v5858 = vunpack.c.h.b16 %v5564
    %v5859 = vunpack.c.l.b16 %v5565
    %v5860 = vunpack.c.h.b16 %v5565
    %v5861 = vunpack.c.l.b16 %v5566
    %v5862 = vunpack.c.h.b16 %v5566
    %v5863 = vunpack.c.l.b16 %v5567
    %v5864 = vunpack.c.h.b16 %v5567
    %v5865 = vunpack.c.l.b16 %v5568
    %v5866 = vunpack.c.h.b16 %v5568
    %v5867 = vunpack.c.l.b16 %v5569
    %v5868 = vunpack.c.h.b16 %v5569
    %v5869 = vunpack.c.l.b16 %v5570
    %v5870 = vunpack.c.h.b16 %v5570
    %v5871 = vunpack.c.l.b16 %v5571
    %v5872 = vunpack.c.h.b16 %v5571
    %v5873 = vunpack.c.l.b16 %v5572
    %v5874 = vunpack.c.h.b16 %v5572
    %v5875 = vunpack.c.l.b16 %v5573
    %v5876 = vunpack.c.h.b16 %v5573
    %v5877 = vunpack.c.l.b16 %v5574
    %v5878 = vunpack.c.h.b16 %v5574
    %v5879 = vunpack.c.l.b16 %v5575
    %v5880 = vunpack.c.h.b16 %v5575
    %v5881 = vunpack.c.l.b16 %v5576
    %v5882 = vunpack.c.h.b16 %v5576
    %v5883 = vunpack.c.l.b16 %v5577
    %v5884 = vunpack.c.h.b16 %v5577
    %v5885 = vunpack.c.l.b16 %v5578
    %v5886 = vunpack.c.h.b16 %v5578
    %v5887 = vunpack.c.l.b16 %v5579
    %v5888 = vunpack.c.h.b16 %v5579
    %v5889 = vunpack.c.l.b16 %v5580
    %v5890 = vunpack.c.h.b16 %v5580
    %v5891 = vunpack.c.l.b16 %v5581
    %v5892 = vunpack.c.h.b16 %v5581
    %v5893 = vunpack.c.l.b16 %v5582
    %v5894 = vunpack.c.h.b16 %v5582
    %v5895 = vunpack.c.l.b16 %v5583
    %v5896 = vunpack.c.h.b16 %v5583
    %v5897 = vunpack.c.l.b16 %v5584
    %v5898 = vunpack.c.h.b16 %v5584
    %v5899 = vunpack.c.l.b16 %v5585
    %v5900 = vunpack.c.h.b16 %v5585
    %v5901 = vunpack.c.l.b16 %v5586
    %v5902 = vunpack.c.h.b16 %v5586
    %v5903 = vunpack.c.l.b16 %v5587
    %v5904 = vunpack.c.h.b16 %v5587
    %v5905 = vunpack.c.l.b16 %v5588
    %v5906 = vunpack.c.h.b16 %v5588
    %v5907 = vunpack.c.l.b16 %v5589
    %v5908 = vunpack.c.h.b16 %v5589
    %v5909 = vunpack.c.l.b16 %v5590
    %v5910 = vunpack.c.h.b16 %v5590
    %v5911 = vunpack.c.l.b16 %v5591
    %v5912 = vunpack.c.h.b16 %v5591
    %v5913 = vunpack.c.l.b16 %v5592
    %v5914 = vunpack.c.h.b16 %v5592
    %v5915 = vunpack.c.l.b16 %v5593
    %v5916 = vunpack.c.h.b16 %v5593
    %v5917 = vunpack.c.l.b16 %v5594
    %v5918 = vunpack.c.h.b16 %v5594
    %v5919 = vunpack.c.l.b16 %v5595
    %v5920 = vunpack.c.h.b16 %v5595
    %v5921 = vunpack.c.l.b16 %v5596
    %v5922 = vunpack.c.h.b16 %v5596
    %v5923 = vunpack.c.l.b16 %v5597
    %v5924 = vunpack.c.h.b16 %v5597
    %v5925 = vunpack.c.l.b16 %v5598
    %v5926 = vunpack.c.h.b16 %v5598
    %v5927 = vunpack.c.l.b16 %v5599
    %v5928 = vunpack.c.h.b16 %v5599
    %v5929 = vunpack.c.l.b16 %v5600
    %v5930 = vunpack.c.h.b16 %v5600
    %v5931 = vunpack.c.l.b16 %v5601
    %v5932 = vunpack.c.h.b16 %v5601
    %v5933 = vunpack.c.l.b16 %v5602
    %v5934 = vunpack.c.h.b16 %v5602
    %v5935 = vunpack.c.l.b16 %v5603
    %v5936 = vunpack.c.h.b16 %v5603
    %v5937 = vunpack.c.l.b16 %v5604
    %v5938 = vunpack.c.h.b16 %v5604
    %v5939 = vunpack.c.l.b16 %v5605
    %v5940 = vunpack.c.h.b16 %v5605
    %v5941 = vunpack.c.l.b16 %v5606
    %v5942 = vunpack.c.h.b16 %v5606
    %v5943 = vunpack.c.l.b16 %v5607
    %v5944 = vunpack.c.h.b16 %v5607
    %v5945 = vunpack.c.l.b16 %v5608
    %v5946 = vunpack.c.h.b16 %v5608
    %v5947 = vunpack.c.l.b16 %v5609
    %v5948 = vunpack.c.h.b16 %v5609
    %v5949 = vunpack.c.l.b16 %v5610
    %v5950 = vunpack.c.h.b16 %v5610
    %v5951 = vunpack.c.l.b16 %v5611
    %v5952 = vunpack.c.h.b16 %v5611
    %v5953 = vunpack.c.l.b16 %v5612
    %v5954 = vunpack.c.h.b16 %v5612
    %v5955 = vunpack.c.l.b16 %v5613
    %v5956 = vunpack.c.h.b16 %v5613
    %v5957 = vunpack.c.l.b16 %v5614
    %v5958 = vunpack.c.h.b16 %v5614
    %v5959 = vunpack.c.l.b16 %v5615
    %v5960 = vunpack.c.h.b16 %v5615
    %v5961 = vunpack.c.l.b16 %v5616
    %v5962 = vunpack.c.h.b16 %v5616
    %v5963 = vunpack.c.l.b16 %v5617
    %v5964 = vunpack.c.h.b16 %v5617
    %v5965 = vunpack.c.l.b16 %v5618
    %v5966 = vunpack.c.h.b16 %v5618
    %v5967 = vunpack.c.l.b16 %v5619
    %v5968 = vunpack.c.h.b16 %v5619
    %v5969 = vunpack.c.l.b16 %v5620
    %v5970 = vunpack.c.h.b16 %v5620
    %v5971 = vunpack.c.l.b16 %v5621
    %v5972 = vunpack.c.h.b16 %v5621
    %v5973 = vunpack.c.l.b16 %v5622
    %v5974 = vunpack.c.h.b16 %v5622
    %v5975 = vunpack.c.l.b16 %v5623
    %v5976 = vunpack.c.h.b16 %v5623
    %v5977 = vunpack.c.l.b16 %v5624
    %v5978 = vunpack.c.h.b16 %v5624
    %v5979 = vunpack.c.l.b16 %v5625
    %v5980 = vunpack.c.h.b16 %v5625
    %v5981 = vunpack.c.l.b16 %v5626
    %v5982 = vunpack.c.h.b16 %v5626
    %v5983 = vunpack.c.l.b16 %v5627
    %v5984 = vunpack.c.h.b16 %v5627
    %v5985 = vunpack.c.l.b16 %v5628
    %v5986 = vunpack.c.h.b16 %v5628
    %v5987 = vunpack.c.l.b16 %v5629
    %v5988 = vunpack.c.h.b16 %v5629
    %v5989 = vunpack.c.l.b16 %v5630
    %v5990 = vunpack.c.h.b16 %v5630
    %v5991 = vunpack.c.l.b16 %v5631
    %v5992 = vunpack.c.h.b16 %v5631
    %v5993 = vunpack.c.l.b16 %v5632
    %v5994 = vunpack.c.h.b16 %v5632
    %v5995 = vunpack.c.l.b16 %v5633
    %v5996 = vunpack.c.h.b16 %v5633
    %v5997 = vunpack.c.l.b16 %v5634
    %v5998 = vunpack.c.h.b16 %v5634
    %v5999 = vunpack.c.l.b16 %v5635
    %v6000 = vunpack.c.h.b16 %v5635
    %v6001 = vunpack.c.l.b16 %v5636
    %v6002 = vunpack.c.h.b16 %v5636
    %v6003 = vunpack.c.l.b16 %v5637
    %v6004 = vunpack.c.h.b16 %v5637
    %v6005 = vunpack.c.l.b16 %v5638
    %v6006 = vunpack.c.h.b16 %v5638
    %v6007 = vunpack.c.l.b16 %v5639
    %v6008 = vunpack.c.h.b16 %v5639
    %v6009 = vunpack.c.l.b16 %v5640
    %v6010 = vunpack.c.h.b16 %v5640
    %v6011 = vunpack.c.l.b16 %v5641
    %v6012 = vunpack.c.h.b16 %v5641
    %v6013 = vunpack.c.l.b16 %v5642
    %v6014 = vunpack.c.h.b16 %v5642
    %v6015 = vunpack.c.l.b16 %v5643
    %v6016 = vunpack.c.h.b16 %v5643
    %v6017 = vunpack.c.l.b16 %v5644
    %v6018 = vunpack.c.h.b16 %v5644
    %v6019 = vunpack.c.l.b16 %v5645
    %v6020 = vunpack.c.h.b16 %v5645
    %v6021 = vunpack.c.l.b16 %v5646
    %v6022 = vunpack.c.h.b16 %v5646
    %v6023 = vunpack.c.l.b16 %v5647
    %v6024 = vunpack.c.h.b16 %v5647
    %v6025 = vunpack.c.l.b16 %v5648
    %v6026 = vunpack.c.h.b16 %v5648
    %v6027 = vunpack.c.l.b16 %v5649
    %v6028 = vunpack.c.h.b16 %v5649
    %v6029 = vunpack.c.l.b16 %v5650
    %v6030 = vunpack.c.h.b16 %v5650
    %v6031 = vunpack.c.l.b16 %v5651
    %v6032 = vunpack.c.h.b16 %v5651
    %v6033 = vunpack.c.l.b16 %v5652
    %v6034 = vunpack.c.h.b16 %v5652
    %v6035 = vunpack.c.l.b16 %v5653
    %v6036 = vunpack.c.h.b16 %v5653
    %v6037 = vunpack.c.l.b16 %v5654
    %v6038 = vunpack.c.h.b16 %v5654
    %v6039 = vunpack.c.l.b16 %v5655
    %v6040 = vunpack.c.h.b16 %v5655
    %v6041 = vunpack.c.l.b16 %v5656
    %v6042 = vunpack.c.h.b16 %v5656
    %v6043 = vunpack.c.l.b16 %v5657
    %v6044 = vunpack.c.h.b16 %v5657
    %v6045 = vunpack.c.l.b16 %v5658
    %v6046 = vunpack.c.h.b16 %v5658
    %v6047 = vunpack.c.l.b16 %v5659
    %v6048 = vunpack.c.h.b16 %v5659
    %v6049 = vunpack.c.l.b16 %v5660
    %v6050 = vunpack.c.h.b16 %v5660
    %v6051 = vunpack.c.l.b16 %v5661
    %v6052 = vunpack.c.h.b16 %v5661
    %v6053 = vunpack.c.l.b16 %v5662
    %v6054 = vunpack.c.h.b16 %v5662
    %v6055 = vunpack.c.l.b16 %v5663
    %v6056 = vunpack.c.h.b16 %v5663
    %v6057 = vunpack.c.l.b16 %v5664
    %v6058 = vunpack.c.h.b16 %v5664
    %v6059 = vunpack.c.l.b16 %v5665
    %v6060 = vunpack.c.h.b16 %v5665
    %v6061 = vunpack.c.l.b16 %v5666
    %v6062 = vunpack.c.h.b16 %v5666
    %v6063 = vunpack.c.l.b16 %v5667
    %v6064 = vunpack.c.h.b16 %v5667
    %v6065 = vunpack.c.l.b16 %v5668
    %v6066 = vunpack.c.h.b16 %v5668
    %v6067 = vunpack.c.l.b16 %v5669
    %v6068 = vunpack.c.h.b16 %v5669
    %v6069 = vunpack.c.l.b16 %v5670
    %v6070 = vunpack.c.h.b16 %v5670
    %v6071 = vunpack.c.l.b16 %v5671
    %v6072 = vunpack.c.h.b16 %v5671
    %v6073 = vunpack.c.l.b16 %v5672
    %v6074 = vunpack.c.h.b16 %v5672
    %v6075 = vunpack.c.l.b16 %v5673
    %v6076 = vunpack.c.h.b16 %v5673
    %v6077 = vunpack.c.l.b16 %v5674
    %v6078 = vunpack.c.h.b16 %v5674
    %v6079 = vunpack.c.l.b16 %v5675
    %v6080 = vunpack.c.h.b16 %v5675
    %v6081 = vunpack.c.l.b16 %v5676
    %v6082 = vunpack.c.h.b16 %v5676
    %v6083 = vpack.c.b16 %v5831, %v5827
    %v6084 = vpack.c.b16 %v5832, %v5828
    %v6085 = vpack.c.b16 %v5833, %v5829
    %v6086 = vpack.c.b16 %v5834, %v5830
    %v6087 = vpack.c.b16 %v5839, %v5835
    %v6088 = vpack.c.b16 %v5840, %v5836
    %v6089 = vpack.c.b16 %v5841, %v5837
    %v6090 = vpack.c.b16 %v5842, %v5838
    %v6091 = vpack.c.b16 %v5847, %v5843
    %v6092 = vpack.c.b16 %v5848, %v5844
    %v6093 = vpack.c.b16 %v5849, %v5845
    %v6094 = vpack.c.b16 %v5850, %v5846
    %v6095 = vpack.c.b16 %v5855, %v5851
    %v6096 = vpack.c.b16 %v5856, %v5852
    %v6097 = vpack.c.b16 %v5857, %v5853
    %v6098 = vpack.c.b16 %v5858, %v5854
    %v6099 = vpack.c.b16 %v5863, %v5859
    %v6100 = vpack.c.b16 %v5864, %v5860
    %v6101 = vpack.c.b16 %v5865, %v5861
    %v6102 = vpack.c.b16 %v5866, %v5862
    %v6103 = vpack.c.b16 %v5871, %v5867
    %v6104 = vpack.c.b16 %v5872, %v5868
    %v6105 = vpack.c.b16 %v5873, %v5869
    %v6106 = vpack.c.b16 %v5874, %v5870
    %v6107 = vpack.c.b16 %v5879, %v5875
    %v6108 = vpack.c.b16 %v5880, %v5876
    %v6109 = vpack.c.b16 %v5881, %v5877
    %v6110 = vpack.c.b16 %v5882, %v5878
    %v6111 = vpack.c.b16 %v5887, %v5883
    %v6112 = vpack.c.b16 %v5888, %v5884
    %v6113 = vpack.c.b16 %v5889, %v5885
    %v6114 = vpack.c.b16 %v5890, %v5886
    %v6115 = vpack.c.b16 %v5895, %v5891
    %v6116 = vpack.c.b16 %v5896, %v5892
    %v6117 = vpack.c.b16 %v5897, %v5893
    %v6118 = vpack.c.b16 %v5898, %v5894
    %v6119 = vpack.c.b16 %v5903, %v5899
    %v6120 = vpack.c.b16 %v5904, %v5900
    %v6121 = vpack.c.b16 %v5905, %v5901
    %v6122 = vpack.c.b16 %v5906, %v5902
    %v6123 = vpack.c.b16 %v5911, %v5907
    %v6124 = vpack.c.b16 %v5912, %v5908
    %v6125 = vpack.c.b16 %v5913, %v5909
    %v6126 = vpack.c.b16 %v5914, %v5910
    %v6127 = vpack.c.b16 %v5919, %v5915
    %v6128 = vpack.c.b16 %v5920, %v5916
    %v6129 = vpack.c.b16 %v5921, %v5917
    %v6130 = vpack.c.b16 %v5922, %v5918
    %v6131 = vpack.c.b16 %v5927, %v5923
    %v6132 = vpack.c.b16 %v5928, %v5924
    %v6133 = vpack.c.b16 %v5929, %v5925
    %v6134 = vpack.c.b16 %v5930, %v5926
    %v6135 = vpack.c.b16 %v5935, %v5931
    %v6136 = vpack.c.b16 %v5936, %v5932
    %v6137 = vpack.c.b16 %v5937, %v5933
    %v6138 = vpack.c.b16 %v5938, %v5934
    %v6139 = vpack.c.b16 %v5943, %v5939
    %v6140 = vpack.c.b16 %v5944, %v5940
    %v6141 = vpack.c.b16 %v5945, %v5941
    %v6142 = vpack.c.b16 %v5946, %v5942
    %v6143 = vpack.c.b16 %v5951, %v5947
    %v6144 = vpack.c.b16 %v5952, %v5948
    %v6145 = vpack.c.b16 %v5953, %v5949
    %v6146 = vpack.c.b16 %v5954, %v5950
    %v6147 = vpack.c.b16 %v5959, %v5955
    %v6148 = vpack.c.b16 %v5960, %v5956
    %v6149 = vpack.c.b16 %v5961, %v5957
    %v6150 = vpack.c.b16 %v5962, %v5958
    %v6151 = vpack.c.b16 %v5967, %v5963
    %v6152 = vpack.c.b16 %v5968, %v5964
    %v6153 = vpack.c.b16 %v5969, %v5965
    %v6154 = vpack.c.b16 %v5970, %v5966
    %v6155 = vpack.c.b16 %v5975, %v5971
    %v6156 = vpack.c.b16 %v5976, %v5972
    %v6157 = vpack.c.b16 %v5977, %v5973
    %v6158 = vpack.c.b16 %v5978, %v5974
    %v6159 = vpack.c.b16 %v5983, %v5979
    %v6160 = vpack.c.b16 %v5984, %v5980
    %v6161 = vpack.c.b16 %v5985, %v5981
    %v6162 = vpack.c.b16 %v5986, %v5982
    %v6163 = vpack.c.b16 %v5991, %v5987
    %v6164 = vpack.c.b16 %v5992, %v5988
    %v6165 = vpack.c.b16 %v5993, %v5989
    %v6166 = vpack.c.b16 %v5994, %v5990
    %v6167 = vpack.c.b16 %v5999, %v5995
    %v6168 = vpack.c.b16 %v6000, %v5996
    %v6169 = vpack.c.b16 %v6001, %v5997
    %v6170 = vpack.c.b16 %v6002, %v5998
    %v6171 = vpack.c.b16 %v6007, %v6003
    %v6172 = vpack.c.b16 %v6008, %v6004
    %v6173 = vpack.c.b16 %v6009, %v6005
    %v6174 = vpack.c.b16 %v6010, %v6006
    %v6175 = vpack.c.b16 %v6015, %v6011
    %v6176 = vpack.c.b16 %v6016, %v6012
    %v6177 = vpack.c.b16 %v6017, %v6013
    %v6178 = vpack.c.b16 %v6018, %v6014
    %v6179 = vpack.c.b16 %v6023, %v6019
    %v6180 = vpack.c.b16 %v6024, %v6020
    %v6181 = vpack.c.b16 %v6025, %v6021
    %v6182 = vpack.c.b16 %v6026, %v6022
    %v6183 = vpack.c.b16 %v6031, %v6027
    %v6184 = vpack.c.b16 %v6032, %v6028
    %v6185 = vpack.c.b16 %v6033, %v6029
    %v6186 = vpack.c.b16 %v6034, %v6030
    %v6187 = vpack.c.b16 %v6039, %v6035
    %v6188 = vpack.c.b16 %v6040, %v6036
    %v6189 = vpack.c.b16 %v6041, %v6037
    %v6190 = vpack.c.b16 %v6042, %v6038
    %v6191 = vpack.c.b16 %v6047, %v6043
    %v6192 = vpack.c.b16 %v6048, %v6044
    %v6193 = vpack.c.b16 %v6049, %v6045
    %v6194 = vpack.c.b16 %v6050, %v6046
    %v6195 = vpack.c.b16 %v6055, %v6051
    %v6196 = vpack.c.b16 %v6056, %v6052
    %v6197 = vpack.c.b16 %v6057, %v6053
    %v6198 = vpack.c.b16 %v6058, %v6054
    %v6199 = vpack.c.b16 %v6063, %v6059
    %v6200 = vpack.c.b16 %v6064, %v6060
    %v6201 = vpack.c.b16 %v6065, %v6061
    %v6202 = vpack.c.b16 %v6066, %v6062
    %v6203 = vpack.c.b16 %v6071, %v6067
    %v6204 = vpack.c.b16 %v6072, %v6068
    %v6205 = vpack.c.b16 %v6073, %v6069
    %v6206 = vpack.c.b16 %v6074, %v6070
    %v6207 = vpack.c.b16 %v6079, %v6075
    %v6208 = vpack.c.b16 %v6080, %v6076
    %v6209 = vpack.c.b16 %v6081, %v6077
    %v6210 = vpack.c.b16 %v6082, %v6078
    %6339 = vmatprep.subr.bf16.mxu0 %v6112
    %6340 = vmatpush1.bf16.msra.mxu0 %v6111
    %6341 = vmatprep.subr.bf16.mxu0 %v6108
    %6342 = vmatpush1.bf16.msra.mxu0 %v6107
    %6343 = vmatprep.subr.bf16.mxu0 %v6104
    %6344 = vmatpush1.bf16.msra.mxu0 %v6103
    %6345 = vmatprep.subr.bf16.mxu0 %v6100
    %6346 = vmatpush1.bf16.msra.mxu0 %v6099
    %6347 = vmatprep.subr.bf16.mxu0 %v6096
    %6348 = vmatpush1.bf16.msra.mxu0 %v6095
    %6349 = vmatprep.subr.bf16.mxu0 %v6092
    %6350 = vmatpush1.bf16.msra.mxu0 %v6091
    %6351 = vmatprep.subr.bf16.mxu0 %v6088
    %6352 = vmatpush1.bf16.msra.mxu0 %v6087
    %6353 = vmatprep.subr.bf16.mxu0 %v6084
    %6354 = vmatpush1.bf16.msra.mxu0 %v6083
    %6355 = vmatprep.subr.bf16.mxu0 %v6144
    %6356 = vmatpush2.bf16.msra.mxu0 %v6143
    %6357 = vmatprep.subr.bf16.mxu0 %v6140
    %6358 = vmatpush2.bf16.msra.mxu0 %v6139
    %6359 = vmatprep.subr.bf16.mxu0 %v6136
    %6360 = vmatpush2.bf16.msra.mxu0 %v6135
    %6361 = vmatprep.subr.bf16.mxu0 %v6132
    %6362 = vmatpush2.bf16.msra.mxu0 %v6131
    %6363 = vmatprep.subr.bf16.mxu0 %v6128
    %6364 = vmatpush2.bf16.msra.mxu0 %v6127
    %6365 = vmatprep.subr.bf16.mxu0 %v6124
    %6366 = vmatpush2.bf16.msra.mxu0 %v6123
    %6367 = vmatprep.subr.bf16.mxu0 %v6120
    %6368 = vmatpush2.bf16.msra.mxu0 %v6119
    %6369 = vmatprep.subr.bf16.mxu0 %v6116
    %6370 = vmatpush2.bf16.msra.mxu0 %v6115
    %6371 = vmatprep.mubr.bf16.mxu0 %v5546
    %6372 = vmatmul.mubr.bf16.gmra.mxu0 %v5545
    %v6373 = vpop.f32.mrf.mxu0
    %v6374 = vadd.f32 %v5682, %v6373
    %v6375 = vpop.f32.mrf.mxu0
    %v6376 = vadd.f32 %v5686, %v6375
    %v6377 = vpop.f32.mrf.mxu0
    %v6378 = vpop.f32.mrf.mxu0
    %6379 = vdwg.mxu0
    %6380 = vmatprep.subr.bf16.mxu0 %v6176
    %6381 = vmatpush1.bf16.msra.mxu0 %v6175
    %6382 = vmatprep.subr.bf16.mxu0 %v6172
    %6383 = vmatpush1.bf16.msra.mxu0 %v6171
    %6384 = vmatprep.subr.bf16.mxu0 %v6168
    %6385 = vmatpush1.bf16.msra.mxu0 %v6167
    %6386 = vmatprep.subr.bf16.mxu0 %v6164
    %6387 = vmatpush1.bf16.msra.mxu0 %v6163
    %6388 = vmatprep.subr.bf16.mxu0 %v6160
    %6389 = vmatpush1.bf16.msra.mxu0 %v6159
    %6390 = vmatprep.subr.bf16.mxu0 %v6156
    %6391 = vmatpush1.bf16.msra.mxu0 %v6155
    %6392 = vmatprep.subr.bf16.mxu0 %v6152
    %6393 = vmatpush1.bf16.msra.mxu0 %v6151
    %6394 = vmatprep.subr.bf16.mxu0 %v6148
    %6395 = vmatpush1.bf16.msra.mxu0 %v6147
    %6396 = vmatprep.subr.bf16.mxu0 %v6208
    %6397 = vmatpush2.bf16.msra.mxu0 %v6207
    %6398 = vmatprep.subr.bf16.mxu0 %v6204
    %6399 = vmatpush2.bf16.msra.mxu0 %v6203
    %6400 = vmatprep.subr.bf16.mxu0 %v6200
    %6401 = vmatpush2.bf16.msra.mxu0 %v6199
    %6402 = vmatprep.subr.bf16.mxu0 %v6196
    %6403 = vmatpush2.bf16.msra.mxu0 %v6195
    %6404 = vmatprep.subr.bf16.mxu0 %v6192
    %6405 = vmatpush2.bf16.msra.mxu0 %v6191
    %6406 = vmatprep.subr.bf16.mxu0 %v6188
    %6407 = vmatpush2.bf16.msra.mxu0 %v6187
    %6408 = vmatprep.subr.bf16.mxu0 %v6184
    %6409 = vmatpush2.bf16.msra.mxu0 %v6183
    %6410 = vmatprep.subr.bf16.mxu0 %v6180
    %6411 = vmatpush2.bf16.msra.mxu0 %v6179
    %6412 = vmatprep.mubr.bf16.mxu0 %v5548
    %6413 = vmatmul.mubr.bf16.gmra.mxu0 %v5547
    %v6414 = vpop.f32.mrf.mxu0
    %v6415 = vadd.f32 %v6374, %v6414
    %v6416 = vpop.f32.mrf.mxu0
    %v6417 = vadd.f32 %v6376, %v6416
    %v6418 = vpop.f32.mrf.mxu0
    %v6419 = vpop.f32.mrf.mxu0
    %6420 = vdwg.mxu0
    %6421 = vmatprep.subr.bf16.mxu0 %v6114
    %6422 = vmatpush1.bf16.msra.mxu0 %v6113
    %6423 = vmatprep.subr.bf16.mxu0 %v6110
    %6424 = vmatpush1.bf16.msra.mxu0 %v6109
    %6425 = vmatprep.subr.bf16.mxu0 %v6106
    %6426 = vmatpush1.bf16.msra.mxu0 %v6105
    %6427 = vmatprep.subr.bf16.mxu0 %v6102
    %6428 = vmatpush1.bf16.msra.mxu0 %v6101
    %6429 = vmatprep.subr.bf16.mxu0 %v6098
    %6430 = vmatpush1.bf16.msra.mxu0 %v6097
    %6431 = vmatprep.subr.bf16.mxu0 %v6094
    %6432 = vmatpush1.bf16.msra.mxu0 %v6093
    %6433 = vmatprep.subr.bf16.mxu0 %v6090
    %6434 = vmatpush1.bf16.msra.mxu0 %v6089
    %6435 = vmatprep.subr.bf16.mxu0 %v6086
    %6436 = vmatpush1.bf16.msra.mxu0 %v6085
    %6437 = vmatprep.subr.bf16.mxu0 %v6146
    %6438 = vmatpush2.bf16.msra.mxu0 %v6145
    %6439 = vmatprep.subr.bf16.mxu0 %v6142
    %6440 = vmatpush2.bf16.msra.mxu0 %v6141
    %6441 = vmatprep.subr.bf16.mxu0 %v6138
    %6442 = vmatpush2.bf16.msra.mxu0 %v6137
    %6443 = vmatprep.subr.bf16.mxu0 %v6134
    %6444 = vmatpush2.bf16.msra.mxu0 %v6133
    %6445 = vmatprep.subr.bf16.mxu0 %v6130
    %6446 = vmatpush2.bf16.msra.mxu0 %v6129
    %6447 = vmatprep.subr.bf16.mxu0 %v6126
    %6448 = vmatpush2.bf16.msra.mxu0 %v6125
    %6449 = vmatprep.subr.bf16.mxu0 %v6122
    %6450 = vmatpush2.bf16.msra.mxu0 %v6121
    %6451 = vmatprep.subr.bf16.mxu0 %v6118
    %6452 = vmatpush2.bf16.msra.mxu0 %v6117
    %6453 = vmatprep.mubr.bf16.mxu0 %v5546
    %6454 = vmatmul.mubr.bf16.gmra.mxu0 %v5545
    %v6455 = vpop.f32.mrf.mxu0
    %v6456 = vadd.f32 %v5690, %v6455
    %v6457 = vpop.f32.mrf.mxu0
    %v6458 = vadd.f32 %v5694, %v6457
    %v6459 = vpop.f32.mrf.mxu0
    %v6460 = vpop.f32.mrf.mxu0
    %6461 = vdwg.mxu0
    %6462 = vmatprep.subr.bf16.mxu0 %v6178
    %6463 = vmatpush1.bf16.msra.mxu0 %v6177
    %6464 = vmatprep.subr.bf16.mxu0 %v6174
    %6465 = vmatpush1.bf16.msra.mxu0 %v6173
    %6466 = vmatprep.subr.bf16.mxu0 %v6170
    %6467 = vmatpush1.bf16.msra.mxu0 %v6169
    %6468 = vmatprep.subr.bf16.mxu0 %v6166
    %6469 = vmatpush1.bf16.msra.mxu0 %v6165
    %6470 = vmatprep.subr.bf16.mxu0 %v6162
    %6471 = vmatpush1.bf16.msra.mxu0 %v6161
    %6472 = vmatprep.subr.bf16.mxu0 %v6158
    %6473 = vmatpush1.bf16.msra.mxu0 %v6157
    %6474 = vmatprep.subr.bf16.mxu0 %v6154
    %6475 = vmatpush1.bf16.msra.mxu0 %v6153
    %6476 = vmatprep.subr.bf16.mxu0 %v6150
    %6477 = vmatpush1.bf16.msra.mxu0 %v6149
    %6478 = vmatprep.subr.bf16.mxu0 %v6210
    %6479 = vmatpush2.bf16.msra.mxu0 %v6209
    %6480 = vmatprep.subr.bf16.mxu0 %v6206
    %6481 = vmatpush2.bf16.msra.mxu0 %v6205
    %6482 = vmatprep.subr.bf16.mxu0 %v6202
    %6483 = vmatpush2.bf16.msra.mxu0 %v6201
    %6484 = vmatprep.subr.bf16.mxu0 %v6198
    %6485 = vmatpush2.bf16.msra.mxu0 %v6197
    %6486 = vmatprep.subr.bf16.mxu0 %v6194
    %6487 = vmatpush2.bf16.msra.mxu0 %v6193
    %6488 = vmatprep.subr.bf16.mxu0 %v6190
    %6489 = vmatpush2.bf16.msra.mxu0 %v6189
    %6490 = vmatprep.subr.bf16.mxu0 %v6186
    %6491 = vmatpush2.bf16.msra.mxu0 %v6185
    %6492 = vmatprep.subr.bf16.mxu0 %v6182
    %6493 = vmatpush2.bf16.msra.mxu0 %v6181
    %6494 = vmatprep.mubr.bf16.mxu0 %v5548
    %6495 = vmatmul.mubr.bf16.gmra.mxu0 %v5547
    %v6496 = vpop.f32.mrf.mxu0
    %v6497 = vadd.f32 %v6456, %v6496
    %v6498 = vpop.f32.mrf.mxu0
    %v6499 = vadd.f32 %v6458, %v6498
    %v6500 = vpop.f32.mrf.mxu0
    %v6501 = vpop.f32.mrf.mxu0
    %6502 = vdwg.mxu0
    %v6503 = vmax.f32 %v6415, 0.0
    %v6504 = vmax.f32 %v6417, 0.0
    %v6505 = vmax.f32 %v6497, 0.0
    %v6506 = vmax.f32 %v6499, 0.0
    %v6507 = vpack.c.bf16 %v6503, %v6503
    %v6508 = vpack.c.bf16 %v6504, %v6504
    %v6509 = vpack.c.bf16 %v6505, %v6505
    %v6510 = vpack.c.bf16 %v6506, %v6506
    %v6511 = vld [vmem:[#allocation12] sm:$0xff]
    %v6512 = vld [vmem:[#allocation12 + $0x8] sm:$0xff]
    %v6513 = vld [vmem:[#allocation12 + $0x10] sm:$0xff]
    %v6514 = vld [vmem:[#allocation12 + $0x18] sm:$0xf]
    %v6515 = vld [vmem:[#allocation12 + $0x1c] sm:$0xff]
    %v6516 = vld [vmem:[#allocation12 + $0x24] sm:$0xff]
    %v6517 = vld [vmem:[#allocation12 + $0x2c] sm:$0xff]
    %v6518 = vld [vmem:[#allocation12 + $0x34] sm:$0xf]
    %v6519 = vld [vmem:[#allocation12 + $0x38] sm:$0xff]
    %v6520 = vld [vmem:[#allocation12 + $0x40] sm:$0xff]
    %v6521 = vld [vmem:[#allocation12 + $0x48] sm:$0xff]
    %v6522 = vld [vmem:[#allocation12 + $0x50] sm:$0xf]
    %v6523 = vld [vmem:[#allocation12 + $0x54] sm:$0xff]
    %v6524 = vld [vmem:[#allocation12 + $0x5c] sm:$0xff]
    %v6525 = vld [vmem:[#allocation12 + $0x64] sm:$0xff]
    %v6526 = vld [vmem:[#allocation12 + $0x6c] sm:$0xf]
    %v6527 = vld [vmem:[#allocation12 + $0x70] sm:$0xff]
    %v6528 = vld [vmem:[#allocation12 + $0x78] sm:$0xff]
    %v6529 = vld [vmem:[#allocation12 + $0x80] sm:$0xff]
    %v6530 = vld [vmem:[#allocation12 + $0x88] sm:$0xf]
    %v6531 = vld [vmem:[#allocation12 + $0x8c] sm:$0xff]
    %v6532 = vld [vmem:[#allocation12 + $0x94] sm:$0xff]
    %v6533 = vld [vmem:[#allocation12 + $0x9c] sm:$0xff]
    %v6534 = vld [vmem:[#allocation12 + $0xa4] sm:$0xf]
    %v6535 = vld [vmem:[#allocation12 + $0xa8] sm:$0xff]
    %v6536 = vld [vmem:[#allocation12 + $0xb0] sm:$0xff]
    %v6537 = vld [vmem:[#allocation12 + $0xb8] sm:$0xff]
    %v6538 = vld [vmem:[#allocation12 + $0xc0] sm:$0xf]
    %v6539 = vld [vmem:[#allocation12 + $0xc4] sm:$0xff]
    %v6540 = vld [vmem:[#allocation12 + $0xcc] sm:$0xff]
    %v6541 = vld [vmem:[#allocation12 + $0xd4] sm:$0xff]
    %v6542 = vld [vmem:[#allocation12 + $0xdc] sm:$0xf]
    %v6543 = vld [vmem:[#allocation12 + $0xe0] sm:$0xff]
    %v6544 = vld [vmem:[#allocation12 + $0xe8] sm:$0xff]
    %v6545 = vld [vmem:[#allocation12 + $0xf0] sm:$0xff]
    %v6546 = vld [vmem:[#allocation12 + $0xf8] sm:$0xf]
    %v6547 = vld [vmem:[#allocation12 + $0xfc] sm:$0xff]
    %v6548 = vld [vmem:[#allocation12 + $0x104] sm:$0xff]
    %v6549 = vld [vmem:[#allocation12 + $0x10c] sm:$0xff]
    %v6550 = vld [vmem:[#allocation12 + $0x114] sm:$0xf]
    %v6551 = vld [vmem:[#allocation12 + $0x118] sm:$0xff]
    %v6552 = vld [vmem:[#allocation12 + $0x120] sm:$0xff]
    %v6553 = vld [vmem:[#allocation12 + $0x128] sm:$0xff]
    %v6554 = vld [vmem:[#allocation12 + $0x130] sm:$0xf]
    %v6555 = vld [vmem:[#allocation12 + $0x134] sm:$0xff]
    %v6556 = vld [vmem:[#allocation12 + $0x13c] sm:$0xff]
    %v6557 = vld [vmem:[#allocation12 + $0x144] sm:$0xff]
    %v6558 = vld [vmem:[#allocation12 + $0x14c] sm:$0xf]
    %v6559 = vld [vmem:[#allocation12 + $0x150] sm:$0xff]
    %v6560 = vld [vmem:[#allocation12 + $0x158] sm:$0xff]
    %v6561 = vld [vmem:[#allocation12 + $0x160] sm:$0xff]
    %v6562 = vld [vmem:[#allocation12 + $0x168] sm:$0xf]
    %v6563 = vld [vmem:[#allocation12 + $0x16c] sm:$0xff]
    %v6564 = vld [vmem:[#allocation12 + $0x174] sm:$0xff]
    %v6565 = vld [vmem:[#allocation12 + $0x17c] sm:$0xff]
    %v6566 = vld [vmem:[#allocation12 + $0x184] sm:$0xf]
    %v6567 = vld [vmem:[#allocation12 + $0x188] sm:$0xff]
    %v6568 = vld [vmem:[#allocation12 + $0x190] sm:$0xff]
    %v6569 = vld [vmem:[#allocation12 + $0x198] sm:$0xff]
    %v6570 = vld [vmem:[#allocation12 + $0x1a0] sm:$0xf]
    %v6571 = vld [vmem:[#allocation12 + $0x1a4] sm:$0xff]
    %v6572 = vld [vmem:[#allocation12 + $0x1ac] sm:$0xff]
    %v6573 = vld [vmem:[#allocation12 + $0x1b4] sm:$0xff]
    %v6574 = vld [vmem:[#allocation12 + $0x1bc] sm:$0xf]
    %v6575 = vld [vmem:[#allocation12 + $0x1c0] sm:$0xff]
    %v6576 = vld [vmem:[#allocation12 + $0x1c8] sm:$0xff]
    %v6577 = vld [vmem:[#allocation12 + $0x1d0] sm:$0xff]
    %v6578 = vld [vmem:[#allocation12 + $0x1d8] sm:$0xf]
    %v6579 = vld [vmem:[#allocation12 + $0x1dc] sm:$0xff]
    %v6580 = vld [vmem:[#allocation12 + $0x1e4] sm:$0xff]
    %v6581 = vld [vmem:[#allocation12 + $0x1ec] sm:$0xff]
    %v6582 = vld [vmem:[#allocation12 + $0x1f4] sm:$0xf]
    %v6583 = vld [vmem:[#allocation12 + $0x1f8] sm:$0xff]
    %v6584 = vld [vmem:[#allocation12 + $0x200] sm:$0xff]
    %v6585 = vld [vmem:[#allocation12 + $0x208] sm:$0xff]
    %v6586 = vld [vmem:[#allocation12 + $0x210] sm:$0xf]
    %v6587 = vld [vmem:[#allocation12 + $0x214] sm:$0xff]
    %v6588 = vld [vmem:[#allocation12 + $0x21c] sm:$0xff]
    %v6589 = vld [vmem:[#allocation12 + $0x224] sm:$0xff]
    %v6590 = vld [vmem:[#allocation12 + $0x22c] sm:$0xf]
    %v6591 = vld [vmem:[#allocation12 + $0x230] sm:$0xff]
    %v6592 = vld [vmem:[#allocation12 + $0x238] sm:$0xff]
    %v6593 = vld [vmem:[#allocation12 + $0x240] sm:$0xff]
    %v6594 = vld [vmem:[#allocation12 + $0x248] sm:$0xf]
    %v6595 = vld [vmem:[#allocation12 + $0x24c] sm:$0xff]
    %v6596 = vld [vmem:[#allocation12 + $0x254] sm:$0xff]
    %v6597 = vld [vmem:[#allocation12 + $0x25c] sm:$0xff]
    %v6598 = vld [vmem:[#allocation12 + $0x264] sm:$0xf]
    %v6599 = vld [vmem:[#allocation12 + $0x268] sm:$0xff]
    %v6600 = vld [vmem:[#allocation12 + $0x270] sm:$0xff]
    %v6601 = vld [vmem:[#allocation12 + $0x278] sm:$0xff]
    %v6602 = vld [vmem:[#allocation12 + $0x280] sm:$0xf]
    %v6603 = vld [vmem:[#allocation12 + $0x284] sm:$0xff]
    %v6604 = vld [vmem:[#allocation12 + $0x28c] sm:$0xff]
    %v6605 = vld [vmem:[#allocation12 + $0x294] sm:$0xff]
    %v6606 = vld [vmem:[#allocation12 + $0x29c] sm:$0xf]
    %v6607 = vld [vmem:[#allocation12 + $0x2a0] sm:$0xff]
    %v6608 = vld [vmem:[#allocation12 + $0x2a8] sm:$0xff]
    %v6609 = vld [vmem:[#allocation12 + $0x2b0] sm:$0xff]
    %v6610 = vld [vmem:[#allocation12 + $0x2b8] sm:$0xf]
    %v6611 = vld [vmem:[#allocation12 + $0x2bc] sm:$0xff]
    %v6612 = vld [vmem:[#allocation12 + $0x2c4] sm:$0xff]
    %v6613 = vld [vmem:[#allocation12 + $0x2cc] sm:$0xff]
    %v6614 = vld [vmem:[#allocation12 + $0x2d4] sm:$0xf]
    %v6615 = vld [vmem:[#allocation12 + $0x2d8] sm:$0xff]
    %v6616 = vld [vmem:[#allocation12 + $0x2e0] sm:$0xff]
    %v6617 = vld [vmem:[#allocation12 + $0x2e8] sm:$0xff]
    %v6618 = vld [vmem:[#allocation12 + $0x2f0] sm:$0xf]
    %v6619 = vld [vmem:[#allocation12 + $0x2f4] sm:$0xff]
    %v6620 = vld [vmem:[#allocation12 + $0x2fc] sm:$0xff]
    %v6621 = vld [vmem:[#allocation12 + $0x304] sm:$0xff]
    %v6622 = vld [vmem:[#allocation12 + $0x30c] sm:$0xf]
    %v6623 = vld [vmem:[#allocation12 + $0x310] sm:$0xff]
    %v6624 = vld [vmem:[#allocation12 + $0x318] sm:$0xff]
    %v6625 = vld [vmem:[#allocation12 + $0x320] sm:$0xff]
    %v6626 = vld [vmem:[#allocation12 + $0x328] sm:$0xf]
    %v6627 = vld [vmem:[#allocation12 + $0x32c] sm:$0xff]
    %v6628 = vld [vmem:[#allocation12 + $0x334] sm:$0xff]
    %v6629 = vld [vmem:[#allocation12 + $0x33c] sm:$0xff]
    %v6630 = vld [vmem:[#allocation12 + $0x344] sm:$0xf]
    %v6631 = vld [vmem:[#allocation12 + $0x348] sm:$0xff]
    %v6632 = vld [vmem:[#allocation12 + $0x350] sm:$0xff]
    %v6633 = vld [vmem:[#allocation12 + $0x358] sm:$0xff]
    %v6634 = vld [vmem:[#allocation12 + $0x360] sm:$0xf]
    %v6635 = vld [vmem:[#allocation12 + $0x364] sm:$0xff]
    %v6636 = vld [vmem:[#allocation12 + $0x36c] sm:$0xff]
    %v6637 = vld [vmem:[#allocation12 + $0x374] sm:$0xff]
    %v6638 = vld [vmem:[#allocation12 + $0x37c] sm:$0xf]
    %v6639 = vld [vmem:[#allocation12 + $0x380] sm:$0xff]
    %v6640 = vld [vmem:[#allocation12 + $0x388] sm:$0xff]
    %v6641 = vld [vmem:[#allocation12 + $0x390] sm:$0xff]
    %v6642 = vld [vmem:[#allocation12 + $0x398] sm:$0xf]
    %v6643 = vld [vmem:[#allocation12 + $0x39c] sm:$0xff]
    %v6644 = vld [vmem:[#allocation12 + $0x3a4] sm:$0xff]
    %v6645 = vld [vmem:[#allocation12 + $0x3ac] sm:$0xff]
    %v6646 = vld [vmem:[#allocation12 + $0x3b4] sm:$0xf]
    %v6647 = vld [vmem:[#allocation12 + $0x3b8] sm:$0xff]
    %v6648 = vld [vmem:[#allocation12 + $0x3c0] sm:$0xff]
    %v6649 = vld [vmem:[#allocation12 + $0x3c8] sm:$0xff]
    %v6650 = vld [vmem:[#allocation12 + $0x3d0] sm:$0xf]
    %v6651 = vld [vmem:[#allocation12 + $0x3d4] sm:$0xff]
    %v6652 = vld [vmem:[#allocation12 + $0x3dc] sm:$0xff]
    %v6653 = vld [vmem:[#allocation12 + $0x3e4] sm:$0xff]
    %v6654 = vld [vmem:[#allocation12 + $0x3ec] sm:$0xf]
    %v6655 = vld [vmem:[#allocation12 + $0x3f0] sm:$0xff]
    %v6656 = vld [vmem:[#allocation12 + $0x3f8] sm:$0xff]
    %v6657 = vld [vmem:[#allocation12 + $0x400] sm:$0xff]
    %v6658 = vld [vmem:[#allocation12 + $0x408] sm:$0xf]
    %v6659 = vld [vmem:[#allocation12 + $0x40c] sm:$0xff]
    %v6660 = vld [vmem:[#allocation12 + $0x414] sm:$0xff]
    %v6661 = vld [vmem:[#allocation12 + $0x41c] sm:$0xff]
    %v6662 = vld [vmem:[#allocation12 + $0x424] sm:$0xf]
    %v6663 = vld [vmem:[#allocation12 + $0x428] sm:$0xff]
    %v6664 = vld [vmem:[#allocation12 + $0x430] sm:$0xff]
    %v6665 = vld [vmem:[#allocation12 + $0x438] sm:$0xff]
    %v6666 = vld [vmem:[#allocation12 + $0x440] sm:$0xf]
    %v6667 = vld [vmem:[#allocation12 + $0x444] sm:$0xff]
    %v6668 = vld [vmem:[#allocation12 + $0x44c] sm:$0xff]
    %v6669 = vld [vmem:[#allocation12 + $0x454] sm:$0xff]
    %v6670 = vld [vmem:[#allocation12 + $0x45c] sm:$0xf]
    %v6671 = vld [vmem:[#allocation12 + $0x460] sm:$0xff]
    %v6672 = vld [vmem:[#allocation12 + $0x468] sm:$0xff]
    %v6673 = vld [vmem:[#allocation12 + $0x470] sm:$0xff]
    %v6674 = vld [vmem:[#allocation12 + $0x478] sm:$0xf]
    %v6675 = vld [vmem:[#allocation12 + $0x47c] sm:$0xff]
    %v6676 = vld [vmem:[#allocation12 + $0x484] sm:$0xff]
    %v6677 = vld [vmem:[#allocation12 + $0x48c] sm:$0xff]
    %v6678 = vld [vmem:[#allocation12 + $0x494] sm:$0xf]
    %v6679 = vld [vmem:[#allocation12 + $0x498] sm:$0xff]
    %v6680 = vld [vmem:[#allocation12 + $0x4a0] sm:$0xff]
    %v6681 = vld [vmem:[#allocation12 + $0x4a8] sm:$0xff]
    %v6682 = vld [vmem:[#allocation12 + $0x4b0] sm:$0xf]
    %v6683 = vld [vmem:[#allocation12 + $0x4b4] sm:$0xff]
    %v6684 = vld [vmem:[#allocation12 + $0x4bc] sm:$0xff]
    %v6685 = vld [vmem:[#allocation12 + $0x4c4] sm:$0xff]
    %v6686 = vld [vmem:[#allocation12 + $0x4cc] sm:$0xf]
    %v6687 = vld [vmem:[#allocation12 + $0x4d0] sm:$0xff]
    %v6688 = vld [vmem:[#allocation12 + $0x4d8] sm:$0xff]
    %v6689 = vld [vmem:[#allocation12 + $0x4e0] sm:$0xff]
    %v6690 = vld [vmem:[#allocation12 + $0x4e8] sm:$0xf]
    %v6691 = vld [vmem:[#allocation12 + $0x4ec] sm:$0xff]
    %v6692 = vld [vmem:[#allocation12 + $0x4f4] sm:$0xff]
    %v6693 = vld [vmem:[#allocation12 + $0x4fc] sm:$0xff]
    %v6694 = vld [vmem:[#allocation12 + $0x504] sm:$0xf]
    %v6695 = vld [vmem:[#allocation12 + $0x508] sm:$0xff]
    %v6696 = vld [vmem:[#allocation12 + $0x510] sm:$0xff]
    %v6697 = vld [vmem:[#allocation12 + $0x518] sm:$0xff]
    %v6698 = vld [vmem:[#allocation12 + $0x520] sm:$0xf]
    %v6699 = vld [vmem:[#allocation12 + $0x524] sm:$0xff]
    %v6700 = vld [vmem:[#allocation12 + $0x52c] sm:$0xff]
    %v6701 = vld [vmem:[#allocation12 + $0x534] sm:$0xff]
    %v6702 = vld [vmem:[#allocation12 + $0x53c] sm:$0xf]
    %v6703 = vld [vmem:[#allocation12 + $0x540] sm:$0xff]
    %v6704 = vld [vmem:[#allocation12 + $0x548] sm:$0xff]
    %v6705 = vld [vmem:[#allocation12 + $0x550] sm:$0xff]
    %v6706 = vld [vmem:[#allocation12 + $0x558] sm:$0xf]
    %v6707 = vld [vmem:[#allocation12 + $0x55c] sm:$0xff]
    %v6708 = vld [vmem:[#allocation12 + $0x564] sm:$0xff]
    %v6709 = vld [vmem:[#allocation12 + $0x56c] sm:$0xff]
    %v6710 = vld [vmem:[#allocation12 + $0x574] sm:$0xf]
    %v6711 = vld [vmem:[#allocation12 + $0x578] sm:$0xff]
    %v6712 = vld [vmem:[#allocation12 + $0x580] sm:$0xff]
    %v6713 = vld [vmem:[#allocation12 + $0x588] sm:$0xff]
    %v6714 = vld [vmem:[#allocation12 + $0x590] sm:$0xf]
    %v6715 = vld [vmem:[#allocation12 + $0x594] sm:$0xff]
    %v6716 = vld [vmem:[#allocation12 + $0x59c] sm:$0xff]
    %v6717 = vld [vmem:[#allocation12 + $0x5a4] sm:$0xff]
    %v6718 = vld [vmem:[#allocation12 + $0x5ac] sm:$0xf]
    %v6719 = vld [vmem:[#allocation12 + $0x5b0] sm:$0xff]
    %v6720 = vld [vmem:[#allocation12 + $0x5b8] sm:$0xff]
    %v6721 = vld [vmem:[#allocation12 + $0x5c0] sm:$0xff]
    %v6722 = vld [vmem:[#allocation12 + $0x5c8] sm:$0xf]
    %v6723 = vld [vmem:[#allocation12 + $0x5cc] sm:$0xff]
    %v6724 = vld [vmem:[#allocation12 + $0x5d4] sm:$0xff]
    %v6725 = vld [vmem:[#allocation12 + $0x5dc] sm:$0xff]
    %v6726 = vld [vmem:[#allocation12 + $0x5e4] sm:$0xf]
    %v6727 = vld [vmem:[#allocation12 + $0x5e8] sm:$0xff]
    %v6728 = vld [vmem:[#allocation12 + $0x5f0] sm:$0xff]
    %v6729 = vld [vmem:[#allocation12 + $0x5f8] sm:$0xff]
    %v6730 = vld [vmem:[#allocation12 + $0x600] sm:$0xf]
    %v6731 = vld [vmem:[#allocation12 + $0x604] sm:$0xff]
    %v6732 = vld [vmem:[#allocation12 + $0x60c] sm:$0xff]
    %v6733 = vld [vmem:[#allocation12 + $0x614] sm:$0xff]
    %v6734 = vld [vmem:[#allocation12 + $0x61c] sm:$0xf]
    %v6735 = vld [vmem:[#allocation12 + $0x620] sm:$0xff]
    %v6736 = vld [vmem:[#allocation12 + $0x628] sm:$0xff]
    %v6737 = vld [vmem:[#allocation12 + $0x630] sm:$0xff]
    %v6738 = vld [vmem:[#allocation12 + $0x638] sm:$0xf]
    %v6739 = vld [vmem:[#allocation12 + $0x63c] sm:$0xff]
    %v6740 = vld [vmem:[#allocation12 + $0x644] sm:$0xff]
    %v6741 = vld [vmem:[#allocation12 + $0x64c] sm:$0xff]
    %v6742 = vld [vmem:[#allocation12 + $0x654] sm:$0xf]
    %v6743 = vld [vmem:[#allocation12 + $0x658] sm:$0xff]
    %v6744 = vld [vmem:[#allocation12 + $0x660] sm:$0xff]
    %v6745 = vld [vmem:[#allocation12 + $0x668] sm:$0xff]
    %v6746 = vld [vmem:[#allocation12 + $0x670] sm:$0xf]
    %v6747 = vld [vmem:[#allocation12 + $0x674] sm:$0xff]
    %v6748 = vld [vmem:[#allocation12 + $0x67c] sm:$0xff]
    %v6749 = vld [vmem:[#allocation12 + $0x684] sm:$0xff]
    %v6750 = vld [vmem:[#allocation12 + $0x68c] sm:$0xf]
    %v6751 = vld [vmem:[#allocation12 + $0x690] sm:$0xff]
    %v6752 = vld [vmem:[#allocation12 + $0x698] sm:$0xff]
    %v6753 = vld [vmem:[#allocation12 + $0x6a0] sm:$0xff]
    %v6754 = vld [vmem:[#allocation12 + $0x6a8] sm:$0xf]
    %v6755 = vld [vmem:[#allocation12 + $0x6ac] sm:$0xff]
    %v6756 = vld [vmem:[#allocation12 + $0x6b4] sm:$0xff]
    %v6757 = vld [vmem:[#allocation12 + $0x6bc] sm:$0xff]
    %v6758 = vld [vmem:[#allocation12 + $0x6c4] sm:$0xf]
    %v6759 = vld [vmem:[#allocation12 + $0x6c8] sm:$0xff]
    %v6760 = vld [vmem:[#allocation12 + $0x6d0] sm:$0xff]
    %v6761 = vld [vmem:[#allocation12 + $0x6d8] sm:$0xff]
    %v6762 = vld [vmem:[#allocation12 + $0x6e0] sm:$0xf]
    %v6763 = vld [vmem:[#allocation12 + $0x6e4] sm:$0xff]
    %v6764 = vld [vmem:[#allocation12 + $0x6ec] sm:$0xff]
    %v6765 = vld [vmem:[#allocation12 + $0x6f4] sm:$0xff]
    %v6766 = vld [vmem:[#allocation12 + $0x6fc] sm:$0xf]
    %v6767 = vld [vmem:[%s17] sm:$0xff]
    %v6769 = vlaneseq
    %v6770 = vshrl.u32 %v6769, 7
    %v6771 = vsub.s32 0, %v6770
    %v6772 = vrot.slane %v6767, %v6771
    %v6773 = vlaneseq
    %v6774 = vshrl.u32 %v6773, 7
    %v6775 = vsub.s32 1, %v6774
    %v6776 = vrot.slane %v6767, %v6775
    %v6777 = vlaneseq
    %v6778 = vshrl.u32 %v6777, 7
    %v6779 = vsub.s32 2, %v6778
    %v6780 = vrot.slane %v6767, %v6779
    %v6781 = vlaneseq
    %v6782 = vshrl.u32 %v6781, 7
    %v6783 = vsub.s32 3, %v6782
    %v6784 = vrot.slane %v6767, %v6783
    %v6785 = vlaneseq
    %v6786 = vshrl.u32 %v6785, 7
    %v6787 = vsub.s32 4, %v6786
    %v6788 = vrot.slane %v6767, %v6787
    %v6789 = vlaneseq
    %v6790 = vshrl.u32 %v6789, 7
    %v6791 = vsub.s32 5, %v6790
    %v6792 = vrot.slane %v6767, %v6791
    %v6793 = vlaneseq
    %v6794 = vshrl.u32 %v6793, 7
    %v6795 = vsub.s32 6, %v6794
    %v6796 = vrot.slane %v6767, %v6795
    %v7060 = vunpack.c.l.b16 %v6511
    %v7061 = vunpack.c.h.b16 %v6511
    %v7062 = vunpack.c.l.b16 %v6512
    %v7063 = vunpack.c.h.b16 %v6512
    %v7064 = vunpack.c.l.b16 %v6513
    %v7065 = vunpack.c.h.b16 %v6513
    %v7066 = vunpack.c.l.b16 %v6514
    %v7067 = vunpack.c.l.b16 %v6515
    %v7068 = vunpack.c.h.b16 %v6515
    %v7069 = vunpack.c.l.b16 %v6516
    %v7070 = vunpack.c.h.b16 %v6516
    %v7071 = vunpack.c.l.b16 %v6517
    %v7072 = vunpack.c.h.b16 %v6517
    %v7073 = vunpack.c.l.b16 %v6518
    %v7074 = vunpack.c.l.b16 %v6519
    %v7075 = vunpack.c.h.b16 %v6519
    %v7076 = vunpack.c.l.b16 %v6520
    %v7077 = vunpack.c.h.b16 %v6520
    %v7078 = vunpack.c.l.b16 %v6521
    %v7079 = vunpack.c.h.b16 %v6521
    %v7080 = vunpack.c.l.b16 %v6522
    %v7081 = vunpack.c.l.b16 %v6523
    %v7082 = vunpack.c.h.b16 %v6523
    %v7083 = vunpack.c.l.b16 %v6524
    %v7084 = vunpack.c.h.b16 %v6524
    %v7085 = vunpack.c.l.b16 %v6525
    %v7086 = vunpack.c.h.b16 %v6525
    %v7087 = vunpack.c.l.b16 %v6526
    %v7088 = vunpack.c.l.b16 %v6527
    %v7089 = vunpack.c.h.b16 %v6527
    %v7090 = vunpack.c.l.b16 %v6528
    %v7091 = vunpack.c.h.b16 %v6528
    %v7092 = vunpack.c.l.b16 %v6529
    %v7093 = vunpack.c.h.b16 %v6529
    %v7094 = vunpack.c.l.b16 %v6530
    %v7095 = vunpack.c.l.b16 %v6531
    %v7096 = vunpack.c.h.b16 %v6531
    %v7097 = vunpack.c.l.b16 %v6532
    %v7098 = vunpack.c.h.b16 %v6532
    %v7099 = vunpack.c.l.b16 %v6533
    %v7100 = vunpack.c.h.b16 %v6533
    %v7101 = vunpack.c.l.b16 %v6534
    %v7102 = vunpack.c.l.b16 %v6535
    %v7103 = vunpack.c.h.b16 %v6535
    %v7104 = vunpack.c.l.b16 %v6536
    %v7105 = vunpack.c.h.b16 %v6536
    %v7106 = vunpack.c.l.b16 %v6537
    %v7107 = vunpack.c.h.b16 %v6537
    %v7108 = vunpack.c.l.b16 %v6538
    %v7109 = vunpack.c.l.b16 %v6539
    %v7110 = vunpack.c.h.b16 %v6539
    %v7111 = vunpack.c.l.b16 %v6540
    %v7112 = vunpack.c.h.b16 %v6540
    %v7113 = vunpack.c.l.b16 %v6541
    %v7114 = vunpack.c.h.b16 %v6541
    %v7115 = vunpack.c.l.b16 %v6542
    %v7116 = vunpack.c.l.b16 %v6543
    %v7117 = vunpack.c.h.b16 %v6543
    %v7118 = vunpack.c.l.b16 %v6544
    %v7119 = vunpack.c.h.b16 %v6544
    %v7120 = vunpack.c.l.b16 %v6545
    %v7121 = vunpack.c.h.b16 %v6545
    %v7122 = vunpack.c.l.b16 %v6546
    %v7123 = vunpack.c.l.b16 %v6547
    %v7124 = vunpack.c.h.b16 %v6547
    %v7125 = vunpack.c.l.b16 %v6548
    %v7126 = vunpack.c.h.b16 %v6548
    %v7127 = vunpack.c.l.b16 %v6549
    %v7128 = vunpack.c.h.b16 %v6549
    %v7129 = vunpack.c.l.b16 %v6550
    %v7130 = vunpack.c.l.b16 %v6551
    %v7131 = vunpack.c.h.b16 %v6551
    %v7132 = vunpack.c.l.b16 %v6552
    %v7133 = vunpack.c.h.b16 %v6552
    %v7134 = vunpack.c.l.b16 %v6553
    %v7135 = vunpack.c.h.b16 %v6553
    %v7136 = vunpack.c.l.b16 %v6554
    %v7137 = vunpack.c.l.b16 %v6555
    %v7138 = vunpack.c.h.b16 %v6555
    %v7139 = vunpack.c.l.b16 %v6556
    %v7140 = vunpack.c.h.b16 %v6556
    %v7141 = vunpack.c.l.b16 %v6557
    %v7142 = vunpack.c.h.b16 %v6557
    %v7143 = vunpack.c.l.b16 %v6558
    %v7144 = vunpack.c.l.b16 %v6559
    %v7145 = vunpack.c.h.b16 %v6559
    %v7146 = vunpack.c.l.b16 %v6560
    %v7147 = vunpack.c.h.b16 %v6560
    %v7148 = vunpack.c.l.b16 %v6561
    %v7149 = vunpack.c.h.b16 %v6561
    %v7150 = vunpack.c.l.b16 %v6562
    %v7151 = vunpack.c.l.b16 %v6563
    %v7152 = vunpack.c.h.b16 %v6563
    %v7153 = vunpack.c.l.b16 %v6564
    %v7154 = vunpack.c.h.b16 %v6564
    %v7155 = vunpack.c.l.b16 %v6565
    %v7156 = vunpack.c.h.b16 %v6565
    %v7157 = vunpack.c.l.b16 %v6566
    %v7158 = vunpack.c.l.b16 %v6567
    %v7159 = vunpack.c.h.b16 %v6567
    %v7160 = vunpack.c.l.b16 %v6568
    %v7161 = vunpack.c.h.b16 %v6568
    %v7162 = vunpack.c.l.b16 %v6569
    %v7163 = vunpack.c.h.b16 %v6569
    %v7164 = vunpack.c.l.b16 %v6570
    %v7165 = vunpack.c.l.b16 %v6571
    %v7166 = vunpack.c.h.b16 %v6571
    %v7167 = vunpack.c.l.b16 %v6572
    %v7168 = vunpack.c.h.b16 %v6572
    %v7169 = vunpack.c.l.b16 %v6573
    %v7170 = vunpack.c.h.b16 %v6573
    %v7171 = vunpack.c.l.b16 %v6574
    %v7172 = vunpack.c.l.b16 %v6575
    %v7173 = vunpack.c.h.b16 %v6575
    %v7174 = vunpack.c.l.b16 %v6576
    %v7175 = vunpack.c.h.b16 %v6576
    %v7176 = vunpack.c.l.b16 %v6577
    %v7177 = vunpack.c.h.b16 %v6577
    %v7178 = vunpack.c.l.b16 %v6578
    %v7179 = vunpack.c.l.b16 %v6579
    %v7180 = vunpack.c.h.b16 %v6579
    %v7181 = vunpack.c.l.b16 %v6580
    %v7182 = vunpack.c.h.b16 %v6580
    %v7183 = vunpack.c.l.b16 %v6581
    %v7184 = vunpack.c.h.b16 %v6581
    %v7185 = vunpack.c.l.b16 %v6582
    %v7186 = vunpack.c.l.b16 %v6583
    %v7187 = vunpack.c.h.b16 %v6583
    %v7188 = vunpack.c.l.b16 %v6584
    %v7189 = vunpack.c.h.b16 %v6584
    %v7190 = vunpack.c.l.b16 %v6585
    %v7191 = vunpack.c.h.b16 %v6585
    %v7192 = vunpack.c.l.b16 %v6586
    %v7193 = vunpack.c.l.b16 %v6587
    %v7194 = vunpack.c.h.b16 %v6587
    %v7195 = vunpack.c.l.b16 %v6588
    %v7196 = vunpack.c.h.b16 %v6588
    %v7197 = vunpack.c.l.b16 %v6589
    %v7198 = vunpack.c.h.b16 %v6589
    %v7199 = vunpack.c.l.b16 %v6590
    %v7200 = vunpack.c.l.b16 %v6591
    %v7201 = vunpack.c.h.b16 %v6591
    %v7202 = vunpack.c.l.b16 %v6592
    %v7203 = vunpack.c.h.b16 %v6592
    %v7204 = vunpack.c.l.b16 %v6593
    %v7205 = vunpack.c.h.b16 %v6593
    %v7206 = vunpack.c.l.b16 %v6594
    %v7207 = vunpack.c.l.b16 %v6595
    %v7208 = vunpack.c.h.b16 %v6595
    %v7209 = vunpack.c.l.b16 %v6596
    %v7210 = vunpack.c.h.b16 %v6596
    %v7211 = vunpack.c.l.b16 %v6597
    %v7212 = vunpack.c.h.b16 %v6597
    %v7213 = vunpack.c.l.b16 %v6598
    %v7214 = vunpack.c.l.b16 %v6599
    %v7215 = vunpack.c.h.b16 %v6599
    %v7216 = vunpack.c.l.b16 %v6600
    %v7217 = vunpack.c.h.b16 %v6600
    %v7218 = vunpack.c.l.b16 %v6601
    %v7219 = vunpack.c.h.b16 %v6601
    %v7220 = vunpack.c.l.b16 %v6602
    %v7221 = vunpack.c.l.b16 %v6603
    %v7222 = vunpack.c.h.b16 %v6603
    %v7223 = vunpack.c.l.b16 %v6604
    %v7224 = vunpack.c.h.b16 %v6604
    %v7225 = vunpack.c.l.b16 %v6605
    %v7226 = vunpack.c.h.b16 %v6605
    %v7227 = vunpack.c.l.b16 %v6606
    %v7228 = vunpack.c.l.b16 %v6607
    %v7229 = vunpack.c.h.b16 %v6607
    %v7230 = vunpack.c.l.b16 %v6608
    %v7231 = vunpack.c.h.b16 %v6608
    %v7232 = vunpack.c.l.b16 %v6609
    %v7233 = vunpack.c.h.b16 %v6609
    %v7234 = vunpack.c.l.b16 %v6610
    %v7235 = vunpack.c.l.b16 %v6611
    %v7236 = vunpack.c.h.b16 %v6611
    %v7237 = vunpack.c.l.b16 %v6612
    %v7238 = vunpack.c.h.b16 %v6612
    %v7239 = vunpack.c.l.b16 %v6613
    %v7240 = vunpack.c.h.b16 %v6613
    %v7241 = vunpack.c.l.b16 %v6614
    %v7242 = vunpack.c.l.b16 %v6615
    %v7243 = vunpack.c.h.b16 %v6615
    %v7244 = vunpack.c.l.b16 %v6616
    %v7245 = vunpack.c.h.b16 %v6616
    %v7246 = vunpack.c.l.b16 %v6617
    %v7247 = vunpack.c.h.b16 %v6617
    %v7248 = vunpack.c.l.b16 %v6618
    %v7249 = vunpack.c.l.b16 %v6619
    %v7250 = vunpack.c.h.b16 %v6619
    %v7251 = vunpack.c.l.b16 %v6620
    %v7252 = vunpack.c.h.b16 %v6620
    %v7253 = vunpack.c.l.b16 %v6621
    %v7254 = vunpack.c.h.b16 %v6621
    %v7255 = vunpack.c.l.b16 %v6622
    %v7256 = vunpack.c.l.b16 %v6623
    %v7257 = vunpack.c.h.b16 %v6623
    %v7258 = vunpack.c.l.b16 %v6624
    %v7259 = vunpack.c.h.b16 %v6624
    %v7260 = vunpack.c.l.b16 %v6625
    %v7261 = vunpack.c.h.b16 %v6625
    %v7262 = vunpack.c.l.b16 %v6626
    %v7263 = vunpack.c.l.b16 %v6627
    %v7264 = vunpack.c.h.b16 %v6627
    %v7265 = vunpack.c.l.b16 %v6628
    %v7266 = vunpack.c.h.b16 %v6628
    %v7267 = vunpack.c.l.b16 %v6629
    %v7268 = vunpack.c.h.b16 %v6629
    %v7269 = vunpack.c.l.b16 %v6630
    %v7270 = vunpack.c.l.b16 %v6631
    %v7271 = vunpack.c.h.b16 %v6631
    %v7272 = vunpack.c.l.b16 %v6632
    %v7273 = vunpack.c.h.b16 %v6632
    %v7274 = vunpack.c.l.b16 %v6633
    %v7275 = vunpack.c.h.b16 %v6633
    %v7276 = vunpack.c.l.b16 %v6634
    %v7277 = vunpack.c.l.b16 %v6635
    %v7278 = vunpack.c.h.b16 %v6635
    %v7279 = vunpack.c.l.b16 %v6636
    %v7280 = vunpack.c.h.b16 %v6636
    %v7281 = vunpack.c.l.b16 %v6637
    %v7282 = vunpack.c.h.b16 %v6637
    %v7283 = vunpack.c.l.b16 %v6638
    %v7284 = vunpack.c.l.b16 %v6639
    %v7285 = vunpack.c.h.b16 %v6639
    %v7286 = vunpack.c.l.b16 %v6640
    %v7287 = vunpack.c.h.b16 %v6640
    %v7288 = vunpack.c.l.b16 %v6641
    %v7289 = vunpack.c.h.b16 %v6641
    %v7290 = vunpack.c.l.b16 %v6642
    %v7291 = vunpack.c.l.b16 %v6643
    %v7292 = vunpack.c.h.b16 %v6643
    %v7293 = vunpack.c.l.b16 %v6644
    %v7294 = vunpack.c.h.b16 %v6644
    %v7295 = vunpack.c.l.b16 %v6645
    %v7296 = vunpack.c.h.b16 %v6645
    %v7297 = vunpack.c.l.b16 %v6646
    %v7298 = vunpack.c.l.b16 %v6647
    %v7299 = vunpack.c.h.b16 %v6647
    %v7300 = vunpack.c.l.b16 %v6648
    %v7301 = vunpack.c.h.b16 %v6648
    %v7302 = vunpack.c.l.b16 %v6649
    %v7303 = vunpack.c.h.b16 %v6649
    %v7304 = vunpack.c.l.b16 %v6650
    %v7305 = vunpack.c.l.b16 %v6651
    %v7306 = vunpack.c.h.b16 %v6651
    %v7307 = vunpack.c.l.b16 %v6652
    %v7308 = vunpack.c.h.b16 %v6652
    %v7309 = vunpack.c.l.b16 %v6653
    %v7310 = vunpack.c.h.b16 %v6653
    %v7311 = vunpack.c.l.b16 %v6654
    %v7312 = vunpack.c.l.b16 %v6655
    %v7313 = vunpack.c.h.b16 %v6655
    %v7314 = vunpack.c.l.b16 %v6656
    %v7315 = vunpack.c.h.b16 %v6656
    %v7316 = vunpack.c.l.b16 %v6657
    %v7317 = vunpack.c.h.b16 %v6657
    %v7318 = vunpack.c.l.b16 %v6658
    %v7319 = vunpack.c.l.b16 %v6659
    %v7320 = vunpack.c.h.b16 %v6659
    %v7321 = vunpack.c.l.b16 %v6660
    %v7322 = vunpack.c.h.b16 %v6660
    %v7323 = vunpack.c.l.b16 %v6661
    %v7324 = vunpack.c.h.b16 %v6661
    %v7325 = vunpack.c.l.b16 %v6662
    %v7326 = vunpack.c.l.b16 %v6663
    %v7327 = vunpack.c.h.b16 %v6663
    %v7328 = vunpack.c.l.b16 %v6664
    %v7329 = vunpack.c.h.b16 %v6664
    %v7330 = vunpack.c.l.b16 %v6665
    %v7331 = vunpack.c.h.b16 %v6665
    %v7332 = vunpack.c.l.b16 %v6666
    %v7333 = vunpack.c.l.b16 %v6667
    %v7334 = vunpack.c.h.b16 %v6667
    %v7335 = vunpack.c.l.b16 %v6668
    %v7336 = vunpack.c.h.b16 %v6668
    %v7337 = vunpack.c.l.b16 %v6669
    %v7338 = vunpack.c.h.b16 %v6669
    %v7339 = vunpack.c.l.b16 %v6670
    %v7340 = vunpack.c.l.b16 %v6671
    %v7341 = vunpack.c.h.b16 %v6671
    %v7342 = vunpack.c.l.b16 %v6672
    %v7343 = vunpack.c.h.b16 %v6672
    %v7344 = vunpack.c.l.b16 %v6673
    %v7345 = vunpack.c.h.b16 %v6673
    %v7346 = vunpack.c.l.b16 %v6674
    %v7347 = vunpack.c.l.b16 %v6675
    %v7348 = vunpack.c.h.b16 %v6675
    %v7349 = vunpack.c.l.b16 %v6676
    %v7350 = vunpack.c.h.b16 %v6676
    %v7351 = vunpack.c.l.b16 %v6677
    %v7352 = vunpack.c.h.b16 %v6677
    %v7353 = vunpack.c.l.b16 %v6678
    %v7354 = vunpack.c.l.b16 %v6679
    %v7355 = vunpack.c.h.b16 %v6679
    %v7356 = vunpack.c.l.b16 %v6680
    %v7357 = vunpack.c.h.b16 %v6680
    %v7358 = vunpack.c.l.b16 %v6681
    %v7359 = vunpack.c.h.b16 %v6681
    %v7360 = vunpack.c.l.b16 %v6682
    %v7361 = vunpack.c.l.b16 %v6683
    %v7362 = vunpack.c.h.b16 %v6683
    %v7363 = vunpack.c.l.b16 %v6684
    %v7364 = vunpack.c.h.b16 %v6684
    %v7365 = vunpack.c.l.b16 %v6685
    %v7366 = vunpack.c.h.b16 %v6685
    %v7367 = vunpack.c.l.b16 %v6686
    %v7368 = vunpack.c.l.b16 %v6687
    %v7369 = vunpack.c.h.b16 %v6687
    %v7370 = vunpack.c.l.b16 %v6688
    %v7371 = vunpack.c.h.b16 %v6688
    %v7372 = vunpack.c.l.b16 %v6689
    %v7373 = vunpack.c.h.b16 %v6689
    %v7374 = vunpack.c.l.b16 %v6690
    %v7375 = vunpack.c.l.b16 %v6691
    %v7376 = vunpack.c.h.b16 %v6691
    %v7377 = vunpack.c.l.b16 %v6692
    %v7378 = vunpack.c.h.b16 %v6692
    %v7379 = vunpack.c.l.b16 %v6693
    %v7380 = vunpack.c.h.b16 %v6693
    %v7381 = vunpack.c.l.b16 %v6694
    %v7382 = vunpack.c.l.b16 %v6695
    %v7383 = vunpack.c.h.b16 %v6695
    %v7384 = vunpack.c.l.b16 %v6696
    %v7385 = vunpack.c.h.b16 %v6696
    %v7386 = vunpack.c.l.b16 %v6697
    %v7387 = vunpack.c.h.b16 %v6697
    %v7388 = vunpack.c.l.b16 %v6698
    %v7389 = vunpack.c.l.b16 %v6699
    %v7390 = vunpack.c.h.b16 %v6699
    %v7391 = vunpack.c.l.b16 %v6700
    %v7392 = vunpack.c.h.b16 %v6700
    %v7393 = vunpack.c.l.b16 %v6701
    %v7394 = vunpack.c.h.b16 %v6701
    %v7395 = vunpack.c.l.b16 %v6702
    %v7396 = vunpack.c.l.b16 %v6703
    %v7397 = vunpack.c.h.b16 %v6703
    %v7398 = vunpack.c.l.b16 %v6704
    %v7399 = vunpack.c.h.b16 %v6704
    %v7400 = vunpack.c.l.b16 %v6705
    %v7401 = vunpack.c.h.b16 %v6705
    %v7402 = vunpack.c.l.b16 %v6706
    %v7403 = vunpack.c.l.b16 %v6707
    %v7404 = vunpack.c.h.b16 %v6707
    %v7405 = vunpack.c.l.b16 %v6708
    %v7406 = vunpack.c.h.b16 %v6708
    %v7407 = vunpack.c.l.b16 %v6709
    %v7408 = vunpack.c.h.b16 %v6709
    %v7409 = vunpack.c.l.b16 %v6710
    %v7410 = vunpack.c.l.b16 %v6711
    %v7411 = vunpack.c.h.b16 %v6711
    %v7412 = vunpack.c.l.b16 %v6712
    %v7413 = vunpack.c.h.b16 %v6712
    %v7414 = vunpack.c.l.b16 %v6713
    %v7415 = vunpack.c.h.b16 %v6713
    %v7416 = vunpack.c.l.b16 %v6714
    %v7417 = vunpack.c.l.b16 %v6715
    %v7418 = vunpack.c.h.b16 %v6715
    %v7419 = vunpack.c.l.b16 %v6716
    %v7420 = vunpack.c.h.b16 %v6716
    %v7421 = vunpack.c.l.b16 %v6717
    %v7422 = vunpack.c.h.b16 %v6717
    %v7423 = vunpack.c.l.b16 %v6718
    %v7424 = vunpack.c.l.b16 %v6719
    %v7425 = vunpack.c.h.b16 %v6719
    %v7426 = vunpack.c.l.b16 %v6720
    %v7427 = vunpack.c.h.b16 %v6720
    %v7428 = vunpack.c.l.b16 %v6721
    %v7429 = vunpack.c.h.b16 %v6721
    %v7430 = vunpack.c.l.b16 %v6722
    %v7431 = vunpack.c.l.b16 %v6723
    %v7432 = vunpack.c.h.b16 %v6723
    %v7433 = vunpack.c.l.b16 %v6724
    %v7434 = vunpack.c.h.b16 %v6724
    %v7435 = vunpack.c.l.b16 %v6725
    %v7436 = vunpack.c.h.b16 %v6725
    %v7437 = vunpack.c.l.b16 %v6726
    %v7438 = vunpack.c.l.b16 %v6727
    %v7439 = vunpack.c.h.b16 %v6727
    %v7440 = vunpack.c.l.b16 %v6728
    %v7441 = vunpack.c.h.b16 %v6728
    %v7442 = vunpack.c.l.b16 %v6729
    %v7443 = vunpack.c.h.b16 %v6729
    %v7444 = vunpack.c.l.b16 %v6730
    %v7445 = vunpack.c.l.b16 %v6731
    %v7446 = vunpack.c.h.b16 %v6731
    %v7447 = vunpack.c.l.b16 %v6732
    %v7448 = vunpack.c.h.b16 %v6732
    %v7449 = vunpack.c.l.b16 %v6733
    %v7450 = vunpack.c.h.b16 %v6733
    %v7451 = vunpack.c.l.b16 %v6734
    %v7452 = vunpack.c.l.b16 %v6735
    %v7453 = vunpack.c.h.b16 %v6735
    %v7454 = vunpack.c.l.b16 %v6736
    %v7455 = vunpack.c.h.b16 %v6736
    %v7456 = vunpack.c.l.b16 %v6737
    %v7457 = vunpack.c.h.b16 %v6737
    %v7458 = vunpack.c.l.b16 %v6738
    %v7459 = vunpack.c.l.b16 %v6739
    %v7460 = vunpack.c.h.b16 %v6739
    %v7461 = vunpack.c.l.b16 %v6740
    %v7462 = vunpack.c.h.b16 %v6740
    %v7463 = vunpack.c.l.b16 %v6741
    %v7464 = vunpack.c.h.b16 %v6741
    %v7465 = vunpack.c.l.b16 %v6742
    %v7466 = vunpack.c.l.b16 %v6743
    %v7467 = vunpack.c.h.b16 %v6743
    %v7468 = vunpack.c.l.b16 %v6744
    %v7469 = vunpack.c.h.b16 %v6744
    %v7470 = vunpack.c.l.b16 %v6745
    %v7471 = vunpack.c.h.b16 %v6745
    %v7472 = vunpack.c.l.b16 %v6746
    %v7473 = vunpack.c.l.b16 %v6747
    %v7474 = vunpack.c.h.b16 %v6747
    %v7475 = vunpack.c.l.b16 %v6748
    %v7476 = vunpack.c.h.b16 %v6748
    %v7477 = vunpack.c.l.b16 %v6749
    %v7478 = vunpack.c.h.b16 %v6749
    %v7479 = vunpack.c.l.b16 %v6750
    %v7480 = vunpack.c.l.b16 %v6751
    %v7481 = vunpack.c.h.b16 %v6751
    %v7482 = vunpack.c.l.b16 %v6752
    %v7483 = vunpack.c.h.b16 %v6752
    %v7484 = vunpack.c.l.b16 %v6753
    %v7485 = vunpack.c.h.b16 %v6753
    %v7486 = vunpack.c.l.b16 %v6754
    %v7487 = vunpack.c.l.b16 %v6755
    %v7488 = vunpack.c.h.b16 %v6755
    %v7489 = vunpack.c.l.b16 %v6756
    %v7490 = vunpack.c.h.b16 %v6756
    %v7491 = vunpack.c.l.b16 %v6757
    %v7492 = vunpack.c.h.b16 %v6757
    %v7493 = vunpack.c.l.b16 %v6758
    %v7494 = vunpack.c.l.b16 %v6759
    %v7495 = vunpack.c.h.b16 %v6759
    %v7496 = vunpack.c.l.b16 %v6760
    %v7497 = vunpack.c.h.b16 %v6760
    %v7498 = vunpack.c.l.b16 %v6761
    %v7499 = vunpack.c.h.b16 %v6761
    %v7500 = vunpack.c.l.b16 %v6762
    %v7501 = vunpack.c.l.b16 %v6763
    %v7502 = vunpack.c.h.b16 %v6763
    %v7503 = vunpack.c.l.b16 %v6764
    %v7504 = vunpack.c.h.b16 %v6764
    %v7505 = vunpack.c.l.b16 %v6765
    %v7506 = vunpack.c.h.b16 %v6765
    %v7507 = vunpack.c.l.b16 %v6766
    %v7508 = vpack.c.b16 %v7067, %v7060
    %v7509 = vpack.c.b16 %v7068, %v7061
    %v7510 = vpack.c.b16 %v7069, %v7062
    %v7511 = vpack.c.b16 %v7070, %v7063
    %v7512 = vpack.c.b16 %v7071, %v7064
    %v7513 = vpack.c.b16 %v7072, %v7065
    %v7514 = vpack.c.b16 %v7073, %v7066
    %v7515 = vpack.c.b16 %v7081, %v7074
    %v7516 = vpack.c.b16 %v7082, %v7075
    %v7517 = vpack.c.b16 %v7083, %v7076
    %v7518 = vpack.c.b16 %v7084, %v7077
    %v7519 = vpack.c.b16 %v7085, %v7078
    %v7520 = vpack.c.b16 %v7086, %v7079
    %v7521 = vpack.c.b16 %v7087, %v7080
    %v7522 = vpack.c.b16 %v7095, %v7088
    %v7523 = vpack.c.b16 %v7096, %v7089
    %v7524 = vpack.c.b16 %v7097, %v7090
    %v7525 = vpack.c.b16 %v7098, %v7091
    %v7526 = vpack.c.b16 %v7099, %v7092
    %v7527 = vpack.c.b16 %v7100, %v7093
    %v7528 = vpack.c.b16 %v7101, %v7094
    %v7529 = vpack.c.b16 %v7109, %v7102
    %v7530 = vpack.c.b16 %v7110, %v7103
    %v7531 = vpack.c.b16 %v7111, %v7104
    %v7532 = vpack.c.b16 %v7112, %v7105
    %v7533 = vpack.c.b16 %v7113, %v7106
    %v7534 = vpack.c.b16 %v7114, %v7107
    %v7535 = vpack.c.b16 %v7115, %v7108
    %v7536 = vpack.c.b16 %v7123, %v7116
    %v7537 = vpack.c.b16 %v7124, %v7117
    %v7538 = vpack.c.b16 %v7125, %v7118
    %v7539 = vpack.c.b16 %v7126, %v7119
    %v7540 = vpack.c.b16 %v7127, %v7120
    %v7541 = vpack.c.b16 %v7128, %v7121
    %v7542 = vpack.c.b16 %v7129, %v7122
    %v7543 = vpack.c.b16 %v7137, %v7130
    %v7544 = vpack.c.b16 %v7138, %v7131
    %v7545 = vpack.c.b16 %v7139, %v7132
    %v7546 = vpack.c.b16 %v7140, %v7133
    %v7547 = vpack.c.b16 %v7141, %v7134
    %v7548 = vpack.c.b16 %v7142, %v7135
    %v7549 = vpack.c.b16 %v7143, %v7136
    %v7550 = vpack.c.b16 %v7151, %v7144
    %v7551 = vpack.c.b16 %v7152, %v7145
    %v7552 = vpack.c.b16 %v7153, %v7146
    %v7553 = vpack.c.b16 %v7154, %v7147
    %v7554 = vpack.c.b16 %v7155, %v7148
    %v7555 = vpack.c.b16 %v7156, %v7149
    %v7556 = vpack.c.b16 %v7157, %v7150
    %v7557 = vpack.c.b16 %v7165, %v7158
    %v7558 = vpack.c.b16 %v7166, %v7159
    %v7559 = vpack.c.b16 %v7167, %v7160
    %v7560 = vpack.c.b16 %v7168, %v7161
    %v7561 = vpack.c.b16 %v7169, %v7162
    %v7562 = vpack.c.b16 %v7170, %v7163
    %v7563 = vpack.c.b16 %v7171, %v7164
    %v7564 = vpack.c.b16 %v7179, %v7172
    %v7565 = vpack.c.b16 %v7180, %v7173
    %v7566 = vpack.c.b16 %v7181, %v7174
    %v7567 = vpack.c.b16 %v7182, %v7175
    %v7568 = vpack.c.b16 %v7183, %v7176
    %v7569 = vpack.c.b16 %v7184, %v7177
    %v7570 = vpack.c.b16 %v7185, %v7178
    %v7571 = vpack.c.b16 %v7193, %v7186
    %v7572 = vpack.c.b16 %v7194, %v7187
    %v7573 = vpack.c.b16 %v7195, %v7188
    %v7574 = vpack.c.b16 %v7196, %v7189
    %v7575 = vpack.c.b16 %v7197, %v7190
    %v7576 = vpack.c.b16 %v7198, %v7191
    %v7577 = vpack.c.b16 %v7199, %v7192
    %v7578 = vpack.c.b16 %v7207, %v7200
    %v7579 = vpack.c.b16 %v7208, %v7201
    %v7580 = vpack.c.b16 %v7209, %v7202
    %v7581 = vpack.c.b16 %v7210, %v7203
    %v7582 = vpack.c.b16 %v7211, %v7204
    %v7583 = vpack.c.b16 %v7212, %v7205
    %v7584 = vpack.c.b16 %v7213, %v7206
    %v7585 = vpack.c.b16 %v7221, %v7214
    %v7586 = vpack.c.b16 %v7222, %v7215
    %v7587 = vpack.c.b16 %v7223, %v7216
    %v7588 = vpack.c.b16 %v7224, %v7217
    %v7589 = vpack.c.b16 %v7225, %v7218
    %v7590 = vpack.c.b16 %v7226, %v7219
    %v7591 = vpack.c.b16 %v7227, %v7220
    %v7592 = vpack.c.b16 %v7235, %v7228
    %v7593 = vpack.c.b16 %v7236, %v7229
    %v7594 = vpack.c.b16 %v7237, %v7230
    %v7595 = vpack.c.b16 %v7238, %v7231
    %v7596 = vpack.c.b16 %v7239, %v7232
    %v7597 = vpack.c.b16 %v7240, %v7233
    %v7598 = vpack.c.b16 %v7241, %v7234
    %v7599 = vpack.c.b16 %v7249, %v7242
    %v7600 = vpack.c.b16 %v7250, %v7243
    %v7601 = vpack.c.b16 %v7251, %v7244
    %v7602 = vpack.c.b16 %v7252, %v7245
    %v7603 = vpack.c.b16 %v7253, %v7246
    %v7604 = vpack.c.b16 %v7254, %v7247
    %v7605 = vpack.c.b16 %v7255, %v7248
    %v7606 = vpack.c.b16 %v7263, %v7256
    %v7607 = vpack.c.b16 %v7264, %v7257
    %v7608 = vpack.c.b16 %v7265, %v7258
    %v7609 = vpack.c.b16 %v7266, %v7259
    %v7610 = vpack.c.b16 %v7267, %v7260
    %v7611 = vpack.c.b16 %v7268, %v7261
    %v7612 = vpack.c.b16 %v7269, %v7262
    %v7613 = vpack.c.b16 %v7277, %v7270
    %v7614 = vpack.c.b16 %v7278, %v7271
    %v7615 = vpack.c.b16 %v7279, %v7272
    %v7616 = vpack.c.b16 %v7280, %v7273
    %v7617 = vpack.c.b16 %v7281, %v7274
    %v7618 = vpack.c.b16 %v7282, %v7275
    %v7619 = vpack.c.b16 %v7283, %v7276
    %v7620 = vpack.c.b16 %v7291, %v7284
    %v7621 = vpack.c.b16 %v7292, %v7285
    %v7622 = vpack.c.b16 %v7293, %v7286
    %v7623 = vpack.c.b16 %v7294, %v7287
    %v7624 = vpack.c.b16 %v7295, %v7288
    %v7625 = vpack.c.b16 %v7296, %v7289
    %v7626 = vpack.c.b16 %v7297, %v7290
    %v7627 = vpack.c.b16 %v7305, %v7298
    %v7628 = vpack.c.b16 %v7306, %v7299
    %v7629 = vpack.c.b16 %v7307, %v7300
    %v7630 = vpack.c.b16 %v7308, %v7301
    %v7631 = vpack.c.b16 %v7309, %v7302
    %v7632 = vpack.c.b16 %v7310, %v7303
    %v7633 = vpack.c.b16 %v7311, %v7304
    %v7634 = vpack.c.b16 %v7319, %v7312
    %v7635 = vpack.c.b16 %v7320, %v7313
    %v7636 = vpack.c.b16 %v7321, %v7314
    %v7637 = vpack.c.b16 %v7322, %v7315
    %v7638 = vpack.c.b16 %v7323, %v7316
    %v7639 = vpack.c.b16 %v7324, %v7317
    %v7640 = vpack.c.b16 %v7325, %v7318
    %v7641 = vpack.c.b16 %v7333, %v7326
    %v7642 = vpack.c.b16 %v7334, %v7327
    %v7643 = vpack.c.b16 %v7335, %v7328
    %v7644 = vpack.c.b16 %v7336, %v7329
    %v7645 = vpack.c.b16 %v7337, %v7330
    %v7646 = vpack.c.b16 %v7338, %v7331
    %v7647 = vpack.c.b16 %v7339, %v7332
    %v7648 = vpack.c.b16 %v7347, %v7340
    %v7649 = vpack.c.b16 %v7348, %v7341
    %v7650 = vpack.c.b16 %v7349, %v7342
    %v7651 = vpack.c.b16 %v7350, %v7343
    %v7652 = vpack.c.b16 %v7351, %v7344
    %v7653 = vpack.c.b16 %v7352, %v7345
    %v7654 = vpack.c.b16 %v7353, %v7346
    %v7655 = vpack.c.b16 %v7361, %v7354
    %v7656 = vpack.c.b16 %v7362, %v7355
    %v7657 = vpack.c.b16 %v7363, %v7356
    %v7658 = vpack.c.b16 %v7364, %v7357
    %v7659 = vpack.c.b16 %v7365, %v7358
    %v7660 = vpack.c.b16 %v7366, %v7359
    %v7661 = vpack.c.b16 %v7367, %v7360
    %v7662 = vpack.c.b16 %v7375, %v7368
    %v7663 = vpack.c.b16 %v7376, %v7369
    %v7664 = vpack.c.b16 %v7377, %v7370
    %v7665 = vpack.c.b16 %v7378, %v7371
    %v7666 = vpack.c.b16 %v7379, %v7372
    %v7667 = vpack.c.b16 %v7380, %v7373
    %v7668 = vpack.c.b16 %v7381, %v7374
    %v7669 = vpack.c.b16 %v7389, %v7382
    %v7670 = vpack.c.b16 %v7390, %v7383
    %v7671 = vpack.c.b16 %v7391, %v7384
    %v7672 = vpack.c.b16 %v7392, %v7385
    %v7673 = vpack.c.b16 %v7393, %v7386
    %v7674 = vpack.c.b16 %v7394, %v7387
    %v7675 = vpack.c.b16 %v7395, %v7388
    %v7676 = vpack.c.b16 %v7403, %v7396
    %v7677 = vpack.c.b16 %v7404, %v7397
    %v7678 = vpack.c.b16 %v7405, %v7398
    %v7679 = vpack.c.b16 %v7406, %v7399
    %v7680 = vpack.c.b16 %v7407, %v7400
    %v7681 = vpack.c.b16 %v7408, %v7401
    %v7682 = vpack.c.b16 %v7409, %v7402
    %v7683 = vpack.c.b16 %v7417, %v7410
    %v7684 = vpack.c.b16 %v7418, %v7411
    %v7685 = vpack.c.b16 %v7419, %v7412
    %v7686 = vpack.c.b16 %v7420, %v7413
    %v7687 = vpack.c.b16 %v7421, %v7414
    %v7688 = vpack.c.b16 %v7422, %v7415
    %v7689 = vpack.c.b16 %v7423, %v7416
    %v7690 = vpack.c.b16 %v7431, %v7424
    %v7691 = vpack.c.b16 %v7432, %v7425
    %v7692 = vpack.c.b16 %v7433, %v7426
    %v7693 = vpack.c.b16 %v7434, %v7427
    %v7694 = vpack.c.b16 %v7435, %v7428
    %v7695 = vpack.c.b16 %v7436, %v7429
    %v7696 = vpack.c.b16 %v7437, %v7430
    %v7697 = vpack.c.b16 %v7445, %v7438
    %v7698 = vpack.c.b16 %v7446, %v7439
    %v7699 = vpack.c.b16 %v7447, %v7440
    %v7700 = vpack.c.b16 %v7448, %v7441
    %v7701 = vpack.c.b16 %v7449, %v7442
    %v7702 = vpack.c.b16 %v7450, %v7443
    %v7703 = vpack.c.b16 %v7451, %v7444
    %v7704 = vpack.c.b16 %v7459, %v7452
    %v7705 = vpack.c.b16 %v7460, %v7453
    %v7706 = vpack.c.b16 %v7461, %v7454
    %v7707 = vpack.c.b16 %v7462, %v7455
    %v7708 = vpack.c.b16 %v7463, %v7456
    %v7709 = vpack.c.b16 %v7464, %v7457
    %v7710 = vpack.c.b16 %v7465, %v7458
    %v7711 = vpack.c.b16 %v7473, %v7466
    %v7712 = vpack.c.b16 %v7474, %v7467
    %v7713 = vpack.c.b16 %v7475, %v7468
    %v7714 = vpack.c.b16 %v7476, %v7469
    %v7715 = vpack.c.b16 %v7477, %v7470
    %v7716 = vpack.c.b16 %v7478, %v7471
    %v7717 = vpack.c.b16 %v7479, %v7472
    %v7718 = vpack.c.b16 %v7487, %v7480
    %v7719 = vpack.c.b16 %v7488, %v7481
    %v7720 = vpack.c.b16 %v7489, %v7482
    %v7721 = vpack.c.b16 %v7490, %v7483
    %v7722 = vpack.c.b16 %v7491, %v7484
    %v7723 = vpack.c.b16 %v7492, %v7485
    %v7724 = vpack.c.b16 %v7493, %v7486
    %v7725 = vpack.c.b16 %v7501, %v7494
    %v7726 = vpack.c.b16 %v7502, %v7495
    %v7727 = vpack.c.b16 %v7503, %v7496
    %v7728 = vpack.c.b16 %v7504, %v7497
    %v7729 = vpack.c.b16 %v7505, %v7498
    %v7730 = vpack.c.b16 %v7506, %v7499
    %v7731 = vpack.c.b16 %v7507, %v7500
    %7956 = vmatprep.subr.bf16.mxu0 %v7558
    %7957 = vmatpush1.bf16.msra.mxu0 %v7557
    %7958 = vmatprep.subr.bf16.mxu0 %v7551
    %7959 = vmatpush1.bf16.msra.mxu0 %v7550
    %7960 = vmatprep.subr.bf16.mxu0 %v7544
    %7961 = vmatpush1.bf16.msra.mxu0 %v7543
    %7962 = vmatprep.subr.bf16.mxu0 %v7537
    %7963 = vmatpush1.bf16.msra.mxu0 %v7536
    %7964 = vmatprep.subr.bf16.mxu0 %v7530
    %7965 = vmatpush1.bf16.msra.mxu0 %v7529
    %7966 = vmatprep.subr.bf16.mxu0 %v7523
    %7967 = vmatpush1.bf16.msra.mxu0 %v7522
    %7968 = vmatprep.subr.bf16.mxu0 %v7516
    %7969 = vmatpush1.bf16.msra.mxu0 %v7515
    %7970 = vmatprep.subr.bf16.mxu0 %v7509
    %7971 = vmatpush1.bf16.msra.mxu0 %v7508
    %7972 = vmatprep.subr.bf16.mxu0 %v7614
    %7973 = vmatpush2.bf16.msra.mxu0 %v7613
    %7974 = vmatprep.subr.bf16.mxu0 %v7607
    %7975 = vmatpush2.bf16.msra.mxu0 %v7606
    %7976 = vmatprep.subr.bf16.mxu0 %v7600
    %7977 = vmatpush2.bf16.msra.mxu0 %v7599
    %7978 = vmatprep.subr.bf16.mxu0 %v7593
    %7979 = vmatpush2.bf16.msra.mxu0 %v7592
    %7980 = vmatprep.subr.bf16.mxu0 %v7586
    %7981 = vmatpush2.bf16.msra.mxu0 %v7585
    %7982 = vmatprep.subr.bf16.mxu0 %v7579
    %7983 = vmatpush2.bf16.msra.mxu0 %v7578
    %7984 = vmatprep.subr.bf16.mxu0 %v7572
    %7985 = vmatpush2.bf16.msra.mxu0 %v7571
    %7986 = vmatprep.subr.bf16.mxu0 %v7565
    %7987 = vmatpush2.bf16.msra.mxu0 %v7564
    %7988 = vmatprep.mubr.bf16.mxu0 %v6508
    %7989 = vmatmul.mubr.bf16.gmra.mxu0 %v6507
    %v7990 = vpop.f32.mrf.mxu0
    %v7991 = vadd.f32 %v6772, %v7990
    %v7992 = vpop.f32.mrf.mxu0
    %v7993 = vadd.f32 %v6776, %v7992
    %v7994 = vpop.f32.mrf.mxu0
    %v7995 = vpop.f32.mrf.mxu0
    %7996 = vdwg.mxu0
    %7997 = vmatprep.subr.bf16.mxu0 %v7670
    %7998 = vmatpush1.bf16.msra.mxu0 %v7669
    %7999 = vmatprep.subr.bf16.mxu0 %v7663
    %8000 = vmatpush1.bf16.msra.mxu0 %v7662
    %8001 = vmatprep.subr.bf16.mxu0 %v7656
    %8002 = vmatpush1.bf16.msra.mxu0 %v7655
    %8003 = vmatprep.subr.bf16.mxu0 %v7649
    %8004 = vmatpush1.bf16.msra.mxu0 %v7648
    %8005 = vmatprep.subr.bf16.mxu0 %v7642
    %8006 = vmatpush1.bf16.msra.mxu0 %v7641
    %8007 = vmatprep.subr.bf16.mxu0 %v7635
    %8008 = vmatpush1.bf16.msra.mxu0 %v7634
    %8009 = vmatprep.subr.bf16.mxu0 %v7628
    %8010 = vmatpush1.bf16.msra.mxu0 %v7627
    %8011 = vmatprep.subr.bf16.mxu0 %v7621
    %8012 = vmatpush1.bf16.msra.mxu0 %v7620
    %8013 = vmatprep.subr.bf16.mxu0 %v7726
    %8014 = vmatpush2.bf16.msra.mxu0 %v7725
    %8015 = vmatprep.subr.bf16.mxu0 %v7719
    %8016 = vmatpush2.bf16.msra.mxu0 %v7718
    %8017 = vmatprep.subr.bf16.mxu0 %v7712
    %8018 = vmatpush2.bf16.msra.mxu0 %v7711
    %8019 = vmatprep.subr.bf16.mxu0 %v7705
    %8020 = vmatpush2.bf16.msra.mxu0 %v7704
    %8021 = vmatprep.subr.bf16.mxu0 %v7698
    %8022 = vmatpush2.bf16.msra.mxu0 %v7697
    %8023 = vmatprep.subr.bf16.mxu0 %v7691
    %8024 = vmatpush2.bf16.msra.mxu0 %v7690
    %8025 = vmatprep.subr.bf16.mxu0 %v7684
    %8026 = vmatpush2.bf16.msra.mxu0 %v7683
    %8027 = vmatprep.subr.bf16.mxu0 %v7677
    %8028 = vmatpush2.bf16.msra.mxu0 %v7676
    %8029 = vmatprep.mubr.bf16.mxu0 %v6510
    %8030 = vmatmul.mubr.bf16.gmra.mxu0 %v6509
    %v8031 = vpop.f32.mrf.mxu0
    %v8032 = vadd.f32 %v7991, %v8031
    %v8033 = vpop.f32.mrf.mxu0
    %v8034 = vadd.f32 %v7993, %v8033
    %v8035 = vpop.f32.mrf.mxu0
    %v8036 = vpop.f32.mrf.mxu0
    %8037 = vdwg.mxu0
    %8038 = vmatprep.subr.bf16.mxu0 %v7560
    %8039 = vmatpush1.bf16.msra.mxu0 %v7559
    %8040 = vmatprep.subr.bf16.mxu0 %v7553
    %8041 = vmatpush1.bf16.msra.mxu0 %v7552
    %8042 = vmatprep.subr.bf16.mxu0 %v7546
    %8043 = vmatpush1.bf16.msra.mxu0 %v7545
    %8044 = vmatprep.subr.bf16.mxu0 %v7539
    %8045 = vmatpush1.bf16.msra.mxu0 %v7538
    %8046 = vmatprep.subr.bf16.mxu0 %v7532
    %8047 = vmatpush1.bf16.msra.mxu0 %v7531
    %8048 = vmatprep.subr.bf16.mxu0 %v7525
    %8049 = vmatpush1.bf16.msra.mxu0 %v7524
    %8050 = vmatprep.subr.bf16.mxu0 %v7518
    %8051 = vmatpush1.bf16.msra.mxu0 %v7517
    %8052 = vmatprep.subr.bf16.mxu0 %v7511
    %8053 = vmatpush1.bf16.msra.mxu0 %v7510
    %8054 = vmatprep.subr.bf16.mxu0 %v7616
    %8055 = vmatpush2.bf16.msra.mxu0 %v7615
    %8056 = vmatprep.subr.bf16.mxu0 %v7609
    %8057 = vmatpush2.bf16.msra.mxu0 %v7608
    %8058 = vmatprep.subr.bf16.mxu0 %v7602
    %8059 = vmatpush2.bf16.msra.mxu0 %v7601
    %8060 = vmatprep.subr.bf16.mxu0 %v7595
    %8061 = vmatpush2.bf16.msra.mxu0 %v7594
    %8062 = vmatprep.subr.bf16.mxu0 %v7588
    %8063 = vmatpush2.bf16.msra.mxu0 %v7587
    %8064 = vmatprep.subr.bf16.mxu0 %v7581
    %8065 = vmatpush2.bf16.msra.mxu0 %v7580
    %8066 = vmatprep.subr.bf16.mxu0 %v7574
    %8067 = vmatpush2.bf16.msra.mxu0 %v7573
    %8068 = vmatprep.subr.bf16.mxu0 %v7567
    %8069 = vmatpush2.bf16.msra.mxu0 %v7566
    %8070 = vmatprep.mubr.bf16.mxu0 %v6508
    %8071 = vmatmul.mubr.bf16.gmra.mxu0 %v6507
    %v8072 = vpop.f32.mrf.mxu0
    %v8073 = vadd.f32 %v6780, %v8072
    %v8074 = vpop.f32.mrf.mxu0
    %v8075 = vadd.f32 %v6784, %v8074
    %v8076 = vpop.f32.mrf.mxu0
    %v8077 = vpop.f32.mrf.mxu0
    %8078 = vdwg.mxu0
    %8079 = vmatprep.subr.bf16.mxu0 %v7672
    %8080 = vmatpush1.bf16.msra.mxu0 %v7671
    %8081 = vmatprep.subr.bf16.mxu0 %v7665
    %8082 = vmatpush1.bf16.msra.mxu0 %v7664
    %8083 = vmatprep.subr.bf16.mxu0 %v7658
    %8084 = vmatpush1.bf16.msra.mxu0 %v7657
    %8085 = vmatprep.subr.bf16.mxu0 %v7651
    %8086 = vmatpush1.bf16.msra.mxu0 %v7650
    %8087 = vmatprep.subr.bf16.mxu0 %v7644
    %8088 = vmatpush1.bf16.msra.mxu0 %v7643
    %8089 = vmatprep.subr.bf16.mxu0 %v7637
    %8090 = vmatpush1.bf16.msra.mxu0 %v7636
    %8091 = vmatprep.subr.bf16.mxu0 %v7630
    %8092 = vmatpush1.bf16.msra.mxu0 %v7629
    %8093 = vmatprep.subr.bf16.mxu0 %v7623
    %8094 = vmatpush1.bf16.msra.mxu0 %v7622
    %8095 = vmatprep.subr.bf16.mxu0 %v7728
    %8096 = vmatpush2.bf16.msra.mxu0 %v7727
    %8097 = vmatprep.subr.bf16.mxu0 %v7721
    %8098 = vmatpush2.bf16.msra.mxu0 %v7720
    %8099 = vmatprep.subr.bf16.mxu0 %v7714
    %8100 = vmatpush2.bf16.msra.mxu0 %v7713
    %8101 = vmatprep.subr.bf16.mxu0 %v7707
    %8102 = vmatpush2.bf16.msra.mxu0 %v7706
    %8103 = vmatprep.subr.bf16.mxu0 %v7700
    %8104 = vmatpush2.bf16.msra.mxu0 %v7699
    %8105 = vmatprep.subr.bf16.mxu0 %v7693
    %8106 = vmatpush2.bf16.msra.mxu0 %v7692
    %8107 = vmatprep.subr.bf16.mxu0 %v7686
    %8108 = vmatpush2.bf16.msra.mxu0 %v7685
    %8109 = vmatprep.subr.bf16.mxu0 %v7679
    %8110 = vmatpush2.bf16.msra.mxu0 %v7678
    %8111 = vmatprep.mubr.bf16.mxu0 %v6510
    %8112 = vmatmul.mubr.bf16.gmra.mxu0 %v6509
    %v8113 = vpop.f32.mrf.mxu0
    %v8114 = vadd.f32 %v8073, %v8113
    %v8115 = vpop.f32.mrf.mxu0
    %v8116 = vadd.f32 %v8075, %v8115
    %v8117 = vpop.f32.mrf.mxu0
    %v8118 = vpop.f32.mrf.mxu0
    %8119 = vdwg.mxu0
    %8120 = vmatprep.subr.bf16.mxu0 %v7562
    %8121 = vmatpush1.bf16.msra.mxu0 %v7561
    %8122 = vmatprep.subr.bf16.mxu0 %v7555
    %8123 = vmatpush1.bf16.msra.mxu0 %v7554
    %8124 = vmatprep.subr.bf16.mxu0 %v7548
    %8125 = vmatpush1.bf16.msra.mxu0 %v7547
    %8126 = vmatprep.subr.bf16.mxu0 %v7541
    %8127 = vmatpush1.bf16.msra.mxu0 %v7540
    %8128 = vmatprep.subr.bf16.mxu0 %v7534
    %8129 = vmatpush1.bf16.msra.mxu0 %v7533
    %8130 = vmatprep.subr.bf16.mxu0 %v7527
    %8131 = vmatpush1.bf16.msra.mxu0 %v7526
    %8132 = vmatprep.subr.bf16.mxu0 %v7520
    %8133 = vmatpush1.bf16.msra.mxu0 %v7519
    %8134 = vmatprep.subr.bf16.mxu0 %v7513
    %8135 = vmatpush1.bf16.msra.mxu0 %v7512
    %8136 = vmatprep.subr.bf16.mxu0 %v7618
    %8137 = vmatpush2.bf16.msra.mxu0 %v7617
    %8138 = vmatprep.subr.bf16.mxu0 %v7611
    %8139 = vmatpush2.bf16.msra.mxu0 %v7610
    %8140 = vmatprep.subr.bf16.mxu0 %v7604
    %8141 = vmatpush2.bf16.msra.mxu0 %v7603
    %8142 = vmatprep.subr.bf16.mxu0 %v7597
    %8143 = vmatpush2.bf16.msra.mxu0 %v7596
    %8144 = vmatprep.subr.bf16.mxu0 %v7590
    %8145 = vmatpush2.bf16.msra.mxu0 %v7589
    %8146 = vmatprep.subr.bf16.mxu0 %v7583
    %8147 = vmatpush2.bf16.msra.mxu0 %v7582
    %8148 = vmatprep.subr.bf16.mxu0 %v7576
    %8149 = vmatpush2.bf16.msra.mxu0 %v7575
    %8150 = vmatprep.subr.bf16.mxu0 %v7569
    %8151 = vmatpush2.bf16.msra.mxu0 %v7568
    %8152 = vmatprep.mubr.bf16.mxu0 %v6508
    %8153 = vmatmul.mubr.bf16.gmra.mxu0 %v6507
    %v8154 = vpop.f32.mrf.mxu0
    %v8155 = vadd.f32 %v6788, %v8154
    %v8156 = vpop.f32.mrf.mxu0
    %v8157 = vadd.f32 %v6792, %v8156
    %v8158 = vpop.f32.mrf.mxu0
    %v8159 = vpop.f32.mrf.mxu0
    %8160 = vdwg.mxu0
    %8161 = vmatprep.subr.bf16.mxu0 %v7674
    %8162 = vmatpush1.bf16.msra.mxu0 %v7673
    %8163 = vmatprep.subr.bf16.mxu0 %v7667
    %8164 = vmatpush1.bf16.msra.mxu0 %v7666
    %8165 = vmatprep.subr.bf16.mxu0 %v7660
    %8166 = vmatpush1.bf16.msra.mxu0 %v7659
    %8167 = vmatprep.subr.bf16.mxu0 %v7653
    %8168 = vmatpush1.bf16.msra.mxu0 %v7652
    %8169 = vmatprep.subr.bf16.mxu0 %v7646
    %8170 = vmatpush1.bf16.msra.mxu0 %v7645
    %8171 = vmatprep.subr.bf16.mxu0 %v7639
    %8172 = vmatpush1.bf16.msra.mxu0 %v7638
    %8173 = vmatprep.subr.bf16.mxu0 %v7632
    %8174 = vmatpush1.bf16.msra.mxu0 %v7631
    %8175 = vmatprep.subr.bf16.mxu0 %v7625
    %8176 = vmatpush1.bf16.msra.mxu0 %v7624
    %8177 = vmatprep.subr.bf16.mxu0 %v7730
    %8178 = vmatpush2.bf16.msra.mxu0 %v7729
    %8179 = vmatprep.subr.bf16.mxu0 %v7723
    %8180 = vmatpush2.bf16.msra.mxu0 %v7722
    %8181 = vmatprep.subr.bf16.mxu0 %v7716
    %8182 = vmatpush2.bf16.msra.mxu0 %v7715
    %8183 = vmatprep.subr.bf16.mxu0 %v7709
    %8184 = vmatpush2.bf16.msra.mxu0 %v7708
    %8185 = vmatprep.subr.bf16.mxu0 %v7702
    %8186 = vmatpush2.bf16.msra.mxu0 %v7701
    %8187 = vmatprep.subr.bf16.mxu0 %v7695
    %8188 = vmatpush2.bf16.msra.mxu0 %v7694
    %8189 = vmatprep.subr.bf16.mxu0 %v7688
    %8190 = vmatpush2.bf16.msra.mxu0 %v7687
    %8191 = vmatprep.subr.bf16.mxu0 %v7681
    %8192 = vmatpush2.bf16.msra.mxu0 %v7680
    %8193 = vmatprep.mubr.bf16.mxu0 %v6510
    %8194 = vmatmul.mubr.bf16.gmra.mxu0 %v6509
    %v8195 = vpop.f32.mrf.mxu0
    %v8196 = vadd.f32 %v8155, %v8195
    %v8197 = vpop.f32.mrf.mxu0
    %v8198 = vadd.f32 %v8157, %v8197
    %v8199 = vpop.f32.mrf.mxu0
    %v8200 = vpop.f32.mrf.mxu0
    %8201 = vdwg.mxu0
    %8202 = vmatprep.subr.bf16.mxu0 0
    %8203 = vmatpush1.bf16.msra.mxu0 %v7563
    %8204 = vmatprep.subr.bf16.mxu0 0
    %8205 = vmatpush1.bf16.msra.mxu0 %v7556
    %8206 = vmatprep.subr.bf16.mxu0 0
    %8207 = vmatpush1.bf16.msra.mxu0 %v7549
    %8208 = vmatprep.subr.bf16.mxu0 0
    %8209 = vmatpush1.bf16.msra.mxu0 %v7542
    %8210 = vmatprep.subr.bf16.mxu0 0
    %8211 = vmatpush1.bf16.msra.mxu0 %v7535
    %8212 = vmatprep.subr.bf16.mxu0 0
    %8213 = vmatpush1.bf16.msra.mxu0 %v7528
    %8214 = vmatprep.subr.bf16.mxu0 0
    %8215 = vmatpush1.bf16.msra.mxu0 %v7521
    %8216 = vmatprep.subr.bf16.mxu0 0
    %8217 = vmatpush1.bf16.msra.mxu0 %v7514
    %8218 = vmatprep.subr.bf16.mxu0 0
    %8219 = vmatpush2.bf16.msra.mxu0 %v7619
    %8220 = vmatprep.subr.bf16.mxu0 0
    %8221 = vmatpush2.bf16.msra.mxu0 %v7612
    %8222 = vmatprep.subr.bf16.mxu0 0
    %8223 = vmatpush2.bf16.msra.mxu0 %v7605
    %8224 = vmatprep.subr.bf16.mxu0 0
    %8225 = vmatpush2.bf16.msra.mxu0 %v7598
    %8226 = vmatprep.subr.bf16.mxu0 0
    %8227 = vmatpush2.bf16.msra.mxu0 %v7591
    %8228 = vmatprep.subr.bf16.mxu0 0
    %8229 = vmatpush2.bf16.msra.mxu0 %v7584
    %8230 = vmatprep.subr.bf16.mxu0 0
    %8231 = vmatpush2.bf16.msra.mxu0 %v7577
    %8232 = vmatprep.subr.bf16.mxu0 0
    %8233 = vmatpush2.bf16.msra.mxu0 %v7570
    %8234 = vmatprep.mubr.bf16.mxu0 %v6508
    %8235 = vmatmul.mubr.bf16.gmra.mxu0 %v6507
    %v8236 = vpop.f32.mrf.mxu0
    %v8237 = vadd.f32 %v6796, %v8236
    %v8238 = vpop.f32.mrf.mxu0
    %v8239 = vpop.f32.mrf.mxu0
    %v8240 = vpop.f32.mrf.mxu0
    %8241 = vdwg.mxu0
    %8242 = vmatprep.subr.bf16.mxu0 0
    %8243 = vmatpush1.bf16.msra.mxu0 %v7675
    %8244 = vmatprep.subr.bf16.mxu0 0
    %8245 = vmatpush1.bf16.msra.mxu0 %v7668
    %8246 = vmatprep.subr.bf16.mxu0 0
    %8247 = vmatpush1.bf16.msra.mxu0 %v7661
    %8248 = vmatprep.subr.bf16.mxu0 0
    %8249 = vmatpush1.bf16.msra.mxu0 %v7654
    %8250 = vmatprep.subr.bf16.mxu0 0
    %8251 = vmatpush1.bf16.msra.mxu0 %v7647
    %8252 = vmatprep.subr.bf16.mxu0 0
    %8253 = vmatpush1.bf16.msra.mxu0 %v7640
    %8254 = vmatprep.subr.bf16.mxu0 0
    %8255 = vmatpush1.bf16.msra.mxu0 %v7633
    %8256 = vmatprep.subr.bf16.mxu0 0
    %8257 = vmatpush1.bf16.msra.mxu0 %v7626
    %8258 = vmatprep.subr.bf16.mxu0 0
    %8259 = vmatpush2.bf16.msra.mxu0 %v7731
    %8260 = vmatprep.subr.bf16.mxu0 0
    %8261 = vmatpush2.bf16.msra.mxu0 %v7724
    %8262 = vmatprep.subr.bf16.mxu0 0
    %8263 = vmatpush2.bf16.msra.mxu0 %v7717
    %8264 = vmatprep.subr.bf16.mxu0 0
    %8265 = vmatpush2.bf16.msra.mxu0 %v7710
    %8266 = vmatprep.subr.bf16.mxu0 0
    %8267 = vmatpush2.bf16.msra.mxu0 %v7703
    %8268 = vmatprep.subr.bf16.mxu0 0
    %8269 = vmatpush2.bf16.msra.mxu0 %v7696
    %8270 = vmatprep.subr.bf16.mxu0 0
    %8271 = vmatpush2.bf16.msra.mxu0 %v7689
    %8272 = vmatprep.subr.bf16.mxu0 0
    %8273 = vmatpush2.bf16.msra.mxu0 %v7682
    %8274 = vmatprep.mubr.bf16.mxu0 %v6510
    %8275 = vmatmul.mubr.bf16.gmra.mxu0 %v6509
    %v8276 = vpop.f32.mrf.mxu0
    %v8277 = vadd.f32 %v8237, %v8276
    %v8278 = vpop.f32.mrf.mxu0
    %v8279 = vpop.f32.mrf.mxu0
    %v8280 = vpop.f32.mrf.mxu0
    %8281 = vdwg.mxu0
    %v8282 = vxor.u32 %v8032, 2147483648
    %v8283 = vxor.u32 %v8034, 2147483648
    %v8284 = vxor.u32 %v8114, 2147483648
    %v8285 = vxor.u32 %v8116, 2147483648
    %v8286 = vxor.u32 %v8196, 2147483648
    %v8287 = vxor.u32 %v8198, 2147483648
    %v8288 = vxor.u32 %v8277, 2147483648
    %v8289 = vmul.f32 %v8282, 1.442695
    %v8290 = vpow.pop %v8289
    %v8291 = vmul.f32 %v8283, 1.442695
    %v8292 = vpow.pop %v8291
    %v8293 = vmul.f32 %v8284, 1.442695
    %v8294 = vpow.pop %v8293
    %v8295 = vmul.f32 %v8285, 1.442695
    %v8296 = vpow.pop %v8295
    %v8297 = vmul.f32 %v8286, 1.442695
    %v8298 = vpow.pop %v8297
    %v8299 = vmul.f32 %v8287, 1.442695
    %v8300 = vpow.pop %v8299
    %v8301 = vmul.f32 %v8288, 1.442695
    %v8302 = vpow.pop %v8301
    %v8303 = vadd.f32 %v8290, 1.0
    %v8304 = vadd.f32 %v8292, 1.0
    %v8305 = vadd.f32 %v8294, 1.0
    %v8306 = vadd.f32 %v8296, 1.0
    %v8307 = vadd.f32 %v8298, 1.0
    %v8308 = vadd.f32 %v8300, 1.0
    %v8309 = vadd.f32 %v8302, 1.0
    %v8310 = vrcp.pop %v8303
    %v8311 = vmul.f32 1.0, %v8310
    %v8312 = vrcp.pop %v8304
    %v8313 = vmul.f32 1.0, %v8312
    %v8314 = vrcp.pop %v8305
    %v8315 = vmul.f32 1.0, %v8314
    %v8316 = vrcp.pop %v8306
    %v8317 = vmul.f32 1.0, %v8316
    %v8318 = vrcp.pop %v8307
    %v8319 = vmul.f32 1.0, %v8318
    %v8320 = vrcp.pop %v8308
    %v8321 = vmul.f32 1.0, %v8320
    %v8322 = vrcp.pop %v8309
    %v8323 = vmul.f32 1.0, %v8322
    %8324 = vst [vmem:[%s18] sm:$0xff] %v8311
    %8325 = vst [vmem:[%s18 + $0x8] sm:$0xff] %v8313
    %8326 = vst [vmem:[%s18 + $0x10] sm:$0xff] %v8315
    %8327 = vst [vmem:[%s18 + $0x18] sm:$0xff] %v8317
    %8328 = vst [vmem:[%s18 + $0x20] sm:$0xff] %v8319
    %8329 = vst [vmem:[%s18 + $0x28] sm:$0xff] %v8321
    %8330 = vst [vmem:[%s18 + $0x30] sm:$0xff] %v8323
    %8331 = vst [vmem:[%s19] sm:$0xff] %v4270
    %8332 = vst [vmem:[%s20] sm:$0xff] %v4272
    // Predicated region
    $region102: #{vae_forward.1} parent=1 // pred_check
      _
    $region103: #{vae_forward.1} parent=1 // pred_check_branch
      %8334 = sbr.rel (0) target = $region105
    $region104: #{vae_forward.1} parent=1 // pred_region
      _
    $region105: #{vae_forward.1} parent=1 // pred_fallthru
      _
    // Predicated region
    $region106: #{vae_forward.1} parent=1 // pred_check
      _
    $region107: #{vae_forward.1} parent=1 // pred_check_branch
      %8336 = sbr.rel (0) target = $region109
    $region108: #{vae_forward.1} parent=1 // pred_region
      _
    $region109: #{vae_forward.1} parent=1 // pred_fallthru
      _
    // Predicated region
    $region110: #{vae_forward.1} parent=1 // pred_check
      _
    $region111: #{vae_forward.1} parent=1 // pred_check_branch
      %8338 = sbr.rel (0) target = $region113
    $region112: #{vae_forward.1} parent=1 // pred_region
      _
    $region113: #{vae_forward.1} parent=1 // pred_fallthru
      _
    // Predicated region
    $region114: #{vae_forward.1} parent=1 // pred_check
      _
    $region115: #{vae_forward.1} parent=1 // pred_check_branch
      %8340 = sbr.rel (0) target = $region117
    $region116: #{vae_forward.1} parent=1 // pred_region
      _
    $region117: #{vae_forward.1} parent=1 // pred_fallthru
      _
    // Predicated region
    $region118: #{vae_forward.1} parent=1 // pred_check
      _
    $region119: #{vae_forward.1} parent=1 // pred_check_branch
      %8342 = sbr.rel (0) target = $region121
    $region120: #{vae_forward.1} parent=1 // pred_region
      _
    $region121: #{vae_forward.1} parent=1 // pred_fallthru
      _
    // Predicated region
    $region122: #{vae_forward.1} parent=1 // pred_check
      _
    $region123: #{vae_forward.1} parent=1 // pred_check_branch
      %8344 = sbr.rel (0) target = $region125
    $region124: #{vae_forward.1} parent=1 // pred_region
      _
    $region125: #{vae_forward.1} parent=1 // pred_fallthru
      _
    %8345 = vsyncpa [#allocation3], 1
    %8346 = vsyncpa [#allocation5], 1
    %8347 = vsyncpa [#allocation8], 1
    %8348 = vsyncpa [#allocation11], 1

</llo_original>
